<compile_context>
chip_gen: v6e
topology: v6e:2x2x1
jax: 0.10.0
libtpu: 0.0.40
codegen_flags: <defaults>
</compile_context>

<pallas_src>
import jax
import jax.numpy as jnp
from jax.experimental import pallas as pl
from jax.experimental.pallas import tpu as pltpu

F32 = jnp.float32
BF16 = jnp.bfloat16


def _round_up(x, m):
    return (x + m - 1) // m * m


def _cdiv(a, b):
    return -(-a // b)


def _pick_tile_b(B):
    """Batch tile: prefer an exact divisor of B (no pad copies) leaving >=2 grid
    steps (v7x has 2 TensorCores); cap at 128 to bound vreg/VMEM pressure."""
    for t in (128, 64):
        if B % t == 0 and B // t >= 2:
            return t
    if B < 16:
        return _round_up(B, 8)
    n_steps = max(2, _cdiv(B, 128))
    return min(128, _round_up(_cdiv(B, n_steps), 8))


# ----------------------------------------------------------------------------
# Single fused kernel: conv1..conv3 (both branches), fc1/fc2, fc_pose,
# fc_pol1, fc_pol2.  Everything stays in VMEM/vregs.
# ----------------------------------------------------------------------------
def _dqn_kernel(cols1_ref, pose_ref,
                w1_ref, b1_ref, w2_ref, b2_ref, w3_ref, b3_ref,
                wfc_ref, bfc_ref, wp_ref, bp_ref,
                wp1a_ref, wp1b_ref, bp1_ref, wp2_ref, bp2_ref,
                o_ref):
    # Hoisted loads (biases / weights used inside the unrolled loops).
    w1 = w1_ref[...]            # (576, 288) bf16  conv1|con4, block-diag over 9 cols
    b1 = b1_ref[...]            # (1, 288)   f32
    w2 = w2_ref[...]            # (5, 288, 192) bf16  conv2|con5 per kernel-row
    b2 = b2_ref[...]            # (1, 192)   f32
    w3 = w3_ref[...]            # (3, 192, 128) bf16  conv3|con6 per output-row

    # conv1 + con4: one GEMM per conv1-output row; output lanes = (col, out_ch).
    y1 = []
    for r in range(9):
        acc = jnp.dot(cols1_ref[r], w1, preferred_element_type=jnp.float32)
        y1.append(jnp.maximum(acc + b1, 0.0).astype(BF16))        # (tb, 288)

    # conv2 + con5 (per conv2-output row oh; 3 output cols packed into 192 lanes),
    # then conv3 + con6 accumulated over the 3x3 conv2 output grid.
    acc3 = None
    for oh in range(3):
        acc2 = jnp.dot(y1[2 * oh], w2[0], preferred_element_type=jnp.float32)
        for kh in range(1, 5):
            acc2 = acc2 + jnp.dot(y1[2 * oh + kh], w2[kh],
                                  preferred_element_type=jnp.float32)
        a2 = jnp.maximum(acc2 + b2, 0.0).astype(BF16)             # (tb, 192)
        d3 = jnp.dot(a2, w3[oh], preferred_element_type=jnp.float32)
        acc3 = d3 if acc3 is None else acc3 + d3
    h36 = jnp.maximum(acc3 + b3_ref[...], 0.0)                    # (tb, 128) = [relu(con3)|relu(con6)]

    # fc1 | fc2 (block-diagonal), fc_pose, fc_pol1 (concat realised as a row
    # split of its weight), fc_pol2.  Small GEMMs kept in f32.
    f12 = jnp.maximum(
        jnp.dot(h36, wfc_ref[...], preferred_element_type=jnp.float32)
        + bfc_ref[...], 0.0)                                       # (tb, 64)
    fp = jnp.maximum(
        jnp.dot(pose_ref[...], wp_ref[...], preferred_element_type=jnp.float32)
        + bp_ref[...], 0.0)                                        # (tb, 32)
    pol1 = (jnp.dot(f12, wp1a_ref[...], preferred_element_type=jnp.float32)
            + jnp.dot(fp, wp1b_ref[...], preferred_element_type=jnp.float32)
            + bp1_ref[...])                                        # (tb, 48), no ReLU (matches PyTorch)
    q = jnp.dot(pol1, wp2_ref[...], preferred_element_type=jnp.float32) + bp2_ref[...]
    o_ref[...] = q.astype(o_ref.dtype)                             # lane-dense (tb, 128)


def dqn_fused(cols1, pose, p, tile_b):
    """cols1: (9, B_pad, 576) bf16; pose: (B_pad, 2) f32.  Returns (B_pad, 128)."""
    B_pad = pose.shape[0]
    grid = (B_pad // tile_b,)
    return pl.pallas_call(
        _dqn_kernel,
        out_shape=jax.ShapeDtypeStruct((B_pad, 128), F32),
        grid_spec=pltpu.PrefetchScalarGridSpec(
            num_scalar_prefetch=0,
            grid=grid,
            in_specs=[
                pl.BlockSpec((9, tile_b, 576), lambda i: (0, i, 0)),
                pl.BlockSpec((tile_b, 2), lambda i: (i, 0)),
                pl.BlockSpec(p["w1"].shape, lambda i: (0, 0)),
                pl.BlockSpec(p["b1"].shape, lambda i: (0, 0)),
                pl.BlockSpec(p["w2"].shape, lambda i: (0, 0, 0)),
                pl.BlockSpec(p["b2"].shape, lambda i: (0, 0)),
                pl.BlockSpec(p["w3"].shape, lambda i: (0, 0, 0)),
                pl.BlockSpec(p["b3"].shape, lambda i: (0, 0)),
                pl.BlockSpec(p["wfc"].shape, lambda i: (0, 0)),
                pl.BlockSpec(p["bfc"].shape, lambda i: (0, 0)),
                pl.BlockSpec(p["wpose"].shape, lambda i: (0, 0)),
                pl.BlockSpec(p["bpose"].shape, lambda i: (0, 0)),
                pl.BlockSpec(p["wpol1a"].shape, lambda i: (0, 0)),
                pl.BlockSpec(p["wpol1b"].shape, lambda i: (0, 0)),
                pl.BlockSpec(p["bpol1"].shape, lambda i: (0, 0)),
                pl.BlockSpec(p["wpol2"].shape, lambda i: (0, 0)),
                pl.BlockSpec(p["bpol2"].shape, lambda i: (0, 0)),
            ],
            out_specs=pl.BlockSpec((tile_b, 128), lambda i: (i, 0)),
        ),
        compiler_params=pltpu.CompilerParams(
            dimension_semantics=("parallel",),
            vmem_limit_bytes=32 * 1024 * 1024,
        ),
    )(cols1, pose, p["w1"], p["b1"], p["w2"], p["b2"], p["w3"], p["b3"],
      p["wfc"], p["bfc"], p["wpose"], p["bpose"],
      p["wpol1a"], p["wpol1b"], p["bpol1"], p["wpol2"], p["bpol2"])


# ----------------------------------------------------------------------------
# XLA glue: conv1 im2col patch extraction, built row-major so the kernel can
# index conv1-output rows directly (no in-kernel gathers).
# ----------------------------------------------------------------------------
def _im2col_conv1_rowmajor(x):
    """x: (B, 40, 40) -> (9, B, 576); cols1[r, b, c*64 + kh*8 + kw] = x[b, 4r+kh, 4c+kw]."""
    B = x.shape[0]
    taps = []
    for kh in range(8):
        for kw in range(8):
            taps.append(x[:, kh:kh + 33:4, kw:kw + 33:4])   # (B, 9, 9), stride 4
    p = jnp.stack(taps, axis=-1)                             # (B, 9, 9, 64); last dim = kh*8+kw
    p = p.transpose(1, 0, 2, 3)                              # (9, B, 9, 64)
    return p.reshape(9, B, 9 * 64)


# ----------------------------------------------------------------------------
# Parameters: raw PyTorch layouts + one-time packing into GEMM-ready slabs.
# ----------------------------------------------------------------------------
def init_raw_params(key):
    ks = jax.random.split(key, 22)

    def w(k, shape):
        return (0.1 * jax.random.normal(k, shape)).astype(F32)

    return {
        "con1_w": w(ks[0], (16, 1, 8, 8)),   "con1_b": w(ks[1], (16,)),
        "con2_w": w(ks[2], (32, 16, 5, 5)),  "con2_b": w(ks[3], (32,)),
        "con3_w": w(ks[4], (64, 32, 3, 3)),  "con3_b": w(ks[5], (64,)),
        "con4_w": w(ks[6], (16, 1, 8, 8)),   "con4_b": w(ks[7], (16,)),
        "con5_w": w(ks[8], (32, 16, 5, 5)),  "con5_b": w(ks[9], (32,)),
        "con6_w": w(ks[10], (64, 32, 3, 3)), "con6_b": w(ks[11], (64,)),
        "fc1_w": w(ks[12], (32, 64)),        "fc1_b": w(ks[13], (32,)),
        "fc2_w": w(ks[14], (32, 64)),        "fc2_b": w(ks[15], (32,)),
        "fc_pose_w": w(ks[16], (32, 2)),     "fc_pose_b": w(ks[17], (32,)),
        "fc_pol1_w": w(ks[18], (48, 96)),    "fc_pol1_b": w(ks[19], (48,)),
        "fc_pol2_w": w(ks[20], (4, 48)),     "fc_pol2_b": w(ks[21], (4,)),
    }


def prepare_params(rp):
    """One-time packing (hoisted out of the forward: no per-call .T/.reshape)."""
    z = jnp.zeros

    # conv1 | con4 -> (64, 32), then block-diagonal over the 9 column positions
    # of a conv1-output row -> (576, 288); output lanes = (col, out_ch).
    w1both = jnp.concatenate([rp["con1_w"].reshape(16, 64).T,
                              rp["con4_w"].reshape(16, 64).T], axis=1)   # (64, 32)
    w1 = z((576, 288), F32)
    for c in range(9):
        w1 = w1.at[c * 64:(c + 1) * 64, c * 32:(c + 1) * 32].set(w1both)
    b1 = jnp.tile(jnp.concatenate([rp["con1_b"], rp["con4_b"]]), 9).reshape(1, 288)

    # conv2 | con5 combined (5,5,32,64), repacked per kernel-row kh into (288, 192):
    # rows = (conv1 col c, in_ch), cols = (conv2 out col ow, out_ch); entry is
    # w2comb[kh, c-2*ow] when 0 <= c-2*ow <= 4, else 0 (stride 2).
    w2a = rp["con2_w"].transpose(2, 3, 1, 0)      # (5,5,16,32)
    w5a = rp["con5_w"].transpose(2, 3, 1, 0)
    w2comb = z((5, 5, 32, 64), F32)
    w2comb = w2comb.at[:, :, 0:16, 0:32].set(w2a)
    w2comb = w2comb.at[:, :, 16:32, 32:64].set(w5a)
    w2 = z((5, 288, 192), F32)
    for ow in range(3):
        for kw in range(5):
            c = 2 * ow + kw
            w2 = w2.at[:, c * 32:(c + 1) * 32, ow * 64:(ow + 1) * 64].set(w2comb[:, kw])
    b2 = jnp.tile(jnp.concatenate([rp["con2_b"], rp["con5_b"]]), 3).reshape(1, 192)

    # conv3 | con6 combined (3,3,64,128) -> per conv2-output-row (3, 192, 128).
    w3a = rp["con3_w"].transpose(2, 3, 1, 0)      # (3,3,32,64)
    w6a = rp["con6_w"].transpose(2, 3, 1, 0)
    w3comb = z((3, 3, 64, 128), F32)
    w3comb = w3comb.at[:, :, 0:32, 0:64].set(w3a)
    w3comb = w3comb.at[:, :, 32:64, 64:128].set(w6a)
    w3 = w3comb.reshape(3, 192, 128)
    b3 = jnp.concatenate([rp["con3_b"], rp["con6_b"]]).reshape(1, 128)

    # fc1 | fc2 block-diagonal (128 -> 64)
    z6432 = z((64, 32), F32)
    wfc = jnp.concatenate([
        jnp.concatenate([rp["fc1_w"].T, z6432], axis=1),
        jnp.concatenate([z6432, rp["fc2_w"].T], axis=1)], axis=0)
    bfc = jnp.concatenate([rp["fc1_b"], rp["fc2_b"]]).reshape(1, 64)

    wpose = rp["fc_pose_w"].T                                  # (2, 32)
    bpose = rp["fc_pose_b"].reshape(1, 32)

    wpol1 = rp["fc_pol1_w"].T                                  # (96, 48)
    wpol1a = wpol1[:64]                                        # rows for [fc1 | fc2]
    wpol1b = wpol1[64:]                                        # rows for pose
    bpol1 = rp["fc_pol1_b"].reshape(1, 48)

    # fc_pol2 padded to a lane-dense 128-wide output slab (cols 4:128 zero)
    wpol2 = jnp.pad(rp["fc_pol2_w"].T, ((0, 0), (0, 124)))     # (48, 128)
    bpol2 = jnp.pad(rp["fc_pol2_b"], (0, 124)).reshape(1, 128)

    # Large streamed conv weights in bf16 (accumulation stays f32 in-kernel).
    return {"w1": w1.astype(BF16), "b1": b1,
            "w2": w2.astype(BF16), "b2": b2,
            "w3": w3.astype(BF16), "b3": b3,
            "wfc": wfc, "bfc": bfc, "wpose": wpose, "bpose": bpose,
            "wpol1a": wpol1a, "wpol1b": wpol1b, "bpol1": bpol1,
            "wpol2": wpol2, "bpol2": bpol2}


# ----------------------------------------------------------------------------
# Forward pass (single pallas_call).
# ----------------------------------------------------------------------------
def dqn_forward(prepared, frame, frame2, robot_pose):
    # The PyTorch forward feeds `frame` (not frame2) into con4..con6; frame2 is
    # accepted only for signature parity.
    del frame2
    B = frame.shape[0]
    tile_b = _pick_tile_b(B)
    B_pad = _round_up(B, tile_b)

    x = frame[:, 0, :, :].astype(BF16)            # (B, 40, 40) bf16 stream
    pose = robot_pose.astype(F32)
    if B_pad != B:                                # only for batches with no clean divisor
        x = jnp.pad(x, ((0, B_pad - B), (0, 0), (0, 0)))
        pose = jnp.pad(pose, ((0, B_pad - B), (0, 0)))

    cols1 = _im2col_conv1_rowmajor(x)             # (9, B_pad, 576) bf16
    out = dqn_fused(cols1, pose, prepared, tile_b)
    return out[:B, :4]


# ----------------------------------------------------------------------------
# Pure-JAX f32 reference (no Pallas) for correctness checking.
# ----------------------------------------------------------------------------
def ref_forward(rp, frame, frame2, robot_pose):
    del frame2  # unused by the PyTorch forward

    def conv(x, w, b, s):
        y = jax.lax.conv_general_dilated(
            x, w, (s, s), "VALID", dimension_numbers=("NCHW", "OIHW", "NCHW"))
        return jax.nn.relu(y + b.reshape(1, -1, 1, 1))

    out = conv(frame, rp["con1_w"], rp["con1_b"], 4)
    out = conv(out, rp["con2_w"], rp["con2_b"], 2)
    out = conv(out, rp["con3_w"], rp["con3_b"], 1)
    out = out.reshape(out.shape[0], -1)
    out = jax.nn.relu(out @ rp["fc1_w"].T + rp["fc1_b"])
    out2 = conv(frame, rp["con4_w"], rp["con4_b"], 4)
    out2 = conv(out2, rp["con5_w"], rp["con5_b"], 2)
    out2 = conv(out2, rp["con6_w"], rp["con6_b"], 1)
    out2 = out2.reshape(out2.shape[0], -1)
    out2 = jax.nn.relu(out2 @ rp["fc2_w"].T + rp["fc2_b"])
    op = jax.nn.relu(robot_pose @ rp["fc_pose_w"].T + rp["fc_pose_b"])
    cat = jnp.concatenate([out, out2, op], axis=1)
    pol1 = cat @ rp["fc_pol1_w"].T + rp["fc_pol1_b"]             # no ReLU (matches PyTorch)
    return pol1 @ rp["fc_pol2_w"].T + rp["fc_pol2_b"]


if __name__ == "__main__":
    key = jax.random.PRNGKey(0)
    k_frame, k_frame2, k_pose, k_params = jax.random.split(key, 4)

    B = 2
    frame = jax.random.normal(k_frame, (B, 1, 40, 40), dtype=F32)
    frame2 = jax.random.normal(k_frame2, (B, 1, 40, 40), dtype=F32)
    robot_pose = jax.random.normal(k_pose, (B, 2), dtype=F32)

    raw = init_raw_params(k_params)
    prepared = prepare_params(raw)

    q = jax.block_until_ready(jax.jit(dqn_forward)(prepared, frame, frame2, robot_pose))
    q_ref = jax.block_until_ready(ref_forward(raw, frame, frame2, robot_pose))

    assert q.shape == (B, 4), q.shape
    # bf16-streamed activations/conv-weights with f32 accumulation vs f32 reference.
    assert jnp.allclose(q, q_ref, atol=2e-2, rtol=2e-2), (q, q_ref)

    print("KERNEL_OK")
</pallas_src>

<mosaic_0001>
module attributes {stable_mosaic.version = 11 : i64} {
  func.func @_dqn_kernel(%arg0: i32, %arg1: memref<9x8x576xbf16, #tpu.memory_space<vmem>>, %arg2: memref<8x2xf32, #tpu.memory_space<vmem>>, %arg3: memref<576x288xbf16, #tpu.memory_space<vmem>>, %arg4: memref<1x288xf32, #tpu.memory_space<vmem>>, %arg5: memref<5x288x192xbf16, #tpu.memory_space<vmem>>, %arg6: memref<1x192xf32, #tpu.memory_space<vmem>>, %arg7: memref<3x192x128xbf16, #tpu.memory_space<vmem>>, %arg8: memref<1x128xf32, #tpu.memory_space<vmem>>, %arg9: memref<128x64xf32, #tpu.memory_space<vmem>>, %arg10: memref<1x64xf32, #tpu.memory_space<vmem>>, %arg11: memref<2x32xf32, #tpu.memory_space<vmem>>, %arg12: memref<1x32xf32, #tpu.memory_space<vmem>>, %arg13: memref<64x48xf32, #tpu.memory_space<vmem>>, %arg14: memref<32x48xf32, #tpu.memory_space<vmem>>, %arg15: memref<1x48xf32, #tpu.memory_space<vmem>>, %arg16: memref<48x128xf32, #tpu.memory_space<vmem>>, %arg17: memref<1x128xf32, #tpu.memory_space<vmem>>, %arg18: memref<8x128xf32, #tpu.memory_space<vmem>>) attributes {dimension_semantics = [#tpu.dimension_semantics<parallel>], iteration_bounds = array<i64: 1>, scalar_prefetch = 0 : i64, scratch_operands = 0 : i64, tpu.core_type = #tpu.core_type<tc>, window_params = [{transform_indices = @transform_0, window_bounds = array<i64: 9, 8, 576>}, {transform_indices = @transform_1, window_bounds = array<i64: 8, 2>}, {pipeline_mode = #tpu.pipeline_mode<synchronous>, transform_indices = @transform_2, window_bounds = array<i64: 576, 288>}, {pipeline_mode = #tpu.pipeline_mode<synchronous>, transform_indices = @transform_3, window_bounds = array<i64: 1, 288>}, {pipeline_mode = #tpu.pipeline_mode<synchronous>, transform_indices = @transform_4, window_bounds = array<i64: 5, 288, 192>}, {pipeline_mode = #tpu.pipeline_mode<synchronous>, transform_indices = @transform_5, window_bounds = array<i64: 1, 192>}, {pipeline_mode = #tpu.pipeline_mode<synchronous>, transform_indices = @transform_6, window_bounds = array<i64: 3, 192, 128>}, {pipeline_mode = #tpu.pipeline_mode<synchronous>, transform_indices = @transform_7, window_bounds = array<i64: 1, 128>}, {pipeline_mode = #tpu.pipeline_mode<synchronous>, transform_indices = @transform_8, window_bounds = array<i64: 128, 64>}, {pipeline_mode = #tpu.pipeline_mode<synchronous>, transform_indices = @transform_9, window_bounds = array<i64: 1, 64>}, {pipeline_mode = #tpu.pipeline_mode<synchronous>, transform_indices = @transform_10, window_bounds = array<i64: 2, 32>}, {pipeline_mode = #tpu.pipeline_mode<synchronous>, transform_indices = @transform_11, window_bounds = array<i64: 1, 32>}, {pipeline_mode = #tpu.pipeline_mode<synchronous>, transform_indices = @transform_12, window_bounds = array<i64: 64, 48>}, {pipeline_mode = #tpu.pipeline_mode<synchronous>, transform_indices = @transform_13, window_bounds = array<i64: 32, 48>}, {pipeline_mode = #tpu.pipeline_mode<synchronous>, transform_indices = @transform_14, window_bounds = array<i64: 1, 48>}, {pipeline_mode = #tpu.pipeline_mode<synchronous>, transform_indices = @transform_15, window_bounds = array<i64: 48, 128>}, {pipeline_mode = #tpu.pipeline_mode<synchronous>, transform_indices = @transform_16, window_bounds = array<i64: 1, 128>}, {transform_indices = @transform_17, window_bounds = array<i64: 8, 128>}]} {
    %c0 = arith.constant 0 : index
    %c0_0 = arith.constant 0 : index
    %0 = vector.load %arg3[%c0, %c0_0] : memref<576x288xbf16, #tpu.memory_space<vmem>>, vector<576x288xbf16>
    %c0_1 = arith.constant 0 : index
    %c0_2 = arith.constant 0 : index
    %1 = vector.load %arg4[%c0_1, %c0_2] : memref<1x288xf32, #tpu.memory_space<vmem>>, vector<1x288xf32>
    %c0_3 = arith.constant 0 : index
    %c0_4 = arith.constant 0 : index
    %c0_5 = arith.constant 0 : index
    %2 = vector.load %arg5[%c0_3, %c0_4, %c0_5] : memref<5x288x192xbf16, #tpu.memory_space<vmem>>, vector<5x288x192xbf16>
    %c0_6 = arith.constant 0 : index
    %c0_7 = arith.constant 0 : index
    %3 = vector.load %arg6[%c0_6, %c0_7] : memref<1x192xf32, #tpu.memory_space<vmem>>, vector<1x192xf32>
    %c0_8 = arith.constant 0 : index
    %c0_9 = arith.constant 0 : index
    %c0_10 = arith.constant 0 : index
    %4 = vector.load %arg7[%c0_8, %c0_9, %c0_10] : memref<3x192x128xbf16, #tpu.memory_space<vmem>>, vector<3x192x128xbf16>
    %c0_11 = arith.constant 0 : index
    %c0_12 = arith.constant 0 : index
    %c0_13 = arith.constant 0 : index
    %5 = vector.load %arg1[%c0_11, %c0_12, %c0_13] : memref<9x8x576xbf16, #tpu.memory_space<vmem>>, vector<1x8x576xbf16>
    %6 = vector.shape_cast %5 : vector<1x8x576xbf16> to vector<8x576xbf16>
    %cst = arith.constant dense<0.000000e+00> : vector<8x288xf32>
    %7 = tpu.matmul %6, %0, %cst {dimension_numbers = #tpu.dot_dimension_numbers<[1], [0], [0], [1], [0, 0, 1, 1], [], []>} : vector<8x576xbf16>, vector<576x288xbf16>, vector<8x288xf32> -> vector<8x288xf32>
    %8 = vector.broadcast %1 : vector<1x288xf32> to vector<8x288xf32>
    %9 = arith.addf %7, %8 : vector<8x288xf32>
    %cst_14 = arith.constant 0.000000e+00 : f32
    %10 = vector.broadcast %cst_14 : f32 to vector<8x288xf32>
    %11 = arith.maximumf %9, %10 : vector<8x288xf32>
    %12 = arith.truncf %11 : vector<8x288xf32> to vector<8x288xbf16>
    %c1 = arith.constant 1 : index
    %c0_15 = arith.constant 0 : index
    %c0_16 = arith.constant 0 : index
    %13 = vector.load %arg1[%c1, %c0_15, %c0_16] : memref<9x8x576xbf16, #tpu.memory_space<vmem>>, vector<1x8x576xbf16>
    %14 = vector.shape_cast %13 : vector<1x8x576xbf16> to vector<8x576xbf16>
    %cst_17 = arith.constant dense<0.000000e+00> : vector<8x288xf32>
    %15 = tpu.matmul %14, %0, %cst_17 {dimension_numbers = #tpu.dot_dimension_numbers<[1], [0], [0], [1], [0, 0, 1, 1], [], []>} : vector<8x576xbf16>, vector<576x288xbf16>, vector<8x288xf32> -> vector<8x288xf32>
    %16 = vector.broadcast %1 : vector<1x288xf32> to vector<8x288xf32>
    %17 = arith.addf %15, %16 : vector<8x288xf32>
    %cst_18 = arith.constant 0.000000e+00 : f32
    %18 = vector.broadcast %cst_18 : f32 to vector<8x288xf32>
    %19 = arith.maximumf %17, %18 : vector<8x288xf32>
    %20 = arith.truncf %19 : vector<8x288xf32> to vector<8x288xbf16>
    %c2 = arith.constant 2 : index
    %c0_19 = arith.constant 0 : index
    %c0_20 = arith.constant 0 : index
    %21 = vector.load %arg1[%c2, %c0_19, %c0_20] : memref<9x8x576xbf16, #tpu.memory_space<vmem>>, vector<1x8x576xbf16>
    %22 = vector.shape_cast %21 : vector<1x8x576xbf16> to vector<8x576xbf16>
    %cst_21 = arith.constant dense<0.000000e+00> : vector<8x288xf32>
    %23 = tpu.matmul %22, %0, %cst_21 {dimension_numbers = #tpu.dot_dimension_numbers<[1], [0], [0], [1], [0, 0, 1, 1], [], []>} : vector<8x576xbf16>, vector<576x288xbf16>, vector<8x288xf32> -> vector<8x288xf32>
    %24 = vector.broadcast %1 : vector<1x288xf32> to vector<8x288xf32>
    %25 = arith.addf %23, %24 : vector<8x288xf32>
    %cst_22 = arith.constant 0.000000e+00 : f32
    %26 = vector.broadcast %cst_22 : f32 to vector<8x288xf32>
    %27 = arith.maximumf %25, %26 : vector<8x288xf32>
    %28 = arith.truncf %27 : vector<8x288xf32> to vector<8x288xbf16>
    %c3 = arith.constant 3 : index
    %c0_23 = arith.constant 0 : index
    %c0_24 = arith.constant 0 : index
    %29 = vector.load %arg1[%c3, %c0_23, %c0_24] : memref<9x8x576xbf16, #tpu.memory_space<vmem>>, vector<1x8x576xbf16>
    %30 = vector.shape_cast %29 : vector<1x8x576xbf16> to vector<8x576xbf16>
    %cst_25 = arith.constant dense<0.000000e+00> : vector<8x288xf32>
    %31 = tpu.matmul %30, %0, %cst_25 {dimension_numbers = #tpu.dot_dimension_numbers<[1], [0], [0], [1], [0, 0, 1, 1], [], []>} : vector<8x576xbf16>, vector<576x288xbf16>, vector<8x288xf32> -> vector<8x288xf32>
    %32 = vector.broadcast %1 : vector<1x288xf32> to vector<8x288xf32>
    %33 = arith.addf %31, %32 : vector<8x288xf32>
    %cst_26 = arith.constant 0.000000e+00 : f32
    %34 = vector.broadcast %cst_26 : f32 to vector<8x288xf32>
    %35 = arith.maximumf %33, %34 : vector<8x288xf32>
    %36 = arith.truncf %35 : vector<8x288xf32> to vector<8x288xbf16>
    %c4 = arith.constant 4 : index
    %c0_27 = arith.constant 0 : index
    %c0_28 = arith.constant 0 : index
    %37 = vector.load %arg1[%c4, %c0_27, %c0_28] : memref<9x8x576xbf16, #tpu.memory_space<vmem>>, vector<1x8x576xbf16>
    %38 = vector.shape_cast %37 : vector<1x8x576xbf16> to vector<8x576xbf16>
    %cst_29 = arith.constant dense<0.000000e+00> : vector<8x288xf32>
    %39 = tpu.matmul %38, %0, %cst_29 {dimension_numbers = #tpu.dot_dimension_numbers<[1], [0], [0], [1], [0, 0, 1, 1], [], []>} : vector<8x576xbf16>, vector<576x288xbf16>, vector<8x288xf32> -> vector<8x288xf32>
    %40 = vector.broadcast %1 : vector<1x288xf32> to vector<8x288xf32>
    %41 = arith.addf %39, %40 : vector<8x288xf32>
    %cst_30 = arith.constant 0.000000e+00 : f32
    %42 = vector.broadcast %cst_30 : f32 to vector<8x288xf32>
    %43 = arith.maximumf %41, %42 : vector<8x288xf32>
    %44 = arith.truncf %43 : vector<8x288xf32> to vector<8x288xbf16>
    %c5 = arith.constant 5 : index
    %c0_31 = arith.constant 0 : index
    %c0_32 = arith.constant 0 : index
    %45 = vector.load %arg1[%c5, %c0_31, %c0_32] : memref<9x8x576xbf16, #tpu.memory_space<vmem>>, vector<1x8x576xbf16>
    %46 = vector.shape_cast %45 : vector<1x8x576xbf16> to vector<8x576xbf16>
    %cst_33 = arith.constant dense<0.000000e+00> : vector<8x288xf32>
    %47 = tpu.matmul %46, %0, %cst_33 {dimension_numbers = #tpu.dot_dimension_numbers<[1], [0], [0], [1], [0, 0, 1, 1], [], []>} : vector<8x576xbf16>, vector<576x288xbf16>, vector<8x288xf32> -> vector<8x288xf32>
    %48 = vector.broadcast %1 : vector<1x288xf32> to vector<8x288xf32>
    %49 = arith.addf %47, %48 : vector<8x288xf32>
    %cst_34 = arith.constant 0.000000e+00 : f32
    %50 = vector.broadcast %cst_34 : f32 to vector<8x288xf32>
    %51 = arith.maximumf %49, %50 : vector<8x288xf32>
    %52 = arith.truncf %51 : vector<8x288xf32> to vector<8x288xbf16>
    %c6 = arith.constant 6 : index
    %c0_35 = arith.constant 0 : index
    %c0_36 = arith.constant 0 : index
    %53 = vector.load %arg1[%c6, %c0_35, %c0_36] : memref<9x8x576xbf16, #tpu.memory_space<vmem>>, vector<1x8x576xbf16>
    %54 = vector.shape_cast %53 : vector<1x8x576xbf16> to vector<8x576xbf16>
    %cst_37 = arith.constant dense<0.000000e+00> : vector<8x288xf32>
    %55 = tpu.matmul %54, %0, %cst_37 {dimension_numbers = #tpu.dot_dimension_numbers<[1], [0], [0], [1], [0, 0, 1, 1], [], []>} : vector<8x576xbf16>, vector<576x288xbf16>, vector<8x288xf32> -> vector<8x288xf32>
    %56 = vector.broadcast %1 : vector<1x288xf32> to vector<8x288xf32>
    %57 = arith.addf %55, %56 : vector<8x288xf32>
    %cst_38 = arith.constant 0.000000e+00 : f32
    %58 = vector.broadcast %cst_38 : f32 to vector<8x288xf32>
    %59 = arith.maximumf %57, %58 : vector<8x288xf32>
    %60 = arith.truncf %59 : vector<8x288xf32> to vector<8x288xbf16>
    %c7 = arith.constant 7 : index
    %c0_39 = arith.constant 0 : index
    %c0_40 = arith.constant 0 : index
    %61 = vector.load %arg1[%c7, %c0_39, %c0_40] : memref<9x8x576xbf16, #tpu.memory_space<vmem>>, vector<1x8x576xbf16>
    %62 = vector.shape_cast %61 : vector<1x8x576xbf16> to vector<8x576xbf16>
    %cst_41 = arith.constant dense<0.000000e+00> : vector<8x288xf32>
    %63 = tpu.matmul %62, %0, %cst_41 {dimension_numbers = #tpu.dot_dimension_numbers<[1], [0], [0], [1], [0, 0, 1, 1], [], []>} : vector<8x576xbf16>, vector<576x288xbf16>, vector<8x288xf32> -> vector<8x288xf32>
    %64 = vector.broadcast %1 : vector<1x288xf32> to vector<8x288xf32>
    %65 = arith.addf %63, %64 : vector<8x288xf32>
    %cst_42 = arith.constant 0.000000e+00 : f32
    %66 = vector.broadcast %cst_42 : f32 to vector<8x288xf32>
    %67 = arith.maximumf %65, %66 : vector<8x288xf32>
    %68 = arith.truncf %67 : vector<8x288xf32> to vector<8x288xbf16>
    %c8 = arith.constant 8 : index
    %c0_43 = arith.constant 0 : index
    %c0_44 = arith.constant 0 : index
    %69 = vector.load %arg1[%c8, %c0_43, %c0_44] : memref<9x8x576xbf16, #tpu.memory_space<vmem>>, vector<1x8x576xbf16>
    %70 = vector.shape_cast %69 : vector<1x8x576xbf16> to vector<8x576xbf16>
    %cst_45 = arith.constant dense<0.000000e+00> : vector<8x288xf32>
    %71 = tpu.matmul %70, %0, %cst_45 {dimension_numbers = #tpu.dot_dimension_numbers<[1], [0], [0], [1], [0, 0, 1, 1], [], []>} : vector<8x576xbf16>, vector<576x288xbf16>, vector<8x288xf32> -> vector<8x288xf32>
    %72 = vector.broadcast %1 : vector<1x288xf32> to vector<8x288xf32>
    %73 = arith.addf %71, %72 : vector<8x288xf32>
    %cst_46 = arith.constant 0.000000e+00 : f32
    %74 = vector.broadcast %cst_46 : f32 to vector<8x288xf32>
    %75 = arith.maximumf %73, %74 : vector<8x288xf32>
    %76 = arith.truncf %75 : vector<8x288xf32> to vector<8x288xbf16>
    %77 = vector.extract_strided_slice %2 {offsets = [0, 0, 0], sizes = [1, 288, 192], strides = [1, 1, 1]} : vector<5x288x192xbf16> to vector<1x288x192xbf16>
    %78 = vector.shape_cast %77 : vector<1x288x192xbf16> to vector<288x192xbf16>
    %cst_47 = arith.constant dense<0.000000e+00> : vector<8x192xf32>
    %79 = tpu.matmul %12, %78, %cst_47 {dimension_numbers = #tpu.dot_dimension_numbers<[1], [0], [0], [1], [0, 0, 1, 1], [], []>} : vector<8x288xbf16>, vector<288x192xbf16>, vector<8x192xf32> -> vector<8x192xf32>
    %80 = vector.extract_strided_slice %2 {offsets = [1, 0, 0], sizes = [1, 288, 192], strides = [1, 1, 1]} : vector<5x288x192xbf16> to vector<1x288x192xbf16>
    %81 = vector.shape_cast %80 : vector<1x288x192xbf16> to vector<288x192xbf16>
    %cst_48 = arith.constant dense<0.000000e+00> : vector<8x192xf32>
    %82 = tpu.matmul %20, %81, %cst_48 {dimension_numbers = #tpu.dot_dimension_numbers<[1], [0], [0], [1], [0, 0, 1, 1], [], []>} : vector<8x288xbf16>, vector<288x192xbf16>, vector<8x192xf32> -> vector<8x192xf32>
    %83 = arith.addf %79, %82 : vector<8x192xf32>
    %84 = vector.extract_strided_slice %2 {offsets = [2, 0, 0], sizes = [1, 288, 192], strides = [1, 1, 1]} : vector<5x288x192xbf16> to vector<1x288x192xbf16>
    %85 = vector.shape_cast %84 : vector<1x288x192xbf16> to vector<288x192xbf16>
    %cst_49 = arith.constant dense<0.000000e+00> : vector<8x192xf32>
    %86 = tpu.matmul %28, %85, %cst_49 {dimension_numbers = #tpu.dot_dimension_numbers<[1], [0], [0], [1], [0, 0, 1, 1], [], []>} : vector<8x288xbf16>, vector<288x192xbf16>, vector<8x192xf32> -> vector<8x192xf32>
    %87 = arith.addf %83, %86 : vector<8x192xf32>
    %88 = vector.extract_strided_slice %2 {offsets = [3, 0, 0], sizes = [1, 288, 192], strides = [1, 1, 1]} : vector<5x288x192xbf16> to vector<1x288x192xbf16>
    %89 = vector.shape_cast %88 : vector<1x288x192xbf16> to vector<288x192xbf16>
    %cst_50 = arith.constant dense<0.000000e+00> : vector<8x192xf32>
    %90 = tpu.matmul %36, %89, %cst_50 {dimension_numbers = #tpu.dot_dimension_numbers<[1], [0], [0], [1], [0, 0, 1, 1], [], []>} : vector<8x288xbf16>, vector<288x192xbf16>, vector<8x192xf32> -> vector<8x192xf32>
    %91 = arith.addf %87, %90 : vector<8x192xf32>
    %92 = vector.extract_strided_slice %2 {offsets = [4, 0, 0], sizes = [1, 288, 192], strides = [1, 1, 1]} : vector<5x288x192xbf16> to vector<1x288x192xbf16>
    %93 = vector.shape_cast %92 : vector<1x288x192xbf16> to vector<288x192xbf16>
    %cst_51 = arith.constant dense<0.000000e+00> : vector<8x192xf32>
    %94 = tpu.matmul %44, %93, %cst_51 {dimension_numbers = #tpu.dot_dimension_numbers<[1], [0], [0], [1], [0, 0, 1, 1], [], []>} : vector<8x288xbf16>, vector<288x192xbf16>, vector<8x192xf32> -> vector<8x192xf32>
    %95 = arith.addf %91, %94 : vector<8x192xf32>
    %96 = vector.broadcast %3 : vector<1x192xf32> to vector<8x192xf32>
    %97 = arith.addf %95, %96 : vector<8x192xf32>
    %cst_52 = arith.constant 0.000000e+00 : f32
    %98 = vector.broadcast %cst_52 : f32 to vector<8x192xf32>
    %99 = arith.maximumf %97, %98 : vector<8x192xf32>
    %100 = arith.truncf %99 : vector<8x192xf32> to vector<8x192xbf16>
    %101 = vector.extract_strided_slice %4 {offsets = [0, 0, 0], sizes = [1, 192, 128], strides = [1, 1, 1]} : vector<3x192x128xbf16> to vector<1x192x128xbf16>
    %102 = vector.shape_cast %101 : vector<1x192x128xbf16> to vector<192x128xbf16>
    %cst_53 = arith.constant dense<0.000000e+00> : vector<8x128xf32>
    %103 = tpu.matmul %100, %102, %cst_53 {dimension_numbers = #tpu.dot_dimension_numbers<[1], [0], [0], [1], [0, 0, 1, 1], [], []>} : vector<8x192xbf16>, vector<192x128xbf16>, vector<8x128xf32> -> vector<8x128xf32>
    %104 = vector.extract_strided_slice %2 {offsets = [0, 0, 0], sizes = [1, 288, 192], strides = [1, 1, 1]} : vector<5x288x192xbf16> to vector<1x288x192xbf16>
    %105 = vector.shape_cast %104 : vector<1x288x192xbf16> to vector<288x192xbf16>
    %cst_54 = arith.constant dense<0.000000e+00> : vector<8x192xf32>
    %106 = tpu.matmul %28, %105, %cst_54 {dimension_numbers = #tpu.dot_dimension_numbers<[1], [0], [0], [1], [0, 0, 1, 1], [], []>} : vector<8x288xbf16>, vector<288x192xbf16>, vector<8x192xf32> -> vector<8x192xf32>
    %107 = vector.extract_strided_slice %2 {offsets = [1, 0, 0], sizes = [1, 288, 192], strides = [1, 1, 1]} : vector<5x288x192xbf16> to vector<1x288x192xbf16>
    %108 = vector.shape_cast %107 : vector<1x288x192xbf16> to vector<288x192xbf16>
    %cst_55 = arith.constant dense<0.000000e+00> : vector<8x192xf32>
    %109 = tpu.matmul %36, %108, %cst_55 {dimension_numbers = #tpu.dot_dimension_numbers<[1], [0], [0], [1], [0, 0, 1, 1], [], []>} : vector<8x288xbf16>, vector<288x192xbf16>, vector<8x192xf32> -> vector<8x192xf32>
    %110 = arith.addf %106, %109 : vector<8x192xf32>
    %111 = vector.extract_strided_slice %2 {offsets = [2, 0, 0], sizes = [1, 288, 192], strides = [1, 1, 1]} : vector<5x288x192xbf16> to vector<1x288x192xbf16>
    %112 = vector.shape_cast %111 : vector<1x288x192xbf16> to vector<288x192xbf16>
    %cst_56 = arith.constant dense<0.000000e+00> : vector<8x192xf32>
    %113 = tpu.matmul %44, %112, %cst_56 {dimension_numbers = #tpu.dot_dimension_numbers<[1], [0], [0], [1], [0, 0, 1, 1], [], []>} : vector<8x288xbf16>, vector<288x192xbf16>, vector<8x192xf32> -> vector<8x192xf32>
    %114 = arith.addf %110, %113 : vector<8x192xf32>
    %115 = vector.extract_strided_slice %2 {offsets = [3, 0, 0], sizes = [1, 288, 192], strides = [1, 1, 1]} : vector<5x288x192xbf16> to vector<1x288x192xbf16>
    %116 = vector.shape_cast %115 : vector<1x288x192xbf16> to vector<288x192xbf16>
    %cst_57 = arith.constant dense<0.000000e+00> : vector<8x192xf32>
    %117 = tpu.matmul %52, %116, %cst_57 {dimension_numbers = #tpu.dot_dimension_numbers<[1], [0], [0], [1], [0, 0, 1, 1], [], []>} : vector<8x288xbf16>, vector<288x192xbf16>, vector<8x192xf32> -> vector<8x192xf32>
    %118 = arith.addf %114, %117 : vector<8x192xf32>
    %119 = vector.extract_strided_slice %2 {offsets = [4, 0, 0], sizes = [1, 288, 192], strides = [1, 1, 1]} : vector<5x288x192xbf16> to vector<1x288x192xbf16>
    %120 = vector.shape_cast %119 : vector<1x288x192xbf16> to vector<288x192xbf16>
    %cst_58 = arith.constant dense<0.000000e+00> : vector<8x192xf32>
    %121 = tpu.matmul %60, %120, %cst_58 {dimension_numbers = #tpu.dot_dimension_numbers<[1], [0], [0], [1], [0, 0, 1, 1], [], []>} : vector<8x288xbf16>, vector<288x192xbf16>, vector<8x192xf32> -> vector<8x192xf32>
    %122 = arith.addf %118, %121 : vector<8x192xf32>
    %123 = vector.broadcast %3 : vector<1x192xf32> to vector<8x192xf32>
    %124 = arith.addf %122, %123 : vector<8x192xf32>
    %cst_59 = arith.constant 0.000000e+00 : f32
    %125 = vector.broadcast %cst_59 : f32 to vector<8x192xf32>
    %126 = arith.maximumf %124, %125 : vector<8x192xf32>
    %127 = arith.truncf %126 : vector<8x192xf32> to vector<8x192xbf16>
    %128 = vector.extract_strided_slice %4 {offsets = [1, 0, 0], sizes = [1, 192, 128], strides = [1, 1, 1]} : vector<3x192x128xbf16> to vector<1x192x128xbf16>
    %129 = vector.shape_cast %128 : vector<1x192x128xbf16> to vector<192x128xbf16>
    %cst_60 = arith.constant dense<0.000000e+00> : vector<8x128xf32>
    %130 = tpu.matmul %127, %129, %cst_60 {dimension_numbers = #tpu.dot_dimension_numbers<[1], [0], [0], [1], [0, 0, 1, 1], [], []>} : vector<8x192xbf16>, vector<192x128xbf16>, vector<8x128xf32> -> vector<8x128xf32>
    %131 = arith.addf %103, %130 : vector<8x128xf32>
    %132 = vector.extract_strided_slice %2 {offsets = [0, 0, 0], sizes = [1, 288, 192], strides = [1, 1, 1]} : vector<5x288x192xbf16> to vector<1x288x192xbf16>
    %133 = vector.shape_cast %132 : vector<1x288x192xbf16> to vector<288x192xbf16>
    %cst_61 = arith.constant dense<0.000000e+00> : vector<8x192xf32>
    %134 = tpu.matmul %44, %133, %cst_61 {dimension_numbers = #tpu.dot_dimension_numbers<[1], [0], [0], [1], [0, 0, 1, 1], [], []>} : vector<8x288xbf16>, vector<288x192xbf16>, vector<8x192xf32> -> vector<8x192xf32>
    %135 = vector.extract_strided_slice %2 {offsets = [1, 0, 0], sizes = [1, 288, 192], strides = [1, 1, 1]} : vector<5x288x192xbf16> to vector<1x288x192xbf16>
    %136 = vector.shape_cast %135 : vector<1x288x192xbf16> to vector<288x192xbf16>
    %cst_62 = arith.constant dense<0.000000e+00> : vector<8x192xf32>
    %137 = tpu.matmul %52, %136, %cst_62 {dimension_numbers = #tpu.dot_dimension_numbers<[1], [0], [0], [1], [0, 0, 1, 1], [], []>} : vector<8x288xbf16>, vector<288x192xbf16>, vector<8x192xf32> -> vector<8x192xf32>
    %138 = arith.addf %134, %137 : vector<8x192xf32>
    %139 = vector.extract_strided_slice %2 {offsets = [2, 0, 0], sizes = [1, 288, 192], strides = [1, 1, 1]} : vector<5x288x192xbf16> to vector<1x288x192xbf16>
    %140 = vector.shape_cast %139 : vector<1x288x192xbf16> to vector<288x192xbf16>
    %cst_63 = arith.constant dense<0.000000e+00> : vector<8x192xf32>
    %141 = tpu.matmul %60, %140, %cst_63 {dimension_numbers = #tpu.dot_dimension_numbers<[1], [0], [0], [1], [0, 0, 1, 1], [], []>} : vector<8x288xbf16>, vector<288x192xbf16>, vector<8x192xf32> -> vector<8x192xf32>
    %142 = arith.addf %138, %141 : vector<8x192xf32>
    %143 = vector.extract_strided_slice %2 {offsets = [3, 0, 0], sizes = [1, 288, 192], strides = [1, 1, 1]} : vector<5x288x192xbf16> to vector<1x288x192xbf16>
    %144 = vector.shape_cast %143 : vector<1x288x192xbf16> to vector<288x192xbf16>
    %cst_64 = arith.constant dense<0.000000e+00> : vector<8x192xf32>
    %145 = tpu.matmul %68, %144, %cst_64 {dimension_numbers = #tpu.dot_dimension_numbers<[1], [0], [0], [1], [0, 0, 1, 1], [], []>} : vector<8x288xbf16>, vector<288x192xbf16>, vector<8x192xf32> -> vector<8x192xf32>
    %146 = arith.addf %142, %145 : vector<8x192xf32>
    %147 = vector.extract_strided_slice %2 {offsets = [4, 0, 0], sizes = [1, 288, 192], strides = [1, 1, 1]} : vector<5x288x192xbf16> to vector<1x288x192xbf16>
    %148 = vector.shape_cast %147 : vector<1x288x192xbf16> to vector<288x192xbf16>
    %cst_65 = arith.constant dense<0.000000e+00> : vector<8x192xf32>
    %149 = tpu.matmul %76, %148, %cst_65 {dimension_numbers = #tpu.dot_dimension_numbers<[1], [0], [0], [1], [0, 0, 1, 1], [], []>} : vector<8x288xbf16>, vector<288x192xbf16>, vector<8x192xf32> -> vector<8x192xf32>
    %150 = arith.addf %146, %149 : vector<8x192xf32>
    %151 = vector.broadcast %3 : vector<1x192xf32> to vector<8x192xf32>
    %152 = arith.addf %150, %151 : vector<8x192xf32>
    %cst_66 = arith.constant 0.000000e+00 : f32
    %153 = vector.broadcast %cst_66 : f32 to vector<8x192xf32>
    %154 = arith.maximumf %152, %153 : vector<8x192xf32>
    %155 = arith.truncf %154 : vector<8x192xf32> to vector<8x192xbf16>
    %156 = vector.extract_strided_slice %4 {offsets = [2, 0, 0], sizes = [1, 192, 128], strides = [1, 1, 1]} : vector<3x192x128xbf16> to vector<1x192x128xbf16>
    %157 = vector.shape_cast %156 : vector<1x192x128xbf16> to vector<192x128xbf16>
    %cst_67 = arith.constant dense<0.000000e+00> : vector<8x128xf32>
    %158 = tpu.matmul %155, %157, %cst_67 {dimension_numbers = #tpu.dot_dimension_numbers<[1], [0], [0], [1], [0, 0, 1, 1], [], []>} : vector<8x192xbf16>, vector<192x128xbf16>, vector<8x128xf32> -> vector<8x128xf32>
    %159 = arith.addf %131, %158 : vector<8x128xf32>
    %c0_68 = arith.constant 0 : index
    %c0_69 = arith.constant 0 : index
    %160 = vector.load %arg8[%c0_68, %c0_69] : memref<1x128xf32, #tpu.memory_space<vmem>>, vector<1x128xf32>
    %161 = vector.broadcast %160 : vector<1x128xf32> to vector<8x128xf32>
    %162 = arith.addf %159, %161 : vector<8x128xf32>
    %cst_70 = arith.constant 0.000000e+00 : f32
    %163 = vector.broadcast %cst_70 : f32 to vector<8x128xf32>
    %164 = arith.maximumf %162, %163 : vector<8x128xf32>
    %c0_71 = arith.constant 0 : index
    %c0_72 = arith.constant 0 : index
    %165 = vector.load %arg9[%c0_71, %c0_72] : memref<128x64xf32, #tpu.memory_space<vmem>>, vector<128x64xf32>
    %cst_73 = arith.constant dense<0.000000e+00> : vector<8x64xf32>
    %166 = tpu.matmul %164, %165, %cst_73 {dimension_numbers = #tpu.dot_dimension_numbers<[1], [0], [0], [1], [0, 0, 1, 1], [], []>} : vector<8x128xf32>, vector<128x64xf32>, vector<8x64xf32> -> vector<8x64xf32>
    %c0_74 = arith.constant 0 : index
    %c0_75 = arith.constant 0 : index
    %167 = vector.load %arg10[%c0_74, %c0_75] : memref<1x64xf32, #tpu.memory_space<vmem>>, vector<1x64xf32>
    %168 = vector.broadcast %167 : vector<1x64xf32> to vector<8x64xf32>
    %169 = arith.addf %166, %168 : vector<8x64xf32>
    %cst_76 = arith.constant 0.000000e+00 : f32
    %170 = vector.broadcast %cst_76 : f32 to vector<8x64xf32>
    %171 = arith.maximumf %169, %170 : vector<8x64xf32>
    %c0_77 = arith.constant 0 : index
    %c0_78 = arith.constant 0 : index
    %172 = vector.load %arg2[%c0_77, %c0_78] : memref<8x2xf32, #tpu.memory_space<vmem>>, vector<8x2xf32>
    %c0_79 = arith.constant 0 : index
    %c0_80 = arith.constant 0 : index
    %173 = vector.load %arg11[%c0_79, %c0_80] : memref<2x32xf32, #tpu.memory_space<vmem>>, vector<2x32xf32>
    %cst_81 = arith.constant dense<0.000000e+00> : vector<8x32xf32>
    %174 = tpu.matmul %172, %173, %cst_81 {dimension_numbers = #tpu.dot_dimension_numbers<[1], [0], [0], [1], [0, 0, 1, 1], [], []>} : vector<8x2xf32>, vector<2x32xf32>, vector<8x32xf32> -> vector<8x32xf32>
    %c0_82 = arith.constant 0 : index
    %c0_83 = arith.constant 0 : index
    %175 = vector.load %arg12[%c0_82, %c0_83] : memref<1x32xf32, #tpu.memory_space<vmem>>, vector<1x32xf32>
    %176 = vector.broadcast %175 : vector<1x32xf32> to vector<8x32xf32>
    %177 = arith.addf %174, %176 : vector<8x32xf32>
    %cst_84 = arith.constant 0.000000e+00 : f32
    %178 = vector.broadcast %cst_84 : f32 to vector<8x32xf32>
    %179 = arith.maximumf %177, %178 : vector<8x32xf32>
    %c0_85 = arith.constant 0 : index
    %c0_86 = arith.constant 0 : index
    %180 = vector.load %arg13[%c0_85, %c0_86] : memref<64x48xf32, #tpu.memory_space<vmem>>, vector<64x48xf32>
    %cst_87 = arith.constant dense<0.000000e+00> : vector<8x48xf32>
    %181 = tpu.matmul %171, %180, %cst_87 {dimension_numbers = #tpu.dot_dimension_numbers<[1], [0], [0], [1], [0, 0, 1, 1], [], []>} : vector<8x64xf32>, vector<64x48xf32>, vector<8x48xf32> -> vector<8x48xf32>
    %c0_88 = arith.constant 0 : index
    %c0_89 = arith.constant 0 : index
    %182 = vector.load %arg14[%c0_88, %c0_89] : memref<32x48xf32, #tpu.memory_space<vmem>>, vector<32x48xf32>
    %cst_90 = arith.constant dense<0.000000e+00> : vector<8x48xf32>
    %183 = tpu.matmul %179, %182, %cst_90 {dimension_numbers = #tpu.dot_dimension_numbers<[1], [0], [0], [1], [0, 0, 1, 1], [], []>} : vector<8x32xf32>, vector<32x48xf32>, vector<8x48xf32> -> vector<8x48xf32>
    %184 = arith.addf %181, %183 : vector<8x48xf32>
    %c0_91 = arith.constant 0 : index
    %c0_92 = arith.constant 0 : index
    %185 = vector.load %arg15[%c0_91, %c0_92] : memref<1x48xf32, #tpu.memory_space<vmem>>, vector<1x48xf32>
    %186 = vector.broadcast %185 : vector<1x48xf32> to vector<8x48xf32>
    %187 = arith.addf %184, %186 : vector<8x48xf32>
    %c0_93 = arith.constant 0 : index
    %c0_94 = arith.constant 0 : index
    %188 = vector.load %arg16[%c0_93, %c0_94] : memref<48x128xf32, #tpu.memory_space<vmem>>, vector<48x128xf32>
    %cst_95 = arith.constant dense<0.000000e+00> : vector<8x128xf32>
    %189 = tpu.matmul %187, %188, %cst_95 {dimension_numbers = #tpu.dot_dimension_numbers<[1], [0], [0], [1], [0, 0, 1, 1], [], []>} : vector<8x48xf32>, vector<48x128xf32>, vector<8x128xf32> -> vector<8x128xf32>
    %c0_96 = arith.constant 0 : index
    %c0_97 = arith.constant 0 : index
    %190 = vector.load %arg17[%c0_96, %c0_97] : memref<1x128xf32, #tpu.memory_space<vmem>>, vector<1x128xf32>
    %191 = vector.broadcast %190 : vector<1x128xf32> to vector<8x128xf32>
    %192 = arith.addf %189, %191 : vector<8x128xf32>
    %c0_98 = arith.constant 0 : index
    %c0_99 = arith.constant 0 : index
    %193 = vector.load %arg18[%c0_98, %c0_99] : memref<8x128xf32, #tpu.memory_space<vmem>>, vector<8x128xf32>
    tpu.vector_store %arg18[%c0_98, %c0_99], %192 {strides = array<i32>} : memref<8x128xf32, #tpu.memory_space<vmem>>, vector<8x128xf32>,
    return
  }
  func.func @transform_0(%arg0: i32) -> (i32, i32, i32) {
    %c0_i32 = arith.constant 0 : i32
    %c0_i32_0 = arith.constant 0 : i32
    %c0_i32_1 = arith.constant 0 : i32
    return %c0_i32, %arg0, %c0_i32_0 : i32, i32, i32
  }
  func.func @transform_1(%arg0: i32) -> (i32, i32) {
    %c0_i32 = arith.constant 0 : i32
    %c0_i32_0 = arith.constant 0 : i32
    return %arg0, %c0_i32 : i32, i32
  }
  func.func @transform_2(%arg0: i32) -> (i32, i32) {
    %c0_i32 = arith.constant 0 : i32
    %c0_i32_0 = arith.constant 0 : i32
    %c0_i32_1 = arith.constant 0 : i32
    return %c0_i32, %c0_i32_0 : i32, i32
  }
  func.func @transform_3(%arg0: i32) -> (i32, i32) {
    %c0_i32 = arith.constant 0 : i32
    %c0_i32_0 = arith.constant 0 : i32
    %c0_i32_1 = arith.constant 0 : i32
    return %c0_i32, %c0_i32_0 : i32, i32
  }
  func.func @transform_4(%arg0: i32) -> (i32, i32, i32) {
    %c0_i32 = arith.constant 0 : i32
    %c0_i32_0 = arith.constant 0 : i32
    %c0_i32_1 = arith.constant 0 : i32
    %c0_i32_2 = arith.constant 0 : i32
    return %c0_i32, %c0_i32_0, %c0_i32_1 : i32, i32, i32
  }
  func.func @transform_5(%arg0: i32) -> (i32, i32) {
    %c0_i32 = arith.constant 0 : i32
    %c0_i32_0 = arith.constant 0 : i32
    %c0_i32_1 = arith.constant 0 : i32
    return %c0_i32, %c0_i32_0 : i32, i32
  }
  func.func @transform_6(%arg0: i32) -> (i32, i32, i32) {
    %c0_i32 = arith.constant 0 : i32
    %c0_i32_0 = arith.constant 0 : i32
    %c0_i32_1 = arith.constant 0 : i32
    %c0_i32_2 = arith.constant 0 : i32
    return %c0_i32, %c0_i32_0, %c0_i32_1 : i32, i32, i32
  }
  func.func @transform_7(%arg0: i32) -> (i32, i32) {
    %c0_i32 = arith.constant 0 : i32
    %c0_i32_0 = arith.constant 0 : i32
    %c0_i32_1 = arith.constant 0 : i32
    return %c0_i32, %c0_i32_0 : i32, i32
  }
  func.func @transform_8(%arg0: i32) -> (i32, i32) {
    %c0_i32 = arith.constant 0 : i32
    %c0_i32_0 = arith.constant 0 : i32
    %c0_i32_1 = arith.constant 0 : i32
    return %c0_i32, %c0_i32_0 : i32, i32
  }
  func.func @transform_9(%arg0: i32) -> (i32, i32) {
    %c0_i32 = arith.constant 0 : i32
    %c0_i32_0 = arith.constant 0 : i32
    %c0_i32_1 = arith.constant 0 : i32
    return %c0_i32, %c0_i32_0 : i32, i32
  }
  func.func @transform_10(%arg0: i32) -> (i32, i32) {
    %c0_i32 = arith.constant 0 : i32
    %c0_i32_0 = arith.constant 0 : i32
    %c0_i32_1 = arith.constant 0 : i32
    return %c0_i32, %c0_i32_0 : i32, i32
  }
  func.func @transform_11(%arg0: i32) -> (i32, i32) {
    %c0_i32 = arith.constant 0 : i32
    %c0_i32_0 = arith.constant 0 : i32
    %c0_i32_1 = arith.constant 0 : i32
    return %c0_i32, %c0_i32_0 : i32, i32
  }
  func.func @transform_12(%arg0: i32) -> (i32, i32) {
    %c0_i32 = arith.constant 0 : i32
    %c0_i32_0 = arith.constant 0 : i32
    %c0_i32_1 = arith.constant 0 : i32
    return %c0_i32, %c0_i32_0 : i32, i32
  }
  func.func @transform_13(%arg0: i32) -> (i32, i32) {
    %c0_i32 = arith.constant 0 : i32
    %c0_i32_0 = arith.constant 0 : i32
    %c0_i32_1 = arith.constant 0 : i32
    return %c0_i32, %c0_i32_0 : i32, i32
  }
  func.func @transform_14(%arg0: i32) -> (i32, i32) {
    %c0_i32 = arith.constant 0 : i32
    %c0_i32_0 = arith.constant 0 : i32
    %c0_i32_1 = arith.constant 0 : i32
    return %c0_i32, %c0_i32_0 : i32, i32
  }
  func.func @transform_15(%arg0: i32) -> (i32, i32) {
    %c0_i32 = arith.constant 0 : i32
    %c0_i32_0 = arith.constant 0 : i32
    %c0_i32_1 = arith.constant 0 : i32
    return %c0_i32, %c0_i32_0 : i32, i32
  }
  func.func @transform_16(%arg0: i32) -> (i32, i32) {
    %c0_i32 = arith.constant 0 : i32
    %c0_i32_0 = arith.constant 0 : i32
    %c0_i32_1 = arith.constant 0 : i32
    return %c0_i32, %c0_i32_0 : i32, i32
  }
  func.func @transform_17(%arg0: i32) -> (i32, i32) {
    %c0_i32 = arith.constant 0 : i32
    %c0_i32_0 = arith.constant 0 : i32
    return %arg0, %c0_i32 : i32, i32
  }
}

</mosaic_0001>

<llo_original>
// kernel: dqn_forward.1
$region0: #{dqn_forward.1}
  #allocation0 [shape = 'u32[]', space=smem, size = 0x4, offset = 0x4, fixed_abs, tag = 'smem constant byte address 0x4 - core index']
  #allocation1 [shape = 'u32[144,128]{1,0:T(1,128)}', space=vmem, size = 0x12000, scoped, tag = 'internal scratch']
  %s0 = inlined_call_operand.vmem [shape: bf16[9,8,576], index: 0, kind: input, shape index: {}]
  %s1 = inlined_call_operand.vmem [shape: f32[8,2], index: 1, kind: input, shape index: {}]
  %s2 = inlined_call_operand.vmem [shape: bf16[576,288], index: 2, kind: input, shape index: {}]
  %s3 = inlined_call_operand.vmem [shape: f32[1,288], index: 3, kind: input, shape index: {}]
  %s4 = inlined_call_operand.vmem [shape: bf16[5,288,192], index: 4, kind: input, shape index: {}]
  %s5 = inlined_call_operand.vmem [shape: f32[1,192], index: 5, kind: input, shape index: {}]
  %s6 = inlined_call_operand.vmem [shape: bf16[3,192,128], index: 6, kind: input, shape index: {}]
  %s7 = inlined_call_operand.vmem [shape: f32[1,128], index: 7, kind: input, shape index: {}]
  %s8 = inlined_call_operand.vmem [shape: f32[128,64], index: 8, kind: input, shape index: {}]
  %s9 = inlined_call_operand.vmem [shape: f32[1,64], index: 9, kind: input, shape index: {}]
  %s10 = inlined_call_operand.vmem [shape: f32[2,32], index: 10, kind: input, shape index: {}]
  %s11 = inlined_call_operand.vmem [shape: f32[1,32], index: 11, kind: input, shape index: {}]
  %s12 = inlined_call_operand.vmem [shape: f32[64,48], index: 12, kind: input, shape index: {}]
  %s13 = inlined_call_operand.vmem [shape: f32[32,48], index: 13, kind: input, shape index: {}]
  %s14 = inlined_call_operand.vmem [shape: f32[1,48], index: 14, kind: input, shape index: {}]
  %s15 = inlined_call_operand.vmem [shape: f32[48,128], index: 15, kind: input, shape index: {}]
  %s16 = inlined_call_operand.vmem [shape: f32[1,128], index: 16, kind: input, shape index: {}]
  %s17 = inlined_call_operand.vmem [shape: f32[8,128], index: 17, kind: output, shape index: {}]
  %s18 = sld [smem:[#allocation0]]
  $region78: #{dqn_forward.1} parent=0
    _
  %s20 = ssub.s32 1, %s18
  %s21 = scalar_select 0, %s20, %s18
  // Predicated region
  $region2: #{dqn_forward.1} parent=0 // pred_check
    _
  $region3: #{dqn_forward.1} parent=0 // pred_check_branch
    %23 = sbr.rel (0) target = $region5
  $region4: #{dqn_forward.1} parent=0 // pred_region
    _
  $region5: #{dqn_forward.1} parent=0 // pred_fallthru
    _
  // Predicated region
  $region6: #{dqn_forward.1} parent=0 // pred_check
    _
  $region7: #{dqn_forward.1} parent=0 // pred_check_branch
    %25 = sbr.rel (0) target = $region9
  $region8: #{dqn_forward.1} parent=0 // pred_region
    _
  $region9: #{dqn_forward.1} parent=0 // pred_fallthru
    _
  // Predicated region
  $region10: #{dqn_forward.1} parent=0 // pred_check
    _
  $region11: #{dqn_forward.1} parent=0 // pred_check_branch
    %27 = sbr.rel (0) target = $region13
  $region12: #{dqn_forward.1} parent=0 // pred_region
    _
  $region13: #{dqn_forward.1} parent=0 // pred_fallthru
    _
  // Predicated region
  $region14: #{dqn_forward.1} parent=0 // pred_check
    _
  $region15: #{dqn_forward.1} parent=0 // pred_check_branch
    %29 = sbr.rel (0) target = $region17
  $region16: #{dqn_forward.1} parent=0 // pred_region
    _
  $region17: #{dqn_forward.1} parent=0 // pred_fallthru
    _
  // Predicated region
  $region18: #{dqn_forward.1} parent=0 // pred_check
    _
  $region19: #{dqn_forward.1} parent=0 // pred_check_branch
    %31 = sbr.rel (0) target = $region21
  $region20: #{dqn_forward.1} parent=0 // pred_region
    _
  $region21: #{dqn_forward.1} parent=0 // pred_fallthru
    _
  // Predicated region
  $region22: #{dqn_forward.1} parent=0 // pred_check
    _
  $region23: #{dqn_forward.1} parent=0 // pred_check_branch
    %33 = sbr.rel (0) target = $region25
  $region24: #{dqn_forward.1} parent=0 // pred_region
    _
  $region25: #{dqn_forward.1} parent=0 // pred_fallthru
    _
  // Predicated region
  $region26: #{dqn_forward.1} parent=0 // pred_check
    _
  $region27: #{dqn_forward.1} parent=0 // pred_check_branch
    %35 = sbr.rel (0) target = $region29
  $region28: #{dqn_forward.1} parent=0 // pred_region
    _
  $region29: #{dqn_forward.1} parent=0 // pred_fallthru
    _
  // Predicated region
  $region30: #{dqn_forward.1} parent=0 // pred_check
    _
  $region31: #{dqn_forward.1} parent=0 // pred_check_branch
    %37 = sbr.rel (0) target = $region33
  $region32: #{dqn_forward.1} parent=0 // pred_region
    _
  $region33: #{dqn_forward.1} parent=0 // pred_fallthru
    _
  // Predicated region
  $region34: #{dqn_forward.1} parent=0 // pred_check
    _
  $region35: #{dqn_forward.1} parent=0 // pred_check_branch
    %39 = sbr.rel (0) target = $region37
  $region36: #{dqn_forward.1} parent=0 // pred_region
    _
  $region37: #{dqn_forward.1} parent=0 // pred_fallthru
    _
  // Predicated region
  $region38: #{dqn_forward.1} parent=0 // pred_check
    _
  $region39: #{dqn_forward.1} parent=0 // pred_check_branch
    %41 = sbr.rel (0) target = $region41
  $region40: #{dqn_forward.1} parent=0 // pred_region
    _
  $region41: #{dqn_forward.1} parent=0 // pred_fallthru
    _
  // Predicated region
  $region42: #{dqn_forward.1} parent=0 // pred_check
    _
  $region43: #{dqn_forward.1} parent=0 // pred_check_branch
    %43 = sbr.rel (0) target = $region45
  $region44: #{dqn_forward.1} parent=0 // pred_region
    _
  $region45: #{dqn_forward.1} parent=0 // pred_fallthru
    _
  // Predicated region
  $region46: #{dqn_forward.1} parent=0 // pred_check
    _
  $region47: #{dqn_forward.1} parent=0 // pred_check_branch
    %45 = sbr.rel (0) target = $region49
  $region48: #{dqn_forward.1} parent=0 // pred_region
    _
  $region49: #{dqn_forward.1} parent=0 // pred_fallthru
    _
  // Predicated region
  $region50: #{dqn_forward.1} parent=0 // pred_check
    _
  $region51: #{dqn_forward.1} parent=0 // pred_check_branch
    %47 = sbr.rel (0) target = $region53
  $region52: #{dqn_forward.1} parent=0 // pred_region
    _
  $region53: #{dqn_forward.1} parent=0 // pred_fallthru
    _
  // Predicated region
  $region54: #{dqn_forward.1} parent=0 // pred_check
    _
  $region55: #{dqn_forward.1} parent=0 // pred_check_branch
    %49 = sbr.rel (0) target = $region57
  $region56: #{dqn_forward.1} parent=0 // pred_region
    _
  $region57: #{dqn_forward.1} parent=0 // pred_fallthru
    _
  // Predicated region
  $region58: #{dqn_forward.1} parent=0 // pred_check
    _
  $region59: #{dqn_forward.1} parent=0 // pred_check_branch
    %51 = sbr.rel (0) target = $region61
  $region60: #{dqn_forward.1} parent=0 // pred_region
    _
  $region61: #{dqn_forward.1} parent=0 // pred_fallthru
    _
  // Predicated region
  $region62: #{dqn_forward.1} parent=0 // pred_check
    _
  $region63: #{dqn_forward.1} parent=0 // pred_check_branch
    %53 = sbr.rel (0) target = $region65
  $region64: #{dqn_forward.1} parent=0 // pred_region
    _
  $region65: #{dqn_forward.1} parent=0 // pred_fallthru
    _
  // Predicated region
  $region66: #{dqn_forward.1} parent=0 // pred_check
    _
  $region67: #{dqn_forward.1} parent=0 // pred_check_branch
    %55 = sbr.rel (0) target = $region69
  $region68: #{dqn_forward.1} parent=0 // pred_region
    _
  $region69: #{dqn_forward.1} parent=0 // pred_fallthru
    _
  %v57 = vld [vmem:[%s2] sm:$0xff]
  %v58 = vld [vmem:[%s2 + $0x8] sm:$0xf]
  %v59 = vld [vmem:[%s2 + $0xc] sm:$0xff]
  %v60 = vld [vmem:[%s2 + $0x14] sm:$0xf]
  %v61 = vld [vmem:[%s2 + $0x18] sm:$0xff]
  %v62 = vld [vmem:[%s2 + $0x20] sm:$0xf]
  %v63 = vld [vmem:[%s2 + $0x24] sm:$0xff]
  %v64 = vld [vmem:[%s2 + $0x2c] sm:$0xf]
  %v65 = vld [vmem:[%s2 + $0x30] sm:$0xff]
  %v66 = vld [vmem:[%s2 + $0x38] sm:$0xf]
  %v67 = vld [vmem:[%s2 + $0x3c] sm:$0xff]
  %v68 = vld [vmem:[%s2 + $0x44] sm:$0xf]
  %v69 = vld [vmem:[%s2 + $0x48] sm:$0xff]
  %v70 = vld [vmem:[%s2 + $0x50] sm:$0xf]
  %v71 = vld [vmem:[%s2 + $0x54] sm:$0xff]
  %v72 = vld [vmem:[%s2 + $0x5c] sm:$0xf]
  %v73 = vld [vmem:[%s2 + $0x60] sm:$0xff]
  %v74 = vld [vmem:[%s2 + $0x68] sm:$0xf]
  %v75 = vld [vmem:[%s2 + $0x6c] sm:$0xff]
  %v76 = vld [vmem:[%s2 + $0x74] sm:$0xf]
  %v77 = vld [vmem:[%s2 + $0x78] sm:$0xff]
  %v78 = vld [vmem:[%s2 + $0x80] sm:$0xf]
  %v79 = vld [vmem:[%s2 + $0x84] sm:$0xff]
  %v80 = vld [vmem:[%s2 + $0x8c] sm:$0xf]
  %v81 = vld [vmem:[%s2 + $0x90] sm:$0xff]
  %v82 = vld [vmem:[%s2 + $0x98] sm:$0xf]
  %v83 = vld [vmem:[%s2 + $0x9c] sm:$0xff]
  %v84 = vld [vmem:[%s2 + $0xa4] sm:$0xf]
  %v85 = vld [vmem:[%s2 + $0xa8] sm:$0xff]
  %v86 = vld [vmem:[%s2 + $0xb0] sm:$0xf]
  %v87 = vld [vmem:[%s2 + $0xb4] sm:$0xff]
  %v88 = vld [vmem:[%s2 + $0xbc] sm:$0xf]
  %v89 = vld [vmem:[%s2 + $0xc0] sm:$0xff]
  %v90 = vld [vmem:[%s2 + $0xc8] sm:$0xf]
  %v91 = vld [vmem:[%s2 + $0xcc] sm:$0xff]
  %v92 = vld [vmem:[%s2 + $0xd4] sm:$0xf]
  %v93 = vld [vmem:[%s2 + $0xd8] sm:$0xff]
  %v94 = vld [vmem:[%s2 + $0xe0] sm:$0xf]
  %v95 = vld [vmem:[%s2 + $0xe4] sm:$0xff]
  %v96 = vld [vmem:[%s2 + $0xec] sm:$0xf]
  %v97 = vld [vmem:[%s2 + $0xf0] sm:$0xff]
  %v98 = vld [vmem:[%s2 + $0xf8] sm:$0xf]
  %v99 = vld [vmem:[%s2 + $0xfc] sm:$0xff]
  %v100 = vld [vmem:[%s2 + $0x104] sm:$0xf]
  %v101 = vld [vmem:[%s2 + $0x108] sm:$0xff]
  %v102 = vld [vmem:[%s2 + $0x110] sm:$0xf]
  %v103 = vld [vmem:[%s2 + $0x114] sm:$0xff]
  %v104 = vld [vmem:[%s2 + $0x11c] sm:$0xf]
  %v105 = vld [vmem:[%s2 + $0x120] sm:$0xff]
  %v106 = vld [vmem:[%s2 + $0x128] sm:$0xf]
  %v107 = vld [vmem:[%s2 + $0x12c] sm:$0xff]
  %v108 = vld [vmem:[%s2 + $0x134] sm:$0xf]
  %v109 = vld [vmem:[%s2 + $0x138] sm:$0xff]
  %v110 = vld [vmem:[%s2 + $0x140] sm:$0xf]
  %v111 = vld [vmem:[%s2 + $0x144] sm:$0xff]
  %v112 = vld [vmem:[%s2 + $0x14c] sm:$0xf]
  %v113 = vld [vmem:[%s2 + $0x150] sm:$0xff]
  %v114 = vld [vmem:[%s2 + $0x158] sm:$0xf]
  %v115 = vld [vmem:[%s2 + $0x15c] sm:$0xff]
  %v116 = vld [vmem:[%s2 + $0x164] sm:$0xf]
  %v117 = vld [vmem:[%s2 + $0x168] sm:$0xff]
  %v118 = vld [vmem:[%s2 + $0x170] sm:$0xf]
  %v119 = vld [vmem:[%s2 + $0x174] sm:$0xff]
  %v120 = vld [vmem:[%s2 + $0x17c] sm:$0xf]
  %v121 = vld [vmem:[%s2 + $0x180] sm:$0xff]
  %v122 = vld [vmem:[%s2 + $0x188] sm:$0xf]
  %v123 = vld [vmem:[%s2 + $0x18c] sm:$0xff]
  %v124 = vld [vmem:[%s2 + $0x194] sm:$0xf]
  %v125 = vld [vmem:[%s2 + $0x198] sm:$0xff]
  %v126 = vld [vmem:[%s2 + $0x1a0] sm:$0xf]
  %v127 = vld [vmem:[%s2 + $0x1a4] sm:$0xff]
  %v128 = vld [vmem:[%s2 + $0x1ac] sm:$0xf]
  %v129 = vld [vmem:[%s2 + $0x1b0] sm:$0xff]
  %v130 = vld [vmem:[%s2 + $0x1b8] sm:$0xf]
  %v131 = vld [vmem:[%s2 + $0x1bc] sm:$0xff]
  %v132 = vld [vmem:[%s2 + $0x1c4] sm:$0xf]
  %v133 = vld [vmem:[%s2 + $0x1c8] sm:$0xff]
  %v134 = vld [vmem:[%s2 + $0x1d0] sm:$0xf]
  %v135 = vld [vmem:[%s2 + $0x1d4] sm:$0xff]
  %v136 = vld [vmem:[%s2 + $0x1dc] sm:$0xf]
  %v137 = vld [vmem:[%s2 + $0x1e0] sm:$0xff]
  %v138 = vld [vmem:[%s2 + $0x1e8] sm:$0xf]
  %v139 = vld [vmem:[%s2 + $0x1ec] sm:$0xff]
  %v140 = vld [vmem:[%s2 + $0x1f4] sm:$0xf]
  %v141 = vld [vmem:[%s2 + $0x1f8] sm:$0xff]
  %v142 = vld [vmem:[%s2 + $0x200] sm:$0xf]
  %v143 = vld [vmem:[%s2 + $0x204] sm:$0xff]
  %v144 = vld [vmem:[%s2 + $0x20c] sm:$0xf]
  %v145 = vld [vmem:[%s2 + $0x210] sm:$0xff]
  %v146 = vld [vmem:[%s2 + $0x218] sm:$0xf]
  %v147 = vld [vmem:[%s2 + $0x21c] sm:$0xff]
  %v148 = vld [vmem:[%s2 + $0x224] sm:$0xf]
  %v149 = vld [vmem:[%s2 + $0x228] sm:$0xff]
  %v150 = vld [vmem:[%s2 + $0x230] sm:$0xf]
  %v151 = vld [vmem:[%s2 + $0x234] sm:$0xff]
  %v152 = vld [vmem:[%s2 + $0x23c] sm:$0xf]
  %v153 = vld [vmem:[%s2 + $0x240] sm:$0xff]
  %v154 = vld [vmem:[%s2 + $0x248] sm:$0xf]
  %v155 = vld [vmem:[%s2 + $0x24c] sm:$0xff]
  %v156 = vld [vmem:[%s2 + $0x254] sm:$0xf]
  %v157 = vld [vmem:[%s2 + $0x258] sm:$0xff]
  %v158 = vld [vmem:[%s2 + $0x260] sm:$0xf]
  %v159 = vld [vmem:[%s2 + $0x264] sm:$0xff]
  %v160 = vld [vmem:[%s2 + $0x26c] sm:$0xf]
  %v161 = vld [vmem:[%s2 + $0x270] sm:$0xff]
  %v162 = vld [vmem:[%s2 + $0x278] sm:$0xf]
  %v163 = vld [vmem:[%s2 + $0x27c] sm:$0xff]
  %v164 = vld [vmem:[%s2 + $0x284] sm:$0xf]
  %v165 = vld [vmem:[%s2 + $0x288] sm:$0xff]
  %v166 = vld [vmem:[%s2 + $0x290] sm:$0xf]
  %v167 = vld [vmem:[%s2 + $0x294] sm:$0xff]
  %v168 = vld [vmem:[%s2 + $0x29c] sm:$0xf]
  %v169 = vld [vmem:[%s2 + $0x2a0] sm:$0xff]
  %v170 = vld [vmem:[%s2 + $0x2a8] sm:$0xf]
  %v171 = vld [vmem:[%s2 + $0x2ac] sm:$0xff]
  %v172 = vld [vmem:[%s2 + $0x2b4] sm:$0xf]
  %v173 = vld [vmem:[%s2 + $0x2b8] sm:$0xff]
  %v174 = vld [vmem:[%s2 + $0x2c0] sm:$0xf]
  %v175 = vld [vmem:[%s2 + $0x2c4] sm:$0xff]
  %v176 = vld [vmem:[%s2 + $0x2cc] sm:$0xf]
  %v177 = vld [vmem:[%s2 + $0x2d0] sm:$0xff]
  %v178 = vld [vmem:[%s2 + $0x2d8] sm:$0xf]
  %v179 = vld [vmem:[%s2 + $0x2dc] sm:$0xff]
  %v180 = vld [vmem:[%s2 + $0x2e4] sm:$0xf]
  %v181 = vld [vmem:[%s2 + $0x2e8] sm:$0xff]
  %v182 = vld [vmem:[%s2 + $0x2f0] sm:$0xf]
  %v183 = vld [vmem:[%s2 + $0x2f4] sm:$0xff]
  %v184 = vld [vmem:[%s2 + $0x2fc] sm:$0xf]
  %v185 = vld [vmem:[%s2 + $0x300] sm:$0xff]
  %v186 = vld [vmem:[%s2 + $0x308] sm:$0xf]
  %v187 = vld [vmem:[%s2 + $0x30c] sm:$0xff]
  %v188 = vld [vmem:[%s2 + $0x314] sm:$0xf]
  %v189 = vld [vmem:[%s2 + $0x318] sm:$0xff]
  %v190 = vld [vmem:[%s2 + $0x320] sm:$0xf]
  %v191 = vld [vmem:[%s2 + $0x324] sm:$0xff]
  %v192 = vld [vmem:[%s2 + $0x32c] sm:$0xf]
  %v193 = vld [vmem:[%s2 + $0x330] sm:$0xff]
  %v194 = vld [vmem:[%s2 + $0x338] sm:$0xf]
  %v195 = vld [vmem:[%s2 + $0x33c] sm:$0xff]
  %v196 = vld [vmem:[%s2 + $0x344] sm:$0xf]
  %v197 = vld [vmem:[%s2 + $0x348] sm:$0xff]
  %v198 = vld [vmem:[%s2 + $0x350] sm:$0xf]
  %v199 = vld [vmem:[%s2 + $0x354] sm:$0xff]
  %v200 = vld [vmem:[%s2 + $0x35c] sm:$0xf]
  %v201 = vld [vmem:[%s3] sm:$0x7]
  %v202 = vld [vmem:[%s4] sm:$0xff]
  %v203 = vld [vmem:[%s4 + $0x8] sm:$0xff]
  %v204 = vld [vmem:[%s4 + $0x10] sm:$0xff]
  %v205 = vld [vmem:[%s4 + $0x18] sm:$0xff]
  %v206 = vld [vmem:[%s4 + $0x20] sm:$0xff]
  %v207 = vld [vmem:[%s4 + $0x28] sm:$0xff]
  %v208 = vld [vmem:[%s4 + $0x30] sm:$0xff]
  %v209 = vld [vmem:[%s4 + $0x38] sm:$0xff]
  %v210 = vld [vmem:[%s4 + $0x40] sm:$0xff]
  %v211 = vld [vmem:[%s4 + $0x48] sm:$0xff]
  %v212 = vld [vmem:[%s4 + $0x50] sm:$0xff]
  %v213 = vld [vmem:[%s4 + $0x58] sm:$0xff]
  %v214 = vld [vmem:[%s4 + $0x60] sm:$0xff]
  %v215 = vld [vmem:[%s4 + $0x68] sm:$0xff]
  %v216 = vld [vmem:[%s4 + $0x70] sm:$0xff]
  %v217 = vld [vmem:[%s4 + $0x78] sm:$0xff]
  %v218 = vld [vmem:[%s4 + $0x80] sm:$0xff]
  %v219 = vld [vmem:[%s4 + $0x88] sm:$0xff]
  %v220 = vld [vmem:[%s4 + $0x90] sm:$0xff]
  %v221 = vld [vmem:[%s4 + $0x98] sm:$0xff]
  %v222 = vld [vmem:[%s4 + $0xa0] sm:$0xff]
  %v223 = vld [vmem:[%s4 + $0xa8] sm:$0xff]
  %v224 = vld [vmem:[%s4 + $0xb0] sm:$0xff]
  %v225 = vld [vmem:[%s4 + $0xb8] sm:$0xff]
  %v226 = vld [vmem:[%s4 + $0xc0] sm:$0xff]
  %v227 = vld [vmem:[%s4 + $0xc8] sm:$0xff]
  %v228 = vld [vmem:[%s4 + $0xd0] sm:$0xff]
  %v229 = vld [vmem:[%s4 + $0xd8] sm:$0xff]
  %v230 = vld [vmem:[%s4 + $0xe0] sm:$0xff]
  %v231 = vld [vmem:[%s4 + $0xe8] sm:$0xff]
  %v232 = vld [vmem:[%s4 + $0xf0] sm:$0xff]
  %v233 = vld [vmem:[%s4 + $0xf8] sm:$0xff]
  %v234 = vld [vmem:[%s4 + $0x100] sm:$0xff]
  %v235 = vld [vmem:[%s4 + $0x108] sm:$0xff]
  %v236 = vld [vmem:[%s4 + $0x110] sm:$0xff]
  %v237 = vld [vmem:[%s4 + $0x118] sm:$0xff]
  %v238 = vld [vmem:[%s4 + $0x120] sm:$0xff]
  %v239 = vld [vmem:[%s4 + $0x128] sm:$0xff]
  %v240 = vld [vmem:[%s4 + $0x130] sm:$0xff]
  %v241 = vld [vmem:[%s4 + $0x138] sm:$0xff]
  %v242 = vld [vmem:[%s4 + $0x140] sm:$0xff]
  %v243 = vld [vmem:[%s4 + $0x148] sm:$0xff]
  %v244 = vld [vmem:[%s4 + $0x150] sm:$0xff]
  %v245 = vld [vmem:[%s4 + $0x158] sm:$0xff]
  %v246 = vld [vmem:[%s4 + $0x160] sm:$0xff]
  %v247 = vld [vmem:[%s4 + $0x168] sm:$0xff]
  %v248 = vld [vmem:[%s4 + $0x170] sm:$0xff]
  %v249 = vld [vmem:[%s4 + $0x178] sm:$0xff]
  %v250 = vld [vmem:[%s4 + $0x180] sm:$0xff]
  %v251 = vld [vmem:[%s4 + $0x188] sm:$0xff]
  %v252 = vld [vmem:[%s4 + $0x190] sm:$0xff]
  %v253 = vld [vmem:[%s4 + $0x198] sm:$0xff]
  %v254 = vld [vmem:[%s4 + $0x1a0] sm:$0xff]
  %v255 = vld [vmem:[%s4 + $0x1a8] sm:$0xff]
  %v256 = vld [vmem:[%s4 + $0x1b0] sm:$0xff]
  %v257 = vld [vmem:[%s4 + $0x1b8] sm:$0xff]
  %v258 = vld [vmem:[%s4 + $0x1c0] sm:$0xff]
  %v259 = vld [vmem:[%s4 + $0x1c8] sm:$0xff]
  %v260 = vld [vmem:[%s4 + $0x1d0] sm:$0xff]
  %v261 = vld [vmem:[%s4 + $0x1d8] sm:$0xff]
  %v262 = vld [vmem:[%s4 + $0x1e0] sm:$0xff]
  %v263 = vld [vmem:[%s4 + $0x1e8] sm:$0xff]
  %v264 = vld [vmem:[%s4 + $0x1f0] sm:$0xff]
  %v265 = vld [vmem:[%s4 + $0x1f8] sm:$0xff]
  %v266 = vld [vmem:[%s4 + $0x200] sm:$0xff]
  %v267 = vld [vmem:[%s4 + $0x208] sm:$0xff]
  %v268 = vld [vmem:[%s4 + $0x210] sm:$0xff]
  %v269 = vld [vmem:[%s4 + $0x218] sm:$0xff]
  %v270 = vld [vmem:[%s4 + $0x220] sm:$0xff]
  %v271 = vld [vmem:[%s4 + $0x228] sm:$0xff]
  %v272 = vld [vmem:[%s4 + $0x230] sm:$0xff]
  %v273 = vld [vmem:[%s4 + $0x238] sm:$0xff]
  %v274 = vld [vmem:[%s4 + $0x240] sm:$0xff]
  %v275 = vld [vmem:[%s4 + $0x248] sm:$0xff]
  %v276 = vld [vmem:[%s4 + $0x250] sm:$0xff]
  %v277 = vld [vmem:[%s4 + $0x258] sm:$0xff]
  %v278 = vld [vmem:[%s4 + $0x260] sm:$0xff]
  %v279 = vld [vmem:[%s4 + $0x268] sm:$0xff]
  %v280 = vld [vmem:[%s4 + $0x270] sm:$0xff]
  %v281 = vld [vmem:[%s4 + $0x278] sm:$0xff]
  %v282 = vld [vmem:[%s4 + $0x280] sm:$0xff]
  %v283 = vld [vmem:[%s4 + $0x288] sm:$0xff]
  %v284 = vld [vmem:[%s4 + $0x290] sm:$0xff]
  %v285 = vld [vmem:[%s4 + $0x298] sm:$0xff]
  %v286 = vld [vmem:[%s4 + $0x2a0] sm:$0xff]
  %v287 = vld [vmem:[%s4 + $0x2a8] sm:$0xff]
  %v288 = vld [vmem:[%s4 + $0x2b0] sm:$0xff]
  %v289 = vld [vmem:[%s4 + $0x2b8] sm:$0xff]
  %v290 = vld [vmem:[%s4 + $0x2c0] sm:$0xff]
  %v291 = vld [vmem:[%s4 + $0x2c8] sm:$0xff]
  %v292 = vld [vmem:[%s4 + $0x2d0] sm:$0xff]
  %v293 = vld [vmem:[%s4 + $0x2d8] sm:$0xff]
  %v294 = vld [vmem:[%s4 + $0x2e0] sm:$0xff]
  %v295 = vld [vmem:[%s4 + $0x2e8] sm:$0xff]
  %v296 = vld [vmem:[%s4 + $0x2f0] sm:$0xff]
  %v297 = vld [vmem:[%s4 + $0x2f8] sm:$0xff]
  %v298 = vld [vmem:[%s4 + $0x300] sm:$0xff]
  %v299 = vld [vmem:[%s4 + $0x308] sm:$0xff]
  %v300 = vld [vmem:[%s4 + $0x310] sm:$0xff]
  %v301 = vld [vmem:[%s4 + $0x318] sm:$0xff]
  %v302 = vld [vmem:[%s4 + $0x320] sm:$0xff]
  %v303 = vld [vmem:[%s4 + $0x328] sm:$0xff]
  %v304 = vld [vmem:[%s4 + $0x330] sm:$0xff]
  %v305 = vld [vmem:[%s4 + $0x338] sm:$0xff]
  %v306 = vld [vmem:[%s4 + $0x340] sm:$0xff]
  %v307 = vld [vmem:[%s4 + $0x348] sm:$0xff]
  %v308 = vld [vmem:[%s4 + $0x350] sm:$0xff]
  %v309 = vld [vmem:[%s4 + $0x358] sm:$0xff]
  %v310 = vld [vmem:[%s4 + $0x360] sm:$0xff]
  %v311 = vld [vmem:[%s4 + $0x368] sm:$0xff]
  %v312 = vld [vmem:[%s4 + $0x370] sm:$0xff]
  %v313 = vld [vmem:[%s4 + $0x378] sm:$0xff]
  %v314 = vld [vmem:[%s4 + $0x380] sm:$0xff]
  %v315 = vld [vmem:[%s4 + $0x388] sm:$0xff]
  %v316 = vld [vmem:[%s4 + $0x390] sm:$0xff]
  %v317 = vld [vmem:[%s4 + $0x398] sm:$0xff]
  %v318 = vld [vmem:[%s4 + $0x3a0] sm:$0xff]
  %v319 = vld [vmem:[%s4 + $0x3a8] sm:$0xff]
  %v320 = vld [vmem:[%s4 + $0x3b0] sm:$0xff]
  %v321 = vld [vmem:[%s4 + $0x3b8] sm:$0xff]
  %v322 = vld [vmem:[%s4 + $0x3c0] sm:$0xff]
  %v323 = vld [vmem:[%s4 + $0x3c8] sm:$0xff]
  %v324 = vld [vmem:[%s4 + $0x3d0] sm:$0xff]
  %v325 = vld [vmem:[%s4 + $0x3d8] sm:$0xff]
  %v326 = vld [vmem:[%s4 + $0x3e0] sm:$0xff]
  %v327 = vld [vmem:[%s4 + $0x3e8] sm:$0xff]
  %v328 = vld [vmem:[%s4 + $0x3f0] sm:$0xff]
  %v329 = vld [vmem:[%s4 + $0x3f8] sm:$0xff]
  %v330 = vld [vmem:[%s4 + $0x400] sm:$0xff]
  %v331 = vld [vmem:[%s4 + $0x408] sm:$0xff]
  %v332 = vld [vmem:[%s4 + $0x410] sm:$0xff]
  %v333 = vld [vmem:[%s4 + $0x418] sm:$0xff]
  %v334 = vld [vmem:[%s4 + $0x420] sm:$0xff]
  %v335 = vld [vmem:[%s4 + $0x428] sm:$0xff]
  %v336 = vld [vmem:[%s4 + $0x430] sm:$0xff]
  %v337 = vld [vmem:[%s4 + $0x438] sm:$0xff]
  %v338 = vld [vmem:[%s4 + $0x440] sm:$0xff]
  %v339 = vld [vmem:[%s4 + $0x448] sm:$0xff]
  %v340 = vld [vmem:[%s4 + $0x450] sm:$0xff]
  %v341 = vld [vmem:[%s4 + $0x458] sm:$0xff]
  %v342 = vld [vmem:[%s4 + $0x460] sm:$0xff]
  %v343 = vld [vmem:[%s4 + $0x468] sm:$0xff]
  %v344 = vld [vmem:[%s4 + $0x470] sm:$0xff]
  %v345 = vld [vmem:[%s4 + $0x478] sm:$0xff]
  %v346 = vld [vmem:[%s4 + $0x480] sm:$0xff]
  %v347 = vld [vmem:[%s4 + $0x488] sm:$0xff]
  %v348 = vld [vmem:[%s4 + $0x490] sm:$0xff]
  %v349 = vld [vmem:[%s4 + $0x498] sm:$0xff]
  %v350 = vld [vmem:[%s4 + $0x4a0] sm:$0xff]
  %v351 = vld [vmem:[%s4 + $0x4a8] sm:$0xff]
  %v352 = vld [vmem:[%s4 + $0x4b0] sm:$0xff]
  %v353 = vld [vmem:[%s4 + $0x4b8] sm:$0xff]
  %v354 = vld [vmem:[%s4 + $0x4c0] sm:$0xff]
  %v355 = vld [vmem:[%s4 + $0x4c8] sm:$0xff]
  %v356 = vld [vmem:[%s4 + $0x4d0] sm:$0xff]
  %v357 = vld [vmem:[%s4 + $0x4d8] sm:$0xff]
  %v358 = vld [vmem:[%s4 + $0x4e0] sm:$0xff]
  %v359 = vld [vmem:[%s4 + $0x4e8] sm:$0xff]
  %v360 = vld [vmem:[%s4 + $0x4f0] sm:$0xff]
  %v361 = vld [vmem:[%s4 + $0x4f8] sm:$0xff]
  %v362 = vld [vmem:[%s4 + $0x500] sm:$0xff]
  %v363 = vld [vmem:[%s4 + $0x508] sm:$0xff]
  %v364 = vld [vmem:[%s4 + $0x510] sm:$0xff]
  %v365 = vld [vmem:[%s4 + $0x518] sm:$0xff]
  %v366 = vld [vmem:[%s4 + $0x520] sm:$0xff]
  %v367 = vld [vmem:[%s4 + $0x528] sm:$0xff]
  %v368 = vld [vmem:[%s4 + $0x530] sm:$0xff]
  %v369 = vld [vmem:[%s4 + $0x538] sm:$0xff]
  %v370 = vld [vmem:[%s4 + $0x540] sm:$0xff]
  %v371 = vld [vmem:[%s4 + $0x548] sm:$0xff]
  %v372 = vld [vmem:[%s4 + $0x550] sm:$0xff]
  %v373 = vld [vmem:[%s4 + $0x558] sm:$0xff]
  %v374 = vld [vmem:[%s4 + $0x560] sm:$0xff]
  %v375 = vld [vmem:[%s4 + $0x568] sm:$0xff]
  %v376 = vld [vmem:[%s4 + $0x570] sm:$0xff]
  %v377 = vld [vmem:[%s4 + $0x578] sm:$0xff]
  %v378 = vld [vmem:[%s4 + $0x580] sm:$0xff]
  %v379 = vld [vmem:[%s4 + $0x588] sm:$0xff]
  %v380 = vld [vmem:[%s4 + $0x590] sm:$0xff]
  %v381 = vld [vmem:[%s4 + $0x598] sm:$0xff]
  %v382 = vld [vmem:[%s5] sm:$0x3]
  %v383 = vld [vmem:[%s6] sm:$0xf]
  %v384 = vld [vmem:[%s6 + $0x4] sm:$0xf]
  %v385 = vld [vmem:[%s6 + $0x8] sm:$0xf]
  %v386 = vld [vmem:[%s6 + $0xc] sm:$0xf]
  %v387 = vld [vmem:[%s6 + $0x10] sm:$0xf]
  %v388 = vld [vmem:[%s6 + $0x14] sm:$0xf]
  %v389 = vld [vmem:[%s6 + $0x18] sm:$0xf]
  %v390 = vld [vmem:[%s6 + $0x1c] sm:$0xf]
  %v391 = vld [vmem:[%s6 + $0x20] sm:$0xf]
  %v392 = vld [vmem:[%s6 + $0x24] sm:$0xf]
  %v393 = vld [vmem:[%s6 + $0x28] sm:$0xf]
  %v394 = vld [vmem:[%s6 + $0x2c] sm:$0xf]
  %v395 = vld [vmem:[%s6 + $0x30] sm:$0xf]
  %v396 = vld [vmem:[%s6 + $0x34] sm:$0xf]
  %v397 = vld [vmem:[%s6 + $0x38] sm:$0xf]
  %v398 = vld [vmem:[%s6 + $0x3c] sm:$0xf]
  %v399 = vld [vmem:[%s6 + $0x40] sm:$0xf]
  %v400 = vld [vmem:[%s6 + $0x44] sm:$0xf]
  %v401 = vld [vmem:[%s6 + $0x48] sm:$0xf]
  %v402 = vld [vmem:[%s6 + $0x4c] sm:$0xf]
  %v403 = vld [vmem:[%s6 + $0x50] sm:$0xf]
  %v404 = vld [vmem:[%s6 + $0x54] sm:$0xf]
  %v405 = vld [vmem:[%s6 + $0x58] sm:$0xf]
  %v406 = vld [vmem:[%s6 + $0x5c] sm:$0xf]
  %v407 = vld [vmem:[%s6 + $0x60] sm:$0xf]
  %v408 = vld [vmem:[%s6 + $0x64] sm:$0xf]
  %v409 = vld [vmem:[%s6 + $0x68] sm:$0xf]
  %v410 = vld [vmem:[%s6 + $0x6c] sm:$0xf]
  %v411 = vld [vmem:[%s6 + $0x70] sm:$0xf]
  %v412 = vld [vmem:[%s6 + $0x74] sm:$0xf]
  %v413 = vld [vmem:[%s6 + $0x78] sm:$0xf]
  %v414 = vld [vmem:[%s6 + $0x7c] sm:$0xf]
  %v415 = vld [vmem:[%s6 + $0x80] sm:$0xf]
  %v416 = vld [vmem:[%s6 + $0x84] sm:$0xf]
  %v417 = vld [vmem:[%s6 + $0x88] sm:$0xf]
  %v418 = vld [vmem:[%s6 + $0x8c] sm:$0xf]
  %v419 = vld [vmem:[%s6 + $0x90] sm:$0xf]
  %v420 = vld [vmem:[%s6 + $0x94] sm:$0xf]
  %v421 = vld [vmem:[%s6 + $0x98] sm:$0xf]
  %v422 = vld [vmem:[%s6 + $0x9c] sm:$0xf]
  %v423 = vld [vmem:[%s6 + $0xa0] sm:$0xf]
  %v424 = vld [vmem:[%s6 + $0xa4] sm:$0xf]
  %v425 = vld [vmem:[%s6 + $0xa8] sm:$0xf]
  %v426 = vld [vmem:[%s6 + $0xac] sm:$0xf]
  %v427 = vld [vmem:[%s6 + $0xb0] sm:$0xf]
  %v428 = vld [vmem:[%s6 + $0xb4] sm:$0xf]
  %v429 = vld [vmem:[%s6 + $0xb8] sm:$0xf]
  %v430 = vld [vmem:[%s6 + $0xbc] sm:$0xf]
  %v431 = vld [vmem:[%s6 + $0xc0] sm:$0xf]
  %v432 = vld [vmem:[%s6 + $0xc4] sm:$0xf]
  %v433 = vld [vmem:[%s6 + $0xc8] sm:$0xf]
  %v434 = vld [vmem:[%s6 + $0xcc] sm:$0xf]
  %v435 = vld [vmem:[%s6 + $0xd0] sm:$0xf]
  %v436 = vld [vmem:[%s6 + $0xd4] sm:$0xf]
  %v437 = vld [vmem:[%s6 + $0xd8] sm:$0xf]
  %v438 = vld [vmem:[%s6 + $0xdc] sm:$0xf]
  %v439 = vld [vmem:[%s6 + $0xe0] sm:$0xf]
  %v440 = vld [vmem:[%s6 + $0xe4] sm:$0xf]
  %v441 = vld [vmem:[%s6 + $0xe8] sm:$0xf]
  %v442 = vld [vmem:[%s6 + $0xec] sm:$0xf]
  %v443 = vld [vmem:[%s6 + $0xf0] sm:$0xf]
  %v444 = vld [vmem:[%s6 + $0xf4] sm:$0xf]
  %v445 = vld [vmem:[%s6 + $0xf8] sm:$0xf]
  %v446 = vld [vmem:[%s6 + $0xfc] sm:$0xf]
  %v447 = vld [vmem:[%s6 + $0x100] sm:$0xf]
  %v448 = vld [vmem:[%s6 + $0x104] sm:$0xf]
  %v449 = vld [vmem:[%s6 + $0x108] sm:$0xf]
  %v450 = vld [vmem:[%s6 + $0x10c] sm:$0xf]
  %v451 = vld [vmem:[%s6 + $0x110] sm:$0xf]
  %v452 = vld [vmem:[%s6 + $0x114] sm:$0xf]
  %v453 = vld [vmem:[%s6 + $0x118] sm:$0xf]
  %v454 = vld [vmem:[%s6 + $0x11c] sm:$0xf]
  %v455 = vld [vmem:[%s0] sm:$0xff]
  %v456 = vld [vmem:[%s0 + $0x8] sm:$0xff]
  %v457 = vld [vmem:[%s0 + $0x10] sm:$0xf]
  %v459 = vlaneseq
  %v460 = vshrl.u32 %v459, 7
  %v461 = vsub.s32 0, %v460
  %v462 = vrot.slane %v201, %v461
  %v463 = vlaneseq
  %v464 = vshrl.u32 %v463, 7
  %v465 = vsub.s32 1, %v464
  %v466 = vrot.slane %v201, %v465
  %v467 = vlaneseq
  %v468 = vshrl.u32 %v467, 7
  %v469 = vsub.s32 2, %v468
  %v470 = vrot.slane %v201, %v469
  %v477 = vunpack.c.l.b16 %v455
  %v478 = vunpack.c.h.b16 %v455
  %v479 = vunpack.c.l.b16 %v456
  %v480 = vunpack.c.h.b16 %v456
  %v481 = vunpack.c.l.b16 %v457
  %v482 = vpack.c.b16 %v477, %v477
  %v483 = vpack.c.b16 %v478, %v478
  %v484 = vpack.c.b16 %v479, %v479
  %v485 = vpack.c.b16 %v480, %v480
  %v486 = vpack.c.b16 %v481, %v481
  %v635 = vunpack.c.l.b16 %v57
  %v636 = vunpack.c.h.b16 %v57
  %v637 = vunpack.c.l.b16 %v58
  %v638 = vunpack.c.l.b16 %v59
  %v639 = vunpack.c.h.b16 %v59
  %v640 = vunpack.c.l.b16 %v60
  %v641 = vunpack.c.l.b16 %v61
  %v642 = vunpack.c.h.b16 %v61
  %v643 = vunpack.c.l.b16 %v62
  %v644 = vunpack.c.l.b16 %v63
  %v645 = vunpack.c.h.b16 %v63
  %v646 = vunpack.c.l.b16 %v64
  %v647 = vunpack.c.l.b16 %v65
  %v648 = vunpack.c.h.b16 %v65
  %v649 = vunpack.c.l.b16 %v66
  %v650 = vunpack.c.l.b16 %v67
  %v651 = vunpack.c.h.b16 %v67
  %v652 = vunpack.c.l.b16 %v68
  %v653 = vunpack.c.l.b16 %v69
  %v654 = vunpack.c.h.b16 %v69
  %v655 = vunpack.c.l.b16 %v70
  %v656 = vunpack.c.l.b16 %v71
  %v657 = vunpack.c.h.b16 %v71
  %v658 = vunpack.c.l.b16 %v72
  %v659 = vunpack.c.l.b16 %v73
  %v660 = vunpack.c.h.b16 %v73
  %v661 = vunpack.c.l.b16 %v74
  %v662 = vunpack.c.l.b16 %v75
  %v663 = vunpack.c.h.b16 %v75
  %v664 = vunpack.c.l.b16 %v76
  %v665 = vunpack.c.l.b16 %v77
  %v666 = vunpack.c.h.b16 %v77
  %v667 = vunpack.c.l.b16 %v78
  %v668 = vunpack.c.l.b16 %v79
  %v669 = vunpack.c.h.b16 %v79
  %v670 = vunpack.c.l.b16 %v80
  %v671 = vunpack.c.l.b16 %v81
  %v672 = vunpack.c.h.b16 %v81
  %v673 = vunpack.c.l.b16 %v82
  %v674 = vunpack.c.l.b16 %v83
  %v675 = vunpack.c.h.b16 %v83
  %v676 = vunpack.c.l.b16 %v84
  %v677 = vunpack.c.l.b16 %v85
  %v678 = vunpack.c.h.b16 %v85
  %v679 = vunpack.c.l.b16 %v86
  %v680 = vunpack.c.l.b16 %v87
  %v681 = vunpack.c.h.b16 %v87
  %v682 = vunpack.c.l.b16 %v88
  %v683 = vunpack.c.l.b16 %v89
  %v684 = vunpack.c.h.b16 %v89
  %v685 = vunpack.c.l.b16 %v90
  %v686 = vunpack.c.l.b16 %v91
  %v687 = vunpack.c.h.b16 %v91
  %v688 = vunpack.c.l.b16 %v92
  %v689 = vunpack.c.l.b16 %v93
  %v690 = vunpack.c.h.b16 %v93
  %v691 = vunpack.c.l.b16 %v94
  %v692 = vunpack.c.l.b16 %v95
  %v693 = vunpack.c.h.b16 %v95
  %v694 = vunpack.c.l.b16 %v96
  %v695 = vunpack.c.l.b16 %v97
  %v696 = vunpack.c.h.b16 %v97
  %v697 = vunpack.c.l.b16 %v98
  %v698 = vunpack.c.l.b16 %v99
  %v699 = vunpack.c.h.b16 %v99
  %v700 = vunpack.c.l.b16 %v100
  %v701 = vunpack.c.l.b16 %v101
  %v702 = vunpack.c.h.b16 %v101
  %v703 = vunpack.c.l.b16 %v102
  %v704 = vunpack.c.l.b16 %v103
  %v705 = vunpack.c.h.b16 %v103
  %v706 = vunpack.c.l.b16 %v104
  %v707 = vunpack.c.l.b16 %v105
  %v708 = vunpack.c.h.b16 %v105
  %v709 = vunpack.c.l.b16 %v106
  %v710 = vunpack.c.l.b16 %v107
  %v711 = vunpack.c.h.b16 %v107
  %v712 = vunpack.c.l.b16 %v108
  %v713 = vunpack.c.l.b16 %v109
  %v714 = vunpack.c.h.b16 %v109
  %v715 = vunpack.c.l.b16 %v110
  %v716 = vunpack.c.l.b16 %v111
  %v717 = vunpack.c.h.b16 %v111
  %v718 = vunpack.c.l.b16 %v112
  %v719 = vunpack.c.l.b16 %v113
  %v720 = vunpack.c.h.b16 %v113
  %v721 = vunpack.c.l.b16 %v114
  %v722 = vunpack.c.l.b16 %v115
  %v723 = vunpack.c.h.b16 %v115
  %v724 = vunpack.c.l.b16 %v116
  %v725 = vunpack.c.l.b16 %v117
  %v726 = vunpack.c.h.b16 %v117
  %v727 = vunpack.c.l.b16 %v118
  %v728 = vunpack.c.l.b16 %v119
  %v729 = vunpack.c.h.b16 %v119
  %v730 = vunpack.c.l.b16 %v120
  %v731 = vunpack.c.l.b16 %v121
  %v732 = vunpack.c.h.b16 %v121
  %v733 = vunpack.c.l.b16 %v122
  %v734 = vunpack.c.l.b16 %v123
  %v735 = vunpack.c.h.b16 %v123
  %v736 = vunpack.c.l.b16 %v124
  %v737 = vunpack.c.l.b16 %v125
  %v738 = vunpack.c.h.b16 %v125
  %v739 = vunpack.c.l.b16 %v126
  %v740 = vunpack.c.l.b16 %v127
  %v741 = vunpack.c.h.b16 %v127
  %v742 = vunpack.c.l.b16 %v128
  %v743 = vunpack.c.l.b16 %v129
  %v744 = vunpack.c.h.b16 %v129
  %v745 = vunpack.c.l.b16 %v130
  %v746 = vunpack.c.l.b16 %v131
  %v747 = vunpack.c.h.b16 %v131
  %v748 = vunpack.c.l.b16 %v132
  %v749 = vunpack.c.l.b16 %v133
  %v750 = vunpack.c.h.b16 %v133
  %v751 = vunpack.c.l.b16 %v134
  %v752 = vunpack.c.l.b16 %v135
  %v753 = vunpack.c.h.b16 %v135
  %v754 = vunpack.c.l.b16 %v136
  %v755 = vunpack.c.l.b16 %v137
  %v756 = vunpack.c.h.b16 %v137
  %v757 = vunpack.c.l.b16 %v138
  %v758 = vunpack.c.l.b16 %v139
  %v759 = vunpack.c.h.b16 %v139
  %v760 = vunpack.c.l.b16 %v140
  %v761 = vunpack.c.l.b16 %v141
  %v762 = vunpack.c.h.b16 %v141
  %v763 = vunpack.c.l.b16 %v142
  %v764 = vunpack.c.l.b16 %v143
  %v765 = vunpack.c.h.b16 %v143
  %v766 = vunpack.c.l.b16 %v144
  %v767 = vunpack.c.l.b16 %v145
  %v768 = vunpack.c.h.b16 %v145
  %v769 = vunpack.c.l.b16 %v146
  %v770 = vunpack.c.l.b16 %v147
  %v771 = vunpack.c.h.b16 %v147
  %v772 = vunpack.c.l.b16 %v148
  %v773 = vunpack.c.l.b16 %v149
  %v774 = vunpack.c.h.b16 %v149
  %v775 = vunpack.c.l.b16 %v150
  %v776 = vunpack.c.l.b16 %v151
  %v777 = vunpack.c.h.b16 %v151
  %v778 = vunpack.c.l.b16 %v152
  %v779 = vunpack.c.l.b16 %v153
  %v780 = vunpack.c.h.b16 %v153
  %v781 = vunpack.c.l.b16 %v154
  %v782 = vunpack.c.l.b16 %v155
  %v783 = vunpack.c.h.b16 %v155
  %v784 = vunpack.c.l.b16 %v156
  %v785 = vunpack.c.l.b16 %v157
  %v786 = vunpack.c.h.b16 %v157
  %v787 = vunpack.c.l.b16 %v158
  %v788 = vunpack.c.l.b16 %v159
  %v789 = vunpack.c.h.b16 %v159
  %v790 = vunpack.c.l.b16 %v160
  %v791 = vunpack.c.l.b16 %v161
  %v792 = vunpack.c.h.b16 %v161
  %v793 = vunpack.c.l.b16 %v162
  %v794 = vunpack.c.l.b16 %v163
  %v795 = vunpack.c.h.b16 %v163
  %v796 = vunpack.c.l.b16 %v164
  %v797 = vunpack.c.l.b16 %v165
  %v798 = vunpack.c.h.b16 %v165
  %v799 = vunpack.c.l.b16 %v166
  %v800 = vunpack.c.l.b16 %v167
  %v801 = vunpack.c.h.b16 %v167
  %v802 = vunpack.c.l.b16 %v168
  %v803 = vunpack.c.l.b16 %v169
  %v804 = vunpack.c.h.b16 %v169
  %v805 = vunpack.c.l.b16 %v170
  %v806 = vunpack.c.l.b16 %v171
  %v807 = vunpack.c.h.b16 %v171
  %v808 = vunpack.c.l.b16 %v172
  %v809 = vunpack.c.l.b16 %v173
  %v810 = vunpack.c.h.b16 %v173
  %v811 = vunpack.c.l.b16 %v174
  %v812 = vunpack.c.l.b16 %v175
  %v813 = vunpack.c.h.b16 %v175
  %v814 = vunpack.c.l.b16 %v176
  %v815 = vunpack.c.l.b16 %v177
  %v816 = vunpack.c.h.b16 %v177
  %v817 = vunpack.c.l.b16 %v178
  %v818 = vunpack.c.l.b16 %v179
  %v819 = vunpack.c.h.b16 %v179
  %v820 = vunpack.c.l.b16 %v180
  %v821 = vunpack.c.l.b16 %v181
  %v822 = vunpack.c.h.b16 %v181
  %v823 = vunpack.c.l.b16 %v182
  %v824 = vunpack.c.l.b16 %v183
  %v825 = vunpack.c.h.b16 %v183
  %v826 = vunpack.c.l.b16 %v184
  %v827 = vunpack.c.l.b16 %v185
  %v828 = vunpack.c.h.b16 %v185
  %v829 = vunpack.c.l.b16 %v186
  %v830 = vunpack.c.l.b16 %v187
  %v831 = vunpack.c.h.b16 %v187
  %v832 = vunpack.c.l.b16 %v188
  %v833 = vunpack.c.l.b16 %v189
  %v834 = vunpack.c.h.b16 %v189
  %v835 = vunpack.c.l.b16 %v190
  %v836 = vunpack.c.l.b16 %v191
  %v837 = vunpack.c.h.b16 %v191
  %v838 = vunpack.c.l.b16 %v192
  %v839 = vunpack.c.l.b16 %v193
  %v840 = vunpack.c.h.b16 %v193
  %v841 = vunpack.c.l.b16 %v194
  %v842 = vunpack.c.l.b16 %v195
  %v843 = vunpack.c.h.b16 %v195
  %v844 = vunpack.c.l.b16 %v196
  %v845 = vunpack.c.l.b16 %v197
  %v846 = vunpack.c.h.b16 %v197
  %v847 = vunpack.c.l.b16 %v198
  %v848 = vunpack.c.l.b16 %v199
  %v849 = vunpack.c.h.b16 %v199
  %v850 = vunpack.c.l.b16 %v200
  %v851 = vpack.c.b16 %v638, %v635
  %v852 = vpack.c.b16 %v639, %v636
  %v853 = vpack.c.b16 %v640, %v637
  %v854 = vpack.c.b16 %v644, %v641
  %v855 = vpack.c.b16 %v645, %v642
  %v856 = vpack.c.b16 %v646, %v643
  %v857 = vpack.c.b16 %v650, %v647
  %v858 = vpack.c.b16 %v651, %v648
  %v859 = vpack.c.b16 %v652, %v649
  %v860 = vpack.c.b16 %v656, %v653
  %v861 = vpack.c.b16 %v657, %v654
  %v862 = vpack.c.b16 %v658, %v655
  %v863 = vpack.c.b16 %v662, %v659
  %v864 = vpack.c.b16 %v663, %v660
  %v865 = vpack.c.b16 %v664, %v661
  %v866 = vpack.c.b16 %v668, %v665
  %v867 = vpack.c.b16 %v669, %v666
  %v868 = vpack.c.b16 %v670, %v667
  %v869 = vpack.c.b16 %v674, %v671
  %v870 = vpack.c.b16 %v675, %v672
  %v871 = vpack.c.b16 %v676, %v673
  %v872 = vpack.c.b16 %v680, %v677
  %v873 = vpack.c.b16 %v681, %v678
  %v874 = vpack.c.b16 %v682, %v679
  %v875 = vpack.c.b16 %v686, %v683
  %v876 = vpack.c.b16 %v687, %v684
  %v877 = vpack.c.b16 %v688, %v685
  %v878 = vpack.c.b16 %v692, %v689
  %v879 = vpack.c.b16 %v693, %v690
  %v880 = vpack.c.b16 %v694, %v691
  %v881 = vpack.c.b16 %v698, %v695
  %v882 = vpack.c.b16 %v699, %v696
  %v883 = vpack.c.b16 %v700, %v697
  %v884 = vpack.c.b16 %v704, %v701
  %v885 = vpack.c.b16 %v705, %v702
  %v886 = vpack.c.b16 %v706, %v703
  %v887 = vpack.c.b16 %v710, %v707
  %v888 = vpack.c.b16 %v711, %v708
  %v889 = vpack.c.b16 %v712, %v709
  %v890 = vpack.c.b16 %v716, %v713
  %v891 = vpack.c.b16 %v717, %v714
  %v892 = vpack.c.b16 %v718, %v715
  %v893 = vpack.c.b16 %v722, %v719
  %v894 = vpack.c.b16 %v723, %v720
  %v895 = vpack.c.b16 %v724, %v721
  %v896 = vpack.c.b16 %v728, %v725
  %v897 = vpack.c.b16 %v729, %v726
  %v898 = vpack.c.b16 %v730, %v727
  %v899 = vpack.c.b16 %v734, %v731
  %v900 = vpack.c.b16 %v735, %v732
  %v901 = vpack.c.b16 %v736, %v733
  %v902 = vpack.c.b16 %v740, %v737
  %v903 = vpack.c.b16 %v741, %v738
  %v904 = vpack.c.b16 %v742, %v739
  %v905 = vpack.c.b16 %v746, %v743
  %v906 = vpack.c.b16 %v747, %v744
  %v907 = vpack.c.b16 %v748, %v745
  %v908 = vpack.c.b16 %v752, %v749
  %v909 = vpack.c.b16 %v753, %v750
  %v910 = vpack.c.b16 %v754, %v751
  %v911 = vpack.c.b16 %v758, %v755
  %v912 = vpack.c.b16 %v759, %v756
  %v913 = vpack.c.b16 %v760, %v757
  %v914 = vpack.c.b16 %v764, %v761
  %v915 = vpack.c.b16 %v765, %v762
  %v916 = vpack.c.b16 %v766, %v763
  %v917 = vpack.c.b16 %v770, %v767
  %v918 = vpack.c.b16 %v771, %v768
  %v919 = vpack.c.b16 %v772, %v769
  %v920 = vpack.c.b16 %v776, %v773
  %v921 = vpack.c.b16 %v777, %v774
  %v922 = vpack.c.b16 %v778, %v775
  %v923 = vpack.c.b16 %v782, %v779
  %v924 = vpack.c.b16 %v783, %v780
  %v925 = vpack.c.b16 %v784, %v781
  %v926 = vpack.c.b16 %v788, %v785
  %v927 = vpack.c.b16 %v789, %v786
  %v928 = vpack.c.b16 %v790, %v787
  %v929 = vpack.c.b16 %v794, %v791
  %v930 = vpack.c.b16 %v795, %v792
  %v931 = vpack.c.b16 %v796, %v793
  %v932 = vpack.c.b16 %v800, %v797
  %v933 = vpack.c.b16 %v801, %v798
  %v934 = vpack.c.b16 %v802, %v799
  %v935 = vpack.c.b16 %v806, %v803
  %v936 = vpack.c.b16 %v807, %v804
  %v937 = vpack.c.b16 %v808, %v805
  %v938 = vpack.c.b16 %v812, %v809
  %v939 = vpack.c.b16 %v813, %v810
  %v940 = vpack.c.b16 %v814, %v811
  %v941 = vpack.c.b16 %v818, %v815
  %v942 = vpack.c.b16 %v819, %v816
  %v943 = vpack.c.b16 %v820, %v817
  %v944 = vpack.c.b16 %v824, %v821
  %v945 = vpack.c.b16 %v825, %v822
  %v946 = vpack.c.b16 %v826, %v823
  %v947 = vpack.c.b16 %v830, %v827
  %v948 = vpack.c.b16 %v831, %v828
  %v949 = vpack.c.b16 %v832, %v829
  %v950 = vpack.c.b16 %v836, %v833
  %v951 = vpack.c.b16 %v837, %v834
  %v952 = vpack.c.b16 %v838, %v835
  %v953 = vpack.c.b16 %v842, %v839
  %v954 = vpack.c.b16 %v843, %v840
  %v955 = vpack.c.b16 %v844, %v841
  %v956 = vpack.c.b16 %v848, %v845
  %v957 = vpack.c.b16 %v849, %v846
  %v958 = vpack.c.b16 %v850, %v847
  %vm1067 = vcmask 523264
  %v1069 = vsel %vm1067, %v486, 0
  %1071 = vmatprep.subr.bf16.mxu0 %v873
  %1072 = vmatpush1.bf16.msra.mxu0 %v872
  %1073 = vmatprep.subr.bf16.mxu0 %v870
  %1074 = vmatpush1.bf16.msra.mxu0 %v869
  %1075 = vmatprep.subr.bf16.mxu0 %v867
  %1076 = vmatpush1.bf16.msra.mxu0 %v866
  %1077 = vmatprep.subr.bf16.mxu0 %v864
  %1078 = vmatpush1.bf16.msra.mxu0 %v863
  %1079 = vmatprep.subr.bf16.mxu0 %v861
  %1080 = vmatpush1.bf16.msra.mxu0 %v860
  %1081 = vmatprep.subr.bf16.mxu0 %v858
  %1082 = vmatpush1.bf16.msra.mxu0 %v857
  %1083 = vmatprep.subr.bf16.mxu0 %v855
  %1084 = vmatpush1.bf16.msra.mxu0 %v854
  %1085 = vmatprep.subr.bf16.mxu0 %v852
  %1086 = vmatpush1.bf16.msra.mxu0 %v851
  %1087 = vmatprep.subr.bf16.mxu0 %v897
  %1088 = vmatpush2.bf16.msra.mxu0 %v896
  %1089 = vmatprep.subr.bf16.mxu0 %v894
  %1090 = vmatpush2.bf16.msra.mxu0 %v893
  %1091 = vmatprep.subr.bf16.mxu0 %v891
  %1092 = vmatpush2.bf16.msra.mxu0 %v890
  %1093 = vmatprep.subr.bf16.mxu0 %v888
  %1094 = vmatpush2.bf16.msra.mxu0 %v887
  %1095 = vmatprep.subr.bf16.mxu0 %v885
  %1096 = vmatpush2.bf16.msra.mxu0 %v884
  %1097 = vmatprep.subr.bf16.mxu0 %v882
  %1098 = vmatpush2.bf16.msra.mxu0 %v881
  %1099 = vmatprep.subr.bf16.mxu0 %v879
  %1100 = vmatpush2.bf16.msra.mxu0 %v878
  %1101 = vmatprep.subr.bf16.mxu0 %v876
  %1102 = vmatpush2.bf16.msra.mxu0 %v875
  %1103 = vmatprep.mubr.bf16.mxu0 %v483
  %1104 = vmatmul.mubr.bf16.gmra.mxu0 %v482
  %v1105 = vpop.f32.mrf.mxu0
  %v1106 = vadd.f32 %v462, %v1105
  %v1107 = vpop.f32.mrf.mxu0
  %v1108 = vadd.f32 %v466, %v1107
  %v1109 = vpop.f32.mrf.mxu0
  %v1110 = vpop.f32.mrf.mxu0
  %1111 = vdwg.mxu0
  %1112 = vmatprep.subr.bf16.mxu0 %v921
  %1113 = vmatpush1.bf16.msra.mxu0 %v920
  %1114 = vmatprep.subr.bf16.mxu0 %v918
  %1115 = vmatpush1.bf16.msra.mxu0 %v917
  %1116 = vmatprep.subr.bf16.mxu0 %v915
  %1117 = vmatpush1.bf16.msra.mxu0 %v914
  %1118 = vmatprep.subr.bf16.mxu0 %v912
  %1119 = vmatpush1.bf16.msra.mxu0 %v911
  %1120 = vmatprep.subr.bf16.mxu0 %v909
  %1121 = vmatpush1.bf16.msra.mxu0 %v908
  %1122 = vmatprep.subr.bf16.mxu0 %v906
  %1123 = vmatpush1.bf16.msra.mxu0 %v905
  %1124 = vmatprep.subr.bf16.mxu0 %v903
  %1125 = vmatpush1.bf16.msra.mxu0 %v902
  %1126 = vmatprep.subr.bf16.mxu0 %v900
  %1127 = vmatpush1.bf16.msra.mxu0 %v899
  %1128 = vmatprep.subr.bf16.mxu0 %v945
  %1129 = vmatpush2.bf16.msra.mxu0 %v944
  %1130 = vmatprep.subr.bf16.mxu0 %v942
  %1131 = vmatpush2.bf16.msra.mxu0 %v941
  %1132 = vmatprep.subr.bf16.mxu0 %v939
  %1133 = vmatpush2.bf16.msra.mxu0 %v938
  %1134 = vmatprep.subr.bf16.mxu0 %v936
  %1135 = vmatpush2.bf16.msra.mxu0 %v935
  %1136 = vmatprep.subr.bf16.mxu0 %v933
  %1137 = vmatpush2.bf16.msra.mxu0 %v932
  %1138 = vmatprep.subr.bf16.mxu0 %v930
  %1139 = vmatpush2.bf16.msra.mxu0 %v929
  %1140 = vmatprep.subr.bf16.mxu0 %v927
  %1141 = vmatpush2.bf16.msra.mxu0 %v926
  %1142 = vmatprep.subr.bf16.mxu0 %v924
  %1143 = vmatpush2.bf16.msra.mxu0 %v923
  %1144 = vmatprep.mubr.bf16.mxu0 %v485
  %1145 = vmatmul.mubr.bf16.gmra.mxu0 %v484
  %v1146 = vpop.f32.mrf.mxu0
  %v1147 = vadd.f32 %v1106, %v1146
  %v1148 = vpop.f32.mrf.mxu0
  %v1149 = vadd.f32 %v1108, %v1148
  %v1150 = vpop.f32.mrf.mxu0
  %v1151 = vpop.f32.mrf.mxu0
  %1152 = vdwg.mxu0
  %1153 = vmatprep.subr.bf16.mxu0 0
  %1154 = vmatpush1.bf16.msra.mxu0 0
  %1155 = vmatprep.subr.bf16.mxu0 0
  %1156 = vmatpush1.bf16.msra.mxu0 0
  %1157 = vmatprep.subr.bf16.mxu0 0
  %1158 = vmatpush1.bf16.msra.mxu0 0
  %1159 = vmatprep.subr.bf16.mxu0 0
  %1160 = vmatpush1.bf16.msra.mxu0 0
  %1161 = vmatprep.subr.bf16.mxu0 %v957
  %1162 = vmatpush1.bf16.msra.mxu0 %v956
  %1163 = vmatprep.subr.bf16.mxu0 %v954
  %1164 = vmatpush1.bf16.msra.mxu0 %v953
  %1165 = vmatprep.subr.bf16.mxu0 %v951
  %1166 = vmatpush1.bf16.msra.mxu0 %v950
  %1167 = vmatprep.subr.bf16.mxu0 %v948
  %1168 = vmatpush1.bf16.msra.mxu0 %v947
  %1169 = vmatprep.subr.bf16.mxu0 0
  %1170 = vmatpush2.bf16.msra.mxu0 0
  %1171 = vmatprep.subr.bf16.mxu0 0
  %1172 = vmatpush2.bf16.msra.mxu0 0
  %1173 = vmatprep.subr.bf16.mxu0 0
  %1174 = vmatpush2.bf16.msra.mxu0 0
  %1175 = vmatprep.subr.bf16.mxu0 0
  %1176 = vmatpush2.bf16.msra.mxu0 0
  %1177 = vmatprep.subr.bf16.mxu0 0
  %1178 = vmatpush2.bf16.msra.mxu0 0
  %1179 = vmatprep.subr.bf16.mxu0 0
  %1180 = vmatpush2.bf16.msra.mxu0 0
  %1181 = vmatprep.subr.bf16.mxu0 0
  %1182 = vmatpush2.bf16.msra.mxu0 0
  %1183 = vmatprep.subr.bf16.mxu0 0
  %1184 = vmatpush2.bf16.msra.mxu0 0
  %1185 = vmatprep.mubr.bf16.mxu0 0
  %1186 = vmatmul.mubr.bf16.gmra.mxu0 %v1069
  %v1187 = vpop.f32.mrf.mxu0
  %v1188 = vadd.f32 %v1147, %v1187
  %v1189 = vpop.f32.mrf.mxu0
  %v1190 = vadd.f32 %v1149, %v1189
  %v1191 = vpop.f32.mrf.mxu0
  %v1192 = vpop.f32.mrf.mxu0
  %1193 = vdwg.mxu0
  %1194 = vmatprep.subr.bf16.mxu0 0
  %1195 = vmatpush1.bf16.msra.mxu0 %v874
  %1196 = vmatprep.subr.bf16.mxu0 0
  %1197 = vmatpush1.bf16.msra.mxu0 %v871
  %1198 = vmatprep.subr.bf16.mxu0 0
  %1199 = vmatpush1.bf16.msra.mxu0 %v868
  %1200 = vmatprep.subr.bf16.mxu0 0
  %1201 = vmatpush1.bf16.msra.mxu0 %v865
  %1202 = vmatprep.subr.bf16.mxu0 0
  %1203 = vmatpush1.bf16.msra.mxu0 %v862
  %1204 = vmatprep.subr.bf16.mxu0 0
  %1205 = vmatpush1.bf16.msra.mxu0 %v859
  %1206 = vmatprep.subr.bf16.mxu0 0
  %1207 = vmatpush1.bf16.msra.mxu0 %v856
  %1208 = vmatprep.subr.bf16.mxu0 0
  %1209 = vmatpush1.bf16.msra.mxu0 %v853
  %1210 = vmatprep.subr.bf16.mxu0 0
  %1211 = vmatpush2.bf16.msra.mxu0 %v898
  %1212 = vmatprep.subr.bf16.mxu0 0
  %1213 = vmatpush2.bf16.msra.mxu0 %v895
  %1214 = vmatprep.subr.bf16.mxu0 0
  %1215 = vmatpush2.bf16.msra.mxu0 %v892
  %1216 = vmatprep.subr.bf16.mxu0 0
  %1217 = vmatpush2.bf16.msra.mxu0 %v889
  %1218 = vmatprep.subr.bf16.mxu0 0
  %1219 = vmatpush2.bf16.msra.mxu0 %v886
  %1220 = vmatprep.subr.bf16.mxu0 0
  %1221 = vmatpush2.bf16.msra.mxu0 %v883
  %1222 = vmatprep.subr.bf16.mxu0 0
  %1223 = vmatpush2.bf16.msra.mxu0 %v880
  %1224 = vmatprep.subr.bf16.mxu0 0
  %1225 = vmatpush2.bf16.msra.mxu0 %v877
  %1226 = vmatprep.mubr.bf16.mxu0 %v483
  %1227 = vmatmul.mubr.bf16.gmra.mxu0 %v482
  %v1228 = vpop.f32.mrf.mxu0
  %v1229 = vadd.f32 %v470, %v1228
  %v1230 = vpop.f32.mrf.mxu0
  %v1231 = vpop.f32.mrf.mxu0
  %v1232 = vpop.f32.mrf.mxu0
  %1233 = vdwg.mxu0
  %1234 = vmatprep.subr.bf16.mxu0 0
  %1235 = vmatpush1.bf16.msra.mxu0 %v922
  %1236 = vmatprep.subr.bf16.mxu0 0
  %1237 = vmatpush1.bf16.msra.mxu0 %v919
  %1238 = vmatprep.subr.bf16.mxu0 0
  %1239 = vmatpush1.bf16.msra.mxu0 %v916
  %1240 = vmatprep.subr.bf16.mxu0 0
  %1241 = vmatpush1.bf16.msra.mxu0 %v913
  %1242 = vmatprep.subr.bf16.mxu0 0
  %1243 = vmatpush1.bf16.msra.mxu0 %v910
  %1244 = vmatprep.subr.bf16.mxu0 0
  %1245 = vmatpush1.bf16.msra.mxu0 %v907
  %1246 = vmatprep.subr.bf16.mxu0 0
  %1247 = vmatpush1.bf16.msra.mxu0 %v904
  %1248 = vmatprep.subr.bf16.mxu0 0
  %1249 = vmatpush1.bf16.msra.mxu0 %v901
  %1250 = vmatprep.subr.bf16.mxu0 0
  %1251 = vmatpush2.bf16.msra.mxu0 %v946
  %1252 = vmatprep.subr.bf16.mxu0 0
  %1253 = vmatpush2.bf16.msra.mxu0 %v943
  %1254 = vmatprep.subr.bf16.mxu0 0
  %1255 = vmatpush2.bf16.msra.mxu0 %v940
  %1256 = vmatprep.subr.bf16.mxu0 0
  %1257 = vmatpush2.bf16.msra.mxu0 %v937
  %1258 = vmatprep.subr.bf16.mxu0 0
  %1259 = vmatpush2.bf16.msra.mxu0 %v934
  %1260 = vmatprep.subr.bf16.mxu0 0
  %1261 = vmatpush2.bf16.msra.mxu0 %v931
  %1262 = vmatprep.subr.bf16.mxu0 0
  %1263 = vmatpush2.bf16.msra.mxu0 %v928
  %1264 = vmatprep.subr.bf16.mxu0 0
  %1265 = vmatpush2.bf16.msra.mxu0 %v925
  %1266 = vmatprep.mubr.bf16.mxu0 %v485
  %1267 = vmatmul.mubr.bf16.gmra.mxu0 %v484
  %v1268 = vpop.f32.mrf.mxu0
  %v1269 = vadd.f32 %v1229, %v1268
  %v1270 = vpop.f32.mrf.mxu0
  %v1271 = vpop.f32.mrf.mxu0
  %v1272 = vpop.f32.mrf.mxu0
  %1273 = vdwg.mxu0
  %1274 = vmatprep.subr.bf16.mxu0 0
  %1275 = vmatpush1.bf16.msra.mxu0 0
  %1276 = vmatprep.subr.bf16.mxu0 0
  %1277 = vmatpush1.bf16.msra.mxu0 0
  %1278 = vmatprep.subr.bf16.mxu0 0
  %1279 = vmatpush1.bf16.msra.mxu0 0
  %1280 = vmatprep.subr.bf16.mxu0 0
  %1281 = vmatpush1.bf16.msra.mxu0 0
  %1282 = vmatprep.subr.bf16.mxu0 0
  %1283 = vmatpush1.bf16.msra.mxu0 %v958
  %1284 = vmatprep.subr.bf16.mxu0 0
  %1285 = vmatpush1.bf16.msra.mxu0 %v955
  %1286 = vmatprep.subr.bf16.mxu0 0
  %1287 = vmatpush1.bf16.msra.mxu0 %v952
  %1288 = vmatprep.subr.bf16.mxu0 0
  %1289 = vmatpush1.bf16.msra.mxu0 %v949
  %1290 = vmatprep.subr.bf16.mxu0 0
  %1291 = vmatpush2.bf16.msra.mxu0 0
  %1292 = vmatprep.subr.bf16.mxu0 0
  %1293 = vmatpush2.bf16.msra.mxu0 0
  %1294 = vmatprep.subr.bf16.mxu0 0
  %1295 = vmatpush2.bf16.msra.mxu0 0
  %1296 = vmatprep.subr.bf16.mxu0 0
  %1297 = vmatpush2.bf16.msra.mxu0 0
  %1298 = vmatprep.subr.bf16.mxu0 0
  %1299 = vmatpush2.bf16.msra.mxu0 0
  %1300 = vmatprep.subr.bf16.mxu0 0
  %1301 = vmatpush2.bf16.msra.mxu0 0
  %1302 = vmatprep.subr.bf16.mxu0 0
  %1303 = vmatpush2.bf16.msra.mxu0 0
  %1304 = vmatprep.subr.bf16.mxu0 0
  %1305 = vmatpush2.bf16.msra.mxu0 0
  %1306 = vmatprep.mubr.bf16.mxu0 0
  %1307 = vmatmul.mubr.bf16.gmra.mxu0 %v1069
  %v1308 = vpop.f32.mrf.mxu0
  %v1309 = vadd.f32 %v1269, %v1308
  %v1310 = vpop.f32.mrf.mxu0
  %v1311 = vpop.f32.mrf.mxu0
  %v1312 = vpop.f32.mrf.mxu0
  %1313 = vdwg.mxu0
  %v1314 = vmax.f32 %v1188, 0.0
  %v1315 = vmax.f32 %v1190, 0.0
  %v1316 = vmax.f32 %v1309, 0.0
  %v1317 = vpack.c.bf16 %v1314, %v1314
  %v1318 = vpack.c.bf16 %v1315, %v1315
  %v1319 = vpack.c.bf16 %v1316, %v1316
  %s1320 = scalar_lea.vmem %s0, 20
  %v1321 = vld [vmem:[%s1320] sm:$0xff]
  %v1322 = vld [vmem:[%s1320 + $0x8] sm:$0xff]
  %v1323 = vld [vmem:[%s1320 + $0x10] sm:$0xf]
  %v1327 = vunpack.c.l.b16 %v1321
  %v1328 = vunpack.c.h.b16 %v1321
  %v1329 = vunpack.c.l.b16 %v1322
  %v1330 = vunpack.c.h.b16 %v1322
  %v1331 = vunpack.c.l.b16 %v1323
  %v1332 = vpack.c.b16 %v1327, %v1327
  %v1333 = vpack.c.b16 %v1328, %v1328
  %v1334 = vpack.c.b16 %v1329, %v1329
  %v1335 = vpack.c.b16 %v1330, %v1330
  %v1336 = vpack.c.b16 %v1331, %v1331
  %v1342 = vsel %vm1067, %v1336, 0
  %1344 = vmatprep.subr.bf16.mxu0 %v873
  %1345 = vmatpush1.bf16.msra.mxu0 %v872
  %1346 = vmatprep.subr.bf16.mxu0 %v870
  %1347 = vmatpush1.bf16.msra.mxu0 %v869
  %1348 = vmatprep.subr.bf16.mxu0 %v867
  %1349 = vmatpush1.bf16.msra.mxu0 %v866
  %1350 = vmatprep.subr.bf16.mxu0 %v864
  %1351 = vmatpush1.bf16.msra.mxu0 %v863
  %1352 = vmatprep.subr.bf16.mxu0 %v861
  %1353 = vmatpush1.bf16.msra.mxu0 %v860
  %1354 = vmatprep.subr.bf16.mxu0 %v858
  %1355 = vmatpush1.bf16.msra.mxu0 %v857
  %1356 = vmatprep.subr.bf16.mxu0 %v855
  %1357 = vmatpush1.bf16.msra.mxu0 %v854
  %1358 = vmatprep.subr.bf16.mxu0 %v852
  %1359 = vmatpush1.bf16.msra.mxu0 %v851
  %1360 = vmatprep.subr.bf16.mxu0 %v897
  %1361 = vmatpush2.bf16.msra.mxu0 %v896
  %1362 = vmatprep.subr.bf16.mxu0 %v894
  %1363 = vmatpush2.bf16.msra.mxu0 %v893
  %1364 = vmatprep.subr.bf16.mxu0 %v891
  %1365 = vmatpush2.bf16.msra.mxu0 %v890
  %1366 = vmatprep.subr.bf16.mxu0 %v888
  %1367 = vmatpush2.bf16.msra.mxu0 %v887
  %1368 = vmatprep.subr.bf16.mxu0 %v885
  %1369 = vmatpush2.bf16.msra.mxu0 %v884
  %1370 = vmatprep.subr.bf16.mxu0 %v882
  %1371 = vmatpush2.bf16.msra.mxu0 %v881
  %1372 = vmatprep.subr.bf16.mxu0 %v879
  %1373 = vmatpush2.bf16.msra.mxu0 %v878
  %1374 = vmatprep.subr.bf16.mxu0 %v876
  %1375 = vmatpush2.bf16.msra.mxu0 %v875
  %1376 = vmatprep.mubr.bf16.mxu0 %v1333
  %1377 = vmatmul.mubr.bf16.gmra.mxu0 %v1332
  %v1378 = vpop.f32.mrf.mxu0
  %v1379 = vadd.f32 %v462, %v1378
  %v1380 = vpop.f32.mrf.mxu0
  %v1381 = vadd.f32 %v466, %v1380
  %v1382 = vpop.f32.mrf.mxu0
  %v1383 = vpop.f32.mrf.mxu0
  %1384 = vdwg.mxu0
  %1385 = vmatprep.subr.bf16.mxu0 %v921
  %1386 = vmatpush1.bf16.msra.mxu0 %v920
  %1387 = vmatprep.subr.bf16.mxu0 %v918
  %1388 = vmatpush1.bf16.msra.mxu0 %v917
  %1389 = vmatprep.subr.bf16.mxu0 %v915
  %1390 = vmatpush1.bf16.msra.mxu0 %v914
  %1391 = vmatprep.subr.bf16.mxu0 %v912
  %1392 = vmatpush1.bf16.msra.mxu0 %v911
  %1393 = vmatprep.subr.bf16.mxu0 %v909
  %1394 = vmatpush1.bf16.msra.mxu0 %v908
  %1395 = vmatprep.subr.bf16.mxu0 %v906
  %1396 = vmatpush1.bf16.msra.mxu0 %v905
  %1397 = vmatprep.subr.bf16.mxu0 %v903
  %1398 = vmatpush1.bf16.msra.mxu0 %v902
  %1399 = vmatprep.subr.bf16.mxu0 %v900
  %1400 = vmatpush1.bf16.msra.mxu0 %v899
  %1401 = vmatprep.subr.bf16.mxu0 %v945
  %1402 = vmatpush2.bf16.msra.mxu0 %v944
  %1403 = vmatprep.subr.bf16.mxu0 %v942
  %1404 = vmatpush2.bf16.msra.mxu0 %v941
  %1405 = vmatprep.subr.bf16.mxu0 %v939
  %1406 = vmatpush2.bf16.msra.mxu0 %v938
  %1407 = vmatprep.subr.bf16.mxu0 %v936
  %1408 = vmatpush2.bf16.msra.mxu0 %v935
  %1409 = vmatprep.subr.bf16.mxu0 %v933
  %1410 = vmatpush2.bf16.msra.mxu0 %v932
  %1411 = vmatprep.subr.bf16.mxu0 %v930
  %1412 = vmatpush2.bf16.msra.mxu0 %v929
  %1413 = vmatprep.subr.bf16.mxu0 %v927
  %1414 = vmatpush2.bf16.msra.mxu0 %v926
  %1415 = vmatprep.subr.bf16.mxu0 %v924
  %1416 = vmatpush2.bf16.msra.mxu0 %v923
  %1417 = vmatprep.mubr.bf16.mxu0 %v1335
  %1418 = vmatmul.mubr.bf16.gmra.mxu0 %v1334
  %v1419 = vpop.f32.mrf.mxu0
  %v1420 = vadd.f32 %v1379, %v1419
  %v1421 = vpop.f32.mrf.mxu0
  %v1422 = vadd.f32 %v1381, %v1421
  %v1423 = vpop.f32.mrf.mxu0
  %v1424 = vpop.f32.mrf.mxu0
  %1425 = vdwg.mxu0
  %1426 = vmatprep.subr.bf16.mxu0 0
  %1427 = vmatpush1.bf16.msra.mxu0 0
  %1428 = vmatprep.subr.bf16.mxu0 0
  %1429 = vmatpush1.bf16.msra.mxu0 0
  %1430 = vmatprep.subr.bf16.mxu0 0
  %1431 = vmatpush1.bf16.msra.mxu0 0
  %1432 = vmatprep.subr.bf16.mxu0 0
  %1433 = vmatpush1.bf16.msra.mxu0 0
  %1434 = vmatprep.subr.bf16.mxu0 %v957
  %1435 = vmatpush1.bf16.msra.mxu0 %v956
  %1436 = vmatprep.subr.bf16.mxu0 %v954
  %1437 = vmatpush1.bf16.msra.mxu0 %v953
  %1438 = vmatprep.subr.bf16.mxu0 %v951
  %1439 = vmatpush1.bf16.msra.mxu0 %v950
  %1440 = vmatprep.subr.bf16.mxu0 %v948
  %1441 = vmatpush1.bf16.msra.mxu0 %v947
  %1442 = vmatprep.subr.bf16.mxu0 0
  %1443 = vmatpush2.bf16.msra.mxu0 0
  %1444 = vmatprep.subr.bf16.mxu0 0
  %1445 = vmatpush2.bf16.msra.mxu0 0
  %1446 = vmatprep.subr.bf16.mxu0 0
  %1447 = vmatpush2.bf16.msra.mxu0 0
  %1448 = vmatprep.subr.bf16.mxu0 0
  %1449 = vmatpush2.bf16.msra.mxu0 0
  %1450 = vmatprep.subr.bf16.mxu0 0
  %1451 = vmatpush2.bf16.msra.mxu0 0
  %1452 = vmatprep.subr.bf16.mxu0 0
  %1453 = vmatpush2.bf16.msra.mxu0 0
  %1454 = vmatprep.subr.bf16.mxu0 0
  %1455 = vmatpush2.bf16.msra.mxu0 0
  %1456 = vmatprep.subr.bf16.mxu0 0
  %1457 = vmatpush2.bf16.msra.mxu0 0
  %1458 = vmatprep.mubr.bf16.mxu0 0
  %1459 = vmatmul.mubr.bf16.gmra.mxu0 %v1342
  %v1460 = vpop.f32.mrf.mxu0
  %v1461 = vadd.f32 %v1420, %v1460
  %v1462 = vpop.f32.mrf.mxu0
  %v1463 = vadd.f32 %v1422, %v1462
  %v1464 = vpop.f32.mrf.mxu0
  %v1465 = vpop.f32.mrf.mxu0
  %1466 = vdwg.mxu0
  %1467 = vmatprep.subr.bf16.mxu0 0
  %1468 = vmatpush1.bf16.msra.mxu0 %v874
  %1469 = vmatprep.subr.bf16.mxu0 0
  %1470 = vmatpush1.bf16.msra.mxu0 %v871
  %1471 = vmatprep.subr.bf16.mxu0 0
  %1472 = vmatpush1.bf16.msra.mxu0 %v868
  %1473 = vmatprep.subr.bf16.mxu0 0
  %1474 = vmatpush1.bf16.msra.mxu0 %v865
  %1475 = vmatprep.subr.bf16.mxu0 0
  %1476 = vmatpush1.bf16.msra.mxu0 %v862
  %1477 = vmatprep.subr.bf16.mxu0 0
  %1478 = vmatpush1.bf16.msra.mxu0 %v859
  %1479 = vmatprep.subr.bf16.mxu0 0
  %1480 = vmatpush1.bf16.msra.mxu0 %v856
  %1481 = vmatprep.subr.bf16.mxu0 0
  %1482 = vmatpush1.bf16.msra.mxu0 %v853
  %1483 = vmatprep.subr.bf16.mxu0 0
  %1484 = vmatpush2.bf16.msra.mxu0 %v898
  %1485 = vmatprep.subr.bf16.mxu0 0
  %1486 = vmatpush2.bf16.msra.mxu0 %v895
  %1487 = vmatprep.subr.bf16.mxu0 0
  %1488 = vmatpush2.bf16.msra.mxu0 %v892
  %1489 = vmatprep.subr.bf16.mxu0 0
  %1490 = vmatpush2.bf16.msra.mxu0 %v889
  %1491 = vmatprep.subr.bf16.mxu0 0
  %1492 = vmatpush2.bf16.msra.mxu0 %v886
  %1493 = vmatprep.subr.bf16.mxu0 0
  %1494 = vmatpush2.bf16.msra.mxu0 %v883
  %1495 = vmatprep.subr.bf16.mxu0 0
  %1496 = vmatpush2.bf16.msra.mxu0 %v880
  %1497 = vmatprep.subr.bf16.mxu0 0
  %1498 = vmatpush2.bf16.msra.mxu0 %v877
  %1499 = vmatprep.mubr.bf16.mxu0 %v1333
  %1500 = vmatmul.mubr.bf16.gmra.mxu0 %v1332
  %v1501 = vpop.f32.mrf.mxu0
  %v1502 = vadd.f32 %v470, %v1501
  %v1503 = vpop.f32.mrf.mxu0
  %v1504 = vpop.f32.mrf.mxu0
  %v1505 = vpop.f32.mrf.mxu0
  %1506 = vdwg.mxu0
  %1507 = vmatprep.subr.bf16.mxu0 0
  %1508 = vmatpush1.bf16.msra.mxu0 %v922
  %1509 = vmatprep.subr.bf16.mxu0 0
  %1510 = vmatpush1.bf16.msra.mxu0 %v919
  %1511 = vmatprep.subr.bf16.mxu0 0
  %1512 = vmatpush1.bf16.msra.mxu0 %v916
  %1513 = vmatprep.subr.bf16.mxu0 0
  %1514 = vmatpush1.bf16.msra.mxu0 %v913
  %1515 = vmatprep.subr.bf16.mxu0 0
  %1516 = vmatpush1.bf16.msra.mxu0 %v910
  %1517 = vmatprep.subr.bf16.mxu0 0
  %1518 = vmatpush1.bf16.msra.mxu0 %v907
  %1519 = vmatprep.subr.bf16.mxu0 0
  %1520 = vmatpush1.bf16.msra.mxu0 %v904
  %1521 = vmatprep.subr.bf16.mxu0 0
  %1522 = vmatpush1.bf16.msra.mxu0 %v901
  %1523 = vmatprep.subr.bf16.mxu0 0
  %1524 = vmatpush2.bf16.msra.mxu0 %v946
  %1525 = vmatprep.subr.bf16.mxu0 0
  %1526 = vmatpush2.bf16.msra.mxu0 %v943
  %1527 = vmatprep.subr.bf16.mxu0 0
  %1528 = vmatpush2.bf16.msra.mxu0 %v940
  %1529 = vmatprep.subr.bf16.mxu0 0
  %1530 = vmatpush2.bf16.msra.mxu0 %v937
  %1531 = vmatprep.subr.bf16.mxu0 0
  %1532 = vmatpush2.bf16.msra.mxu0 %v934
  %1533 = vmatprep.subr.bf16.mxu0 0
  %1534 = vmatpush2.bf16.msra.mxu0 %v931
  %1535 = vmatprep.subr.bf16.mxu0 0
  %1536 = vmatpush2.bf16.msra.mxu0 %v928
  %1537 = vmatprep.subr.bf16.mxu0 0
  %1538 = vmatpush2.bf16.msra.mxu0 %v925
  %1539 = vmatprep.mubr.bf16.mxu0 %v1335
  %1540 = vmatmul.mubr.bf16.gmra.mxu0 %v1334
  %v1541 = vpop.f32.mrf.mxu0
  %v1542 = vadd.f32 %v1502, %v1541
  %v1543 = vpop.f32.mrf.mxu0
  %v1544 = vpop.f32.mrf.mxu0
  %v1545 = vpop.f32.mrf.mxu0
  %1546 = vdwg.mxu0
  %1547 = vmatprep.subr.bf16.mxu0 0
  %1548 = vmatpush1.bf16.msra.mxu0 0
  %1549 = vmatprep.subr.bf16.mxu0 0
  %1550 = vmatpush1.bf16.msra.mxu0 0
  %1551 = vmatprep.subr.bf16.mxu0 0
  %1552 = vmatpush1.bf16.msra.mxu0 0
  %1553 = vmatprep.subr.bf16.mxu0 0
  %1554 = vmatpush1.bf16.msra.mxu0 0
  %1555 = vmatprep.subr.bf16.mxu0 0
  %1556 = vmatpush1.bf16.msra.mxu0 %v958
  %1557 = vmatprep.subr.bf16.mxu0 0
  %1558 = vmatpush1.bf16.msra.mxu0 %v955
  %1559 = vmatprep.subr.bf16.mxu0 0
  %1560 = vmatpush1.bf16.msra.mxu0 %v952
  %1561 = vmatprep.subr.bf16.mxu0 0
  %1562 = vmatpush1.bf16.msra.mxu0 %v949
  %1563 = vmatprep.subr.bf16.mxu0 0
  %1564 = vmatpush2.bf16.msra.mxu0 0
  %1565 = vmatprep.subr.bf16.mxu0 0
  %1566 = vmatpush2.bf16.msra.mxu0 0
  %1567 = vmatprep.subr.bf16.mxu0 0
  %1568 = vmatpush2.bf16.msra.mxu0 0
  %1569 = vmatprep.subr.bf16.mxu0 0
  %1570 = vmatpush2.bf16.msra.mxu0 0
  %1571 = vmatprep.subr.bf16.mxu0 0
  %1572 = vmatpush2.bf16.msra.mxu0 0
  %1573 = vmatprep.subr.bf16.mxu0 0
  %1574 = vmatpush2.bf16.msra.mxu0 0
  %1575 = vmatprep.subr.bf16.mxu0 0
  %1576 = vmatpush2.bf16.msra.mxu0 0
  %1577 = vmatprep.subr.bf16.mxu0 0
  %1578 = vmatpush2.bf16.msra.mxu0 0
  %1579 = vmatprep.mubr.bf16.mxu0 0
  %1580 = vmatmul.mubr.bf16.gmra.mxu0 %v1342
  %v1581 = vpop.f32.mrf.mxu0
  %v1582 = vadd.f32 %v1542, %v1581
  %v1583 = vpop.f32.mrf.mxu0
  %v1584 = vpop.f32.mrf.mxu0
  %v1585 = vpop.f32.mrf.mxu0
  %1586 = vdwg.mxu0
  %v1587 = vmax.f32 %v1461, 0.0
  %v1588 = vmax.f32 %v1463, 0.0
  %v1589 = vmax.f32 %v1582, 0.0
  %v1590 = vpack.c.bf16 %v1587, %v1587
  %v1591 = vpack.c.bf16 %v1588, %v1588
  %v1592 = vpack.c.bf16 %v1589, %v1589
  %s1593 = scalar_lea.vmem %s0, 40
  %v1594 = vld [vmem:[%s1593] sm:$0xff]
  %v1595 = vld [vmem:[%s1593 + $0x8] sm:$0xff]
  %v1596 = vld [vmem:[%s1593 + $0x10] sm:$0xf]
  %v1600 = vunpack.c.l.b16 %v1594
  %v1601 = vunpack.c.h.b16 %v1594
  %v1602 = vunpack.c.l.b16 %v1595
  %v1603 = vunpack.c.h.b16 %v1595
  %v1604 = vunpack.c.l.b16 %v1596
  %v1605 = vpack.c.b16 %v1600, %v1600
  %v1606 = vpack.c.b16 %v1601, %v1601
  %v1607 = vpack.c.b16 %v1602, %v1602
  %v1608 = vpack.c.b16 %v1603, %v1603
  %v1609 = vpack.c.b16 %v1604, %v1604
  %v1615 = vsel %vm1067, %v1609, 0
  %1617 = vmatprep.subr.bf16.mxu0 %v873
  %1618 = vmatpush1.bf16.msra.mxu0 %v872
  %1619 = vmatprep.subr.bf16.mxu0 %v870
  %1620 = vmatpush1.bf16.msra.mxu0 %v869
  %1621 = vmatprep.subr.bf16.mxu0 %v867
  %1622 = vmatpush1.bf16.msra.mxu0 %v866
  %1623 = vmatprep.subr.bf16.mxu0 %v864
  %1624 = vmatpush1.bf16.msra.mxu0 %v863
  %1625 = vmatprep.subr.bf16.mxu0 %v861
  %1626 = vmatpush1.bf16.msra.mxu0 %v860
  %1627 = vmatprep.subr.bf16.mxu0 %v858
  %1628 = vmatpush1.bf16.msra.mxu0 %v857
  %1629 = vmatprep.subr.bf16.mxu0 %v855
  %1630 = vmatpush1.bf16.msra.mxu0 %v854
  %1631 = vmatprep.subr.bf16.mxu0 %v852
  %1632 = vmatpush1.bf16.msra.mxu0 %v851
  %1633 = vmatprep.subr.bf16.mxu0 %v897
  %1634 = vmatpush2.bf16.msra.mxu0 %v896
  %1635 = vmatprep.subr.bf16.mxu0 %v894
  %1636 = vmatpush2.bf16.msra.mxu0 %v893
  %1637 = vmatprep.subr.bf16.mxu0 %v891
  %1638 = vmatpush2.bf16.msra.mxu0 %v890
  %1639 = vmatprep.subr.bf16.mxu0 %v888
  %1640 = vmatpush2.bf16.msra.mxu0 %v887
  %1641 = vmatprep.subr.bf16.mxu0 %v885
  %1642 = vmatpush2.bf16.msra.mxu0 %v884
  %1643 = vmatprep.subr.bf16.mxu0 %v882
  %1644 = vmatpush2.bf16.msra.mxu0 %v881
  %1645 = vmatprep.subr.bf16.mxu0 %v879
  %1646 = vmatpush2.bf16.msra.mxu0 %v878
  %1647 = vmatprep.subr.bf16.mxu0 %v876
  %1648 = vmatpush2.bf16.msra.mxu0 %v875
  %1649 = vmatprep.mubr.bf16.mxu0 %v1606
  %1650 = vmatmul.mubr.bf16.gmra.mxu0 %v1605
  %v1651 = vpop.f32.mrf.mxu0
  %v1652 = vadd.f32 %v462, %v1651
  %v1653 = vpop.f32.mrf.mxu0
  %v1654 = vadd.f32 %v466, %v1653
  %v1655 = vpop.f32.mrf.mxu0
  %v1656 = vpop.f32.mrf.mxu0
  %1657 = vdwg.mxu0
  %1658 = vmatprep.subr.bf16.mxu0 %v921
  %1659 = vmatpush1.bf16.msra.mxu0 %v920
  %1660 = vmatprep.subr.bf16.mxu0 %v918
  %1661 = vmatpush1.bf16.msra.mxu0 %v917
  %1662 = vmatprep.subr.bf16.mxu0 %v915
  %1663 = vmatpush1.bf16.msra.mxu0 %v914
  %1664 = vmatprep.subr.bf16.mxu0 %v912
  %1665 = vmatpush1.bf16.msra.mxu0 %v911
  %1666 = vmatprep.subr.bf16.mxu0 %v909
  %1667 = vmatpush1.bf16.msra.mxu0 %v908
  %1668 = vmatprep.subr.bf16.mxu0 %v906
  %1669 = vmatpush1.bf16.msra.mxu0 %v905
  %1670 = vmatprep.subr.bf16.mxu0 %v903
  %1671 = vmatpush1.bf16.msra.mxu0 %v902
  %1672 = vmatprep.subr.bf16.mxu0 %v900
  %1673 = vmatpush1.bf16.msra.mxu0 %v899
  %1674 = vmatprep.subr.bf16.mxu0 %v945
  %1675 = vmatpush2.bf16.msra.mxu0 %v944
  %1676 = vmatprep.subr.bf16.mxu0 %v942
  %1677 = vmatpush2.bf16.msra.mxu0 %v941
  %1678 = vmatprep.subr.bf16.mxu0 %v939
  %1679 = vmatpush2.bf16.msra.mxu0 %v938
  %1680 = vmatprep.subr.bf16.mxu0 %v936
  %1681 = vmatpush2.bf16.msra.mxu0 %v935
  %1682 = vmatprep.subr.bf16.mxu0 %v933
  %1683 = vmatpush2.bf16.msra.mxu0 %v932
  %1684 = vmatprep.subr.bf16.mxu0 %v930
  %1685 = vmatpush2.bf16.msra.mxu0 %v929
  %1686 = vmatprep.subr.bf16.mxu0 %v927
  %1687 = vmatpush2.bf16.msra.mxu0 %v926
  %1688 = vmatprep.subr.bf16.mxu0 %v924
  %1689 = vmatpush2.bf16.msra.mxu0 %v923
  %1690 = vmatprep.mubr.bf16.mxu0 %v1608
  %1691 = vmatmul.mubr.bf16.gmra.mxu0 %v1607
  %v1692 = vpop.f32.mrf.mxu0
  %v1693 = vadd.f32 %v1652, %v1692
  %v1694 = vpop.f32.mrf.mxu0
  %v1695 = vadd.f32 %v1654, %v1694
  %v1696 = vpop.f32.mrf.mxu0
  %v1697 = vpop.f32.mrf.mxu0
  %1698 = vdwg.mxu0
  %1699 = vmatprep.subr.bf16.mxu0 0
  %1700 = vmatpush1.bf16.msra.mxu0 0
  %1701 = vmatprep.subr.bf16.mxu0 0
  %1702 = vmatpush1.bf16.msra.mxu0 0
  %1703 = vmatprep.subr.bf16.mxu0 0
  %1704 = vmatpush1.bf16.msra.mxu0 0
  %1705 = vmatprep.subr.bf16.mxu0 0
  %1706 = vmatpush1.bf16.msra.mxu0 0
  %1707 = vmatprep.subr.bf16.mxu0 %v957
  %1708 = vmatpush1.bf16.msra.mxu0 %v956
  %1709 = vmatprep.subr.bf16.mxu0 %v954
  %1710 = vmatpush1.bf16.msra.mxu0 %v953
  %1711 = vmatprep.subr.bf16.mxu0 %v951
  %1712 = vmatpush1.bf16.msra.mxu0 %v950
  %1713 = vmatprep.subr.bf16.mxu0 %v948
  %1714 = vmatpush1.bf16.msra.mxu0 %v947
  %1715 = vmatprep.subr.bf16.mxu0 0
  %1716 = vmatpush2.bf16.msra.mxu0 0
  %1717 = vmatprep.subr.bf16.mxu0 0
  %1718 = vmatpush2.bf16.msra.mxu0 0
  %1719 = vmatprep.subr.bf16.mxu0 0
  %1720 = vmatpush2.bf16.msra.mxu0 0
  %1721 = vmatprep.subr.bf16.mxu0 0
  %1722 = vmatpush2.bf16.msra.mxu0 0
  %1723 = vmatprep.subr.bf16.mxu0 0
  %1724 = vmatpush2.bf16.msra.mxu0 0
  %1725 = vmatprep.subr.bf16.mxu0 0
  %1726 = vmatpush2.bf16.msra.mxu0 0
  %1727 = vmatprep.subr.bf16.mxu0 0
  %1728 = vmatpush2.bf16.msra.mxu0 0
  %1729 = vmatprep.subr.bf16.mxu0 0
  %1730 = vmatpush2.bf16.msra.mxu0 0
  %1731 = vmatprep.mubr.bf16.mxu0 0
  %1732 = vmatmul.mubr.bf16.gmra.mxu0 %v1615
  %v1733 = vpop.f32.mrf.mxu0
  %v1734 = vadd.f32 %v1693, %v1733
  %v1735 = vpop.f32.mrf.mxu0
  %v1736 = vadd.f32 %v1695, %v1735
  %v1737 = vpop.f32.mrf.mxu0
  %v1738 = vpop.f32.mrf.mxu0
  %1739 = vdwg.mxu0
  %1740 = vmatprep.subr.bf16.mxu0 0
  %1741 = vmatpush1.bf16.msra.mxu0 %v874
  %1742 = vmatprep.subr.bf16.mxu0 0
  %1743 = vmatpush1.bf16.msra.mxu0 %v871
  %1744 = vmatprep.subr.bf16.mxu0 0
  %1745 = vmatpush1.bf16.msra.mxu0 %v868
  %1746 = vmatprep.subr.bf16.mxu0 0
  %1747 = vmatpush1.bf16.msra.mxu0 %v865
  %1748 = vmatprep.subr.bf16.mxu0 0
  %1749 = vmatpush1.bf16.msra.mxu0 %v862
  %1750 = vmatprep.subr.bf16.mxu0 0
  %1751 = vmatpush1.bf16.msra.mxu0 %v859
  %1752 = vmatprep.subr.bf16.mxu0 0
  %1753 = vmatpush1.bf16.msra.mxu0 %v856
  %1754 = vmatprep.subr.bf16.mxu0 0
  %1755 = vmatpush1.bf16.msra.mxu0 %v853
  %1756 = vmatprep.subr.bf16.mxu0 0
  %1757 = vmatpush2.bf16.msra.mxu0 %v898
  %1758 = vmatprep.subr.bf16.mxu0 0
  %1759 = vmatpush2.bf16.msra.mxu0 %v895
  %1760 = vmatprep.subr.bf16.mxu0 0
  %1761 = vmatpush2.bf16.msra.mxu0 %v892
  %1762 = vmatprep.subr.bf16.mxu0 0
  %1763 = vmatpush2.bf16.msra.mxu0 %v889
  %1764 = vmatprep.subr.bf16.mxu0 0
  %1765 = vmatpush2.bf16.msra.mxu0 %v886
  %1766 = vmatprep.subr.bf16.mxu0 0
  %1767 = vmatpush2.bf16.msra.mxu0 %v883
  %1768 = vmatprep.subr.bf16.mxu0 0
  %1769 = vmatpush2.bf16.msra.mxu0 %v880
  %1770 = vmatprep.subr.bf16.mxu0 0
  %1771 = vmatpush2.bf16.msra.mxu0 %v877
  %1772 = vmatprep.mubr.bf16.mxu0 %v1606
  %1773 = vmatmul.mubr.bf16.gmra.mxu0 %v1605
  %v1774 = vpop.f32.mrf.mxu0
  %v1775 = vadd.f32 %v470, %v1774
  %v1776 = vpop.f32.mrf.mxu0
  %v1777 = vpop.f32.mrf.mxu0
  %v1778 = vpop.f32.mrf.mxu0
  %1779 = vdwg.mxu0
  %1780 = vmatprep.subr.bf16.mxu0 0
  %1781 = vmatpush1.bf16.msra.mxu0 %v922
  %1782 = vmatprep.subr.bf16.mxu0 0
  %1783 = vmatpush1.bf16.msra.mxu0 %v919
  %1784 = vmatprep.subr.bf16.mxu0 0
  %1785 = vmatpush1.bf16.msra.mxu0 %v916
  %1786 = vmatprep.subr.bf16.mxu0 0
  %1787 = vmatpush1.bf16.msra.mxu0 %v913
  %1788 = vmatprep.subr.bf16.mxu0 0
  %1789 = vmatpush1.bf16.msra.mxu0 %v910
  %1790 = vmatprep.subr.bf16.mxu0 0
  %1791 = vmatpush1.bf16.msra.mxu0 %v907
  %1792 = vmatprep.subr.bf16.mxu0 0
  %1793 = vmatpush1.bf16.msra.mxu0 %v904
  %1794 = vmatprep.subr.bf16.mxu0 0
  %1795 = vmatpush1.bf16.msra.mxu0 %v901
  %1796 = vmatprep.subr.bf16.mxu0 0
  %1797 = vmatpush2.bf16.msra.mxu0 %v946
  %1798 = vmatprep.subr.bf16.mxu0 0
  %1799 = vmatpush2.bf16.msra.mxu0 %v943
  %1800 = vmatprep.subr.bf16.mxu0 0
  %1801 = vmatpush2.bf16.msra.mxu0 %v940
  %1802 = vmatprep.subr.bf16.mxu0 0
  %1803 = vmatpush2.bf16.msra.mxu0 %v937
  %1804 = vmatprep.subr.bf16.mxu0 0
  %1805 = vmatpush2.bf16.msra.mxu0 %v934
  %1806 = vmatprep.subr.bf16.mxu0 0
  %1807 = vmatpush2.bf16.msra.mxu0 %v931
  %1808 = vmatprep.subr.bf16.mxu0 0
  %1809 = vmatpush2.bf16.msra.mxu0 %v928
  %1810 = vmatprep.subr.bf16.mxu0 0
  %1811 = vmatpush2.bf16.msra.mxu0 %v925
  %1812 = vmatprep.mubr.bf16.mxu0 %v1608
  %1813 = vmatmul.mubr.bf16.gmra.mxu0 %v1607
  %v1814 = vpop.f32.mrf.mxu0
  %v1815 = vadd.f32 %v1775, %v1814
  %v1816 = vpop.f32.mrf.mxu0
  %v1817 = vpop.f32.mrf.mxu0
  %v1818 = vpop.f32.mrf.mxu0
  %1819 = vdwg.mxu0
  %1820 = vmatprep.subr.bf16.mxu0 0
  %1821 = vmatpush1.bf16.msra.mxu0 0
  %1822 = vmatprep.subr.bf16.mxu0 0
  %1823 = vmatpush1.bf16.msra.mxu0 0
  %1824 = vmatprep.subr.bf16.mxu0 0
  %1825 = vmatpush1.bf16.msra.mxu0 0
  %1826 = vmatprep.subr.bf16.mxu0 0
  %1827 = vmatpush1.bf16.msra.mxu0 0
  %1828 = vmatprep.subr.bf16.mxu0 0
  %1829 = vmatpush1.bf16.msra.mxu0 %v958
  %1830 = vmatprep.subr.bf16.mxu0 0
  %1831 = vmatpush1.bf16.msra.mxu0 %v955
  %1832 = vmatprep.subr.bf16.mxu0 0
  %1833 = vmatpush1.bf16.msra.mxu0 %v952
  %1834 = vmatprep.subr.bf16.mxu0 0
  %1835 = vmatpush1.bf16.msra.mxu0 %v949
  %1836 = vmatprep.subr.bf16.mxu0 0
  %1837 = vmatpush2.bf16.msra.mxu0 0
  %1838 = vmatprep.subr.bf16.mxu0 0
  %1839 = vmatpush2.bf16.msra.mxu0 0
  %1840 = vmatprep.subr.bf16.mxu0 0
  %1841 = vmatpush2.bf16.msra.mxu0 0
  %1842 = vmatprep.subr.bf16.mxu0 0
  %1843 = vmatpush2.bf16.msra.mxu0 0
  %1844 = vmatprep.subr.bf16.mxu0 0
  %1845 = vmatpush2.bf16.msra.mxu0 0
  %1846 = vmatprep.subr.bf16.mxu0 0
  %1847 = vmatpush2.bf16.msra.mxu0 0
  %1848 = vmatprep.subr.bf16.mxu0 0
  %1849 = vmatpush2.bf16.msra.mxu0 0
  %1850 = vmatprep.subr.bf16.mxu0 0
  %1851 = vmatpush2.bf16.msra.mxu0 0
  %1852 = vmatprep.mubr.bf16.mxu0 0
  %1853 = vmatmul.mubr.bf16.gmra.mxu0 %v1615
  %v1854 = vpop.f32.mrf.mxu0
  %v1855 = vadd.f32 %v1815, %v1854
  %v1856 = vpop.f32.mrf.mxu0
  %v1857 = vpop.f32.mrf.mxu0
  %v1858 = vpop.f32.mrf.mxu0
  %1859 = vdwg.mxu0
  %v1860 = vmax.f32 %v1734, 0.0
  %v1861 = vmax.f32 %v1736, 0.0
  %v1862 = vmax.f32 %v1855, 0.0
  %v1863 = vpack.c.bf16 %v1860, %v1860
  %v1864 = vpack.c.bf16 %v1861, %v1861
  %v1865 = vpack.c.bf16 %v1862, %v1862
  %s1866 = scalar_lea.vmem %s0, 60
  %v1867 = vld [vmem:[%s1866] sm:$0xff]
  %v1868 = vld [vmem:[%s1866 + $0x8] sm:$0xff]
  %v1869 = vld [vmem:[%s1866 + $0x10] sm:$0xf]
  %v1873 = vunpack.c.l.b16 %v1867
  %v1874 = vunpack.c.h.b16 %v1867
  %v1875 = vunpack.c.l.b16 %v1868
  %v1876 = vunpack.c.h.b16 %v1868
  %v1877 = vunpack.c.l.b16 %v1869
  %v1878 = vpack.c.b16 %v1873, %v1873
  %v1879 = vpack.c.b16 %v1874, %v1874
  %v1880 = vpack.c.b16 %v1875, %v1875
  %v1881 = vpack.c.b16 %v1876, %v1876
  %v1882 = vpack.c.b16 %v1877, %v1877
  %v1888 = vsel %vm1067, %v1882, 0
  %1890 = vmatprep.subr.bf16.mxu0 %v873
  %1891 = vmatpush1.bf16.msra.mxu0 %v872
  %1892 = vmatprep.subr.bf16.mxu0 %v870
  %1893 = vmatpush1.bf16.msra.mxu0 %v869
  %1894 = vmatprep.subr.bf16.mxu0 %v867
  %1895 = vmatpush1.bf16.msra.mxu0 %v866
  %1896 = vmatprep.subr.bf16.mxu0 %v864
  %1897 = vmatpush1.bf16.msra.mxu0 %v863
  %1898 = vmatprep.subr.bf16.mxu0 %v861
  %1899 = vmatpush1.bf16.msra.mxu0 %v860
  %1900 = vmatprep.subr.bf16.mxu0 %v858
  %1901 = vmatpush1.bf16.msra.mxu0 %v857
  %1902 = vmatprep.subr.bf16.mxu0 %v855
  %1903 = vmatpush1.bf16.msra.mxu0 %v854
  %1904 = vmatprep.subr.bf16.mxu0 %v852
  %1905 = vmatpush1.bf16.msra.mxu0 %v851
  %1906 = vmatprep.subr.bf16.mxu0 %v897
  %1907 = vmatpush2.bf16.msra.mxu0 %v896
  %1908 = vmatprep.subr.bf16.mxu0 %v894
  %1909 = vmatpush2.bf16.msra.mxu0 %v893
  %1910 = vmatprep.subr.bf16.mxu0 %v891
  %1911 = vmatpush2.bf16.msra.mxu0 %v890
  %1912 = vmatprep.subr.bf16.mxu0 %v888
  %1913 = vmatpush2.bf16.msra.mxu0 %v887
  %1914 = vmatprep.subr.bf16.mxu0 %v885
  %1915 = vmatpush2.bf16.msra.mxu0 %v884
  %1916 = vmatprep.subr.bf16.mxu0 %v882
  %1917 = vmatpush2.bf16.msra.mxu0 %v881
  %1918 = vmatprep.subr.bf16.mxu0 %v879
  %1919 = vmatpush2.bf16.msra.mxu0 %v878
  %1920 = vmatprep.subr.bf16.mxu0 %v876
  %1921 = vmatpush2.bf16.msra.mxu0 %v875
  %1922 = vmatprep.mubr.bf16.mxu0 %v1879
  %1923 = vmatmul.mubr.bf16.gmra.mxu0 %v1878
  %v1924 = vpop.f32.mrf.mxu0
  %v1925 = vadd.f32 %v462, %v1924
  %v1926 = vpop.f32.mrf.mxu0
  %v1927 = vadd.f32 %v466, %v1926
  %v1928 = vpop.f32.mrf.mxu0
  %v1929 = vpop.f32.mrf.mxu0
  %1930 = vdwg.mxu0
  %1931 = vmatprep.subr.bf16.mxu0 %v921
  %1932 = vmatpush1.bf16.msra.mxu0 %v920
  %1933 = vmatprep.subr.bf16.mxu0 %v918
  %1934 = vmatpush1.bf16.msra.mxu0 %v917
  %1935 = vmatprep.subr.bf16.mxu0 %v915
  %1936 = vmatpush1.bf16.msra.mxu0 %v914
  %1937 = vmatprep.subr.bf16.mxu0 %v912
  %1938 = vmatpush1.bf16.msra.mxu0 %v911
  %1939 = vmatprep.subr.bf16.mxu0 %v909
  %1940 = vmatpush1.bf16.msra.mxu0 %v908
  %1941 = vmatprep.subr.bf16.mxu0 %v906
  %1942 = vmatpush1.bf16.msra.mxu0 %v905
  %1943 = vmatprep.subr.bf16.mxu0 %v903
  %1944 = vmatpush1.bf16.msra.mxu0 %v902
  %1945 = vmatprep.subr.bf16.mxu0 %v900
  %1946 = vmatpush1.bf16.msra.mxu0 %v899
  %1947 = vmatprep.subr.bf16.mxu0 %v945
  %1948 = vmatpush2.bf16.msra.mxu0 %v944
  %1949 = vmatprep.subr.bf16.mxu0 %v942
  %1950 = vmatpush2.bf16.msra.mxu0 %v941
  %1951 = vmatprep.subr.bf16.mxu0 %v939
  %1952 = vmatpush2.bf16.msra.mxu0 %v938
  %1953 = vmatprep.subr.bf16.mxu0 %v936
  %1954 = vmatpush2.bf16.msra.mxu0 %v935
  %1955 = vmatprep.subr.bf16.mxu0 %v933
  %1956 = vmatpush2.bf16.msra.mxu0 %v932
  %1957 = vmatprep.subr.bf16.mxu0 %v930
  %1958 = vmatpush2.bf16.msra.mxu0 %v929
  %1959 = vmatprep.subr.bf16.mxu0 %v927
  %1960 = vmatpush2.bf16.msra.mxu0 %v926
  %1961 = vmatprep.subr.bf16.mxu0 %v924
  %1962 = vmatpush2.bf16.msra.mxu0 %v923
  %1963 = vmatprep.mubr.bf16.mxu0 %v1881
  %1964 = vmatmul.mubr.bf16.gmra.mxu0 %v1880
  %v1965 = vpop.f32.mrf.mxu0
  %v1966 = vadd.f32 %v1925, %v1965
  %v1967 = vpop.f32.mrf.mxu0
  %v1968 = vadd.f32 %v1927, %v1967
  %v1969 = vpop.f32.mrf.mxu0
  %v1970 = vpop.f32.mrf.mxu0
  %1971 = vdwg.mxu0
  %1972 = vmatprep.subr.bf16.mxu0 0
  %1973 = vmatpush1.bf16.msra.mxu0 0
  %1974 = vmatprep.subr.bf16.mxu0 0
  %1975 = vmatpush1.bf16.msra.mxu0 0
  %1976 = vmatprep.subr.bf16.mxu0 0
  %1977 = vmatpush1.bf16.msra.mxu0 0
  %1978 = vmatprep.subr.bf16.mxu0 0
  %1979 = vmatpush1.bf16.msra.mxu0 0
  %1980 = vmatprep.subr.bf16.mxu0 %v957
  %1981 = vmatpush1.bf16.msra.mxu0 %v956
  %1982 = vmatprep.subr.bf16.mxu0 %v954
  %1983 = vmatpush1.bf16.msra.mxu0 %v953
  %1984 = vmatprep.subr.bf16.mxu0 %v951
  %1985 = vmatpush1.bf16.msra.mxu0 %v950
  %1986 = vmatprep.subr.bf16.mxu0 %v948
  %1987 = vmatpush1.bf16.msra.mxu0 %v947
  %1988 = vmatprep.subr.bf16.mxu0 0
  %1989 = vmatpush2.bf16.msra.mxu0 0
  %1990 = vmatprep.subr.bf16.mxu0 0
  %1991 = vmatpush2.bf16.msra.mxu0 0
  %1992 = vmatprep.subr.bf16.mxu0 0
  %1993 = vmatpush2.bf16.msra.mxu0 0
  %1994 = vmatprep.subr.bf16.mxu0 0
  %1995 = vmatpush2.bf16.msra.mxu0 0
  %1996 = vmatprep.subr.bf16.mxu0 0
  %1997 = vmatpush2.bf16.msra.mxu0 0
  %1998 = vmatprep.subr.bf16.mxu0 0
  %1999 = vmatpush2.bf16.msra.mxu0 0
  %2000 = vmatprep.subr.bf16.mxu0 0
  %2001 = vmatpush2.bf16.msra.mxu0 0
  %2002 = vmatprep.subr.bf16.mxu0 0
  %2003 = vmatpush2.bf16.msra.mxu0 0
  %2004 = vmatprep.mubr.bf16.mxu0 0
  %2005 = vmatmul.mubr.bf16.gmra.mxu0 %v1888
  %v2006 = vpop.f32.mrf.mxu0
  %v2007 = vadd.f32 %v1966, %v2006
  %v2008 = vpop.f32.mrf.mxu0
  %v2009 = vadd.f32 %v1968, %v2008
  %v2010 = vpop.f32.mrf.mxu0
  %v2011 = vpop.f32.mrf.mxu0
  %2012 = vdwg.mxu0
  %2013 = vmatprep.subr.bf16.mxu0 0
  %2014 = vmatpush1.bf16.msra.mxu0 %v874
  %2015 = vmatprep.subr.bf16.mxu0 0
  %2016 = vmatpush1.bf16.msra.mxu0 %v871
  %2017 = vmatprep.subr.bf16.mxu0 0
  %2018 = vmatpush1.bf16.msra.mxu0 %v868
  %2019 = vmatprep.subr.bf16.mxu0 0
  %2020 = vmatpush1.bf16.msra.mxu0 %v865
  %2021 = vmatprep.subr.bf16.mxu0 0
  %2022 = vmatpush1.bf16.msra.mxu0 %v862
  %2023 = vmatprep.subr.bf16.mxu0 0
  %2024 = vmatpush1.bf16.msra.mxu0 %v859
  %2025 = vmatprep.subr.bf16.mxu0 0
  %2026 = vmatpush1.bf16.msra.mxu0 %v856
  %2027 = vmatprep.subr.bf16.mxu0 0
  %2028 = vmatpush1.bf16.msra.mxu0 %v853
  %2029 = vmatprep.subr.bf16.mxu0 0
  %2030 = vmatpush2.bf16.msra.mxu0 %v898
  %2031 = vmatprep.subr.bf16.mxu0 0
  %2032 = vmatpush2.bf16.msra.mxu0 %v895
  %2033 = vmatprep.subr.bf16.mxu0 0
  %2034 = vmatpush2.bf16.msra.mxu0 %v892
  %2035 = vmatprep.subr.bf16.mxu0 0
  %2036 = vmatpush2.bf16.msra.mxu0 %v889
  %2037 = vmatprep.subr.bf16.mxu0 0
  %2038 = vmatpush2.bf16.msra.mxu0 %v886
  %2039 = vmatprep.subr.bf16.mxu0 0
  %2040 = vmatpush2.bf16.msra.mxu0 %v883
  %2041 = vmatprep.subr.bf16.mxu0 0
  %2042 = vmatpush2.bf16.msra.mxu0 %v880
  %2043 = vmatprep.subr.bf16.mxu0 0
  %2044 = vmatpush2.bf16.msra.mxu0 %v877
  %2045 = vmatprep.mubr.bf16.mxu0 %v1879
  %2046 = vmatmul.mubr.bf16.gmra.mxu0 %v1878
  %v2047 = vpop.f32.mrf.mxu0
  %v2048 = vadd.f32 %v470, %v2047
  %v2049 = vpop.f32.mrf.mxu0
  %v2050 = vpop.f32.mrf.mxu0
  %v2051 = vpop.f32.mrf.mxu0
  %2052 = vdwg.mxu0
  %2053 = vmatprep.subr.bf16.mxu0 0
  %2054 = vmatpush1.bf16.msra.mxu0 %v922
  %2055 = vmatprep.subr.bf16.mxu0 0
  %2056 = vmatpush1.bf16.msra.mxu0 %v919
  %2057 = vmatprep.subr.bf16.mxu0 0
  %2058 = vmatpush1.bf16.msra.mxu0 %v916
  %2059 = vmatprep.subr.bf16.mxu0 0
  %2060 = vmatpush1.bf16.msra.mxu0 %v913
  %2061 = vmatprep.subr.bf16.mxu0 0
  %2062 = vmatpush1.bf16.msra.mxu0 %v910
  %2063 = vmatprep.subr.bf16.mxu0 0
  %2064 = vmatpush1.bf16.msra.mxu0 %v907
  %2065 = vmatprep.subr.bf16.mxu0 0
  %2066 = vmatpush1.bf16.msra.mxu0 %v904
  %2067 = vmatprep.subr.bf16.mxu0 0
  %2068 = vmatpush1.bf16.msra.mxu0 %v901
  %2069 = vmatprep.subr.bf16.mxu0 0
  %2070 = vmatpush2.bf16.msra.mxu0 %v946
  %2071 = vmatprep.subr.bf16.mxu0 0
  %2072 = vmatpush2.bf16.msra.mxu0 %v943
  %2073 = vmatprep.subr.bf16.mxu0 0
  %2074 = vmatpush2.bf16.msra.mxu0 %v940
  %2075 = vmatprep.subr.bf16.mxu0 0
  %2076 = vmatpush2.bf16.msra.mxu0 %v937
  %2077 = vmatprep.subr.bf16.mxu0 0
  %2078 = vmatpush2.bf16.msra.mxu0 %v934
  %2079 = vmatprep.subr.bf16.mxu0 0
  %2080 = vmatpush2.bf16.msra.mxu0 %v931
  %2081 = vmatprep.subr.bf16.mxu0 0
  %2082 = vmatpush2.bf16.msra.mxu0 %v928
  %2083 = vmatprep.subr.bf16.mxu0 0
  %2084 = vmatpush2.bf16.msra.mxu0 %v925
  %2085 = vmatprep.mubr.bf16.mxu0 %v1881
  %2086 = vmatmul.mubr.bf16.gmra.mxu0 %v1880
  %v2087 = vpop.f32.mrf.mxu0
  %v2088 = vadd.f32 %v2048, %v2087
  %v2089 = vpop.f32.mrf.mxu0
  %v2090 = vpop.f32.mrf.mxu0
  %v2091 = vpop.f32.mrf.mxu0
  %2092 = vdwg.mxu0
  %2093 = vmatprep.subr.bf16.mxu0 0
  %2094 = vmatpush1.bf16.msra.mxu0 0
  %2095 = vmatprep.subr.bf16.mxu0 0
  %2096 = vmatpush1.bf16.msra.mxu0 0
  %2097 = vmatprep.subr.bf16.mxu0 0
  %2098 = vmatpush1.bf16.msra.mxu0 0
  %2099 = vmatprep.subr.bf16.mxu0 0
  %2100 = vmatpush1.bf16.msra.mxu0 0
  %2101 = vmatprep.subr.bf16.mxu0 0
  %2102 = vmatpush1.bf16.msra.mxu0 %v958
  %2103 = vmatprep.subr.bf16.mxu0 0
  %2104 = vmatpush1.bf16.msra.mxu0 %v955
  %2105 = vmatprep.subr.bf16.mxu0 0
  %2106 = vmatpush1.bf16.msra.mxu0 %v952
  %2107 = vmatprep.subr.bf16.mxu0 0
  %2108 = vmatpush1.bf16.msra.mxu0 %v949
  %2109 = vmatprep.subr.bf16.mxu0 0
  %2110 = vmatpush2.bf16.msra.mxu0 0
  %2111 = vmatprep.subr.bf16.mxu0 0
  %2112 = vmatpush2.bf16.msra.mxu0 0
  %2113 = vmatprep.subr.bf16.mxu0 0
  %2114 = vmatpush2.bf16.msra.mxu0 0
  %2115 = vmatprep.subr.bf16.mxu0 0
  %2116 = vmatpush2.bf16.msra.mxu0 0
  %2117 = vmatprep.subr.bf16.mxu0 0
  %2118 = vmatpush2.bf16.msra.mxu0 0
  %2119 = vmatprep.subr.bf16.mxu0 0
  %2120 = vmatpush2.bf16.msra.mxu0 0
  %2121 = vmatprep.subr.bf16.mxu0 0
  %2122 = vmatpush2.bf16.msra.mxu0 0
  %2123 = vmatprep.subr.bf16.mxu0 0
  %2124 = vmatpush2.bf16.msra.mxu0 0
  %2125 = vmatprep.mubr.bf16.mxu0 0
  %2126 = vmatmul.mubr.bf16.gmra.mxu0 %v1888
  %v2127 = vpop.f32.mrf.mxu0
  %v2128 = vadd.f32 %v2088, %v2127
  %v2129 = vpop.f32.mrf.mxu0
  %v2130 = vpop.f32.mrf.mxu0
  %v2131 = vpop.f32.mrf.mxu0
  %2132 = vdwg.mxu0
  %v2133 = vmax.f32 %v2007, 0.0
  %v2134 = vmax.f32 %v2009, 0.0
  %v2135 = vmax.f32 %v2128, 0.0
  %v2136 = vpack.c.bf16 %v2133, %v2133
  %v2137 = vpack.c.bf16 %v2134, %v2134
  %v2138 = vpack.c.bf16 %v2135, %v2135
  %s2139 = scalar_lea.vmem %s0, 80
  %v2140 = vld [vmem:[%s2139] sm:$0xff]
  %v2141 = vld [vmem:[%s2139 + $0x8] sm:$0xff]
  %v2142 = vld [vmem:[%s2139 + $0x10] sm:$0xf]
  %v2146 = vunpack.c.l.b16 %v2140
  %v2147 = vunpack.c.h.b16 %v2140
  %v2148 = vunpack.c.l.b16 %v2141
  %v2149 = vunpack.c.h.b16 %v2141
  %v2150 = vunpack.c.l.b16 %v2142
  %v2151 = vpack.c.b16 %v2146, %v2146
  %v2152 = vpack.c.b16 %v2147, %v2147
  %v2153 = vpack.c.b16 %v2148, %v2148
  %v2154 = vpack.c.b16 %v2149, %v2149
  %v2155 = vpack.c.b16 %v2150, %v2150
  %v2161 = vsel %vm1067, %v2155, 0
  %2163 = vmatprep.subr.bf16.mxu0 %v873
  %2164 = vmatpush1.bf16.msra.mxu0 %v872
  %2165 = vmatprep.subr.bf16.mxu0 %v870
  %2166 = vmatpush1.bf16.msra.mxu0 %v869
  %2167 = vmatprep.subr.bf16.mxu0 %v867
  %2168 = vmatpush1.bf16.msra.mxu0 %v866
  %2169 = vmatprep.subr.bf16.mxu0 %v864
  %2170 = vmatpush1.bf16.msra.mxu0 %v863
  %2171 = vmatprep.subr.bf16.mxu0 %v861
  %2172 = vmatpush1.bf16.msra.mxu0 %v860
  %2173 = vmatprep.subr.bf16.mxu0 %v858
  %2174 = vmatpush1.bf16.msra.mxu0 %v857
  %2175 = vmatprep.subr.bf16.mxu0 %v855
  %2176 = vmatpush1.bf16.msra.mxu0 %v854
  %2177 = vmatprep.subr.bf16.mxu0 %v852
  %2178 = vmatpush1.bf16.msra.mxu0 %v851
  %2179 = vmatprep.subr.bf16.mxu0 %v897
  %2180 = vmatpush2.bf16.msra.mxu0 %v896
  %2181 = vmatprep.subr.bf16.mxu0 %v894
  %2182 = vmatpush2.bf16.msra.mxu0 %v893
  %2183 = vmatprep.subr.bf16.mxu0 %v891
  %2184 = vmatpush2.bf16.msra.mxu0 %v890
  %2185 = vmatprep.subr.bf16.mxu0 %v888
  %2186 = vmatpush2.bf16.msra.mxu0 %v887
  %2187 = vmatprep.subr.bf16.mxu0 %v885
  %2188 = vmatpush2.bf16.msra.mxu0 %v884
  %2189 = vmatprep.subr.bf16.mxu0 %v882
  %2190 = vmatpush2.bf16.msra.mxu0 %v881
  %2191 = vmatprep.subr.bf16.mxu0 %v879
  %2192 = vmatpush2.bf16.msra.mxu0 %v878
  %2193 = vmatprep.subr.bf16.mxu0 %v876
  %2194 = vmatpush2.bf16.msra.mxu0 %v875
  %2195 = vmatprep.mubr.bf16.mxu0 %v2152
  %2196 = vmatmul.mubr.bf16.gmra.mxu0 %v2151
  %v2197 = vpop.f32.mrf.mxu0
  %v2198 = vadd.f32 %v462, %v2197
  %v2199 = vpop.f32.mrf.mxu0
  %v2200 = vadd.f32 %v466, %v2199
  %v2201 = vpop.f32.mrf.mxu0
  %v2202 = vpop.f32.mrf.mxu0
  %2203 = vdwg.mxu0
  %2204 = vmatprep.subr.bf16.mxu0 %v921
  %2205 = vmatpush1.bf16.msra.mxu0 %v920
  %2206 = vmatprep.subr.bf16.mxu0 %v918
  %2207 = vmatpush1.bf16.msra.mxu0 %v917
  %2208 = vmatprep.subr.bf16.mxu0 %v915
  %2209 = vmatpush1.bf16.msra.mxu0 %v914
  %2210 = vmatprep.subr.bf16.mxu0 %v912
  %2211 = vmatpush1.bf16.msra.mxu0 %v911
  %2212 = vmatprep.subr.bf16.mxu0 %v909
  %2213 = vmatpush1.bf16.msra.mxu0 %v908
  %2214 = vmatprep.subr.bf16.mxu0 %v906
  %2215 = vmatpush1.bf16.msra.mxu0 %v905
  %2216 = vmatprep.subr.bf16.mxu0 %v903
  %2217 = vmatpush1.bf16.msra.mxu0 %v902
  %2218 = vmatprep.subr.bf16.mxu0 %v900
  %2219 = vmatpush1.bf16.msra.mxu0 %v899
  %2220 = vmatprep.subr.bf16.mxu0 %v945
  %2221 = vmatpush2.bf16.msra.mxu0 %v944
  %2222 = vmatprep.subr.bf16.mxu0 %v942
  %2223 = vmatpush2.bf16.msra.mxu0 %v941
  %2224 = vmatprep.subr.bf16.mxu0 %v939
  %2225 = vmatpush2.bf16.msra.mxu0 %v938
  %2226 = vmatprep.subr.bf16.mxu0 %v936
  %2227 = vmatpush2.bf16.msra.mxu0 %v935
  %2228 = vmatprep.subr.bf16.mxu0 %v933
  %2229 = vmatpush2.bf16.msra.mxu0 %v932
  %2230 = vmatprep.subr.bf16.mxu0 %v930
  %2231 = vmatpush2.bf16.msra.mxu0 %v929
  %2232 = vmatprep.subr.bf16.mxu0 %v927
  %2233 = vmatpush2.bf16.msra.mxu0 %v926
  %2234 = vmatprep.subr.bf16.mxu0 %v924
  %2235 = vmatpush2.bf16.msra.mxu0 %v923
  %2236 = vmatprep.mubr.bf16.mxu0 %v2154
  %2237 = vmatmul.mubr.bf16.gmra.mxu0 %v2153
  %v2238 = vpop.f32.mrf.mxu0
  %v2239 = vadd.f32 %v2198, %v2238
  %v2240 = vpop.f32.mrf.mxu0
  %v2241 = vadd.f32 %v2200, %v2240
  %v2242 = vpop.f32.mrf.mxu0
  %v2243 = vpop.f32.mrf.mxu0
  %2244 = vdwg.mxu0
  %2245 = vmatprep.subr.bf16.mxu0 0
  %2246 = vmatpush1.bf16.msra.mxu0 0
  %2247 = vmatprep.subr.bf16.mxu0 0
  %2248 = vmatpush1.bf16.msra.mxu0 0
  %2249 = vmatprep.subr.bf16.mxu0 0
  %2250 = vmatpush1.bf16.msra.mxu0 0
  %2251 = vmatprep.subr.bf16.mxu0 0
  %2252 = vmatpush1.bf16.msra.mxu0 0
  %2253 = vmatprep.subr.bf16.mxu0 %v957
  %2254 = vmatpush1.bf16.msra.mxu0 %v956
  %2255 = vmatprep.subr.bf16.mxu0 %v954
  %2256 = vmatpush1.bf16.msra.mxu0 %v953
  %2257 = vmatprep.subr.bf16.mxu0 %v951
  %2258 = vmatpush1.bf16.msra.mxu0 %v950
  %2259 = vmatprep.subr.bf16.mxu0 %v948
  %2260 = vmatpush1.bf16.msra.mxu0 %v947
  %2261 = vmatprep.subr.bf16.mxu0 0
  %2262 = vmatpush2.bf16.msra.mxu0 0
  %2263 = vmatprep.subr.bf16.mxu0 0
  %2264 = vmatpush2.bf16.msra.mxu0 0
  %2265 = vmatprep.subr.bf16.mxu0 0
  %2266 = vmatpush2.bf16.msra.mxu0 0
  %2267 = vmatprep.subr.bf16.mxu0 0
  %2268 = vmatpush2.bf16.msra.mxu0 0
  %2269 = vmatprep.subr.bf16.mxu0 0
  %2270 = vmatpush2.bf16.msra.mxu0 0
  %2271 = vmatprep.subr.bf16.mxu0 0
  %2272 = vmatpush2.bf16.msra.mxu0 0
  %2273 = vmatprep.subr.bf16.mxu0 0
  %2274 = vmatpush2.bf16.msra.mxu0 0
  %2275 = vmatprep.subr.bf16.mxu0 0
  %2276 = vmatpush2.bf16.msra.mxu0 0
  %2277 = vmatprep.mubr.bf16.mxu0 0
  %2278 = vmatmul.mubr.bf16.gmra.mxu0 %v2161
  %v2279 = vpop.f32.mrf.mxu0
  %v2280 = vadd.f32 %v2239, %v2279
  %v2281 = vpop.f32.mrf.mxu0
  %v2282 = vadd.f32 %v2241, %v2281
  %v2283 = vpop.f32.mrf.mxu0
  %v2284 = vpop.f32.mrf.mxu0
  %2285 = vdwg.mxu0
  %2286 = vmatprep.subr.bf16.mxu0 0
  %2287 = vmatpush1.bf16.msra.mxu0 %v874
  %2288 = vmatprep.subr.bf16.mxu0 0
  %2289 = vmatpush1.bf16.msra.mxu0 %v871
  %2290 = vmatprep.subr.bf16.mxu0 0
  %2291 = vmatpush1.bf16.msra.mxu0 %v868
  %2292 = vmatprep.subr.bf16.mxu0 0
  %2293 = vmatpush1.bf16.msra.mxu0 %v865
  %2294 = vmatprep.subr.bf16.mxu0 0
  %2295 = vmatpush1.bf16.msra.mxu0 %v862
  %2296 = vmatprep.subr.bf16.mxu0 0
  %2297 = vmatpush1.bf16.msra.mxu0 %v859
  %2298 = vmatprep.subr.bf16.mxu0 0
  %2299 = vmatpush1.bf16.msra.mxu0 %v856
  %2300 = vmatprep.subr.bf16.mxu0 0
  %2301 = vmatpush1.bf16.msra.mxu0 %v853
  %2302 = vmatprep.subr.bf16.mxu0 0
  %2303 = vmatpush2.bf16.msra.mxu0 %v898
  %2304 = vmatprep.subr.bf16.mxu0 0
  %2305 = vmatpush2.bf16.msra.mxu0 %v895
  %2306 = vmatprep.subr.bf16.mxu0 0
  %2307 = vmatpush2.bf16.msra.mxu0 %v892
  %2308 = vmatprep.subr.bf16.mxu0 0
  %2309 = vmatpush2.bf16.msra.mxu0 %v889
  %2310 = vmatprep.subr.bf16.mxu0 0
  %2311 = vmatpush2.bf16.msra.mxu0 %v886
  %2312 = vmatprep.subr.bf16.mxu0 0
  %2313 = vmatpush2.bf16.msra.mxu0 %v883
  %2314 = vmatprep.subr.bf16.mxu0 0
  %2315 = vmatpush2.bf16.msra.mxu0 %v880
  %2316 = vmatprep.subr.bf16.mxu0 0
  %2317 = vmatpush2.bf16.msra.mxu0 %v877
  %2318 = vmatprep.mubr.bf16.mxu0 %v2152
  %2319 = vmatmul.mubr.bf16.gmra.mxu0 %v2151
  %v2320 = vpop.f32.mrf.mxu0
  %v2321 = vadd.f32 %v470, %v2320
  %v2322 = vpop.f32.mrf.mxu0
  %v2323 = vpop.f32.mrf.mxu0
  %v2324 = vpop.f32.mrf.mxu0
  %2325 = vdwg.mxu0
  %2326 = vmatprep.subr.bf16.mxu0 0
  %2327 = vmatpush1.bf16.msra.mxu0 %v922
  %2328 = vmatprep.subr.bf16.mxu0 0
  %2329 = vmatpush1.bf16.msra.mxu0 %v919
  %2330 = vmatprep.subr.bf16.mxu0 0
  %2331 = vmatpush1.bf16.msra.mxu0 %v916
  %2332 = vmatprep.subr.bf16.mxu0 0
  %2333 = vmatpush1.bf16.msra.mxu0 %v913
  %2334 = vmatprep.subr.bf16.mxu0 0
  %2335 = vmatpush1.bf16.msra.mxu0 %v910
  %2336 = vmatprep.subr.bf16.mxu0 0
  %2337 = vmatpush1.bf16.msra.mxu0 %v907
  %2338 = vmatprep.subr.bf16.mxu0 0
  %2339 = vmatpush1.bf16.msra.mxu0 %v904
  %2340 = vmatprep.subr.bf16.mxu0 0
  %2341 = vmatpush1.bf16.msra.mxu0 %v901
  %2342 = vmatprep.subr.bf16.mxu0 0
  %2343 = vmatpush2.bf16.msra.mxu0 %v946
  %2344 = vmatprep.subr.bf16.mxu0 0
  %2345 = vmatpush2.bf16.msra.mxu0 %v943
  %2346 = vmatprep.subr.bf16.mxu0 0
  %2347 = vmatpush2.bf16.msra.mxu0 %v940
  %2348 = vmatprep.subr.bf16.mxu0 0
  %2349 = vmatpush2.bf16.msra.mxu0 %v937
  %2350 = vmatprep.subr.bf16.mxu0 0
  %2351 = vmatpush2.bf16.msra.mxu0 %v934
  %2352 = vmatprep.subr.bf16.mxu0 0
  %2353 = vmatpush2.bf16.msra.mxu0 %v931
  %2354 = vmatprep.subr.bf16.mxu0 0
  %2355 = vmatpush2.bf16.msra.mxu0 %v928
  %2356 = vmatprep.subr.bf16.mxu0 0
  %2357 = vmatpush2.bf16.msra.mxu0 %v925
  %2358 = vmatprep.mubr.bf16.mxu0 %v2154
  %2359 = vmatmul.mubr.bf16.gmra.mxu0 %v2153
  %v2360 = vpop.f32.mrf.mxu0
  %v2361 = vadd.f32 %v2321, %v2360
  %v2362 = vpop.f32.mrf.mxu0
  %v2363 = vpop.f32.mrf.mxu0
  %v2364 = vpop.f32.mrf.mxu0
  %2365 = vdwg.mxu0
  %2366 = vmatprep.subr.bf16.mxu0 0
  %2367 = vmatpush1.bf16.msra.mxu0 0
  %2368 = vmatprep.subr.bf16.mxu0 0
  %2369 = vmatpush1.bf16.msra.mxu0 0
  %2370 = vmatprep.subr.bf16.mxu0 0
  %2371 = vmatpush1.bf16.msra.mxu0 0
  %2372 = vmatprep.subr.bf16.mxu0 0
  %2373 = vmatpush1.bf16.msra.mxu0 0
  %2374 = vmatprep.subr.bf16.mxu0 0
  %2375 = vmatpush1.bf16.msra.mxu0 %v958
  %2376 = vmatprep.subr.bf16.mxu0 0
  %2377 = vmatpush1.bf16.msra.mxu0 %v955
  %2378 = vmatprep.subr.bf16.mxu0 0
  %2379 = vmatpush1.bf16.msra.mxu0 %v952
  %2380 = vmatprep.subr.bf16.mxu0 0
  %2381 = vmatpush1.bf16.msra.mxu0 %v949
  %2382 = vmatprep.subr.bf16.mxu0 0
  %2383 = vmatpush2.bf16.msra.mxu0 0
  %2384 = vmatprep.subr.bf16.mxu0 0
  %2385 = vmatpush2.bf16.msra.mxu0 0
  %2386 = vmatprep.subr.bf16.mxu0 0
  %2387 = vmatpush2.bf16.msra.mxu0 0
  %2388 = vmatprep.subr.bf16.mxu0 0
  %2389 = vmatpush2.bf16.msra.mxu0 0
  %2390 = vmatprep.subr.bf16.mxu0 0
  %2391 = vmatpush2.bf16.msra.mxu0 0
  %2392 = vmatprep.subr.bf16.mxu0 0
  %2393 = vmatpush2.bf16.msra.mxu0 0
  %2394 = vmatprep.subr.bf16.mxu0 0
  %2395 = vmatpush2.bf16.msra.mxu0 0
  %2396 = vmatprep.subr.bf16.mxu0 0
  %2397 = vmatpush2.bf16.msra.mxu0 0
  %2398 = vmatprep.mubr.bf16.mxu0 0
  %2399 = vmatmul.mubr.bf16.gmra.mxu0 %v2161
  %v2400 = vpop.f32.mrf.mxu0
  %v2401 = vadd.f32 %v2361, %v2400
  %v2402 = vpop.f32.mrf.mxu0
  %v2403 = vpop.f32.mrf.mxu0
  %v2404 = vpop.f32.mrf.mxu0
  %2405 = vdwg.mxu0
  %v2406 = vmax.f32 %v2280, 0.0
  %v2407 = vmax.f32 %v2282, 0.0
  %v2408 = vmax.f32 %v2401, 0.0
  %v2409 = vpack.c.bf16 %v2406, %v2406
  %v2410 = vpack.c.bf16 %v2407, %v2407
  %v2411 = vpack.c.bf16 %v2408, %v2408
  %s2412 = scalar_lea.vmem %s0, 100
  %v2413 = vld [vmem:[%s2412] sm:$0xff]
  %v2414 = vld [vmem:[%s2412 + $0x8] sm:$0xff]
  %v2415 = vld [vmem:[%s2412 + $0x10] sm:$0xf]
  %v2419 = vunpack.c.l.b16 %v2413
  %v2420 = vunpack.c.h.b16 %v2413
  %v2421 = vunpack.c.l.b16 %v2414
  %v2422 = vunpack.c.h.b16 %v2414
  %v2423 = vunpack.c.l.b16 %v2415
  %v2424 = vpack.c.b16 %v2419, %v2419
  %v2425 = vpack.c.b16 %v2420, %v2420
  %v2426 = vpack.c.b16 %v2421, %v2421
  %v2427 = vpack.c.b16 %v2422, %v2422
  %v2428 = vpack.c.b16 %v2423, %v2423
  %v2434 = vsel %vm1067, %v2428, 0
  %2436 = vmatprep.subr.bf16.mxu0 %v873
  %2437 = vmatpush1.bf16.msra.mxu0 %v872
  %2438 = vmatprep.subr.bf16.mxu0 %v870
  %2439 = vmatpush1.bf16.msra.mxu0 %v869
  %2440 = vmatprep.subr.bf16.mxu0 %v867
  %2441 = vmatpush1.bf16.msra.mxu0 %v866
  %2442 = vmatprep.subr.bf16.mxu0 %v864
  %2443 = vmatpush1.bf16.msra.mxu0 %v863
  %2444 = vmatprep.subr.bf16.mxu0 %v861
  %2445 = vmatpush1.bf16.msra.mxu0 %v860
  %2446 = vmatprep.subr.bf16.mxu0 %v858
  %2447 = vmatpush1.bf16.msra.mxu0 %v857
  %2448 = vmatprep.subr.bf16.mxu0 %v855
  %2449 = vmatpush1.bf16.msra.mxu0 %v854
  %2450 = vmatprep.subr.bf16.mxu0 %v852
  %2451 = vmatpush1.bf16.msra.mxu0 %v851
  %2452 = vmatprep.subr.bf16.mxu0 %v897
  %2453 = vmatpush2.bf16.msra.mxu0 %v896
  %2454 = vmatprep.subr.bf16.mxu0 %v894
  %2455 = vmatpush2.bf16.msra.mxu0 %v893
  %2456 = vmatprep.subr.bf16.mxu0 %v891
  %2457 = vmatpush2.bf16.msra.mxu0 %v890
  %2458 = vmatprep.subr.bf16.mxu0 %v888
  %2459 = vmatpush2.bf16.msra.mxu0 %v887
  %2460 = vmatprep.subr.bf16.mxu0 %v885
  %2461 = vmatpush2.bf16.msra.mxu0 %v884
  %2462 = vmatprep.subr.bf16.mxu0 %v882
  %2463 = vmatpush2.bf16.msra.mxu0 %v881
  %2464 = vmatprep.subr.bf16.mxu0 %v879
  %2465 = vmatpush2.bf16.msra.mxu0 %v878
  %2466 = vmatprep.subr.bf16.mxu0 %v876
  %2467 = vmatpush2.bf16.msra.mxu0 %v875
  %2468 = vmatprep.mubr.bf16.mxu0 %v2425
  %2469 = vmatmul.mubr.bf16.gmra.mxu0 %v2424
  %v2470 = vpop.f32.mrf.mxu0
  %v2471 = vadd.f32 %v462, %v2470
  %v2472 = vpop.f32.mrf.mxu0
  %v2473 = vadd.f32 %v466, %v2472
  %v2474 = vpop.f32.mrf.mxu0
  %v2475 = vpop.f32.mrf.mxu0
  %2476 = vdwg.mxu0
  %2477 = vmatprep.subr.bf16.mxu0 %v921
  %2478 = vmatpush1.bf16.msra.mxu0 %v920
  %2479 = vmatprep.subr.bf16.mxu0 %v918
  %2480 = vmatpush1.bf16.msra.mxu0 %v917
  %2481 = vmatprep.subr.bf16.mxu0 %v915
  %2482 = vmatpush1.bf16.msra.mxu0 %v914
  %2483 = vmatprep.subr.bf16.mxu0 %v912
  %2484 = vmatpush1.bf16.msra.mxu0 %v911
  %2485 = vmatprep.subr.bf16.mxu0 %v909
  %2486 = vmatpush1.bf16.msra.mxu0 %v908
  %2487 = vmatprep.subr.bf16.mxu0 %v906
  %2488 = vmatpush1.bf16.msra.mxu0 %v905
  %2489 = vmatprep.subr.bf16.mxu0 %v903
  %2490 = vmatpush1.bf16.msra.mxu0 %v902
  %2491 = vmatprep.subr.bf16.mxu0 %v900
  %2492 = vmatpush1.bf16.msra.mxu0 %v899
  %2493 = vmatprep.subr.bf16.mxu0 %v945
  %2494 = vmatpush2.bf16.msra.mxu0 %v944
  %2495 = vmatprep.subr.bf16.mxu0 %v942
  %2496 = vmatpush2.bf16.msra.mxu0 %v941
  %2497 = vmatprep.subr.bf16.mxu0 %v939
  %2498 = vmatpush2.bf16.msra.mxu0 %v938
  %2499 = vmatprep.subr.bf16.mxu0 %v936
  %2500 = vmatpush2.bf16.msra.mxu0 %v935
  %2501 = vmatprep.subr.bf16.mxu0 %v933
  %2502 = vmatpush2.bf16.msra.mxu0 %v932
  %2503 = vmatprep.subr.bf16.mxu0 %v930
  %2504 = vmatpush2.bf16.msra.mxu0 %v929
  %2505 = vmatprep.subr.bf16.mxu0 %v927
  %2506 = vmatpush2.bf16.msra.mxu0 %v926
  %2507 = vmatprep.subr.bf16.mxu0 %v924
  %2508 = vmatpush2.bf16.msra.mxu0 %v923
  %2509 = vmatprep.mubr.bf16.mxu0 %v2427
  %2510 = vmatmul.mubr.bf16.gmra.mxu0 %v2426
  %v2511 = vpop.f32.mrf.mxu0
  %v2512 = vadd.f32 %v2471, %v2511
  %v2513 = vpop.f32.mrf.mxu0
  %v2514 = vadd.f32 %v2473, %v2513
  %v2515 = vpop.f32.mrf.mxu0
  %v2516 = vpop.f32.mrf.mxu0
  %2517 = vdwg.mxu0
  %2518 = vmatprep.subr.bf16.mxu0 0
  %2519 = vmatpush1.bf16.msra.mxu0 0
  %2520 = vmatprep.subr.bf16.mxu0 0
  %2521 = vmatpush1.bf16.msra.mxu0 0
  %2522 = vmatprep.subr.bf16.mxu0 0
  %2523 = vmatpush1.bf16.msra.mxu0 0
  %2524 = vmatprep.subr.bf16.mxu0 0
  %2525 = vmatpush1.bf16.msra.mxu0 0
  %2526 = vmatprep.subr.bf16.mxu0 %v957
  %2527 = vmatpush1.bf16.msra.mxu0 %v956
  %2528 = vmatprep.subr.bf16.mxu0 %v954
  %2529 = vmatpush1.bf16.msra.mxu0 %v953
  %2530 = vmatprep.subr.bf16.mxu0 %v951
  %2531 = vmatpush1.bf16.msra.mxu0 %v950
  %2532 = vmatprep.subr.bf16.mxu0 %v948
  %2533 = vmatpush1.bf16.msra.mxu0 %v947
  %2534 = vmatprep.subr.bf16.mxu0 0
  %2535 = vmatpush2.bf16.msra.mxu0 0
  %2536 = vmatprep.subr.bf16.mxu0 0
  %2537 = vmatpush2.bf16.msra.mxu0 0
  %2538 = vmatprep.subr.bf16.mxu0 0
  %2539 = vmatpush2.bf16.msra.mxu0 0
  %2540 = vmatprep.subr.bf16.mxu0 0
  %2541 = vmatpush2.bf16.msra.mxu0 0
  %2542 = vmatprep.subr.bf16.mxu0 0
  %2543 = vmatpush2.bf16.msra.mxu0 0
  %2544 = vmatprep.subr.bf16.mxu0 0
  %2545 = vmatpush2.bf16.msra.mxu0 0
  %2546 = vmatprep.subr.bf16.mxu0 0
  %2547 = vmatpush2.bf16.msra.mxu0 0
  %2548 = vmatprep.subr.bf16.mxu0 0
  %2549 = vmatpush2.bf16.msra.mxu0 0
  %2550 = vmatprep.mubr.bf16.mxu0 0
  %2551 = vmatmul.mubr.bf16.gmra.mxu0 %v2434
  %v2552 = vpop.f32.mrf.mxu0
  %v2553 = vadd.f32 %v2512, %v2552
  %v2554 = vpop.f32.mrf.mxu0
  %v2555 = vadd.f32 %v2514, %v2554
  %v2556 = vpop.f32.mrf.mxu0
  %v2557 = vpop.f32.mrf.mxu0
  %2558 = vdwg.mxu0
  %2559 = vmatprep.subr.bf16.mxu0 0
  %2560 = vmatpush1.bf16.msra.mxu0 %v874
  %2561 = vmatprep.subr.bf16.mxu0 0
  %2562 = vmatpush1.bf16.msra.mxu0 %v871
  %2563 = vmatprep.subr.bf16.mxu0 0
  %2564 = vmatpush1.bf16.msra.mxu0 %v868
  %2565 = vmatprep.subr.bf16.mxu0 0
  %2566 = vmatpush1.bf16.msra.mxu0 %v865
  %2567 = vmatprep.subr.bf16.mxu0 0
  %2568 = vmatpush1.bf16.msra.mxu0 %v862
  %2569 = vmatprep.subr.bf16.mxu0 0
  %2570 = vmatpush1.bf16.msra.mxu0 %v859
  %2571 = vmatprep.subr.bf16.mxu0 0
  %2572 = vmatpush1.bf16.msra.mxu0 %v856
  %2573 = vmatprep.subr.bf16.mxu0 0
  %2574 = vmatpush1.bf16.msra.mxu0 %v853
  %2575 = vmatprep.subr.bf16.mxu0 0
  %2576 = vmatpush2.bf16.msra.mxu0 %v898
  %2577 = vmatprep.subr.bf16.mxu0 0
  %2578 = vmatpush2.bf16.msra.mxu0 %v895
  %2579 = vmatprep.subr.bf16.mxu0 0
  %2580 = vmatpush2.bf16.msra.mxu0 %v892
  %2581 = vmatprep.subr.bf16.mxu0 0
  %2582 = vmatpush2.bf16.msra.mxu0 %v889
  %2583 = vmatprep.subr.bf16.mxu0 0
  %2584 = vmatpush2.bf16.msra.mxu0 %v886
  %2585 = vmatprep.subr.bf16.mxu0 0
  %2586 = vmatpush2.bf16.msra.mxu0 %v883
  %2587 = vmatprep.subr.bf16.mxu0 0
  %2588 = vmatpush2.bf16.msra.mxu0 %v880
  %2589 = vmatprep.subr.bf16.mxu0 0
  %2590 = vmatpush2.bf16.msra.mxu0 %v877
  %2591 = vmatprep.mubr.bf16.mxu0 %v2425
  %2592 = vmatmul.mubr.bf16.gmra.mxu0 %v2424
  %v2593 = vpop.f32.mrf.mxu0
  %v2594 = vadd.f32 %v470, %v2593
  %v2595 = vpop.f32.mrf.mxu0
  %v2596 = vpop.f32.mrf.mxu0
  %v2597 = vpop.f32.mrf.mxu0
  %2598 = vdwg.mxu0
  %2599 = vmatprep.subr.bf16.mxu0 0
  %2600 = vmatpush1.bf16.msra.mxu0 %v922
  %2601 = vmatprep.subr.bf16.mxu0 0
  %2602 = vmatpush1.bf16.msra.mxu0 %v919
  %2603 = vmatprep.subr.bf16.mxu0 0
  %2604 = vmatpush1.bf16.msra.mxu0 %v916
  %2605 = vmatprep.subr.bf16.mxu0 0
  %2606 = vmatpush1.bf16.msra.mxu0 %v913
  %2607 = vmatprep.subr.bf16.mxu0 0
  %2608 = vmatpush1.bf16.msra.mxu0 %v910
  %2609 = vmatprep.subr.bf16.mxu0 0
  %2610 = vmatpush1.bf16.msra.mxu0 %v907
  %2611 = vmatprep.subr.bf16.mxu0 0
  %2612 = vmatpush1.bf16.msra.mxu0 %v904
  %2613 = vmatprep.subr.bf16.mxu0 0
  %2614 = vmatpush1.bf16.msra.mxu0 %v901
  %2615 = vmatprep.subr.bf16.mxu0 0
  %2616 = vmatpush2.bf16.msra.mxu0 %v946
  %2617 = vmatprep.subr.bf16.mxu0 0
  %2618 = vmatpush2.bf16.msra.mxu0 %v943
  %2619 = vmatprep.subr.bf16.mxu0 0
  %2620 = vmatpush2.bf16.msra.mxu0 %v940
  %2621 = vmatprep.subr.bf16.mxu0 0
  %2622 = vmatpush2.bf16.msra.mxu0 %v937
  %2623 = vmatprep.subr.bf16.mxu0 0
  %2624 = vmatpush2.bf16.msra.mxu0 %v934
  %2625 = vmatprep.subr.bf16.mxu0 0
  %2626 = vmatpush2.bf16.msra.mxu0 %v931
  %2627 = vmatprep.subr.bf16.mxu0 0
  %2628 = vmatpush2.bf16.msra.mxu0 %v928
  %2629 = vmatprep.subr.bf16.mxu0 0
  %2630 = vmatpush2.bf16.msra.mxu0 %v925
  %2631 = vmatprep.mubr.bf16.mxu0 %v2427
  %2632 = vmatmul.mubr.bf16.gmra.mxu0 %v2426
  %v2633 = vpop.f32.mrf.mxu0
  %v2634 = vadd.f32 %v2594, %v2633
  %v2635 = vpop.f32.mrf.mxu0
  %v2636 = vpop.f32.mrf.mxu0
  %v2637 = vpop.f32.mrf.mxu0
  %2638 = vdwg.mxu0
  %2639 = vmatprep.subr.bf16.mxu0 0
  %2640 = vmatpush1.bf16.msra.mxu0 0
  %2641 = vmatprep.subr.bf16.mxu0 0
  %2642 = vmatpush1.bf16.msra.mxu0 0
  %2643 = vmatprep.subr.bf16.mxu0 0
  %2644 = vmatpush1.bf16.msra.mxu0 0
  %2645 = vmatprep.subr.bf16.mxu0 0
  %2646 = vmatpush1.bf16.msra.mxu0 0
  %2647 = vmatprep.subr.bf16.mxu0 0
  %2648 = vmatpush1.bf16.msra.mxu0 %v958
  %2649 = vmatprep.subr.bf16.mxu0 0
  %2650 = vmatpush1.bf16.msra.mxu0 %v955
  %2651 = vmatprep.subr.bf16.mxu0 0
  %2652 = vmatpush1.bf16.msra.mxu0 %v952
  %2653 = vmatprep.subr.bf16.mxu0 0
  %2654 = vmatpush1.bf16.msra.mxu0 %v949
  %2655 = vmatprep.subr.bf16.mxu0 0
  %2656 = vmatpush2.bf16.msra.mxu0 0
  %2657 = vmatprep.subr.bf16.mxu0 0
  %2658 = vmatpush2.bf16.msra.mxu0 0
  %2659 = vmatprep.subr.bf16.mxu0 0
  %2660 = vmatpush2.bf16.msra.mxu0 0
  %2661 = vmatprep.subr.bf16.mxu0 0
  %2662 = vmatpush2.bf16.msra.mxu0 0
  %2663 = vmatprep.subr.bf16.mxu0 0
  %2664 = vmatpush2.bf16.msra.mxu0 0
  %2665 = vmatprep.subr.bf16.mxu0 0
  %2666 = vmatpush2.bf16.msra.mxu0 0
  %2667 = vmatprep.subr.bf16.mxu0 0
  %2668 = vmatpush2.bf16.msra.mxu0 0
  %2669 = vmatprep.subr.bf16.mxu0 0
  %2670 = vmatpush2.bf16.msra.mxu0 0
  %2671 = vmatprep.mubr.bf16.mxu0 0
  %2672 = vmatmul.mubr.bf16.gmra.mxu0 %v2434
  %v2673 = vpop.f32.mrf.mxu0
  %v2674 = vadd.f32 %v2634, %v2673
  %v2675 = vpop.f32.mrf.mxu0
  %v2676 = vpop.f32.mrf.mxu0
  %v2677 = vpop.f32.mrf.mxu0
  %2678 = vdwg.mxu0
  %v2679 = vmax.f32 %v2553, 0.0
  %v2680 = vmax.f32 %v2555, 0.0
  %v2681 = vmax.f32 %v2674, 0.0
  %v2682 = vpack.c.bf16 %v2679, %v2679
  %v2683 = vpack.c.bf16 %v2680, %v2680
  %v2684 = vpack.c.bf16 %v2681, %v2681
  %s2685 = scalar_lea.vmem %s0, 120
  %v2686 = vld [vmem:[%s2685] sm:$0xff]
  %v2687 = vld [vmem:[%s2685 + $0x8] sm:$0xff]
  %v2688 = vld [vmem:[%s2685 + $0x10] sm:$0xf]
  %v2692 = vunpack.c.l.b16 %v2686
  %v2693 = vunpack.c.h.b16 %v2686
  %v2694 = vunpack.c.l.b16 %v2687
  %v2695 = vunpack.c.h.b16 %v2687
  %v2696 = vunpack.c.l.b16 %v2688
  %v2697 = vpack.c.b16 %v2692, %v2692
  %v2698 = vpack.c.b16 %v2693, %v2693
  %v2699 = vpack.c.b16 %v2694, %v2694
  %v2700 = vpack.c.b16 %v2695, %v2695
  %v2701 = vpack.c.b16 %v2696, %v2696
  %v2707 = vsel %vm1067, %v2701, 0
  %2709 = vmatprep.subr.bf16.mxu0 %v873
  %2710 = vmatpush1.bf16.msra.mxu0 %v872
  %2711 = vmatprep.subr.bf16.mxu0 %v870
  %2712 = vmatpush1.bf16.msra.mxu0 %v869
  %2713 = vmatprep.subr.bf16.mxu0 %v867
  %2714 = vmatpush1.bf16.msra.mxu0 %v866
  %2715 = vmatprep.subr.bf16.mxu0 %v864
  %2716 = vmatpush1.bf16.msra.mxu0 %v863
  %2717 = vmatprep.subr.bf16.mxu0 %v861
  %2718 = vmatpush1.bf16.msra.mxu0 %v860
  %2719 = vmatprep.subr.bf16.mxu0 %v858
  %2720 = vmatpush1.bf16.msra.mxu0 %v857
  %2721 = vmatprep.subr.bf16.mxu0 %v855
  %2722 = vmatpush1.bf16.msra.mxu0 %v854
  %2723 = vmatprep.subr.bf16.mxu0 %v852
  %2724 = vmatpush1.bf16.msra.mxu0 %v851
  %2725 = vmatprep.subr.bf16.mxu0 %v897
  %2726 = vmatpush2.bf16.msra.mxu0 %v896
  %2727 = vmatprep.subr.bf16.mxu0 %v894
  %2728 = vmatpush2.bf16.msra.mxu0 %v893
  %2729 = vmatprep.subr.bf16.mxu0 %v891
  %2730 = vmatpush2.bf16.msra.mxu0 %v890
  %2731 = vmatprep.subr.bf16.mxu0 %v888
  %2732 = vmatpush2.bf16.msra.mxu0 %v887
  %2733 = vmatprep.subr.bf16.mxu0 %v885
  %2734 = vmatpush2.bf16.msra.mxu0 %v884
  %2735 = vmatprep.subr.bf16.mxu0 %v882
  %2736 = vmatpush2.bf16.msra.mxu0 %v881
  %2737 = vmatprep.subr.bf16.mxu0 %v879
  %2738 = vmatpush2.bf16.msra.mxu0 %v878
  %2739 = vmatprep.subr.bf16.mxu0 %v876
  %2740 = vmatpush2.bf16.msra.mxu0 %v875
  %2741 = vmatprep.mubr.bf16.mxu0 %v2698
  %2742 = vmatmul.mubr.bf16.gmra.mxu0 %v2697
  %v2743 = vpop.f32.mrf.mxu0
  %v2744 = vadd.f32 %v462, %v2743
  %v2745 = vpop.f32.mrf.mxu0
  %v2746 = vadd.f32 %v466, %v2745
  %v2747 = vpop.f32.mrf.mxu0
  %v2748 = vpop.f32.mrf.mxu0
  %2749 = vdwg.mxu0
  %2750 = vmatprep.subr.bf16.mxu0 %v921
  %2751 = vmatpush1.bf16.msra.mxu0 %v920
  %2752 = vmatprep.subr.bf16.mxu0 %v918
  %2753 = vmatpush1.bf16.msra.mxu0 %v917
  %2754 = vmatprep.subr.bf16.mxu0 %v915
  %2755 = vmatpush1.bf16.msra.mxu0 %v914
  %2756 = vmatprep.subr.bf16.mxu0 %v912
  %2757 = vmatpush1.bf16.msra.mxu0 %v911
  %2758 = vmatprep.subr.bf16.mxu0 %v909
  %2759 = vmatpush1.bf16.msra.mxu0 %v908
  %2760 = vmatprep.subr.bf16.mxu0 %v906
  %2761 = vmatpush1.bf16.msra.mxu0 %v905
  %2762 = vmatprep.subr.bf16.mxu0 %v903
  %2763 = vmatpush1.bf16.msra.mxu0 %v902
  %2764 = vmatprep.subr.bf16.mxu0 %v900
  %2765 = vmatpush1.bf16.msra.mxu0 %v899
  %2766 = vmatprep.subr.bf16.mxu0 %v945
  %2767 = vmatpush2.bf16.msra.mxu0 %v944
  %2768 = vmatprep.subr.bf16.mxu0 %v942
  %2769 = vmatpush2.bf16.msra.mxu0 %v941
  %2770 = vmatprep.subr.bf16.mxu0 %v939
  %2771 = vmatpush2.bf16.msra.mxu0 %v938
  %2772 = vmatprep.subr.bf16.mxu0 %v936
  %2773 = vmatpush2.bf16.msra.mxu0 %v935
  %2774 = vmatprep.subr.bf16.mxu0 %v933
  %2775 = vmatpush2.bf16.msra.mxu0 %v932
  %2776 = vmatprep.subr.bf16.mxu0 %v930
  %2777 = vmatpush2.bf16.msra.mxu0 %v929
  %2778 = vmatprep.subr.bf16.mxu0 %v927
  %2779 = vmatpush2.bf16.msra.mxu0 %v926
  %2780 = vmatprep.subr.bf16.mxu0 %v924
  %2781 = vmatpush2.bf16.msra.mxu0 %v923
  %2782 = vmatprep.mubr.bf16.mxu0 %v2700
  %2783 = vmatmul.mubr.bf16.gmra.mxu0 %v2699
  %v2784 = vpop.f32.mrf.mxu0
  %v2785 = vadd.f32 %v2744, %v2784
  %v2786 = vpop.f32.mrf.mxu0
  %v2787 = vadd.f32 %v2746, %v2786
  %v2788 = vpop.f32.mrf.mxu0
  %v2789 = vpop.f32.mrf.mxu0
  %2790 = vdwg.mxu0
  %2791 = vmatprep.subr.bf16.mxu0 0
  %2792 = vmatpush1.bf16.msra.mxu0 0
  %2793 = vmatprep.subr.bf16.mxu0 0
  %2794 = vmatpush1.bf16.msra.mxu0 0
  %2795 = vmatprep.subr.bf16.mxu0 0
  %2796 = vmatpush1.bf16.msra.mxu0 0
  %2797 = vmatprep.subr.bf16.mxu0 0
  %2798 = vmatpush1.bf16.msra.mxu0 0
  %2799 = vmatprep.subr.bf16.mxu0 %v957
  %2800 = vmatpush1.bf16.msra.mxu0 %v956
  %2801 = vmatprep.subr.bf16.mxu0 %v954
  %2802 = vmatpush1.bf16.msra.mxu0 %v953
  %2803 = vmatprep.subr.bf16.mxu0 %v951
  %2804 = vmatpush1.bf16.msra.mxu0 %v950
  %2805 = vmatprep.subr.bf16.mxu0 %v948
  %2806 = vmatpush1.bf16.msra.mxu0 %v947
  %2807 = vmatprep.subr.bf16.mxu0 0
  %2808 = vmatpush2.bf16.msra.mxu0 0
  %2809 = vmatprep.subr.bf16.mxu0 0
  %2810 = vmatpush2.bf16.msra.mxu0 0
  %2811 = vmatprep.subr.bf16.mxu0 0
  %2812 = vmatpush2.bf16.msra.mxu0 0
  %2813 = vmatprep.subr.bf16.mxu0 0
  %2814 = vmatpush2.bf16.msra.mxu0 0
  %2815 = vmatprep.subr.bf16.mxu0 0
  %2816 = vmatpush2.bf16.msra.mxu0 0
  %2817 = vmatprep.subr.bf16.mxu0 0
  %2818 = vmatpush2.bf16.msra.mxu0 0
  %2819 = vmatprep.subr.bf16.mxu0 0
  %2820 = vmatpush2.bf16.msra.mxu0 0
  %2821 = vmatprep.subr.bf16.mxu0 0
  %2822 = vmatpush2.bf16.msra.mxu0 0
  %2823 = vmatprep.mubr.bf16.mxu0 0
  %2824 = vmatmul.mubr.bf16.gmra.mxu0 %v2707
  %v2825 = vpop.f32.mrf.mxu0
  %v2826 = vadd.f32 %v2785, %v2825
  %v2827 = vpop.f32.mrf.mxu0
  %v2828 = vadd.f32 %v2787, %v2827
  %v2829 = vpop.f32.mrf.mxu0
  %v2830 = vpop.f32.mrf.mxu0
  %2831 = vdwg.mxu0
  %2832 = vmatprep.subr.bf16.mxu0 0
  %2833 = vmatpush1.bf16.msra.mxu0 %v874
  %2834 = vmatprep.subr.bf16.mxu0 0
  %2835 = vmatpush1.bf16.msra.mxu0 %v871
  %2836 = vmatprep.subr.bf16.mxu0 0
  %2837 = vmatpush1.bf16.msra.mxu0 %v868
  %2838 = vmatprep.subr.bf16.mxu0 0
  %2839 = vmatpush1.bf16.msra.mxu0 %v865
  %2840 = vmatprep.subr.bf16.mxu0 0
  %2841 = vmatpush1.bf16.msra.mxu0 %v862
  %2842 = vmatprep.subr.bf16.mxu0 0
  %2843 = vmatpush1.bf16.msra.mxu0 %v859
  %2844 = vmatprep.subr.bf16.mxu0 0
  %2845 = vmatpush1.bf16.msra.mxu0 %v856
  %2846 = vmatprep.subr.bf16.mxu0 0
  %2847 = vmatpush1.bf16.msra.mxu0 %v853
  %2848 = vmatprep.subr.bf16.mxu0 0
  %2849 = vmatpush2.bf16.msra.mxu0 %v898
  %2850 = vmatprep.subr.bf16.mxu0 0
  %2851 = vmatpush2.bf16.msra.mxu0 %v895
  %2852 = vmatprep.subr.bf16.mxu0 0
  %2853 = vmatpush2.bf16.msra.mxu0 %v892
  %2854 = vmatprep.subr.bf16.mxu0 0
  %2855 = vmatpush2.bf16.msra.mxu0 %v889
  %2856 = vmatprep.subr.bf16.mxu0 0
  %2857 = vmatpush2.bf16.msra.mxu0 %v886
  %2858 = vmatprep.subr.bf16.mxu0 0
  %2859 = vmatpush2.bf16.msra.mxu0 %v883
  %2860 = vmatprep.subr.bf16.mxu0 0
  %2861 = vmatpush2.bf16.msra.mxu0 %v880
  %2862 = vmatprep.subr.bf16.mxu0 0
  %2863 = vmatpush2.bf16.msra.mxu0 %v877
  %2864 = vmatprep.mubr.bf16.mxu0 %v2698
  %2865 = vmatmul.mubr.bf16.gmra.mxu0 %v2697
  %v2866 = vpop.f32.mrf.mxu0
  %v2867 = vadd.f32 %v470, %v2866
  %v2868 = vpop.f32.mrf.mxu0
  %v2869 = vpop.f32.mrf.mxu0
  %v2870 = vpop.f32.mrf.mxu0
  %2871 = vdwg.mxu0
  %2872 = vmatprep.subr.bf16.mxu0 0
  %2873 = vmatpush1.bf16.msra.mxu0 %v922
  %2874 = vmatprep.subr.bf16.mxu0 0
  %2875 = vmatpush1.bf16.msra.mxu0 %v919
  %2876 = vmatprep.subr.bf16.mxu0 0
  %2877 = vmatpush1.bf16.msra.mxu0 %v916
  %2878 = vmatprep.subr.bf16.mxu0 0
  %2879 = vmatpush1.bf16.msra.mxu0 %v913
  %2880 = vmatprep.subr.bf16.mxu0 0
  %2881 = vmatpush1.bf16.msra.mxu0 %v910
  %2882 = vmatprep.subr.bf16.mxu0 0
  %2883 = vmatpush1.bf16.msra.mxu0 %v907
  %2884 = vmatprep.subr.bf16.mxu0 0
  %2885 = vmatpush1.bf16.msra.mxu0 %v904
  %2886 = vmatprep.subr.bf16.mxu0 0
  %2887 = vmatpush1.bf16.msra.mxu0 %v901
  %2888 = vmatprep.subr.bf16.mxu0 0
  %2889 = vmatpush2.bf16.msra.mxu0 %v946
  %2890 = vmatprep.subr.bf16.mxu0 0
  %2891 = vmatpush2.bf16.msra.mxu0 %v943
  %2892 = vmatprep.subr.bf16.mxu0 0
  %2893 = vmatpush2.bf16.msra.mxu0 %v940
  %2894 = vmatprep.subr.bf16.mxu0 0
  %2895 = vmatpush2.bf16.msra.mxu0 %v937
  %2896 = vmatprep.subr.bf16.mxu0 0
  %2897 = vmatpush2.bf16.msra.mxu0 %v934
  %2898 = vmatprep.subr.bf16.mxu0 0
  %2899 = vmatpush2.bf16.msra.mxu0 %v931
  %2900 = vmatprep.subr.bf16.mxu0 0
  %2901 = vmatpush2.bf16.msra.mxu0 %v928
  %2902 = vmatprep.subr.bf16.mxu0 0
  %2903 = vmatpush2.bf16.msra.mxu0 %v925
  %2904 = vmatprep.mubr.bf16.mxu0 %v2700
  %2905 = vmatmul.mubr.bf16.gmra.mxu0 %v2699
  %v2906 = vpop.f32.mrf.mxu0
  %v2907 = vadd.f32 %v2867, %v2906
  %v2908 = vpop.f32.mrf.mxu0
  %v2909 = vpop.f32.mrf.mxu0
  %v2910 = vpop.f32.mrf.mxu0
  %2911 = vdwg.mxu0
  %2912 = vmatprep.subr.bf16.mxu0 0
  %2913 = vmatpush1.bf16.msra.mxu0 0
  %2914 = vmatprep.subr.bf16.mxu0 0
  %2915 = vmatpush1.bf16.msra.mxu0 0
  %2916 = vmatprep.subr.bf16.mxu0 0
  %2917 = vmatpush1.bf16.msra.mxu0 0
  %2918 = vmatprep.subr.bf16.mxu0 0
  %2919 = vmatpush1.bf16.msra.mxu0 0
  %2920 = vmatprep.subr.bf16.mxu0 0
  %2921 = vmatpush1.bf16.msra.mxu0 %v958
  %2922 = vmatprep.subr.bf16.mxu0 0
  %2923 = vmatpush1.bf16.msra.mxu0 %v955
  %2924 = vmatprep.subr.bf16.mxu0 0
  %2925 = vmatpush1.bf16.msra.mxu0 %v952
  %2926 = vmatprep.subr.bf16.mxu0 0
  %2927 = vmatpush1.bf16.msra.mxu0 %v949
  %2928 = vmatprep.subr.bf16.mxu0 0
  %2929 = vmatpush2.bf16.msra.mxu0 0
  %2930 = vmatprep.subr.bf16.mxu0 0
  %2931 = vmatpush2.bf16.msra.mxu0 0
  %2932 = vmatprep.subr.bf16.mxu0 0
  %2933 = vmatpush2.bf16.msra.mxu0 0
  %2934 = vmatprep.subr.bf16.mxu0 0
  %2935 = vmatpush2.bf16.msra.mxu0 0
  %2936 = vmatprep.subr.bf16.mxu0 0
  %2937 = vmatpush2.bf16.msra.mxu0 0
  %2938 = vmatprep.subr.bf16.mxu0 0
  %2939 = vmatpush2.bf16.msra.mxu0 0
  %2940 = vmatprep.subr.bf16.mxu0 0
  %2941 = vmatpush2.bf16.msra.mxu0 0
  %2942 = vmatprep.subr.bf16.mxu0 0
  %2943 = vmatpush2.bf16.msra.mxu0 0
  %2944 = vmatprep.mubr.bf16.mxu0 0
  %2945 = vmatmul.mubr.bf16.gmra.mxu0 %v2707
  %v2946 = vpop.f32.mrf.mxu0
  %v2947 = vadd.f32 %v2907, %v2946
  %v2948 = vpop.f32.mrf.mxu0
  %v2949 = vpop.f32.mrf.mxu0
  %v2950 = vpop.f32.mrf.mxu0
  %2951 = vdwg.mxu0
  %v2952 = vmax.f32 %v2826, 0.0
  %v2953 = vmax.f32 %v2828, 0.0
  %v2954 = vmax.f32 %v2947, 0.0
  %v2955 = vpack.c.bf16 %v2952, %v2952
  %v2956 = vpack.c.bf16 %v2953, %v2953
  %v2957 = vpack.c.bf16 %v2954, %v2954
  %s2958 = scalar_lea.vmem %s0, 140
  %v2959 = vld [vmem:[%s2958] sm:$0xff]
  %v2960 = vld [vmem:[%s2958 + $0x8] sm:$0xff]
  %v2961 = vld [vmem:[%s2958 + $0x10] sm:$0xf]
  %v2965 = vunpack.c.l.b16 %v2959
  %v2966 = vunpack.c.h.b16 %v2959
  %v2967 = vunpack.c.l.b16 %v2960
  %v2968 = vunpack.c.h.b16 %v2960
  %v2969 = vunpack.c.l.b16 %v2961
  %v2970 = vpack.c.b16 %v2965, %v2965
  %v2971 = vpack.c.b16 %v2966, %v2966
  %v2972 = vpack.c.b16 %v2967, %v2967
  %v2973 = vpack.c.b16 %v2968, %v2968
  %v2974 = vpack.c.b16 %v2969, %v2969
  %v2980 = vsel %vm1067, %v2974, 0
  %2982 = vmatprep.subr.bf16.mxu0 %v873
  %2983 = vmatpush1.bf16.msra.mxu0 %v872
  %2984 = vmatprep.subr.bf16.mxu0 %v870
  %2985 = vmatpush1.bf16.msra.mxu0 %v869
  %2986 = vmatprep.subr.bf16.mxu0 %v867
  %2987 = vmatpush1.bf16.msra.mxu0 %v866
  %2988 = vmatprep.subr.bf16.mxu0 %v864
  %2989 = vmatpush1.bf16.msra.mxu0 %v863
  %2990 = vmatprep.subr.bf16.mxu0 %v861
  %2991 = vmatpush1.bf16.msra.mxu0 %v860
  %2992 = vmatprep.subr.bf16.mxu0 %v858
  %2993 = vmatpush1.bf16.msra.mxu0 %v857
  %2994 = vmatprep.subr.bf16.mxu0 %v855
  %2995 = vmatpush1.bf16.msra.mxu0 %v854
  %2996 = vmatprep.subr.bf16.mxu0 %v852
  %2997 = vmatpush1.bf16.msra.mxu0 %v851
  %2998 = vmatprep.subr.bf16.mxu0 %v897
  %2999 = vmatpush2.bf16.msra.mxu0 %v896
  %3000 = vmatprep.subr.bf16.mxu0 %v894
  %3001 = vmatpush2.bf16.msra.mxu0 %v893
  %3002 = vmatprep.subr.bf16.mxu0 %v891
  %3003 = vmatpush2.bf16.msra.mxu0 %v890
  %3004 = vmatprep.subr.bf16.mxu0 %v888
  %3005 = vmatpush2.bf16.msra.mxu0 %v887
  %3006 = vmatprep.subr.bf16.mxu0 %v885
  %3007 = vmatpush2.bf16.msra.mxu0 %v884
  %3008 = vmatprep.subr.bf16.mxu0 %v882
  %3009 = vmatpush2.bf16.msra.mxu0 %v881
  %3010 = vmatprep.subr.bf16.mxu0 %v879
  %3011 = vmatpush2.bf16.msra.mxu0 %v878
  %3012 = vmatprep.subr.bf16.mxu0 %v876
  %3013 = vmatpush2.bf16.msra.mxu0 %v875
  %3014 = vmatprep.mubr.bf16.mxu0 %v2971
  %3015 = vmatmul.mubr.bf16.gmra.mxu0 %v2970
  %v3016 = vpop.f32.mrf.mxu0
  %v3017 = vadd.f32 %v462, %v3016
  %v3018 = vpop.f32.mrf.mxu0
  %v3019 = vadd.f32 %v466, %v3018
  %v3020 = vpop.f32.mrf.mxu0
  %v3021 = vpop.f32.mrf.mxu0
  %3022 = vdwg.mxu0
  %3023 = vmatprep.subr.bf16.mxu0 %v921
  %3024 = vmatpush1.bf16.msra.mxu0 %v920
  %3025 = vmatprep.subr.bf16.mxu0 %v918
  %3026 = vmatpush1.bf16.msra.mxu0 %v917
  %3027 = vmatprep.subr.bf16.mxu0 %v915
  %3028 = vmatpush1.bf16.msra.mxu0 %v914
  %3029 = vmatprep.subr.bf16.mxu0 %v912
  %3030 = vmatpush1.bf16.msra.mxu0 %v911
  %3031 = vmatprep.subr.bf16.mxu0 %v909
  %3032 = vmatpush1.bf16.msra.mxu0 %v908
  %3033 = vmatprep.subr.bf16.mxu0 %v906
  %3034 = vmatpush1.bf16.msra.mxu0 %v905
  %3035 = vmatprep.subr.bf16.mxu0 %v903
  %3036 = vmatpush1.bf16.msra.mxu0 %v902
  %3037 = vmatprep.subr.bf16.mxu0 %v900
  %3038 = vmatpush1.bf16.msra.mxu0 %v899
  %3039 = vmatprep.subr.bf16.mxu0 %v945
  %3040 = vmatpush2.bf16.msra.mxu0 %v944
  %3041 = vmatprep.subr.bf16.mxu0 %v942
  %3042 = vmatpush2.bf16.msra.mxu0 %v941
  %3043 = vmatprep.subr.bf16.mxu0 %v939
  %3044 = vmatpush2.bf16.msra.mxu0 %v938
  %3045 = vmatprep.subr.bf16.mxu0 %v936
  %3046 = vmatpush2.bf16.msra.mxu0 %v935
  %3047 = vmatprep.subr.bf16.mxu0 %v933
  %3048 = vmatpush2.bf16.msra.mxu0 %v932
  %3049 = vmatprep.subr.bf16.mxu0 %v930
  %3050 = vmatpush2.bf16.msra.mxu0 %v929
  %3051 = vmatprep.subr.bf16.mxu0 %v927
  %3052 = vmatpush2.bf16.msra.mxu0 %v926
  %3053 = vmatprep.subr.bf16.mxu0 %v924
  %3054 = vmatpush2.bf16.msra.mxu0 %v923
  %3055 = vmatprep.mubr.bf16.mxu0 %v2973
  %3056 = vmatmul.mubr.bf16.gmra.mxu0 %v2972
  %v3057 = vpop.f32.mrf.mxu0
  %v3058 = vadd.f32 %v3017, %v3057
  %v3059 = vpop.f32.mrf.mxu0
  %v3060 = vadd.f32 %v3019, %v3059
  %v3061 = vpop.f32.mrf.mxu0
  %v3062 = vpop.f32.mrf.mxu0
  %3063 = vdwg.mxu0
  %3064 = vmatprep.subr.bf16.mxu0 0
  %3065 = vmatpush1.bf16.msra.mxu0 0
  %3066 = vmatprep.subr.bf16.mxu0 0
  %3067 = vmatpush1.bf16.msra.mxu0 0
  %3068 = vmatprep.subr.bf16.mxu0 0
  %3069 = vmatpush1.bf16.msra.mxu0 0
  %3070 = vmatprep.subr.bf16.mxu0 0
  %3071 = vmatpush1.bf16.msra.mxu0 0
  %3072 = vmatprep.subr.bf16.mxu0 %v957
  %3073 = vmatpush1.bf16.msra.mxu0 %v956
  %3074 = vmatprep.subr.bf16.mxu0 %v954
  %3075 = vmatpush1.bf16.msra.mxu0 %v953
  %3076 = vmatprep.subr.bf16.mxu0 %v951
  %3077 = vmatpush1.bf16.msra.mxu0 %v950
  %3078 = vmatprep.subr.bf16.mxu0 %v948
  %3079 = vmatpush1.bf16.msra.mxu0 %v947
  %3080 = vmatprep.subr.bf16.mxu0 0
  %3081 = vmatpush2.bf16.msra.mxu0 0
  %3082 = vmatprep.subr.bf16.mxu0 0
  %3083 = vmatpush2.bf16.msra.mxu0 0
  %3084 = vmatprep.subr.bf16.mxu0 0
  %3085 = vmatpush2.bf16.msra.mxu0 0
  %3086 = vmatprep.subr.bf16.mxu0 0
  %3087 = vmatpush2.bf16.msra.mxu0 0
  %3088 = vmatprep.subr.bf16.mxu0 0
  %3089 = vmatpush2.bf16.msra.mxu0 0
  %3090 = vmatprep.subr.bf16.mxu0 0
  %3091 = vmatpush2.bf16.msra.mxu0 0
  %3092 = vmatprep.subr.bf16.mxu0 0
  %3093 = vmatpush2.bf16.msra.mxu0 0
  %3094 = vmatprep.subr.bf16.mxu0 0
  %3095 = vmatpush2.bf16.msra.mxu0 0
  %3096 = vmatprep.mubr.bf16.mxu0 0
  %3097 = vmatmul.mubr.bf16.gmra.mxu0 %v2980
  %v3098 = vpop.f32.mrf.mxu0
  %v3099 = vadd.f32 %v3058, %v3098
  %v3100 = vpop.f32.mrf.mxu0
  %v3101 = vadd.f32 %v3060, %v3100
  %v3102 = vpop.f32.mrf.mxu0
  %v3103 = vpop.f32.mrf.mxu0
  %3104 = vdwg.mxu0
  %3105 = vmatprep.subr.bf16.mxu0 0
  %3106 = vmatpush1.bf16.msra.mxu0 %v874
  %3107 = vmatprep.subr.bf16.mxu0 0
  %3108 = vmatpush1.bf16.msra.mxu0 %v871
  %3109 = vmatprep.subr.bf16.mxu0 0
  %3110 = vmatpush1.bf16.msra.mxu0 %v868
  %3111 = vmatprep.subr.bf16.mxu0 0
  %3112 = vmatpush1.bf16.msra.mxu0 %v865
  %3113 = vmatprep.subr.bf16.mxu0 0
  %3114 = vmatpush1.bf16.msra.mxu0 %v862
  %3115 = vmatprep.subr.bf16.mxu0 0
  %3116 = vmatpush1.bf16.msra.mxu0 %v859
  %3117 = vmatprep.subr.bf16.mxu0 0
  %3118 = vmatpush1.bf16.msra.mxu0 %v856
  %3119 = vmatprep.subr.bf16.mxu0 0
  %3120 = vmatpush1.bf16.msra.mxu0 %v853
  %3121 = vmatprep.subr.bf16.mxu0 0
  %3122 = vmatpush2.bf16.msra.mxu0 %v898
  %3123 = vmatprep.subr.bf16.mxu0 0
  %3124 = vmatpush2.bf16.msra.mxu0 %v895
  %3125 = vmatprep.subr.bf16.mxu0 0
  %3126 = vmatpush2.bf16.msra.mxu0 %v892
  %3127 = vmatprep.subr.bf16.mxu0 0
  %3128 = vmatpush2.bf16.msra.mxu0 %v889
  %3129 = vmatprep.subr.bf16.mxu0 0
  %3130 = vmatpush2.bf16.msra.mxu0 %v886
  %3131 = vmatprep.subr.bf16.mxu0 0
  %3132 = vmatpush2.bf16.msra.mxu0 %v883
  %3133 = vmatprep.subr.bf16.mxu0 0
  %3134 = vmatpush2.bf16.msra.mxu0 %v880
  %3135 = vmatprep.subr.bf16.mxu0 0
  %3136 = vmatpush2.bf16.msra.mxu0 %v877
  %3137 = vmatprep.mubr.bf16.mxu0 %v2971
  %3138 = vmatmul.mubr.bf16.gmra.mxu0 %v2970
  %v3139 = vpop.f32.mrf.mxu0
  %v3140 = vadd.f32 %v470, %v3139
  %v3141 = vpop.f32.mrf.mxu0
  %v3142 = vpop.f32.mrf.mxu0
  %v3143 = vpop.f32.mrf.mxu0
  %3144 = vdwg.mxu0
  %3145 = vmatprep.subr.bf16.mxu0 0
  %3146 = vmatpush1.bf16.msra.mxu0 %v922
  %3147 = vmatprep.subr.bf16.mxu0 0
  %3148 = vmatpush1.bf16.msra.mxu0 %v919
  %3149 = vmatprep.subr.bf16.mxu0 0
  %3150 = vmatpush1.bf16.msra.mxu0 %v916
  %3151 = vmatprep.subr.bf16.mxu0 0
  %3152 = vmatpush1.bf16.msra.mxu0 %v913
  %3153 = vmatprep.subr.bf16.mxu0 0
  %3154 = vmatpush1.bf16.msra.mxu0 %v910
  %3155 = vmatprep.subr.bf16.mxu0 0
  %3156 = vmatpush1.bf16.msra.mxu0 %v907
  %3157 = vmatprep.subr.bf16.mxu0 0
  %3158 = vmatpush1.bf16.msra.mxu0 %v904
  %3159 = vmatprep.subr.bf16.mxu0 0
  %3160 = vmatpush1.bf16.msra.mxu0 %v901
  %3161 = vmatprep.subr.bf16.mxu0 0
  %3162 = vmatpush2.bf16.msra.mxu0 %v946
  %3163 = vmatprep.subr.bf16.mxu0 0
  %3164 = vmatpush2.bf16.msra.mxu0 %v943
  %3165 = vmatprep.subr.bf16.mxu0 0
  %3166 = vmatpush2.bf16.msra.mxu0 %v940
  %3167 = vmatprep.subr.bf16.mxu0 0
  %3168 = vmatpush2.bf16.msra.mxu0 %v937
  %3169 = vmatprep.subr.bf16.mxu0 0
  %3170 = vmatpush2.bf16.msra.mxu0 %v934
  %3171 = vmatprep.subr.bf16.mxu0 0
  %3172 = vmatpush2.bf16.msra.mxu0 %v931
  %3173 = vmatprep.subr.bf16.mxu0 0
  %3174 = vmatpush2.bf16.msra.mxu0 %v928
  %3175 = vmatprep.subr.bf16.mxu0 0
  %3176 = vmatpush2.bf16.msra.mxu0 %v925
  %3177 = vmatprep.mubr.bf16.mxu0 %v2973
  %3178 = vmatmul.mubr.bf16.gmra.mxu0 %v2972
  %v3179 = vpop.f32.mrf.mxu0
  %v3180 = vadd.f32 %v3140, %v3179
  %v3181 = vpop.f32.mrf.mxu0
  %v3182 = vpop.f32.mrf.mxu0
  %v3183 = vpop.f32.mrf.mxu0
  %3184 = vdwg.mxu0
  %3185 = vmatprep.subr.bf16.mxu0 0
  %3186 = vmatpush1.bf16.msra.mxu0 0
  %3187 = vmatprep.subr.bf16.mxu0 0
  %3188 = vmatpush1.bf16.msra.mxu0 0
  %3189 = vmatprep.subr.bf16.mxu0 0
  %3190 = vmatpush1.bf16.msra.mxu0 0
  %3191 = vmatprep.subr.bf16.mxu0 0
  %3192 = vmatpush1.bf16.msra.mxu0 0
  %3193 = vmatprep.subr.bf16.mxu0 0
  %3194 = vmatpush1.bf16.msra.mxu0 %v958
  %3195 = vmatprep.subr.bf16.mxu0 0
  %3196 = vmatpush1.bf16.msra.mxu0 %v955
  %3197 = vmatprep.subr.bf16.mxu0 0
  %3198 = vmatpush1.bf16.msra.mxu0 %v952
  %3199 = vmatprep.subr.bf16.mxu0 0
  %3200 = vmatpush1.bf16.msra.mxu0 %v949
  %3201 = vmatprep.subr.bf16.mxu0 0
  %3202 = vmatpush2.bf16.msra.mxu0 0
  %3203 = vmatprep.subr.bf16.mxu0 0
  %3204 = vmatpush2.bf16.msra.mxu0 0
  %3205 = vmatprep.subr.bf16.mxu0 0
  %3206 = vmatpush2.bf16.msra.mxu0 0
  %3207 = vmatprep.subr.bf16.mxu0 0
  %3208 = vmatpush2.bf16.msra.mxu0 0
  %3209 = vmatprep.subr.bf16.mxu0 0
  %3210 = vmatpush2.bf16.msra.mxu0 0
  %3211 = vmatprep.subr.bf16.mxu0 0
  %3212 = vmatpush2.bf16.msra.mxu0 0
  %3213 = vmatprep.subr.bf16.mxu0 0
  %3214 = vmatpush2.bf16.msra.mxu0 0
  %3215 = vmatprep.subr.bf16.mxu0 0
  %3216 = vmatpush2.bf16.msra.mxu0 0
  %3217 = vmatprep.mubr.bf16.mxu0 0
  %3218 = vmatmul.mubr.bf16.gmra.mxu0 %v2980
  %v3219 = vpop.f32.mrf.mxu0
  %v3220 = vadd.f32 %v3180, %v3219
  %v3221 = vpop.f32.mrf.mxu0
  %v3222 = vpop.f32.mrf.mxu0
  %v3223 = vpop.f32.mrf.mxu0
  %3224 = vdwg.mxu0
  %v3225 = vmax.f32 %v3099, 0.0
  %v3226 = vmax.f32 %v3101, 0.0
  %v3227 = vmax.f32 %v3220, 0.0
  %v3228 = vpack.c.bf16 %v3225, %v3225
  %v3229 = vpack.c.bf16 %v3226, %v3226
  %v3230 = vpack.c.bf16 %v3227, %v3227
  %s3231 = scalar_lea.vmem %s0, 160
  %v3232 = vld [vmem:[%s3231] sm:$0xff]
  %v3233 = vld [vmem:[%s3231 + $0x8] sm:$0xff]
  %v3234 = vld [vmem:[%s3231 + $0x10] sm:$0xf]
  %v3238 = vunpack.c.l.b16 %v3232
  %v3239 = vunpack.c.h.b16 %v3232
  %v3240 = vunpack.c.l.b16 %v3233
  %v3241 = vunpack.c.h.b16 %v3233
  %v3242 = vunpack.c.l.b16 %v3234
  %v3243 = vpack.c.b16 %v3238, %v3238
  %v3244 = vpack.c.b16 %v3239, %v3239
  %v3245 = vpack.c.b16 %v3240, %v3240
  %v3246 = vpack.c.b16 %v3241, %v3241
  %v3247 = vpack.c.b16 %v3242, %v3242
  %v3253 = vsel %vm1067, %v3247, 0
  %3255 = vmatprep.subr.bf16.mxu0 %v873
  %3256 = vmatpush1.bf16.msra.mxu0 %v872
  %3257 = vmatprep.subr.bf16.mxu0 %v870
  %3258 = vmatpush1.bf16.msra.mxu0 %v869
  %3259 = vmatprep.subr.bf16.mxu0 %v867
  %3260 = vmatpush1.bf16.msra.mxu0 %v866
  %3261 = vmatprep.subr.bf16.mxu0 %v864
  %3262 = vmatpush1.bf16.msra.mxu0 %v863
  %3263 = vmatprep.subr.bf16.mxu0 %v861
  %3264 = vmatpush1.bf16.msra.mxu0 %v860
  %3265 = vmatprep.subr.bf16.mxu0 %v858
  %3266 = vmatpush1.bf16.msra.mxu0 %v857
  %3267 = vmatprep.subr.bf16.mxu0 %v855
  %3268 = vmatpush1.bf16.msra.mxu0 %v854
  %3269 = vmatprep.subr.bf16.mxu0 %v852
  %3270 = vmatpush1.bf16.msra.mxu0 %v851
  %3271 = vmatprep.subr.bf16.mxu0 %v897
  %3272 = vmatpush2.bf16.msra.mxu0 %v896
  %3273 = vmatprep.subr.bf16.mxu0 %v894
  %3274 = vmatpush2.bf16.msra.mxu0 %v893
  %3275 = vmatprep.subr.bf16.mxu0 %v891
  %3276 = vmatpush2.bf16.msra.mxu0 %v890
  %3277 = vmatprep.subr.bf16.mxu0 %v888
  %3278 = vmatpush2.bf16.msra.mxu0 %v887
  %3279 = vmatprep.subr.bf16.mxu0 %v885
  %3280 = vmatpush2.bf16.msra.mxu0 %v884
  %3281 = vmatprep.subr.bf16.mxu0 %v882
  %3282 = vmatpush2.bf16.msra.mxu0 %v881
  %3283 = vmatprep.subr.bf16.mxu0 %v879
  %3284 = vmatpush2.bf16.msra.mxu0 %v878
  %3285 = vmatprep.subr.bf16.mxu0 %v876
  %3286 = vmatpush2.bf16.msra.mxu0 %v875
  %3287 = vmatprep.mubr.bf16.mxu0 %v3244
  %3288 = vmatmul.mubr.bf16.gmra.mxu0 %v3243
  %v3289 = vpop.f32.mrf.mxu0
  %v3290 = vadd.f32 %v462, %v3289
  %v3291 = vpop.f32.mrf.mxu0
  %v3292 = vadd.f32 %v466, %v3291
  %v3293 = vpop.f32.mrf.mxu0
  %v3294 = vpop.f32.mrf.mxu0
  %3295 = vdwg.mxu0
  %3296 = vmatprep.subr.bf16.mxu0 %v921
  %3297 = vmatpush1.bf16.msra.mxu0 %v920
  %3298 = vmatprep.subr.bf16.mxu0 %v918
  %3299 = vmatpush1.bf16.msra.mxu0 %v917
  %3300 = vmatprep.subr.bf16.mxu0 %v915
  %3301 = vmatpush1.bf16.msra.mxu0 %v914
  %3302 = vmatprep.subr.bf16.mxu0 %v912
  %3303 = vmatpush1.bf16.msra.mxu0 %v911
  %3304 = vmatprep.subr.bf16.mxu0 %v909
  %3305 = vmatpush1.bf16.msra.mxu0 %v908
  %3306 = vmatprep.subr.bf16.mxu0 %v906
  %3307 = vmatpush1.bf16.msra.mxu0 %v905
  %3308 = vmatprep.subr.bf16.mxu0 %v903
  %3309 = vmatpush1.bf16.msra.mxu0 %v902
  %3310 = vmatprep.subr.bf16.mxu0 %v900
  %3311 = vmatpush1.bf16.msra.mxu0 %v899
  %3312 = vmatprep.subr.bf16.mxu0 %v945
  %3313 = vmatpush2.bf16.msra.mxu0 %v944
  %3314 = vmatprep.subr.bf16.mxu0 %v942
  %3315 = vmatpush2.bf16.msra.mxu0 %v941
  %3316 = vmatprep.subr.bf16.mxu0 %v939
  %3317 = vmatpush2.bf16.msra.mxu0 %v938
  %3318 = vmatprep.subr.bf16.mxu0 %v936
  %3319 = vmatpush2.bf16.msra.mxu0 %v935
  %3320 = vmatprep.subr.bf16.mxu0 %v933
  %3321 = vmatpush2.bf16.msra.mxu0 %v932
  %3322 = vmatprep.subr.bf16.mxu0 %v930
  %3323 = vmatpush2.bf16.msra.mxu0 %v929
  %3324 = vmatprep.subr.bf16.mxu0 %v927
  %3325 = vmatpush2.bf16.msra.mxu0 %v926
  %3326 = vmatprep.subr.bf16.mxu0 %v924
  %3327 = vmatpush2.bf16.msra.mxu0 %v923
  %3328 = vmatprep.mubr.bf16.mxu0 %v3246
  %3329 = vmatmul.mubr.bf16.gmra.mxu0 %v3245
  %v3330 = vpop.f32.mrf.mxu0
  %v3331 = vadd.f32 %v3290, %v3330
  %v3332 = vpop.f32.mrf.mxu0
  %v3333 = vadd.f32 %v3292, %v3332
  %v3334 = vpop.f32.mrf.mxu0
  %v3335 = vpop.f32.mrf.mxu0
  %3336 = vdwg.mxu0
  %3337 = vmatprep.subr.bf16.mxu0 0
  %3338 = vmatpush1.bf16.msra.mxu0 0
  %3339 = vmatprep.subr.bf16.mxu0 0
  %3340 = vmatpush1.bf16.msra.mxu0 0
  %3341 = vmatprep.subr.bf16.mxu0 0
  %3342 = vmatpush1.bf16.msra.mxu0 0
  %3343 = vmatprep.subr.bf16.mxu0 0
  %3344 = vmatpush1.bf16.msra.mxu0 0
  %3345 = vmatprep.subr.bf16.mxu0 %v957
  %3346 = vmatpush1.bf16.msra.mxu0 %v956
  %3347 = vmatprep.subr.bf16.mxu0 %v954
  %3348 = vmatpush1.bf16.msra.mxu0 %v953
  %3349 = vmatprep.subr.bf16.mxu0 %v951
  %3350 = vmatpush1.bf16.msra.mxu0 %v950
  %3351 = vmatprep.subr.bf16.mxu0 %v948
  %3352 = vmatpush1.bf16.msra.mxu0 %v947
  %3353 = vmatprep.subr.bf16.mxu0 0
  %3354 = vmatpush2.bf16.msra.mxu0 0
  %3355 = vmatprep.subr.bf16.mxu0 0
  %3356 = vmatpush2.bf16.msra.mxu0 0
  %3357 = vmatprep.subr.bf16.mxu0 0
  %3358 = vmatpush2.bf16.msra.mxu0 0
  %3359 = vmatprep.subr.bf16.mxu0 0
  %3360 = vmatpush2.bf16.msra.mxu0 0
  %3361 = vmatprep.subr.bf16.mxu0 0
  %3362 = vmatpush2.bf16.msra.mxu0 0
  %3363 = vmatprep.subr.bf16.mxu0 0
  %3364 = vmatpush2.bf16.msra.mxu0 0
  %3365 = vmatprep.subr.bf16.mxu0 0
  %3366 = vmatpush2.bf16.msra.mxu0 0
  %3367 = vmatprep.subr.bf16.mxu0 0
  %3368 = vmatpush2.bf16.msra.mxu0 0
  %3369 = vmatprep.mubr.bf16.mxu0 0
  %3370 = vmatmul.mubr.bf16.gmra.mxu0 %v3253
  %v3371 = vpop.f32.mrf.mxu0
  %v3372 = vadd.f32 %v3331, %v3371
  %v3373 = vpop.f32.mrf.mxu0
  %v3374 = vadd.f32 %v3333, %v3373
  %v3375 = vpop.f32.mrf.mxu0
  %v3376 = vpop.f32.mrf.mxu0
  %3377 = vdwg.mxu0
  %3378 = vmatprep.subr.bf16.mxu0 0
  %3379 = vmatpush1.bf16.msra.mxu0 %v874
  %3380 = vmatprep.subr.bf16.mxu0 0
  %3381 = vmatpush1.bf16.msra.mxu0 %v871
  %3382 = vmatprep.subr.bf16.mxu0 0
  %3383 = vmatpush1.bf16.msra.mxu0 %v868
  %3384 = vmatprep.subr.bf16.mxu0 0
  %3385 = vmatpush1.bf16.msra.mxu0 %v865
  %3386 = vmatprep.subr.bf16.mxu0 0
  %3387 = vmatpush1.bf16.msra.mxu0 %v862
  %3388 = vmatprep.subr.bf16.mxu0 0
  %3389 = vmatpush1.bf16.msra.mxu0 %v859
  %3390 = vmatprep.subr.bf16.mxu0 0
  %3391 = vmatpush1.bf16.msra.mxu0 %v856
  %3392 = vmatprep.subr.bf16.mxu0 0
  %3393 = vmatpush1.bf16.msra.mxu0 %v853
  %3394 = vmatprep.subr.bf16.mxu0 0
  %3395 = vmatpush2.bf16.msra.mxu0 %v898
  %3396 = vmatprep.subr.bf16.mxu0 0
  %3397 = vmatpush2.bf16.msra.mxu0 %v895
  %3398 = vmatprep.subr.bf16.mxu0 0
  %3399 = vmatpush2.bf16.msra.mxu0 %v892
  %3400 = vmatprep.subr.bf16.mxu0 0
  %3401 = vmatpush2.bf16.msra.mxu0 %v889
  %3402 = vmatprep.subr.bf16.mxu0 0
  %3403 = vmatpush2.bf16.msra.mxu0 %v886
  %3404 = vmatprep.subr.bf16.mxu0 0
  %3405 = vmatpush2.bf16.msra.mxu0 %v883
  %3406 = vmatprep.subr.bf16.mxu0 0
  %3407 = vmatpush2.bf16.msra.mxu0 %v880
  %3408 = vmatprep.subr.bf16.mxu0 0
  %3409 = vmatpush2.bf16.msra.mxu0 %v877
  %3410 = vmatprep.mubr.bf16.mxu0 %v3244
  %3411 = vmatmul.mubr.bf16.gmra.mxu0 %v3243
  %v3412 = vpop.f32.mrf.mxu0
  %v3413 = vadd.f32 %v470, %v3412
  %v3414 = vpop.f32.mrf.mxu0
  %v3415 = vpop.f32.mrf.mxu0
  %v3416 = vpop.f32.mrf.mxu0
  %3417 = vdwg.mxu0
  %3418 = vmatprep.subr.bf16.mxu0 0
  %3419 = vmatpush1.bf16.msra.mxu0 %v922
  %3420 = vmatprep.subr.bf16.mxu0 0
  %3421 = vmatpush1.bf16.msra.mxu0 %v919
  %3422 = vmatprep.subr.bf16.mxu0 0
  %3423 = vmatpush1.bf16.msra.mxu0 %v916
  %3424 = vmatprep.subr.bf16.mxu0 0
  %3425 = vmatpush1.bf16.msra.mxu0 %v913
  %3426 = vmatprep.subr.bf16.mxu0 0
  %3427 = vmatpush1.bf16.msra.mxu0 %v910
  %3428 = vmatprep.subr.bf16.mxu0 0
  %3429 = vmatpush1.bf16.msra.mxu0 %v907
  %3430 = vmatprep.subr.bf16.mxu0 0
  %3431 = vmatpush1.bf16.msra.mxu0 %v904
  %3432 = vmatprep.subr.bf16.mxu0 0
  %3433 = vmatpush1.bf16.msra.mxu0 %v901
  %3434 = vmatprep.subr.bf16.mxu0 0
  %3435 = vmatpush2.bf16.msra.mxu0 %v946
  %3436 = vmatprep.subr.bf16.mxu0 0
  %3437 = vmatpush2.bf16.msra.mxu0 %v943
  %3438 = vmatprep.subr.bf16.mxu0 0
  %3439 = vmatpush2.bf16.msra.mxu0 %v940
  %3440 = vmatprep.subr.bf16.mxu0 0
  %3441 = vmatpush2.bf16.msra.mxu0 %v937
  %3442 = vmatprep.subr.bf16.mxu0 0
  %3443 = vmatpush2.bf16.msra.mxu0 %v934
  %3444 = vmatprep.subr.bf16.mxu0 0
  %3445 = vmatpush2.bf16.msra.mxu0 %v931
  %3446 = vmatprep.subr.bf16.mxu0 0
  %3447 = vmatpush2.bf16.msra.mxu0 %v928
  %3448 = vmatprep.subr.bf16.mxu0 0
  %3449 = vmatpush2.bf16.msra.mxu0 %v925
  %3450 = vmatprep.mubr.bf16.mxu0 %v3246
  %3451 = vmatmul.mubr.bf16.gmra.mxu0 %v3245
  %v3452 = vpop.f32.mrf.mxu0
  %v3453 = vadd.f32 %v3413, %v3452
  %v3454 = vpop.f32.mrf.mxu0
  %v3455 = vpop.f32.mrf.mxu0
  %v3456 = vpop.f32.mrf.mxu0
  %3457 = vdwg.mxu0
  %3458 = vmatprep.subr.bf16.mxu0 0
  %3459 = vmatpush1.bf16.msra.mxu0 0
  %3460 = vmatprep.subr.bf16.mxu0 0
  %3461 = vmatpush1.bf16.msra.mxu0 0
  %3462 = vmatprep.subr.bf16.mxu0 0
  %3463 = vmatpush1.bf16.msra.mxu0 0
  %3464 = vmatprep.subr.bf16.mxu0 0
  %3465 = vmatpush1.bf16.msra.mxu0 0
  %3466 = vmatprep.subr.bf16.mxu0 0
  %3467 = vmatpush1.bf16.msra.mxu0 %v958
  %3468 = vmatprep.subr.bf16.mxu0 0
  %3469 = vmatpush1.bf16.msra.mxu0 %v955
  %3470 = vmatprep.subr.bf16.mxu0 0
  %3471 = vmatpush1.bf16.msra.mxu0 %v952
  %3472 = vmatprep.subr.bf16.mxu0 0
  %3473 = vmatpush1.bf16.msra.mxu0 %v949
  %3474 = vmatprep.subr.bf16.mxu0 0
  %3475 = vmatpush2.bf16.msra.mxu0 0
  %3476 = vmatprep.subr.bf16.mxu0 0
  %3477 = vmatpush2.bf16.msra.mxu0 0
  %3478 = vmatprep.subr.bf16.mxu0 0
  %3479 = vmatpush2.bf16.msra.mxu0 0
  %3480 = vmatprep.subr.bf16.mxu0 0
  %3481 = vmatpush2.bf16.msra.mxu0 0
  %3482 = vmatprep.subr.bf16.mxu0 0
  %3483 = vmatpush2.bf16.msra.mxu0 0
  %3484 = vmatprep.subr.bf16.mxu0 0
  %3485 = vmatpush2.bf16.msra.mxu0 0
  %3486 = vmatprep.subr.bf16.mxu0 0
  %3487 = vmatpush2.bf16.msra.mxu0 0
  %3488 = vmatprep.subr.bf16.mxu0 0
  %3489 = vmatpush2.bf16.msra.mxu0 0
  %3490 = vmatprep.mubr.bf16.mxu0 0
  %3491 = vmatmul.mubr.bf16.gmra.mxu0 %v3253
  %v3492 = vpop.f32.mrf.mxu0
  %v3493 = vadd.f32 %v3453, %v3492
  %v3494 = vpop.f32.mrf.mxu0
  %v3495 = vpop.f32.mrf.mxu0
  %v3496 = vpop.f32.mrf.mxu0
  %3497 = vdwg.mxu0
  %v3498 = vmax.f32 %v3372, 0.0
  %v3499 = vmax.f32 %v3374, 0.0
  %v3500 = vmax.f32 %v3493, 0.0
  %v3501 = vpack.c.bf16 %v3498, %v3498
  %v3502 = vpack.c.bf16 %v3499, %v3499
  %v3503 = vpack.c.bf16 %v3500, %v3500
  %v3540 = vunpack.c.l.b16 %v238
  %v3541 = vunpack.c.h.b16 %v238
  %v3542 = vunpack.c.l.b16 %v239
  %v3543 = vunpack.c.h.b16 %v239
  %v3544 = vunpack.c.l.b16 %v240
  %v3545 = vunpack.c.h.b16 %v240
  %v3546 = vunpack.c.l.b16 %v241
  %v3547 = vunpack.c.h.b16 %v241
  %v3548 = vunpack.c.l.b16 %v242
  %v3549 = vunpack.c.h.b16 %v242
  %v3550 = vunpack.c.l.b16 %v243
  %v3551 = vunpack.c.h.b16 %v243
  %v3552 = vunpack.c.l.b16 %v244
  %v3553 = vunpack.c.h.b16 %v244
  %v3554 = vunpack.c.l.b16 %v245
  %v3555 = vunpack.c.h.b16 %v245
  %v3556 = vunpack.c.l.b16 %v246
  %v3557 = vunpack.c.h.b16 %v246
  %v3558 = vunpack.c.l.b16 %v247
  %v3559 = vunpack.c.h.b16 %v247
  %v3560 = vunpack.c.l.b16 %v248
  %v3561 = vunpack.c.h.b16 %v248
  %v3562 = vunpack.c.l.b16 %v249
  %v3563 = vunpack.c.h.b16 %v249
  %v3564 = vunpack.c.l.b16 %v250
  %v3565 = vunpack.c.h.b16 %v250
  %v3566 = vunpack.c.l.b16 %v251
  %v3567 = vunpack.c.h.b16 %v251
  %v3568 = vunpack.c.l.b16 %v252
  %v3569 = vunpack.c.h.b16 %v252
  %v3570 = vunpack.c.l.b16 %v253
  %v3571 = vunpack.c.h.b16 %v253
  %v3572 = vunpack.c.l.b16 %v254
  %v3573 = vunpack.c.h.b16 %v254
  %v3574 = vunpack.c.l.b16 %v255
  %v3575 = vunpack.c.h.b16 %v255
  %v3576 = vunpack.c.l.b16 %v256
  %v3577 = vunpack.c.h.b16 %v256
  %v3578 = vunpack.c.l.b16 %v257
  %v3579 = vunpack.c.h.b16 %v257
  %v3580 = vunpack.c.l.b16 %v258
  %v3581 = vunpack.c.h.b16 %v258
  %v3582 = vunpack.c.l.b16 %v259
  %v3583 = vunpack.c.h.b16 %v259
  %v3584 = vunpack.c.l.b16 %v260
  %v3585 = vunpack.c.h.b16 %v260
  %v3586 = vunpack.c.l.b16 %v261
  %v3587 = vunpack.c.h.b16 %v261
  %v3588 = vunpack.c.l.b16 %v262
  %v3589 = vunpack.c.h.b16 %v262
  %v3590 = vunpack.c.l.b16 %v263
  %v3591 = vunpack.c.h.b16 %v263
  %v3592 = vunpack.c.l.b16 %v264
  %v3593 = vunpack.c.h.b16 %v264
  %v3594 = vunpack.c.l.b16 %v265
  %v3595 = vunpack.c.h.b16 %v265
  %v3596 = vunpack.c.l.b16 %v266
  %v3597 = vunpack.c.h.b16 %v266
  %v3598 = vunpack.c.l.b16 %v267
  %v3599 = vunpack.c.h.b16 %v267
  %v3600 = vunpack.c.l.b16 %v268
  %v3601 = vunpack.c.h.b16 %v268
  %v3602 = vunpack.c.l.b16 %v269
  %v3603 = vunpack.c.h.b16 %v269
  %v3604 = vunpack.c.l.b16 %v270
  %v3605 = vunpack.c.h.b16 %v270
  %v3606 = vunpack.c.l.b16 %v271
  %v3607 = vunpack.c.h.b16 %v271
  %v3608 = vunpack.c.l.b16 %v272
  %v3609 = vunpack.c.h.b16 %v272
  %v3610 = vunpack.c.l.b16 %v273
  %v3611 = vunpack.c.h.b16 %v273
  %v3612 = vpack.c.b16 %v3542, %v3540
  %v3613 = vpack.c.b16 %v3543, %v3541
  %v3614 = vpack.c.b16 %v3546, %v3544
  %v3615 = vpack.c.b16 %v3547, %v3545
  %v3616 = vpack.c.b16 %v3550, %v3548
  %v3617 = vpack.c.b16 %v3551, %v3549
  %v3618 = vpack.c.b16 %v3554, %v3552
  %v3619 = vpack.c.b16 %v3555, %v3553
  %v3620 = vpack.c.b16 %v3558, %v3556
  %v3621 = vpack.c.b16 %v3559, %v3557
  %v3622 = vpack.c.b16 %v3562, %v3560
  %v3623 = vpack.c.b16 %v3563, %v3561
  %v3624 = vpack.c.b16 %v3566, %v3564
  %v3625 = vpack.c.b16 %v3567, %v3565
  %v3626 = vpack.c.b16 %v3570, %v3568
  %v3627 = vpack.c.b16 %v3571, %v3569
  %v3628 = vpack.c.b16 %v3574, %v3572
  %v3629 = vpack.c.b16 %v3575, %v3573
  %v3630 = vpack.c.b16 %v3578, %v3576
  %v3631 = vpack.c.b16 %v3579, %v3577
  %v3632 = vpack.c.b16 %v3582, %v3580
  %v3633 = vpack.c.b16 %v3583, %v3581
  %v3634 = vpack.c.b16 %v3586, %v3584
  %v3635 = vpack.c.b16 %v3587, %v3585
  %v3636 = vpack.c.b16 %v3590, %v3588
  %v3637 = vpack.c.b16 %v3591, %v3589
  %v3638 = vpack.c.b16 %v3594, %v3592
  %v3639 = vpack.c.b16 %v3595, %v3593
  %v3640 = vpack.c.b16 %v3598, %v3596
  %v3641 = vpack.c.b16 %v3599, %v3597
  %v3642 = vpack.c.b16 %v3602, %v3600
  %v3643 = vpack.c.b16 %v3603, %v3601
  %v3644 = vpack.c.b16 %v3606, %v3604
  %v3645 = vpack.c.b16 %v3607, %v3605
  %v3646 = vpack.c.b16 %v3610, %v3608
  %v3647 = vpack.c.b16 %v3611, %v3609
  %vm3684 = vcmask 261120
  %v3686 = vsel %vm3684, %v1592, 0
  %3688 = vmatprep.subr.bf16.mxu0 %v3627
  %3689 = vmatpush1.bf16.msra.mxu0 %v3626
  %3690 = vmatprep.subr.bf16.mxu0 %v3625
  %3691 = vmatpush1.bf16.msra.mxu0 %v3624
  %3692 = vmatprep.subr.bf16.mxu0 %v3623
  %3693 = vmatpush1.bf16.msra.mxu0 %v3622
  %3694 = vmatprep.subr.bf16.mxu0 %v3621
  %3695 = vmatpush1.bf16.msra.mxu0 %v3620
  %3696 = vmatprep.subr.bf16.mxu0 %v3619
  %3697 = vmatpush1.bf16.msra.mxu0 %v3618
  %3698 = vmatprep.subr.bf16.mxu0 %v3617
  %3699 = vmatpush1.bf16.msra.mxu0 %v3616
  %3700 = vmatprep.subr.bf16.mxu0 %v3615
  %3701 = vmatpush1.bf16.msra.mxu0 %v3614
  %3702 = vmatprep.subr.bf16.mxu0 %v3613
  %3703 = vmatpush1.bf16.msra.mxu0 %v3612
  %3704 = vmatprep.subr.bf16.mxu0 %v3643
  %3705 = vmatpush2.bf16.msra.mxu0 %v3642
  %3706 = vmatprep.subr.bf16.mxu0 %v3641
  %3707 = vmatpush2.bf16.msra.mxu0 %v3640
  %3708 = vmatprep.subr.bf16.mxu0 %v3639
  %3709 = vmatpush2.bf16.msra.mxu0 %v3638
  %3710 = vmatprep.subr.bf16.mxu0 %v3637
  %3711 = vmatpush2.bf16.msra.mxu0 %v3636
  %3712 = vmatprep.subr.bf16.mxu0 %v3635
  %3713 = vmatpush2.bf16.msra.mxu0 %v3634
  %3714 = vmatprep.subr.bf16.mxu0 %v3633
  %3715 = vmatpush2.bf16.msra.mxu0 %v3632
  %3716 = vmatprep.subr.bf16.mxu0 %v3631
  %3717 = vmatpush2.bf16.msra.mxu0 %v3630
  %3718 = vmatprep.subr.bf16.mxu0 %v3629
  %3719 = vmatpush2.bf16.msra.mxu0 %v3628
  %3720 = vmatprep.mubr.bf16.mxu0 %v1591
  %3721 = vmatmul.mubr.bf16.gmra.mxu0 %v1590
  %v3722 = vpop.f32.mrf.mxu0
  %v3723 = vadd.f32 0.0, %v3722
  %v3724 = vpop.f32.mrf.mxu0
  %v3725 = vadd.f32 0.0, %v3724
  %v3726 = vpop.f32.mrf.mxu0
  %v3727 = vpop.f32.mrf.mxu0
  %3728 = vdwg.mxu0
  %3729 = vmatprep.subr.bf16.mxu0 0
  %3730 = vmatpush1.bf16.msra.mxu0 0
  %3731 = vmatprep.subr.bf16.mxu0 0
  %3732 = vmatpush1.bf16.msra.mxu0 0
  %3733 = vmatprep.subr.bf16.mxu0 0
  %3734 = vmatpush1.bf16.msra.mxu0 0
  %3735 = vmatprep.subr.bf16.mxu0 0
  %3736 = vmatpush1.bf16.msra.mxu0 0
  %3737 = vmatprep.subr.bf16.mxu0 0
  %3738 = vmatpush1.bf16.msra.mxu0 0
  %3739 = vmatprep.subr.bf16.mxu0 0
  %3740 = vmatpush1.bf16.msra.mxu0 0
  %3741 = vmatprep.subr.bf16.mxu0 %v3647
  %3742 = vmatpush1.bf16.msra.mxu0 %v3646
  %3743 = vmatprep.subr.bf16.mxu0 %v3645
  %3744 = vmatpush1.bf16.msra.mxu0 %v3644
  %3745 = vmatprep.subr.bf16.mxu0 0
  %3746 = vmatpush2.bf16.msra.mxu0 0
  %3747 = vmatprep.subr.bf16.mxu0 0
  %3748 = vmatpush2.bf16.msra.mxu0 0
  %3749 = vmatprep.subr.bf16.mxu0 0
  %3750 = vmatpush2.bf16.msra.mxu0 0
  %3751 = vmatprep.subr.bf16.mxu0 0
  %3752 = vmatpush2.bf16.msra.mxu0 0
  %3753 = vmatprep.subr.bf16.mxu0 0
  %3754 = vmatpush2.bf16.msra.mxu0 0
  %3755 = vmatprep.subr.bf16.mxu0 0
  %3756 = vmatpush2.bf16.msra.mxu0 0
  %3757 = vmatprep.subr.bf16.mxu0 0
  %3758 = vmatpush2.bf16.msra.mxu0 0
  %3759 = vmatprep.subr.bf16.mxu0 0
  %3760 = vmatpush2.bf16.msra.mxu0 0
  %3761 = vmatprep.mubr.bf16.mxu0 0
  %3762 = vmatmul.mubr.bf16.gmra.mxu0 %v3686
  %v3763 = vpop.f32.mrf.mxu0
  %v3764 = vadd.f32 %v3723, %v3763
  %v3765 = vpop.f32.mrf.mxu0
  %v3766 = vadd.f32 %v3725, %v3765
  %v3767 = vpop.f32.mrf.mxu0
  %v3768 = vpop.f32.mrf.mxu0
  %3769 = vdwg.mxu0
  %v3806 = vunpack.c.l.b16 %v202
  %v3807 = vunpack.c.h.b16 %v202
  %v3808 = vunpack.c.l.b16 %v203
  %v3809 = vunpack.c.h.b16 %v203
  %v3810 = vunpack.c.l.b16 %v204
  %v3811 = vunpack.c.h.b16 %v204
  %v3812 = vunpack.c.l.b16 %v205
  %v3813 = vunpack.c.h.b16 %v205
  %v3814 = vunpack.c.l.b16 %v206
  %v3815 = vunpack.c.h.b16 %v206
  %v3816 = vunpack.c.l.b16 %v207
  %v3817 = vunpack.c.h.b16 %v207
  %v3818 = vunpack.c.l.b16 %v208
  %v3819 = vunpack.c.h.b16 %v208
  %v3820 = vunpack.c.l.b16 %v209
  %v3821 = vunpack.c.h.b16 %v209
  %v3822 = vunpack.c.l.b16 %v210
  %v3823 = vunpack.c.h.b16 %v210
  %v3824 = vunpack.c.l.b16 %v211
  %v3825 = vunpack.c.h.b16 %v211
  %v3826 = vunpack.c.l.b16 %v212
  %v3827 = vunpack.c.h.b16 %v212
  %v3828 = vunpack.c.l.b16 %v213
  %v3829 = vunpack.c.h.b16 %v213
  %v3830 = vunpack.c.l.b16 %v214
  %v3831 = vunpack.c.h.b16 %v214
  %v3832 = vunpack.c.l.b16 %v215
  %v3833 = vunpack.c.h.b16 %v215
  %v3834 = vunpack.c.l.b16 %v216
  %v3835 = vunpack.c.h.b16 %v216
  %v3836 = vunpack.c.l.b16 %v217
  %v3837 = vunpack.c.h.b16 %v217
  %v3838 = vunpack.c.l.b16 %v218
  %v3839 = vunpack.c.h.b16 %v218
  %v3840 = vunpack.c.l.b16 %v219
  %v3841 = vunpack.c.h.b16 %v219
  %v3842 = vunpack.c.l.b16 %v220
  %v3843 = vunpack.c.h.b16 %v220
  %v3844 = vunpack.c.l.b16 %v221
  %v3845 = vunpack.c.h.b16 %v221
  %v3846 = vunpack.c.l.b16 %v222
  %v3847 = vunpack.c.h.b16 %v222
  %v3848 = vunpack.c.l.b16 %v223
  %v3849 = vunpack.c.h.b16 %v223
  %v3850 = vunpack.c.l.b16 %v224
  %v3851 = vunpack.c.h.b16 %v224
  %v3852 = vunpack.c.l.b16 %v225
  %v3853 = vunpack.c.h.b16 %v225
  %v3854 = vunpack.c.l.b16 %v226
  %v3855 = vunpack.c.h.b16 %v226
  %v3856 = vunpack.c.l.b16 %v227
  %v3857 = vunpack.c.h.b16 %v227
  %v3858 = vunpack.c.l.b16 %v228
  %v3859 = vunpack.c.h.b16 %v228
  %v3860 = vunpack.c.l.b16 %v229
  %v3861 = vunpack.c.h.b16 %v229
  %v3862 = vunpack.c.l.b16 %v230
  %v3863 = vunpack.c.h.b16 %v230
  %v3864 = vunpack.c.l.b16 %v231
  %v3865 = vunpack.c.h.b16 %v231
  %v3866 = vunpack.c.l.b16 %v232
  %v3867 = vunpack.c.h.b16 %v232
  %v3868 = vunpack.c.l.b16 %v233
  %v3869 = vunpack.c.h.b16 %v233
  %v3870 = vunpack.c.l.b16 %v234
  %v3871 = vunpack.c.h.b16 %v234
  %v3872 = vunpack.c.l.b16 %v235
  %v3873 = vunpack.c.h.b16 %v235
  %v3874 = vunpack.c.l.b16 %v236
  %v3875 = vunpack.c.h.b16 %v236
  %v3876 = vunpack.c.l.b16 %v237
  %v3877 = vunpack.c.h.b16 %v237
  %v3878 = vpack.c.b16 %v3808, %v3806
  %v3879 = vpack.c.b16 %v3809, %v3807
  %v3880 = vpack.c.b16 %v3812, %v3810
  %v3881 = vpack.c.b16 %v3813, %v3811
  %v3882 = vpack.c.b16 %v3816, %v3814
  %v3883 = vpack.c.b16 %v3817, %v3815
  %v3884 = vpack.c.b16 %v3820, %v3818
  %v3885 = vpack.c.b16 %v3821, %v3819
  %v3886 = vpack.c.b16 %v3824, %v3822
  %v3887 = vpack.c.b16 %v3825, %v3823
  %v3888 = vpack.c.b16 %v3828, %v3826
  %v3889 = vpack.c.b16 %v3829, %v3827
  %v3890 = vpack.c.b16 %v3832, %v3830
  %v3891 = vpack.c.b16 %v3833, %v3831
  %v3892 = vpack.c.b16 %v3836, %v3834
  %v3893 = vpack.c.b16 %v3837, %v3835
  %v3894 = vpack.c.b16 %v3840, %v3838
  %v3895 = vpack.c.b16 %v3841, %v3839
  %v3896 = vpack.c.b16 %v3844, %v3842
  %v3897 = vpack.c.b16 %v3845, %v3843
  %v3898 = vpack.c.b16 %v3848, %v3846
  %v3899 = vpack.c.b16 %v3849, %v3847
  %v3900 = vpack.c.b16 %v3852, %v3850
  %v3901 = vpack.c.b16 %v3853, %v3851
  %v3902 = vpack.c.b16 %v3856, %v3854
  %v3903 = vpack.c.b16 %v3857, %v3855
  %v3904 = vpack.c.b16 %v3860, %v3858
  %v3905 = vpack.c.b16 %v3861, %v3859
  %v3906 = vpack.c.b16 %v3864, %v3862
  %v3907 = vpack.c.b16 %v3865, %v3863
  %v3908 = vpack.c.b16 %v3868, %v3866
  %v3909 = vpack.c.b16 %v3869, %v3867
  %v3910 = vpack.c.b16 %v3872, %v3870
  %v3911 = vpack.c.b16 %v3873, %v3871
  %v3912 = vpack.c.b16 %v3876, %v3874
  %v3913 = vpack.c.b16 %v3877, %v3875
  %v3951 = vsel %vm3684, %v1319, 0
  %3953 = vmatprep.subr.bf16.mxu0 %v3893
  %3954 = vmatpush1.bf16.msra.mxu0 %v3892
  %3955 = vmatprep.subr.bf16.mxu0 %v3891
  %3956 = vmatpush1.bf16.msra.mxu0 %v3890
  %3957 = vmatprep.subr.bf16.mxu0 %v3889
  %3958 = vmatpush1.bf16.msra.mxu0 %v3888
  %3959 = vmatprep.subr.bf16.mxu0 %v3887
  %3960 = vmatpush1.bf16.msra.mxu0 %v3886
  %3961 = vmatprep.subr.bf16.mxu0 %v3885
  %3962 = vmatpush1.bf16.msra.mxu0 %v3884
  %3963 = vmatprep.subr.bf16.mxu0 %v3883
  %3964 = vmatpush1.bf16.msra.mxu0 %v3882
  %3965 = vmatprep.subr.bf16.mxu0 %v3881
  %3966 = vmatpush1.bf16.msra.mxu0 %v3880
  %3967 = vmatprep.subr.bf16.mxu0 %v3879
  %3968 = vmatpush1.bf16.msra.mxu0 %v3878
  %3969 = vmatprep.subr.bf16.mxu0 %v3909
  %3970 = vmatpush2.bf16.msra.mxu0 %v3908
  %3971 = vmatprep.subr.bf16.mxu0 %v3907
  %3972 = vmatpush2.bf16.msra.mxu0 %v3906
  %3973 = vmatprep.subr.bf16.mxu0 %v3905
  %3974 = vmatpush2.bf16.msra.mxu0 %v3904
  %3975 = vmatprep.subr.bf16.mxu0 %v3903
  %3976 = vmatpush2.bf16.msra.mxu0 %v3902
  %3977 = vmatprep.subr.bf16.mxu0 %v3901
  %3978 = vmatpush2.bf16.msra.mxu0 %v3900
  %3979 = vmatprep.subr.bf16.mxu0 %v3899
  %3980 = vmatpush2.bf16.msra.mxu0 %v3898
  %3981 = vmatprep.subr.bf16.mxu0 %v3897
  %3982 = vmatpush2.bf16.msra.mxu0 %v3896
  %3983 = vmatprep.subr.bf16.mxu0 %v3895
  %3984 = vmatpush2.bf16.msra.mxu0 %v3894
  %3985 = vmatprep.mubr.bf16.mxu0 %v1318
  %3986 = vmatmul.mubr.bf16.gmra.mxu0 %v1317
  %v3987 = vpop.f32.mrf.mxu0
  %v3988 = vadd.f32 %v3764, %v3987
  %v3989 = vpop.f32.mrf.mxu0
  %v3990 = vadd.f32 %v3766, %v3989
  %v3991 = vpop.f32.mrf.mxu0
  %v3992 = vpop.f32.mrf.mxu0
  %3993 = vdwg.mxu0
  %3994 = vmatprep.subr.bf16.mxu0 0
  %3995 = vmatpush1.bf16.msra.mxu0 0
  %3996 = vmatprep.subr.bf16.mxu0 0
  %3997 = vmatpush1.bf16.msra.mxu0 0
  %3998 = vmatprep.subr.bf16.mxu0 0
  %3999 = vmatpush1.bf16.msra.mxu0 0
  %4000 = vmatprep.subr.bf16.mxu0 0
  %4001 = vmatpush1.bf16.msra.mxu0 0
  %4002 = vmatprep.subr.bf16.mxu0 0
  %4003 = vmatpush1.bf16.msra.mxu0 0
  %4004 = vmatprep.subr.bf16.mxu0 0
  %4005 = vmatpush1.bf16.msra.mxu0 0
  %4006 = vmatprep.subr.bf16.mxu0 %v3913
  %4007 = vmatpush1.bf16.msra.mxu0 %v3912
  %4008 = vmatprep.subr.bf16.mxu0 %v3911
  %4009 = vmatpush1.bf16.msra.mxu0 %v3910
  %4010 = vmatprep.subr.bf16.mxu0 0
  %4011 = vmatpush2.bf16.msra.mxu0 0
  %4012 = vmatprep.subr.bf16.mxu0 0
  %4013 = vmatpush2.bf16.msra.mxu0 0
  %4014 = vmatprep.subr.bf16.mxu0 0
  %4015 = vmatpush2.bf16.msra.mxu0 0
  %4016 = vmatprep.subr.bf16.mxu0 0
  %4017 = vmatpush2.bf16.msra.mxu0 0
  %4018 = vmatprep.subr.bf16.mxu0 0
  %4019 = vmatpush2.bf16.msra.mxu0 0
  %4020 = vmatprep.subr.bf16.mxu0 0
  %4021 = vmatpush2.bf16.msra.mxu0 0
  %4022 = vmatprep.subr.bf16.mxu0 0
  %4023 = vmatpush2.bf16.msra.mxu0 0
  %4024 = vmatprep.subr.bf16.mxu0 0
  %4025 = vmatpush2.bf16.msra.mxu0 0
  %4026 = vmatprep.mubr.bf16.mxu0 0
  %4027 = vmatmul.mubr.bf16.gmra.mxu0 %v3951
  %v4028 = vpop.f32.mrf.mxu0
  %v4029 = vadd.f32 %v3988, %v4028
  %v4030 = vpop.f32.mrf.mxu0
  %v4031 = vadd.f32 %v3990, %v4030
  %v4032 = vpop.f32.mrf.mxu0
  %v4033 = vpop.f32.mrf.mxu0
  %4034 = vdwg.mxu0
  %v4071 = vunpack.c.l.b16 %v274
  %v4072 = vunpack.c.h.b16 %v274
  %v4073 = vunpack.c.l.b16 %v275
  %v4074 = vunpack.c.h.b16 %v275
  %v4075 = vunpack.c.l.b16 %v276
  %v4076 = vunpack.c.h.b16 %v276
  %v4077 = vunpack.c.l.b16 %v277
  %v4078 = vunpack.c.h.b16 %v277
  %v4079 = vunpack.c.l.b16 %v278
  %v4080 = vunpack.c.h.b16 %v278
  %v4081 = vunpack.c.l.b16 %v279
  %v4082 = vunpack.c.h.b16 %v279
  %v4083 = vunpack.c.l.b16 %v280
  %v4084 = vunpack.c.h.b16 %v280
  %v4085 = vunpack.c.l.b16 %v281
  %v4086 = vunpack.c.h.b16 %v281
  %v4087 = vunpack.c.l.b16 %v282
  %v4088 = vunpack.c.h.b16 %v282
  %v4089 = vunpack.c.l.b16 %v283
  %v4090 = vunpack.c.h.b16 %v283
  %v4091 = vunpack.c.l.b16 %v284
  %v4092 = vunpack.c.h.b16 %v284
  %v4093 = vunpack.c.l.b16 %v285
  %v4094 = vunpack.c.h.b16 %v285
  %v4095 = vunpack.c.l.b16 %v286
  %v4096 = vunpack.c.h.b16 %v286
  %v4097 = vunpack.c.l.b16 %v287
  %v4098 = vunpack.c.h.b16 %v287
  %v4099 = vunpack.c.l.b16 %v288
  %v4100 = vunpack.c.h.b16 %v288
  %v4101 = vunpack.c.l.b16 %v289
  %v4102 = vunpack.c.h.b16 %v289
  %v4103 = vunpack.c.l.b16 %v290
  %v4104 = vunpack.c.h.b16 %v290
  %v4105 = vunpack.c.l.b16 %v291
  %v4106 = vunpack.c.h.b16 %v291
  %v4107 = vunpack.c.l.b16 %v292
  %v4108 = vunpack.c.h.b16 %v292
  %v4109 = vunpack.c.l.b16 %v293
  %v4110 = vunpack.c.h.b16 %v293
  %v4111 = vunpack.c.l.b16 %v294
  %v4112 = vunpack.c.h.b16 %v294
  %v4113 = vunpack.c.l.b16 %v295
  %v4114 = vunpack.c.h.b16 %v295
  %v4115 = vunpack.c.l.b16 %v296
  %v4116 = vunpack.c.h.b16 %v296
  %v4117 = vunpack.c.l.b16 %v297
  %v4118 = vunpack.c.h.b16 %v297
  %v4119 = vunpack.c.l.b16 %v298
  %v4120 = vunpack.c.h.b16 %v298
  %v4121 = vunpack.c.l.b16 %v299
  %v4122 = vunpack.c.h.b16 %v299
  %v4123 = vunpack.c.l.b16 %v300
  %v4124 = vunpack.c.h.b16 %v300
  %v4125 = vunpack.c.l.b16 %v301
  %v4126 = vunpack.c.h.b16 %v301
  %v4127 = vunpack.c.l.b16 %v302
  %v4128 = vunpack.c.h.b16 %v302
  %v4129 = vunpack.c.l.b16 %v303
  %v4130 = vunpack.c.h.b16 %v303
  %v4131 = vunpack.c.l.b16 %v304
  %v4132 = vunpack.c.h.b16 %v304
  %v4133 = vunpack.c.l.b16 %v305
  %v4134 = vunpack.c.h.b16 %v305
  %v4135 = vunpack.c.l.b16 %v306
  %v4136 = vunpack.c.h.b16 %v306
  %v4137 = vunpack.c.l.b16 %v307
  %v4138 = vunpack.c.h.b16 %v307
  %v4139 = vunpack.c.l.b16 %v308
  %v4140 = vunpack.c.h.b16 %v308
  %v4141 = vunpack.c.l.b16 %v309
  %v4142 = vunpack.c.h.b16 %v309
  %v4143 = vpack.c.b16 %v4073, %v4071
  %v4144 = vpack.c.b16 %v4074, %v4072
  %v4145 = vpack.c.b16 %v4077, %v4075
  %v4146 = vpack.c.b16 %v4078, %v4076
  %v4147 = vpack.c.b16 %v4081, %v4079
  %v4148 = vpack.c.b16 %v4082, %v4080
  %v4149 = vpack.c.b16 %v4085, %v4083
  %v4150 = vpack.c.b16 %v4086, %v4084
  %v4151 = vpack.c.b16 %v4089, %v4087
  %v4152 = vpack.c.b16 %v4090, %v4088
  %v4153 = vpack.c.b16 %v4093, %v4091
  %v4154 = vpack.c.b16 %v4094, %v4092
  %v4155 = vpack.c.b16 %v4097, %v4095
  %v4156 = vpack.c.b16 %v4098, %v4096
  %v4157 = vpack.c.b16 %v4101, %v4099
  %v4158 = vpack.c.b16 %v4102, %v4100
  %v4159 = vpack.c.b16 %v4105, %v4103
  %v4160 = vpack.c.b16 %v4106, %v4104
  %v4161 = vpack.c.b16 %v4109, %v4107
  %v4162 = vpack.c.b16 %v4110, %v4108
  %v4163 = vpack.c.b16 %v4113, %v4111
  %v4164 = vpack.c.b16 %v4114, %v4112
  %v4165 = vpack.c.b16 %v4117, %v4115
  %v4166 = vpack.c.b16 %v4118, %v4116
  %v4167 = vpack.c.b16 %v4121, %v4119
  %v4168 = vpack.c.b16 %v4122, %v4120
  %v4169 = vpack.c.b16 %v4125, %v4123
  %v4170 = vpack.c.b16 %v4126, %v4124
  %v4171 = vpack.c.b16 %v4129, %v4127
  %v4172 = vpack.c.b16 %v4130, %v4128
  %v4173 = vpack.c.b16 %v4133, %v4131
  %v4174 = vpack.c.b16 %v4134, %v4132
  %v4175 = vpack.c.b16 %v4137, %v4135
  %v4176 = vpack.c.b16 %v4138, %v4136
  %v4177 = vpack.c.b16 %v4141, %v4139
  %v4178 = vpack.c.b16 %v4142, %v4140
  %v4216 = vsel %vm3684, %v1865, 0
  %4218 = vmatprep.subr.bf16.mxu0 %v4158
  %4219 = vmatpush1.bf16.msra.mxu0 %v4157
  %4220 = vmatprep.subr.bf16.mxu0 %v4156
  %4221 = vmatpush1.bf16.msra.mxu0 %v4155
  %4222 = vmatprep.subr.bf16.mxu0 %v4154
  %4223 = vmatpush1.bf16.msra.mxu0 %v4153
  %4224 = vmatprep.subr.bf16.mxu0 %v4152
  %4225 = vmatpush1.bf16.msra.mxu0 %v4151
  %4226 = vmatprep.subr.bf16.mxu0 %v4150
  %4227 = vmatpush1.bf16.msra.mxu0 %v4149
  %4228 = vmatprep.subr.bf16.mxu0 %v4148
  %4229 = vmatpush1.bf16.msra.mxu0 %v4147
  %4230 = vmatprep.subr.bf16.mxu0 %v4146
  %4231 = vmatpush1.bf16.msra.mxu0 %v4145
  %4232 = vmatprep.subr.bf16.mxu0 %v4144
  %4233 = vmatpush1.bf16.msra.mxu0 %v4143
  %4234 = vmatprep.subr.bf16.mxu0 %v4174
  %4235 = vmatpush2.bf16.msra.mxu0 %v4173
  %4236 = vmatprep.subr.bf16.mxu0 %v4172
  %4237 = vmatpush2.bf16.msra.mxu0 %v4171
  %4238 = vmatprep.subr.bf16.mxu0 %v4170
  %4239 = vmatpush2.bf16.msra.mxu0 %v4169
  %4240 = vmatprep.subr.bf16.mxu0 %v4168
  %4241 = vmatpush2.bf16.msra.mxu0 %v4167
  %4242 = vmatprep.subr.bf16.mxu0 %v4166
  %4243 = vmatpush2.bf16.msra.mxu0 %v4165
  %4244 = vmatprep.subr.bf16.mxu0 %v4164
  %4245 = vmatpush2.bf16.msra.mxu0 %v4163
  %4246 = vmatprep.subr.bf16.mxu0 %v4162
  %4247 = vmatpush2.bf16.msra.mxu0 %v4161
  %4248 = vmatprep.subr.bf16.mxu0 %v4160
  %4249 = vmatpush2.bf16.msra.mxu0 %v4159
  %4250 = vmatprep.mubr.bf16.mxu0 %v1864
  %4251 = vmatmul.mubr.bf16.gmra.mxu0 %v1863
  %v4252 = vpop.f32.mrf.mxu0
  %v4253 = vadd.f32 0.0, %v4252
  %v4254 = vpop.f32.mrf.mxu0
  %v4255 = vadd.f32 0.0, %v4254
  %v4256 = vpop.f32.mrf.mxu0
  %v4257 = vpop.f32.mrf.mxu0
  %4258 = vdwg.mxu0
  %4259 = vmatprep.subr.bf16.mxu0 0
  %4260 = vmatpush1.bf16.msra.mxu0 0
  %4261 = vmatprep.subr.bf16.mxu0 0
  %4262 = vmatpush1.bf16.msra.mxu0 0
  %4263 = vmatprep.subr.bf16.mxu0 0
  %4264 = vmatpush1.bf16.msra.mxu0 0
  %4265 = vmatprep.subr.bf16.mxu0 0
  %4266 = vmatpush1.bf16.msra.mxu0 0
  %4267 = vmatprep.subr.bf16.mxu0 0
  %4268 = vmatpush1.bf16.msra.mxu0 0
  %4269 = vmatprep.subr.bf16.mxu0 0
  %4270 = vmatpush1.bf16.msra.mxu0 0
  %4271 = vmatprep.subr.bf16.mxu0 %v4178
  %4272 = vmatpush1.bf16.msra.mxu0 %v4177
  %4273 = vmatprep.subr.bf16.mxu0 %v4176
  %4274 = vmatpush1.bf16.msra.mxu0 %v4175
  %4275 = vmatprep.subr.bf16.mxu0 0
  %4276 = vmatpush2.bf16.msra.mxu0 0
  %4277 = vmatprep.subr.bf16.mxu0 0
  %4278 = vmatpush2.bf16.msra.mxu0 0
  %4279 = vmatprep.subr.bf16.mxu0 0
  %4280 = vmatpush2.bf16.msra.mxu0 0
  %4281 = vmatprep.subr.bf16.mxu0 0
  %4282 = vmatpush2.bf16.msra.mxu0 0
  %4283 = vmatprep.subr.bf16.mxu0 0
  %4284 = vmatpush2.bf16.msra.mxu0 0
  %4285 = vmatprep.subr.bf16.mxu0 0
  %4286 = vmatpush2.bf16.msra.mxu0 0
  %4287 = vmatprep.subr.bf16.mxu0 0
  %4288 = vmatpush2.bf16.msra.mxu0 0
  %4289 = vmatprep.subr.bf16.mxu0 0
  %4290 = vmatpush2.bf16.msra.mxu0 0
  %4291 = vmatprep.mubr.bf16.mxu0 0
  %4292 = vmatmul.mubr.bf16.gmra.mxu0 %v4216
  %v4293 = vpop.f32.mrf.mxu0
  %v4294 = vadd.f32 %v4253, %v4293
  %v4295 = vpop.f32.mrf.mxu0
  %v4296 = vadd.f32 %v4255, %v4295
  %v4297 = vpop.f32.mrf.mxu0
  %v4298 = vpop.f32.mrf.mxu0
  %4299 = vdwg.mxu0
  %v4300 = vadd.f32 %v4029, %v4294
  %v4301 = vadd.f32 %v4031, %v4296
  %v4338 = vunpack.c.l.b16 %v310
  %v4339 = vunpack.c.h.b16 %v310
  %v4340 = vunpack.c.l.b16 %v311
  %v4341 = vunpack.c.h.b16 %v311
  %v4342 = vunpack.c.l.b16 %v312
  %v4343 = vunpack.c.h.b16 %v312
  %v4344 = vunpack.c.l.b16 %v313
  %v4345 = vunpack.c.h.b16 %v313
  %v4346 = vunpack.c.l.b16 %v314
  %v4347 = vunpack.c.h.b16 %v314
  %v4348 = vunpack.c.l.b16 %v315
  %v4349 = vunpack.c.h.b16 %v315
  %v4350 = vunpack.c.l.b16 %v316
  %v4351 = vunpack.c.h.b16 %v316
  %v4352 = vunpack.c.l.b16 %v317
  %v4353 = vunpack.c.h.b16 %v317
  %v4354 = vunpack.c.l.b16 %v318
  %v4355 = vunpack.c.h.b16 %v318
  %v4356 = vunpack.c.l.b16 %v319
  %v4357 = vunpack.c.h.b16 %v319
  %v4358 = vunpack.c.l.b16 %v320
  %v4359 = vunpack.c.h.b16 %v320
  %v4360 = vunpack.c.l.b16 %v321
  %v4361 = vunpack.c.h.b16 %v321
  %v4362 = vunpack.c.l.b16 %v322
  %v4363 = vunpack.c.h.b16 %v322
  %v4364 = vunpack.c.l.b16 %v323
  %v4365 = vunpack.c.h.b16 %v323
  %v4366 = vunpack.c.l.b16 %v324
  %v4367 = vunpack.c.h.b16 %v324
  %v4368 = vunpack.c.l.b16 %v325
  %v4369 = vunpack.c.h.b16 %v325
  %v4370 = vunpack.c.l.b16 %v326
  %v4371 = vunpack.c.h.b16 %v326
  %v4372 = vunpack.c.l.b16 %v327
  %v4373 = vunpack.c.h.b16 %v327
  %v4374 = vunpack.c.l.b16 %v328
  %v4375 = vunpack.c.h.b16 %v328
  %v4376 = vunpack.c.l.b16 %v329
  %v4377 = vunpack.c.h.b16 %v329
  %v4378 = vunpack.c.l.b16 %v330
  %v4379 = vunpack.c.h.b16 %v330
  %v4380 = vunpack.c.l.b16 %v331
  %v4381 = vunpack.c.h.b16 %v331
  %v4382 = vunpack.c.l.b16 %v332
  %v4383 = vunpack.c.h.b16 %v332
  %v4384 = vunpack.c.l.b16 %v333
  %v4385 = vunpack.c.h.b16 %v333
  %v4386 = vunpack.c.l.b16 %v334
  %v4387 = vunpack.c.h.b16 %v334
  %v4388 = vunpack.c.l.b16 %v335
  %v4389 = vunpack.c.h.b16 %v335
  %v4390 = vunpack.c.l.b16 %v336
  %v4391 = vunpack.c.h.b16 %v336
  %v4392 = vunpack.c.l.b16 %v337
  %v4393 = vunpack.c.h.b16 %v337
  %v4394 = vunpack.c.l.b16 %v338
  %v4395 = vunpack.c.h.b16 %v338
  %v4396 = vunpack.c.l.b16 %v339
  %v4397 = vunpack.c.h.b16 %v339
  %v4398 = vunpack.c.l.b16 %v340
  %v4399 = vunpack.c.h.b16 %v340
  %v4400 = vunpack.c.l.b16 %v341
  %v4401 = vunpack.c.h.b16 %v341
  %v4402 = vunpack.c.l.b16 %v342
  %v4403 = vunpack.c.h.b16 %v342
  %v4404 = vunpack.c.l.b16 %v343
  %v4405 = vunpack.c.h.b16 %v343
  %v4406 = vunpack.c.l.b16 %v344
  %v4407 = vunpack.c.h.b16 %v344
  %v4408 = vunpack.c.l.b16 %v345
  %v4409 = vunpack.c.h.b16 %v345
  %v4410 = vpack.c.b16 %v4340, %v4338
  %v4411 = vpack.c.b16 %v4341, %v4339
  %v4412 = vpack.c.b16 %v4344, %v4342
  %v4413 = vpack.c.b16 %v4345, %v4343
  %v4414 = vpack.c.b16 %v4348, %v4346
  %v4415 = vpack.c.b16 %v4349, %v4347
  %v4416 = vpack.c.b16 %v4352, %v4350
  %v4417 = vpack.c.b16 %v4353, %v4351
  %v4418 = vpack.c.b16 %v4356, %v4354
  %v4419 = vpack.c.b16 %v4357, %v4355
  %v4420 = vpack.c.b16 %v4360, %v4358
  %v4421 = vpack.c.b16 %v4361, %v4359
  %v4422 = vpack.c.b16 %v4364, %v4362
  %v4423 = vpack.c.b16 %v4365, %v4363
  %v4424 = vpack.c.b16 %v4368, %v4366
  %v4425 = vpack.c.b16 %v4369, %v4367
  %v4426 = vpack.c.b16 %v4372, %v4370
  %v4427 = vpack.c.b16 %v4373, %v4371
  %v4428 = vpack.c.b16 %v4376, %v4374
  %v4429 = vpack.c.b16 %v4377, %v4375
  %v4430 = vpack.c.b16 %v4380, %v4378
  %v4431 = vpack.c.b16 %v4381, %v4379
  %v4432 = vpack.c.b16 %v4384, %v4382
  %v4433 = vpack.c.b16 %v4385, %v4383
  %v4434 = vpack.c.b16 %v4388, %v4386
  %v4435 = vpack.c.b16 %v4389, %v4387
  %v4436 = vpack.c.b16 %v4392, %v4390
  %v4437 = vpack.c.b16 %v4393, %v4391
  %v4438 = vpack.c.b16 %v4396, %v4394
  %v4439 = vpack.c.b16 %v4397, %v4395
  %v4440 = vpack.c.b16 %v4400, %v4398
  %v4441 = vpack.c.b16 %v4401, %v4399
  %v4442 = vpack.c.b16 %v4404, %v4402
  %v4443 = vpack.c.b16 %v4405, %v4403
  %v4444 = vpack.c.b16 %v4408, %v4406
  %v4445 = vpack.c.b16 %v4409, %v4407
  %v4483 = vsel %vm3684, %v2138, 0
  %4485 = vmatprep.subr.bf16.mxu0 %v4425
  %4486 = vmatpush1.bf16.msra.mxu0 %v4424
  %4487 = vmatprep.subr.bf16.mxu0 %v4423
  %4488 = vmatpush1.bf16.msra.mxu0 %v4422
  %4489 = vmatprep.subr.bf16.mxu0 %v4421
  %4490 = vmatpush1.bf16.msra.mxu0 %v4420
  %4491 = vmatprep.subr.bf16.mxu0 %v4419
  %4492 = vmatpush1.bf16.msra.mxu0 %v4418
  %4493 = vmatprep.subr.bf16.mxu0 %v4417
  %4494 = vmatpush1.bf16.msra.mxu0 %v4416
  %4495 = vmatprep.subr.bf16.mxu0 %v4415
  %4496 = vmatpush1.bf16.msra.mxu0 %v4414
  %4497 = vmatprep.subr.bf16.mxu0 %v4413
  %4498 = vmatpush1.bf16.msra.mxu0 %v4412
  %4499 = vmatprep.subr.bf16.mxu0 %v4411
  %4500 = vmatpush1.bf16.msra.mxu0 %v4410
  %4501 = vmatprep.subr.bf16.mxu0 %v4441
  %4502 = vmatpush2.bf16.msra.mxu0 %v4440
  %4503 = vmatprep.subr.bf16.mxu0 %v4439
  %4504 = vmatpush2.bf16.msra.mxu0 %v4438
  %4505 = vmatprep.subr.bf16.mxu0 %v4437
  %4506 = vmatpush2.bf16.msra.mxu0 %v4436
  %4507 = vmatprep.subr.bf16.mxu0 %v4435
  %4508 = vmatpush2.bf16.msra.mxu0 %v4434
  %4509 = vmatprep.subr.bf16.mxu0 %v4433
  %4510 = vmatpush2.bf16.msra.mxu0 %v4432
  %4511 = vmatprep.subr.bf16.mxu0 %v4431
  %4512 = vmatpush2.bf16.msra.mxu0 %v4430
  %4513 = vmatprep.subr.bf16.mxu0 %v4429
  %4514 = vmatpush2.bf16.msra.mxu0 %v4428
  %4515 = vmatprep.subr.bf16.mxu0 %v4427
  %4516 = vmatpush2.bf16.msra.mxu0 %v4426
  %4517 = vmatprep.mubr.bf16.mxu0 %v2137
  %4518 = vmatmul.mubr.bf16.gmra.mxu0 %v2136
  %v4519 = vpop.f32.mrf.mxu0
  %v4520 = vadd.f32 0.0, %v4519
  %v4521 = vpop.f32.mrf.mxu0
  %v4522 = vadd.f32 0.0, %v4521
  %v4523 = vpop.f32.mrf.mxu0
  %v4524 = vpop.f32.mrf.mxu0
  %4525 = vdwg.mxu0
  %4526 = vmatprep.subr.bf16.mxu0 0
  %4527 = vmatpush1.bf16.msra.mxu0 0
  %4528 = vmatprep.subr.bf16.mxu0 0
  %4529 = vmatpush1.bf16.msra.mxu0 0
  %4530 = vmatprep.subr.bf16.mxu0 0
  %4531 = vmatpush1.bf16.msra.mxu0 0
  %4532 = vmatprep.subr.bf16.mxu0 0
  %4533 = vmatpush1.bf16.msra.mxu0 0
  %4534 = vmatprep.subr.bf16.mxu0 0
  %4535 = vmatpush1.bf16.msra.mxu0 0
  %4536 = vmatprep.subr.bf16.mxu0 0
  %4537 = vmatpush1.bf16.msra.mxu0 0
  %4538 = vmatprep.subr.bf16.mxu0 %v4445
  %4539 = vmatpush1.bf16.msra.mxu0 %v4444
  %4540 = vmatprep.subr.bf16.mxu0 %v4443
  %4541 = vmatpush1.bf16.msra.mxu0 %v4442
  %4542 = vmatprep.subr.bf16.mxu0 0
  %4543 = vmatpush2.bf16.msra.mxu0 0
  %4544 = vmatprep.subr.bf16.mxu0 0
  %4545 = vmatpush2.bf16.msra.mxu0 0
  %4546 = vmatprep.subr.bf16.mxu0 0
  %4547 = vmatpush2.bf16.msra.mxu0 0
  %4548 = vmatprep.subr.bf16.mxu0 0
  %4549 = vmatpush2.bf16.msra.mxu0 0
  %4550 = vmatprep.subr.bf16.mxu0 0
  %4551 = vmatpush2.bf16.msra.mxu0 0
  %4552 = vmatprep.subr.bf16.mxu0 0
  %4553 = vmatpush2.bf16.msra.mxu0 0
  %4554 = vmatprep.subr.bf16.mxu0 0
  %4555 = vmatpush2.bf16.msra.mxu0 0
  %4556 = vmatprep.subr.bf16.mxu0 0
  %4557 = vmatpush2.bf16.msra.mxu0 0
  %4558 = vmatprep.mubr.bf16.mxu0 0
  %4559 = vmatmul.mubr.bf16.gmra.mxu0 %v4483
  %v4560 = vpop.f32.mrf.mxu0
  %v4561 = vadd.f32 %v4520, %v4560
  %v4562 = vpop.f32.mrf.mxu0
  %v4563 = vadd.f32 %v4522, %v4562
  %v4564 = vpop.f32.mrf.mxu0
  %v4565 = vpop.f32.mrf.mxu0
  %4566 = vdwg.mxu0
  %v4567 = vadd.f32 %v4300, %v4561
  %v4568 = vadd.f32 %v4301, %v4563
  %v4605 = vunpack.c.l.b16 %v346
  %v4606 = vunpack.c.h.b16 %v346
  %v4607 = vunpack.c.l.b16 %v347
  %v4608 = vunpack.c.h.b16 %v347
  %v4609 = vunpack.c.l.b16 %v348
  %v4610 = vunpack.c.h.b16 %v348
  %v4611 = vunpack.c.l.b16 %v349
  %v4612 = vunpack.c.h.b16 %v349
  %v4613 = vunpack.c.l.b16 %v350
  %v4614 = vunpack.c.h.b16 %v350
  %v4615 = vunpack.c.l.b16 %v351
  %v4616 = vunpack.c.h.b16 %v351
  %v4617 = vunpack.c.l.b16 %v352
  %v4618 = vunpack.c.h.b16 %v352
  %v4619 = vunpack.c.l.b16 %v353
  %v4620 = vunpack.c.h.b16 %v353
  %v4621 = vunpack.c.l.b16 %v354
  %v4622 = vunpack.c.h.b16 %v354
  %v4623 = vunpack.c.l.b16 %v355
  %v4624 = vunpack.c.h.b16 %v355
  %v4625 = vunpack.c.l.b16 %v356
  %v4626 = vunpack.c.h.b16 %v356
  %v4627 = vunpack.c.l.b16 %v357
  %v4628 = vunpack.c.h.b16 %v357
  %v4629 = vunpack.c.l.b16 %v358
  %v4630 = vunpack.c.h.b16 %v358
  %v4631 = vunpack.c.l.b16 %v359
  %v4632 = vunpack.c.h.b16 %v359
  %v4633 = vunpack.c.l.b16 %v360
  %v4634 = vunpack.c.h.b16 %v360
  %v4635 = vunpack.c.l.b16 %v361
  %v4636 = vunpack.c.h.b16 %v361
  %v4637 = vunpack.c.l.b16 %v362
  %v4638 = vunpack.c.h.b16 %v362
  %v4639 = vunpack.c.l.b16 %v363
  %v4640 = vunpack.c.h.b16 %v363
  %v4641 = vunpack.c.l.b16 %v364
  %v4642 = vunpack.c.h.b16 %v364
  %v4643 = vunpack.c.l.b16 %v365
  %v4644 = vunpack.c.h.b16 %v365
  %v4645 = vunpack.c.l.b16 %v366
  %v4646 = vunpack.c.h.b16 %v366
  %v4647 = vunpack.c.l.b16 %v367
  %v4648 = vunpack.c.h.b16 %v367
  %v4649 = vunpack.c.l.b16 %v368
  %v4650 = vunpack.c.h.b16 %v368
  %v4651 = vunpack.c.l.b16 %v369
  %v4652 = vunpack.c.h.b16 %v369
  %v4653 = vunpack.c.l.b16 %v370
  %v4654 = vunpack.c.h.b16 %v370
  %v4655 = vunpack.c.l.b16 %v371
  %v4656 = vunpack.c.h.b16 %v371
  %v4657 = vunpack.c.l.b16 %v372
  %v4658 = vunpack.c.h.b16 %v372
  %v4659 = vunpack.c.l.b16 %v373
  %v4660 = vunpack.c.h.b16 %v373
  %v4661 = vunpack.c.l.b16 %v374
  %v4662 = vunpack.c.h.b16 %v374
  %v4663 = vunpack.c.l.b16 %v375
  %v4664 = vunpack.c.h.b16 %v375
  %v4665 = vunpack.c.l.b16 %v376
  %v4666 = vunpack.c.h.b16 %v376
  %v4667 = vunpack.c.l.b16 %v377
  %v4668 = vunpack.c.h.b16 %v377
  %v4669 = vunpack.c.l.b16 %v378
  %v4670 = vunpack.c.h.b16 %v378
  %v4671 = vunpack.c.l.b16 %v379
  %v4672 = vunpack.c.h.b16 %v379
  %v4673 = vunpack.c.l.b16 %v380
  %v4674 = vunpack.c.h.b16 %v380
  %v4675 = vunpack.c.l.b16 %v381
  %v4676 = vunpack.c.h.b16 %v381
  %v4677 = vpack.c.b16 %v4607, %v4605
  %v4678 = vpack.c.b16 %v4608, %v4606
  %v4679 = vpack.c.b16 %v4611, %v4609
  %v4680 = vpack.c.b16 %v4612, %v4610
  %v4681 = vpack.c.b16 %v4615, %v4613
  %v4682 = vpack.c.b16 %v4616, %v4614
  %v4683 = vpack.c.b16 %v4619, %v4617
  %v4684 = vpack.c.b16 %v4620, %v4618
  %v4685 = vpack.c.b16 %v4623, %v4621
  %v4686 = vpack.c.b16 %v4624, %v4622
  %v4687 = vpack.c.b16 %v4627, %v4625
  %v4688 = vpack.c.b16 %v4628, %v4626
  %v4689 = vpack.c.b16 %v4631, %v4629
  %v4690 = vpack.c.b16 %v4632, %v4630
  %v4691 = vpack.c.b16 %v4635, %v4633
  %v4692 = vpack.c.b16 %v4636, %v4634
  %v4693 = vpack.c.b16 %v4639, %v4637
  %v4694 = vpack.c.b16 %v4640, %v4638
  %v4695 = vpack.c.b16 %v4643, %v4641
  %v4696 = vpack.c.b16 %v4644, %v4642
  %v4697 = vpack.c.b16 %v4647, %v4645
  %v4698 = vpack.c.b16 %v4648, %v4646
  %v4699 = vpack.c.b16 %v4651, %v4649
  %v4700 = vpack.c.b16 %v4652, %v4650
  %v4701 = vpack.c.b16 %v4655, %v4653
  %v4702 = vpack.c.b16 %v4656, %v4654
  %v4703 = vpack.c.b16 %v4659, %v4657
  %v4704 = vpack.c.b16 %v4660, %v4658
  %v4705 = vpack.c.b16 %v4663, %v4661
  %v4706 = vpack.c.b16 %v4664, %v4662
  %v4707 = vpack.c.b16 %v4667, %v4665
  %v4708 = vpack.c.b16 %v4668, %v4666
  %v4709 = vpack.c.b16 %v4671, %v4669
  %v4710 = vpack.c.b16 %v4672, %v4670
  %v4711 = vpack.c.b16 %v4675, %v4673
  %v4712 = vpack.c.b16 %v4676, %v4674
  %v4750 = vsel %vm3684, %v2411, 0
  %4752 = vmatprep.subr.bf16.mxu0 %v4692
  %4753 = vmatpush1.bf16.msra.mxu0 %v4691
  %4754 = vmatprep.subr.bf16.mxu0 %v4690
  %4755 = vmatpush1.bf16.msra.mxu0 %v4689
  %4756 = vmatprep.subr.bf16.mxu0 %v4688
  %4757 = vmatpush1.bf16.msra.mxu0 %v4687
  %4758 = vmatprep.subr.bf16.mxu0 %v4686
  %4759 = vmatpush1.bf16.msra.mxu0 %v4685
  %4760 = vmatprep.subr.bf16.mxu0 %v4684
  %4761 = vmatpush1.bf16.msra.mxu0 %v4683
  %4762 = vmatprep.subr.bf16.mxu0 %v4682
  %4763 = vmatpush1.bf16.msra.mxu0 %v4681
  %4764 = vmatprep.subr.bf16.mxu0 %v4680
  %4765 = vmatpush1.bf16.msra.mxu0 %v4679
  %4766 = vmatprep.subr.bf16.mxu0 %v4678
  %4767 = vmatpush1.bf16.msra.mxu0 %v4677
  %4768 = vmatprep.subr.bf16.mxu0 %v4708
  %4769 = vmatpush2.bf16.msra.mxu0 %v4707
  %4770 = vmatprep.subr.bf16.mxu0 %v4706
  %4771 = vmatpush2.bf16.msra.mxu0 %v4705
  %4772 = vmatprep.subr.bf16.mxu0 %v4704
  %4773 = vmatpush2.bf16.msra.mxu0 %v4703
  %4774 = vmatprep.subr.bf16.mxu0 %v4702
  %4775 = vmatpush2.bf16.msra.mxu0 %v4701
  %4776 = vmatprep.subr.bf16.mxu0 %v4700
  %4777 = vmatpush2.bf16.msra.mxu0 %v4699
  %4778 = vmatprep.subr.bf16.mxu0 %v4698
  %4779 = vmatpush2.bf16.msra.mxu0 %v4697
  %4780 = vmatprep.subr.bf16.mxu0 %v4696
  %4781 = vmatpush2.bf16.msra.mxu0 %v4695
  %4782 = vmatprep.subr.bf16.mxu0 %v4694
  %4783 = vmatpush2.bf16.msra.mxu0 %v4693
  %4784 = vmatprep.mubr.bf16.mxu0 %v2410
  %4785 = vmatmul.mubr.bf16.gmra.mxu0 %v2409
  %v4786 = vpop.f32.mrf.mxu0
  %v4787 = vadd.f32 0.0, %v4786
  %v4788 = vpop.f32.mrf.mxu0
  %v4789 = vadd.f32 0.0, %v4788
  %v4790 = vpop.f32.mrf.mxu0
  %v4791 = vpop.f32.mrf.mxu0
  %4792 = vdwg.mxu0
  %4793 = vmatprep.subr.bf16.mxu0 0
  %4794 = vmatpush1.bf16.msra.mxu0 0
  %4795 = vmatprep.subr.bf16.mxu0 0
  %4796 = vmatpush1.bf16.msra.mxu0 0
  %4797 = vmatprep.subr.bf16.mxu0 0
  %4798 = vmatpush1.bf16.msra.mxu0 0
  %4799 = vmatprep.subr.bf16.mxu0 0
  %4800 = vmatpush1.bf16.msra.mxu0 0
  %4801 = vmatprep.subr.bf16.mxu0 0
  %4802 = vmatpush1.bf16.msra.mxu0 0
  %4803 = vmatprep.subr.bf16.mxu0 0
  %4804 = vmatpush1.bf16.msra.mxu0 0
  %4805 = vmatprep.subr.bf16.mxu0 %v4712
  %4806 = vmatpush1.bf16.msra.mxu0 %v4711
  %4807 = vmatprep.subr.bf16.mxu0 %v4710
  %4808 = vmatpush1.bf16.msra.mxu0 %v4709
  %4809 = vmatprep.subr.bf16.mxu0 0
  %4810 = vmatpush2.bf16.msra.mxu0 0
  %4811 = vmatprep.subr.bf16.mxu0 0
  %4812 = vmatpush2.bf16.msra.mxu0 0
  %4813 = vmatprep.subr.bf16.mxu0 0
  %4814 = vmatpush2.bf16.msra.mxu0 0
  %4815 = vmatprep.subr.bf16.mxu0 0
  %4816 = vmatpush2.bf16.msra.mxu0 0
  %4817 = vmatprep.subr.bf16.mxu0 0
  %4818 = vmatpush2.bf16.msra.mxu0 0
  %4819 = vmatprep.subr.bf16.mxu0 0
  %4820 = vmatpush2.bf16.msra.mxu0 0
  %4821 = vmatprep.subr.bf16.mxu0 0
  %4822 = vmatpush2.bf16.msra.mxu0 0
  %4823 = vmatprep.subr.bf16.mxu0 0
  %4824 = vmatpush2.bf16.msra.mxu0 0
  %4825 = vmatprep.mubr.bf16.mxu0 0
  %4826 = vmatmul.mubr.bf16.gmra.mxu0 %v4750
  %v4827 = vpop.f32.mrf.mxu0
  %v4828 = vadd.f32 %v4787, %v4827
  %v4829 = vpop.f32.mrf.mxu0
  %v4830 = vadd.f32 %v4789, %v4829
  %v4831 = vpop.f32.mrf.mxu0
  %v4832 = vpop.f32.mrf.mxu0
  %4833 = vdwg.mxu0
  %v4834 = vadd.f32 %v4567, %v4828
  %v4835 = vadd.f32 %v4568, %v4830
  %v4837 = vlaneseq
  %v4838 = vshrl.u32 %v4837, 7
  %v4839 = vsub.s32 0, %v4838
  %v4840 = vrot.slane %v382, %v4839
  %v4841 = vlaneseq
  %v4842 = vshrl.u32 %v4841, 7
  %v4843 = vsub.s32 1, %v4842
  %v4844 = vrot.slane %v382, %v4843
  %v4847 = vadd.f32 %v4834, %v4840
  %v4848 = vadd.f32 %v4835, %v4844
  %v4849 = vmax.f32 %v4847, 0.0
  %v4850 = vmax.f32 %v4848, 0.0
  %v4851 = vpack.c.bf16 %v4849, %v4849
  %v4852 = vpack.c.bf16 %v4850, %v4850
  %4853 = vmatprep.subr.bf16.mxu0 %v3627
  %4854 = vmatpush1.bf16.msra.mxu0 %v3626
  %4855 = vmatprep.subr.bf16.mxu0 %v3625
  %4856 = vmatpush1.bf16.msra.mxu0 %v3624
  %4857 = vmatprep.subr.bf16.mxu0 %v3623
  %4858 = vmatpush1.bf16.msra.mxu0 %v3622
  %4859 = vmatprep.subr.bf16.mxu0 %v3621
  %4860 = vmatpush1.bf16.msra.mxu0 %v3620
  %4861 = vmatprep.subr.bf16.mxu0 %v3619
  %4862 = vmatpush1.bf16.msra.mxu0 %v3618
  %4863 = vmatprep.subr.bf16.mxu0 %v3617
  %4864 = vmatpush1.bf16.msra.mxu0 %v3616
  %4865 = vmatprep.subr.bf16.mxu0 %v3615
  %4866 = vmatpush1.bf16.msra.mxu0 %v3614
  %4867 = vmatprep.subr.bf16.mxu0 %v3613
  %4868 = vmatpush1.bf16.msra.mxu0 %v3612
  %4869 = vmatprep.subr.bf16.mxu0 %v3643
  %4870 = vmatpush2.bf16.msra.mxu0 %v3642
  %4871 = vmatprep.subr.bf16.mxu0 %v3641
  %4872 = vmatpush2.bf16.msra.mxu0 %v3640
  %4873 = vmatprep.subr.bf16.mxu0 %v3639
  %4874 = vmatpush2.bf16.msra.mxu0 %v3638
  %4875 = vmatprep.subr.bf16.mxu0 %v3637
  %4876 = vmatpush2.bf16.msra.mxu0 %v3636
  %4877 = vmatprep.subr.bf16.mxu0 %v3635
  %4878 = vmatpush2.bf16.msra.mxu0 %v3634
  %4879 = vmatprep.subr.bf16.mxu0 %v3633
  %4880 = vmatpush2.bf16.msra.mxu0 %v3632
  %4881 = vmatprep.subr.bf16.mxu0 %v3631
  %4882 = vmatpush2.bf16.msra.mxu0 %v3630
  %4883 = vmatprep.subr.bf16.mxu0 %v3629
  %4884 = vmatpush2.bf16.msra.mxu0 %v3628
  %4885 = vmatprep.mubr.bf16.mxu0 %v2137
  %4886 = vmatmul.mubr.bf16.gmra.mxu0 %v2136
  %v4887 = vpop.f32.mrf.mxu0
  %v4888 = vadd.f32 0.0, %v4887
  %v4889 = vpop.f32.mrf.mxu0
  %v4890 = vadd.f32 0.0, %v4889
  %v4891 = vpop.f32.mrf.mxu0
  %v4892 = vpop.f32.mrf.mxu0
  %4893 = vdwg.mxu0
  %4894 = vmatprep.subr.bf16.mxu0 0
  %4895 = vmatpush1.bf16.msra.mxu0 0
  %4896 = vmatprep.subr.bf16.mxu0 0
  %4897 = vmatpush1.bf16.msra.mxu0 0
  %4898 = vmatprep.subr.bf16.mxu0 0
  %4899 = vmatpush1.bf16.msra.mxu0 0
  %4900 = vmatprep.subr.bf16.mxu0 0
  %4901 = vmatpush1.bf16.msra.mxu0 0
  %4902 = vmatprep.subr.bf16.mxu0 0
  %4903 = vmatpush1.bf16.msra.mxu0 0
  %4904 = vmatprep.subr.bf16.mxu0 0
  %4905 = vmatpush1.bf16.msra.mxu0 0
  %4906 = vmatprep.subr.bf16.mxu0 %v3647
  %4907 = vmatpush1.bf16.msra.mxu0 %v3646
  %4908 = vmatprep.subr.bf16.mxu0 %v3645
  %4909 = vmatpush1.bf16.msra.mxu0 %v3644
  %4910 = vmatprep.subr.bf16.mxu0 0
  %4911 = vmatpush2.bf16.msra.mxu0 0
  %4912 = vmatprep.subr.bf16.mxu0 0
  %4913 = vmatpush2.bf16.msra.mxu0 0
  %4914 = vmatprep.subr.bf16.mxu0 0
  %4915 = vmatpush2.bf16.msra.mxu0 0
  %4916 = vmatprep.subr.bf16.mxu0 0
  %4917 = vmatpush2.bf16.msra.mxu0 0
  %4918 = vmatprep.subr.bf16.mxu0 0
  %4919 = vmatpush2.bf16.msra.mxu0 0
  %4920 = vmatprep.subr.bf16.mxu0 0
  %4921 = vmatpush2.bf16.msra.mxu0 0
  %4922 = vmatprep.subr.bf16.mxu0 0
  %4923 = vmatpush2.bf16.msra.mxu0 0
  %4924 = vmatprep.subr.bf16.mxu0 0
  %4925 = vmatpush2.bf16.msra.mxu0 0
  %4926 = vmatprep.mubr.bf16.mxu0 0
  %4927 = vmatmul.mubr.bf16.gmra.mxu0 %v4483
  %v4928 = vpop.f32.mrf.mxu0
  %v4929 = vadd.f32 %v4888, %v4928
  %v4930 = vpop.f32.mrf.mxu0
  %v4931 = vadd.f32 %v4890, %v4930
  %v4932 = vpop.f32.mrf.mxu0
  %v4933 = vpop.f32.mrf.mxu0
  %4934 = vdwg.mxu0
  %4935 = vmatprep.subr.bf16.mxu0 %v3893
  %4936 = vmatpush1.bf16.msra.mxu0 %v3892
  %4937 = vmatprep.subr.bf16.mxu0 %v3891
  %4938 = vmatpush1.bf16.msra.mxu0 %v3890
  %4939 = vmatprep.subr.bf16.mxu0 %v3889
  %4940 = vmatpush1.bf16.msra.mxu0 %v3888
  %4941 = vmatprep.subr.bf16.mxu0 %v3887
  %4942 = vmatpush1.bf16.msra.mxu0 %v3886
  %4943 = vmatprep.subr.bf16.mxu0 %v3885
  %4944 = vmatpush1.bf16.msra.mxu0 %v3884
  %4945 = vmatprep.subr.bf16.mxu0 %v3883
  %4946 = vmatpush1.bf16.msra.mxu0 %v3882
  %4947 = vmatprep.subr.bf16.mxu0 %v3881
  %4948 = vmatpush1.bf16.msra.mxu0 %v3880
  %4949 = vmatprep.subr.bf16.mxu0 %v3879
  %4950 = vmatpush1.bf16.msra.mxu0 %v3878
  %4951 = vmatprep.subr.bf16.mxu0 %v3909
  %4952 = vmatpush2.bf16.msra.mxu0 %v3908
  %4953 = vmatprep.subr.bf16.mxu0 %v3907
  %4954 = vmatpush2.bf16.msra.mxu0 %v3906
  %4955 = vmatprep.subr.bf16.mxu0 %v3905
  %4956 = vmatpush2.bf16.msra.mxu0 %v3904
  %4957 = vmatprep.subr.bf16.mxu0 %v3903
  %4958 = vmatpush2.bf16.msra.mxu0 %v3902
  %4959 = vmatprep.subr.bf16.mxu0 %v3901
  %4960 = vmatpush2.bf16.msra.mxu0 %v3900
  %4961 = vmatprep.subr.bf16.mxu0 %v3899
  %4962 = vmatpush2.bf16.msra.mxu0 %v3898
  %4963 = vmatprep.subr.bf16.mxu0 %v3897
  %4964 = vmatpush2.bf16.msra.mxu0 %v3896
  %4965 = vmatprep.subr.bf16.mxu0 %v3895
  %4966 = vmatpush2.bf16.msra.mxu0 %v3894
  %4967 = vmatprep.mubr.bf16.mxu0 %v1864
  %4968 = vmatmul.mubr.bf16.gmra.mxu0 %v1863
  %v4969 = vpop.f32.mrf.mxu0
  %v4970 = vadd.f32 %v4929, %v4969
  %v4971 = vpop.f32.mrf.mxu0
  %v4972 = vadd.f32 %v4931, %v4971
  %v4973 = vpop.f32.mrf.mxu0
  %v4974 = vpop.f32.mrf.mxu0
  %4975 = vdwg.mxu0
  %4976 = vmatprep.subr.bf16.mxu0 0
  %4977 = vmatpush1.bf16.msra.mxu0 0
  %4978 = vmatprep.subr.bf16.mxu0 0
  %4979 = vmatpush1.bf16.msra.mxu0 0
  %4980 = vmatprep.subr.bf16.mxu0 0
  %4981 = vmatpush1.bf16.msra.mxu0 0
  %4982 = vmatprep.subr.bf16.mxu0 0
  %4983 = vmatpush1.bf16.msra.mxu0 0
  %4984 = vmatprep.subr.bf16.mxu0 0
  %4985 = vmatpush1.bf16.msra.mxu0 0
  %4986 = vmatprep.subr.bf16.mxu0 0
  %4987 = vmatpush1.bf16.msra.mxu0 0
  %4988 = vmatprep.subr.bf16.mxu0 %v3913
  %4989 = vmatpush1.bf16.msra.mxu0 %v3912
  %4990 = vmatprep.subr.bf16.mxu0 %v3911
  %4991 = vmatpush1.bf16.msra.mxu0 %v3910
  %4992 = vmatprep.subr.bf16.mxu0 0
  %4993 = vmatpush2.bf16.msra.mxu0 0
  %4994 = vmatprep.subr.bf16.mxu0 0
  %4995 = vmatpush2.bf16.msra.mxu0 0
  %4996 = vmatprep.subr.bf16.mxu0 0
  %4997 = vmatpush2.bf16.msra.mxu0 0
  %4998 = vmatprep.subr.bf16.mxu0 0
  %4999 = vmatpush2.bf16.msra.mxu0 0
  %5000 = vmatprep.subr.bf16.mxu0 0
  %5001 = vmatpush2.bf16.msra.mxu0 0
  %5002 = vmatprep.subr.bf16.mxu0 0
  %5003 = vmatpush2.bf16.msra.mxu0 0
  %5004 = vmatprep.subr.bf16.mxu0 0
  %5005 = vmatpush2.bf16.msra.mxu0 0
  %5006 = vmatprep.subr.bf16.mxu0 0
  %5007 = vmatpush2.bf16.msra.mxu0 0
  %5008 = vmatprep.mubr.bf16.mxu0 0
  %5009 = vmatmul.mubr.bf16.gmra.mxu0 %v4216
  %v5010 = vpop.f32.mrf.mxu0
  %v5011 = vadd.f32 %v4970, %v5010
  %v5012 = vpop.f32.mrf.mxu0
  %v5013 = vadd.f32 %v4972, %v5012
  %v5014 = vpop.f32.mrf.mxu0
  %v5015 = vpop.f32.mrf.mxu0
  %5016 = vdwg.mxu0
  %5017 = vmatprep.subr.bf16.mxu0 %v4158
  %5018 = vmatpush1.bf16.msra.mxu0 %v4157
  %5019 = vmatprep.subr.bf16.mxu0 %v4156
  %5020 = vmatpush1.bf16.msra.mxu0 %v4155
  %5021 = vmatprep.subr.bf16.mxu0 %v4154
  %5022 = vmatpush1.bf16.msra.mxu0 %v4153
  %5023 = vmatprep.subr.bf16.mxu0 %v4152
  %5024 = vmatpush1.bf16.msra.mxu0 %v4151
  %5025 = vmatprep.subr.bf16.mxu0 %v4150
  %5026 = vmatpush1.bf16.msra.mxu0 %v4149
  %5027 = vmatprep.subr.bf16.mxu0 %v4148
  %5028 = vmatpush1.bf16.msra.mxu0 %v4147
  %5029 = vmatprep.subr.bf16.mxu0 %v4146
  %5030 = vmatpush1.bf16.msra.mxu0 %v4145
  %5031 = vmatprep.subr.bf16.mxu0 %v4144
  %5032 = vmatpush1.bf16.msra.mxu0 %v4143
  %5033 = vmatprep.subr.bf16.mxu0 %v4174
  %5034 = vmatpush2.bf16.msra.mxu0 %v4173
  %5035 = vmatprep.subr.bf16.mxu0 %v4172
  %5036 = vmatpush2.bf16.msra.mxu0 %v4171
  %5037 = vmatprep.subr.bf16.mxu0 %v4170
  %5038 = vmatpush2.bf16.msra.mxu0 %v4169
  %5039 = vmatprep.subr.bf16.mxu0 %v4168
  %5040 = vmatpush2.bf16.msra.mxu0 %v4167
  %5041 = vmatprep.subr.bf16.mxu0 %v4166
  %5042 = vmatpush2.bf16.msra.mxu0 %v4165
  %5043 = vmatprep.subr.bf16.mxu0 %v4164
  %5044 = vmatpush2.bf16.msra.mxu0 %v4163
  %5045 = vmatprep.subr.bf16.mxu0 %v4162
  %5046 = vmatpush2.bf16.msra.mxu0 %v4161
  %5047 = vmatprep.subr.bf16.mxu0 %v4160
  %5048 = vmatpush2.bf16.msra.mxu0 %v4159
  %5049 = vmatprep.mubr.bf16.mxu0 %v2410
  %5050 = vmatmul.mubr.bf16.gmra.mxu0 %v2409
  %v5051 = vpop.f32.mrf.mxu0
  %v5052 = vadd.f32 0.0, %v5051
  %v5053 = vpop.f32.mrf.mxu0
  %v5054 = vadd.f32 0.0, %v5053
  %v5055 = vpop.f32.mrf.mxu0
  %v5056 = vpop.f32.mrf.mxu0
  %5057 = vdwg.mxu0
  %5058 = vmatprep.subr.bf16.mxu0 0
  %5059 = vmatpush1.bf16.msra.mxu0 0
  %5060 = vmatprep.subr.bf16.mxu0 0
  %5061 = vmatpush1.bf16.msra.mxu0 0
  %5062 = vmatprep.subr.bf16.mxu0 0
  %5063 = vmatpush1.bf16.msra.mxu0 0
  %5064 = vmatprep.subr.bf16.mxu0 0
  %5065 = vmatpush1.bf16.msra.mxu0 0
  %5066 = vmatprep.subr.bf16.mxu0 0
  %5067 = vmatpush1.bf16.msra.mxu0 0
  %5068 = vmatprep.subr.bf16.mxu0 0
  %5069 = vmatpush1.bf16.msra.mxu0 0
  %5070 = vmatprep.subr.bf16.mxu0 %v4178
  %5071 = vmatpush1.bf16.msra.mxu0 %v4177
  %5072 = vmatprep.subr.bf16.mxu0 %v4176
  %5073 = vmatpush1.bf16.msra.mxu0 %v4175
  %5074 = vmatprep.subr.bf16.mxu0 0
  %5075 = vmatpush2.bf16.msra.mxu0 0
  %5076 = vmatprep.subr.bf16.mxu0 0
  %5077 = vmatpush2.bf16.msra.mxu0 0
  %5078 = vmatprep.subr.bf16.mxu0 0
  %5079 = vmatpush2.bf16.msra.mxu0 0
  %5080 = vmatprep.subr.bf16.mxu0 0
  %5081 = vmatpush2.bf16.msra.mxu0 0
  %5082 = vmatprep.subr.bf16.mxu0 0
  %5083 = vmatpush2.bf16.msra.mxu0 0
  %5084 = vmatprep.subr.bf16.mxu0 0
  %5085 = vmatpush2.bf16.msra.mxu0 0
  %5086 = vmatprep.subr.bf16.mxu0 0
  %5087 = vmatpush2.bf16.msra.mxu0 0
  %5088 = vmatprep.subr.bf16.mxu0 0
  %5089 = vmatpush2.bf16.msra.mxu0 0
  %5090 = vmatprep.mubr.bf16.mxu0 0
  %5091 = vmatmul.mubr.bf16.gmra.mxu0 %v4750
  %v5092 = vpop.f32.mrf.mxu0
  %v5093 = vadd.f32 %v5052, %v5092
  %v5094 = vpop.f32.mrf.mxu0
  %v5095 = vadd.f32 %v5054, %v5094
  %v5096 = vpop.f32.mrf.mxu0
  %v5097 = vpop.f32.mrf.mxu0
  %5098 = vdwg.mxu0
  %v5099 = vadd.f32 %v5011, %v5093
  %v5100 = vadd.f32 %v5013, %v5095
  %v5102 = vsel %vm3684, %v2684, 0
  %5104 = vmatprep.subr.bf16.mxu0 %v4425
  %5105 = vmatpush1.bf16.msra.mxu0 %v4424
  %5106 = vmatprep.subr.bf16.mxu0 %v4423
  %5107 = vmatpush1.bf16.msra.mxu0 %v4422
  %5108 = vmatprep.subr.bf16.mxu0 %v4421
  %5109 = vmatpush1.bf16.msra.mxu0 %v4420
  %5110 = vmatprep.subr.bf16.mxu0 %v4419
  %5111 = vmatpush1.bf16.msra.mxu0 %v4418
  %5112 = vmatprep.subr.bf16.mxu0 %v4417
  %5113 = vmatpush1.bf16.msra.mxu0 %v4416
  %5114 = vmatprep.subr.bf16.mxu0 %v4415
  %5115 = vmatpush1.bf16.msra.mxu0 %v4414
  %5116 = vmatprep.subr.bf16.mxu0 %v4413
  %5117 = vmatpush1.bf16.msra.mxu0 %v4412
  %5118 = vmatprep.subr.bf16.mxu0 %v4411
  %5119 = vmatpush1.bf16.msra.mxu0 %v4410
  %5120 = vmatprep.subr.bf16.mxu0 %v4441
  %5121 = vmatpush2.bf16.msra.mxu0 %v4440
  %5122 = vmatprep.subr.bf16.mxu0 %v4439
  %5123 = vmatpush2.bf16.msra.mxu0 %v4438
  %5124 = vmatprep.subr.bf16.mxu0 %v4437
  %5125 = vmatpush2.bf16.msra.mxu0 %v4436
  %5126 = vmatprep.subr.bf16.mxu0 %v4435
  %5127 = vmatpush2.bf16.msra.mxu0 %v4434
  %5128 = vmatprep.subr.bf16.mxu0 %v4433
  %5129 = vmatpush2.bf16.msra.mxu0 %v4432
  %5130 = vmatprep.subr.bf16.mxu0 %v4431
  %5131 = vmatpush2.bf16.msra.mxu0 %v4430
  %5132 = vmatprep.subr.bf16.mxu0 %v4429
  %5133 = vmatpush2.bf16.msra.mxu0 %v4428
  %5134 = vmatprep.subr.bf16.mxu0 %v4427
  %5135 = vmatpush2.bf16.msra.mxu0 %v4426
  %5136 = vmatprep.mubr.bf16.mxu0 %v2683
  %5137 = vmatmul.mubr.bf16.gmra.mxu0 %v2682
  %v5138 = vpop.f32.mrf.mxu0
  %v5139 = vadd.f32 0.0, %v5138
  %v5140 = vpop.f32.mrf.mxu0
  %v5141 = vadd.f32 0.0, %v5140
  %v5142 = vpop.f32.mrf.mxu0
  %v5143 = vpop.f32.mrf.mxu0
  %5144 = vdwg.mxu0
  %5145 = vmatprep.subr.bf16.mxu0 0
  %5146 = vmatpush1.bf16.msra.mxu0 0
  %5147 = vmatprep.subr.bf16.mxu0 0
  %5148 = vmatpush1.bf16.msra.mxu0 0
  %5149 = vmatprep.subr.bf16.mxu0 0
  %5150 = vmatpush1.bf16.msra.mxu0 0
  %5151 = vmatprep.subr.bf16.mxu0 0
  %5152 = vmatpush1.bf16.msra.mxu0 0
  %5153 = vmatprep.subr.bf16.mxu0 0
  %5154 = vmatpush1.bf16.msra.mxu0 0
  %5155 = vmatprep.subr.bf16.mxu0 0
  %5156 = vmatpush1.bf16.msra.mxu0 0
  %5157 = vmatprep.subr.bf16.mxu0 %v4445
  %5158 = vmatpush1.bf16.msra.mxu0 %v4444
  %5159 = vmatprep.subr.bf16.mxu0 %v4443
  %5160 = vmatpush1.bf16.msra.mxu0 %v4442
  %5161 = vmatprep.subr.bf16.mxu0 0
  %5162 = vmatpush2.bf16.msra.mxu0 0
  %5163 = vmatprep.subr.bf16.mxu0 0
  %5164 = vmatpush2.bf16.msra.mxu0 0
  %5165 = vmatprep.subr.bf16.mxu0 0
  %5166 = vmatpush2.bf16.msra.mxu0 0
  %5167 = vmatprep.subr.bf16.mxu0 0
  %5168 = vmatpush2.bf16.msra.mxu0 0
  %5169 = vmatprep.subr.bf16.mxu0 0
  %5170 = vmatpush2.bf16.msra.mxu0 0
  %5171 = vmatprep.subr.bf16.mxu0 0
  %5172 = vmatpush2.bf16.msra.mxu0 0
  %5173 = vmatprep.subr.bf16.mxu0 0
  %5174 = vmatpush2.bf16.msra.mxu0 0
  %5175 = vmatprep.subr.bf16.mxu0 0
  %5176 = vmatpush2.bf16.msra.mxu0 0
  %5177 = vmatprep.mubr.bf16.mxu0 0
  %5178 = vmatmul.mubr.bf16.gmra.mxu0 %v5102
  %v5179 = vpop.f32.mrf.mxu0
  %v5180 = vadd.f32 %v5139, %v5179
  %v5181 = vpop.f32.mrf.mxu0
  %v5182 = vadd.f32 %v5141, %v5181
  %v5183 = vpop.f32.mrf.mxu0
  %v5184 = vpop.f32.mrf.mxu0
  %5185 = vdwg.mxu0
  %v5186 = vadd.f32 %v5099, %v5180
  %v5187 = vadd.f32 %v5100, %v5182
  %v5189 = vsel %vm3684, %v2957, 0
  %5191 = vmatprep.subr.bf16.mxu0 %v4692
  %5192 = vmatpush1.bf16.msra.mxu0 %v4691
  %5193 = vmatprep.subr.bf16.mxu0 %v4690
  %5194 = vmatpush1.bf16.msra.mxu0 %v4689
  %5195 = vmatprep.subr.bf16.mxu0 %v4688
  %5196 = vmatpush1.bf16.msra.mxu0 %v4687
  %5197 = vmatprep.subr.bf16.mxu0 %v4686
  %5198 = vmatpush1.bf16.msra.mxu0 %v4685
  %5199 = vmatprep.subr.bf16.mxu0 %v4684
  %5200 = vmatpush1.bf16.msra.mxu0 %v4683
  %5201 = vmatprep.subr.bf16.mxu0 %v4682
  %5202 = vmatpush1.bf16.msra.mxu0 %v4681
  %5203 = vmatprep.subr.bf16.mxu0 %v4680
  %5204 = vmatpush1.bf16.msra.mxu0 %v4679
  %5205 = vmatprep.subr.bf16.mxu0 %v4678
  %5206 = vmatpush1.bf16.msra.mxu0 %v4677
  %5207 = vmatprep.subr.bf16.mxu0 %v4708
  %5208 = vmatpush2.bf16.msra.mxu0 %v4707
  %5209 = vmatprep.subr.bf16.mxu0 %v4706
  %5210 = vmatpush2.bf16.msra.mxu0 %v4705
  %5211 = vmatprep.subr.bf16.mxu0 %v4704
  %5212 = vmatpush2.bf16.msra.mxu0 %v4703
  %5213 = vmatprep.subr.bf16.mxu0 %v4702
  %5214 = vmatpush2.bf16.msra.mxu0 %v4701
  %5215 = vmatprep.subr.bf16.mxu0 %v4700
  %5216 = vmatpush2.bf16.msra.mxu0 %v4699
  %5217 = vmatprep.subr.bf16.mxu0 %v4698
  %5218 = vmatpush2.bf16.msra.mxu0 %v4697
  %5219 = vmatprep.subr.bf16.mxu0 %v4696
  %5220 = vmatpush2.bf16.msra.mxu0 %v4695
  %5221 = vmatprep.subr.bf16.mxu0 %v4694
  %5222 = vmatpush2.bf16.msra.mxu0 %v4693
  %5223 = vmatprep.mubr.bf16.mxu0 %v2956
  %5224 = vmatmul.mubr.bf16.gmra.mxu0 %v2955
  %v5225 = vpop.f32.mrf.mxu0
  %v5226 = vadd.f32 0.0, %v5225
  %v5227 = vpop.f32.mrf.mxu0
  %v5228 = vadd.f32 0.0, %v5227
  %v5229 = vpop.f32.mrf.mxu0
  %v5230 = vpop.f32.mrf.mxu0
  %5231 = vdwg.mxu0
  %5232 = vmatprep.subr.bf16.mxu0 0
  %5233 = vmatpush1.bf16.msra.mxu0 0
  %5234 = vmatprep.subr.bf16.mxu0 0
  %5235 = vmatpush1.bf16.msra.mxu0 0
  %5236 = vmatprep.subr.bf16.mxu0 0
  %5237 = vmatpush1.bf16.msra.mxu0 0
  %5238 = vmatprep.subr.bf16.mxu0 0
  %5239 = vmatpush1.bf16.msra.mxu0 0
  %5240 = vmatprep.subr.bf16.mxu0 0
  %5241 = vmatpush1.bf16.msra.mxu0 0
  %5242 = vmatprep.subr.bf16.mxu0 0
  %5243 = vmatpush1.bf16.msra.mxu0 0
  %5244 = vmatprep.subr.bf16.mxu0 %v4712
  %5245 = vmatpush1.bf16.msra.mxu0 %v4711
  %5246 = vmatprep.subr.bf16.mxu0 %v4710
  %5247 = vmatpush1.bf16.msra.mxu0 %v4709
  %5248 = vmatprep.subr.bf16.mxu0 0
  %5249 = vmatpush2.bf16.msra.mxu0 0
  %5250 = vmatprep.subr.bf16.mxu0 0
  %5251 = vmatpush2.bf16.msra.mxu0 0
  %5252 = vmatprep.subr.bf16.mxu0 0
  %5253 = vmatpush2.bf16.msra.mxu0 0
  %5254 = vmatprep.subr.bf16.mxu0 0
  %5255 = vmatpush2.bf16.msra.mxu0 0
  %5256 = vmatprep.subr.bf16.mxu0 0
  %5257 = vmatpush2.bf16.msra.mxu0 0
  %5258 = vmatprep.subr.bf16.mxu0 0
  %5259 = vmatpush2.bf16.msra.mxu0 0
  %5260 = vmatprep.subr.bf16.mxu0 0
  %5261 = vmatpush2.bf16.msra.mxu0 0
  %5262 = vmatprep.subr.bf16.mxu0 0
  %5263 = vmatpush2.bf16.msra.mxu0 0
  %5264 = vmatprep.mubr.bf16.mxu0 0
  %5265 = vmatmul.mubr.bf16.gmra.mxu0 %v5189
  %v5266 = vpop.f32.mrf.mxu0
  %v5267 = vadd.f32 %v5226, %v5266
  %v5268 = vpop.f32.mrf.mxu0
  %v5269 = vadd.f32 %v5228, %v5268
  %v5270 = vpop.f32.mrf.mxu0
  %v5271 = vpop.f32.mrf.mxu0
  %5272 = vdwg.mxu0
  %v5273 = vadd.f32 %v5186, %v5267
  %v5274 = vadd.f32 %v5187, %v5269
  %v5275 = vadd.f32 %v5273, %v4840
  %v5276 = vadd.f32 %v5274, %v4844
  %v5277 = vmax.f32 %v5275, 0.0
  %v5278 = vmax.f32 %v5276, 0.0
  %v5279 = vpack.c.bf16 %v5277, %v5277
  %v5280 = vpack.c.bf16 %v5278, %v5278
  %v5305 = vunpack.c.l.b16 %v407
  %v5306 = vunpack.c.l.b16 %v408
  %v5307 = vunpack.c.l.b16 %v409
  %v5308 = vunpack.c.l.b16 %v410
  %v5309 = vunpack.c.l.b16 %v411
  %v5310 = vunpack.c.l.b16 %v412
  %v5311 = vunpack.c.l.b16 %v413
  %v5312 = vunpack.c.l.b16 %v414
  %v5313 = vunpack.c.l.b16 %v415
  %v5314 = vunpack.c.l.b16 %v416
  %v5315 = vunpack.c.l.b16 %v417
  %v5316 = vunpack.c.l.b16 %v418
  %v5317 = vunpack.c.l.b16 %v419
  %v5318 = vunpack.c.l.b16 %v420
  %v5319 = vunpack.c.l.b16 %v421
  %v5320 = vunpack.c.l.b16 %v422
  %v5321 = vunpack.c.l.b16 %v423
  %v5322 = vunpack.c.l.b16 %v424
  %v5323 = vunpack.c.l.b16 %v425
  %v5324 = vunpack.c.l.b16 %v426
  %v5325 = vunpack.c.l.b16 %v427
  %v5326 = vunpack.c.l.b16 %v428
  %v5327 = vunpack.c.l.b16 %v429
  %v5328 = vunpack.c.l.b16 %v430
  %v5329 = vpack.c.b16 %v5306, %v5305
  %v5330 = vpack.c.b16 %v5308, %v5307
  %v5331 = vpack.c.b16 %v5310, %v5309
  %v5332 = vpack.c.b16 %v5312, %v5311
  %v5333 = vpack.c.b16 %v5314, %v5313
  %v5334 = vpack.c.b16 %v5316, %v5315
  %v5335 = vpack.c.b16 %v5318, %v5317
  %v5336 = vpack.c.b16 %v5320, %v5319
  %v5337 = vpack.c.b16 %v5322, %v5321
  %v5338 = vpack.c.b16 %v5324, %v5323
  %v5339 = vpack.c.b16 %v5326, %v5325
  %v5340 = vpack.c.b16 %v5328, %v5327
  %v5354 = vsel %vm1067, %v5280, 0
  %5356 = vmatprep.subr.bf16.mxu0 0
  %5357 = vmatpush1.bf16.msra.mxu0 %v5336
  %5358 = vmatprep.subr.bf16.mxu0 0
  %5359 = vmatpush1.bf16.msra.mxu0 %v5335
  %5360 = vmatprep.subr.bf16.mxu0 0
  %5361 = vmatpush1.bf16.msra.mxu0 %v5334
  %5362 = vmatprep.subr.bf16.mxu0 0
  %5363 = vmatpush1.bf16.msra.mxu0 %v5333
  %5364 = vmatprep.subr.bf16.mxu0 0
  %5365 = vmatpush1.bf16.msra.mxu0 %v5332
  %5366 = vmatprep.subr.bf16.mxu0 0
  %5367 = vmatpush1.bf16.msra.mxu0 %v5331
  %5368 = vmatprep.subr.bf16.mxu0 0
  %5369 = vmatpush1.bf16.msra.mxu0 %v5330
  %5370 = vmatprep.subr.bf16.mxu0 0
  %5371 = vmatpush1.bf16.msra.mxu0 %v5329
  %5372 = vmatprep.subr.bf16.mxu0 0
  %5373 = vmatpush2.bf16.msra.mxu0 0
  %5374 = vmatprep.subr.bf16.mxu0 0
  %5375 = vmatpush2.bf16.msra.mxu0 0
  %5376 = vmatprep.subr.bf16.mxu0 0
  %5377 = vmatpush2.bf16.msra.mxu0 0
  %5378 = vmatprep.subr.bf16.mxu0 0
  %5379 = vmatpush2.bf16.msra.mxu0 0
  %5380 = vmatprep.subr.bf16.mxu0 0
  %5381 = vmatpush2.bf16.msra.mxu0 %v5340
  %5382 = vmatprep.subr.bf16.mxu0 0
  %5383 = vmatpush2.bf16.msra.mxu0 %v5339
  %5384 = vmatprep.subr.bf16.mxu0 0
  %5385 = vmatpush2.bf16.msra.mxu0 %v5338
  %5386 = vmatprep.subr.bf16.mxu0 0
  %5387 = vmatpush2.bf16.msra.mxu0 %v5337
  %5388 = vmatprep.mubr.bf16.mxu0 %v5354
  %5389 = vmatmul.mubr.bf16.gmra.mxu0 %v5279
  %v5390 = vpop.f32.mrf.mxu0
  %v5391 = vadd.f32 0.0, %v5390
  %v5392 = vpop.f32.mrf.mxu0
  %v5393 = vpop.f32.mrf.mxu0
  %v5394 = vpop.f32.mrf.mxu0
  %5395 = vdwg.mxu0
  %v5420 = vunpack.c.l.b16 %v383
  %v5421 = vunpack.c.l.b16 %v384
  %v5422 = vunpack.c.l.b16 %v385
  %v5423 = vunpack.c.l.b16 %v386
  %v5424 = vunpack.c.l.b16 %v387
  %v5425 = vunpack.c.l.b16 %v388
  %v5426 = vunpack.c.l.b16 %v389
  %v5427 = vunpack.c.l.b16 %v390
  %v5428 = vunpack.c.l.b16 %v391
  %v5429 = vunpack.c.l.b16 %v392
  %v5430 = vunpack.c.l.b16 %v393
  %v5431 = vunpack.c.l.b16 %v394
  %v5432 = vunpack.c.l.b16 %v395
  %v5433 = vunpack.c.l.b16 %v396
  %v5434 = vunpack.c.l.b16 %v397
  %v5435 = vunpack.c.l.b16 %v398
  %v5436 = vunpack.c.l.b16 %v399
  %v5437 = vunpack.c.l.b16 %v400
  %v5438 = vunpack.c.l.b16 %v401
  %v5439 = vunpack.c.l.b16 %v402
  %v5440 = vunpack.c.l.b16 %v403
  %v5441 = vunpack.c.l.b16 %v404
  %v5442 = vunpack.c.l.b16 %v405
  %v5443 = vunpack.c.l.b16 %v406
  %v5444 = vpack.c.b16 %v5421, %v5420
  %v5445 = vpack.c.b16 %v5423, %v5422
  %v5446 = vpack.c.b16 %v5425, %v5424
  %v5447 = vpack.c.b16 %v5427, %v5426
  %v5448 = vpack.c.b16 %v5429, %v5428
  %v5449 = vpack.c.b16 %v5431, %v5430
  %v5450 = vpack.c.b16 %v5433, %v5432
  %v5451 = vpack.c.b16 %v5435, %v5434
  %v5452 = vpack.c.b16 %v5437, %v5436
  %v5453 = vpack.c.b16 %v5439, %v5438
  %v5454 = vpack.c.b16 %v5441, %v5440
  %v5455 = vpack.c.b16 %v5443, %v5442
  %v5469 = vsel %vm1067, %v4852, 0
  %5471 = vmatprep.subr.bf16.mxu0 0
  %5472 = vmatpush1.bf16.msra.mxu0 %v5451
  %5473 = vmatprep.subr.bf16.mxu0 0
  %5474 = vmatpush1.bf16.msra.mxu0 %v5450
  %5475 = vmatprep.subr.bf16.mxu0 0
  %5476 = vmatpush1.bf16.msra.mxu0 %v5449
  %5477 = vmatprep.subr.bf16.mxu0 0
  %5478 = vmatpush1.bf16.msra.mxu0 %v5448
  %5479 = vmatprep.subr.bf16.mxu0 0
  %5480 = vmatpush1.bf16.msra.mxu0 %v5447
  %5481 = vmatprep.subr.bf16.mxu0 0
  %5482 = vmatpush1.bf16.msra.mxu0 %v5446
  %5483 = vmatprep.subr.bf16.mxu0 0
  %5484 = vmatpush1.bf16.msra.mxu0 %v5445
  %5485 = vmatprep.subr.bf16.mxu0 0
  %5486 = vmatpush1.bf16.msra.mxu0 %v5444
  %5487 = vmatprep.subr.bf16.mxu0 0
  %5488 = vmatpush2.bf16.msra.mxu0 0
  %5489 = vmatprep.subr.bf16.mxu0 0
  %5490 = vmatpush2.bf16.msra.mxu0 0
  %5491 = vmatprep.subr.bf16.mxu0 0
  %5492 = vmatpush2.bf16.msra.mxu0 0
  %5493 = vmatprep.subr.bf16.mxu0 0
  %5494 = vmatpush2.bf16.msra.mxu0 0
  %5495 = vmatprep.subr.bf16.mxu0 0
  %5496 = vmatpush2.bf16.msra.mxu0 %v5455
  %5497 = vmatprep.subr.bf16.mxu0 0
  %5498 = vmatpush2.bf16.msra.mxu0 %v5454
  %5499 = vmatprep.subr.bf16.mxu0 0
  %5500 = vmatpush2.bf16.msra.mxu0 %v5453
  %5501 = vmatprep.subr.bf16.mxu0 0
  %5502 = vmatpush2.bf16.msra.mxu0 %v5452
  %5503 = vmatprep.mubr.bf16.mxu0 %v5469
  %5504 = vmatmul.mubr.bf16.gmra.mxu0 %v4851
  %v5505 = vpop.f32.mrf.mxu0
  %v5506 = vadd.f32 %v5391, %v5505
  %v5507 = vpop.f32.mrf.mxu0
  %v5508 = vpop.f32.mrf.mxu0
  %v5509 = vpop.f32.mrf.mxu0
  %5510 = vdwg.mxu0
  %5511 = vmatprep.subr.bf16.mxu0 %v3627
  %5512 = vmatpush1.bf16.msra.mxu0 %v3626
  %5513 = vmatprep.subr.bf16.mxu0 %v3625
  %5514 = vmatpush1.bf16.msra.mxu0 %v3624
  %5515 = vmatprep.subr.bf16.mxu0 %v3623
  %5516 = vmatpush1.bf16.msra.mxu0 %v3622
  %5517 = vmatprep.subr.bf16.mxu0 %v3621
  %5518 = vmatpush1.bf16.msra.mxu0 %v3620
  %5519 = vmatprep.subr.bf16.mxu0 %v3619
  %5520 = vmatpush1.bf16.msra.mxu0 %v3618
  %5521 = vmatprep.subr.bf16.mxu0 %v3617
  %5522 = vmatpush1.bf16.msra.mxu0 %v3616
  %5523 = vmatprep.subr.bf16.mxu0 %v3615
  %5524 = vmatpush1.bf16.msra.mxu0 %v3614
  %5525 = vmatprep.subr.bf16.mxu0 %v3613
  %5526 = vmatpush1.bf16.msra.mxu0 %v3612
  %5527 = vmatprep.subr.bf16.mxu0 %v3643
  %5528 = vmatpush2.bf16.msra.mxu0 %v3642
  %5529 = vmatprep.subr.bf16.mxu0 %v3641
  %5530 = vmatpush2.bf16.msra.mxu0 %v3640
  %5531 = vmatprep.subr.bf16.mxu0 %v3639
  %5532 = vmatpush2.bf16.msra.mxu0 %v3638
  %5533 = vmatprep.subr.bf16.mxu0 %v3637
  %5534 = vmatpush2.bf16.msra.mxu0 %v3636
  %5535 = vmatprep.subr.bf16.mxu0 %v3635
  %5536 = vmatpush2.bf16.msra.mxu0 %v3634
  %5537 = vmatprep.subr.bf16.mxu0 %v3633
  %5538 = vmatpush2.bf16.msra.mxu0 %v3632
  %5539 = vmatprep.subr.bf16.mxu0 %v3631
  %5540 = vmatpush2.bf16.msra.mxu0 %v3630
  %5541 = vmatprep.subr.bf16.mxu0 %v3629
  %5542 = vmatpush2.bf16.msra.mxu0 %v3628
  %5543 = vmatprep.mubr.bf16.mxu0 %v2683
  %5544 = vmatmul.mubr.bf16.gmra.mxu0 %v2682
  %v5545 = vpop.f32.mrf.mxu0
  %v5546 = vadd.f32 0.0, %v5545
  %v5547 = vpop.f32.mrf.mxu0
  %v5548 = vadd.f32 0.0, %v5547
  %v5549 = vpop.f32.mrf.mxu0
  %v5550 = vpop.f32.mrf.mxu0
  %5551 = vdwg.mxu0
  %5552 = vmatprep.subr.bf16.mxu0 0
  %5553 = vmatpush1.bf16.msra.mxu0 0
  %5554 = vmatprep.subr.bf16.mxu0 0
  %5555 = vmatpush1.bf16.msra.mxu0 0
  %5556 = vmatprep.subr.bf16.mxu0 0
  %5557 = vmatpush1.bf16.msra.mxu0 0
  %5558 = vmatprep.subr.bf16.mxu0 0
  %5559 = vmatpush1.bf16.msra.mxu0 0
  %5560 = vmatprep.subr.bf16.mxu0 0
  %5561 = vmatpush1.bf16.msra.mxu0 0
  %5562 = vmatprep.subr.bf16.mxu0 0
  %5563 = vmatpush1.bf16.msra.mxu0 0
  %5564 = vmatprep.subr.bf16.mxu0 %v3647
  %5565 = vmatpush1.bf16.msra.mxu0 %v3646
  %5566 = vmatprep.subr.bf16.mxu0 %v3645
  %5567 = vmatpush1.bf16.msra.mxu0 %v3644
  %5568 = vmatprep.subr.bf16.mxu0 0
  %5569 = vmatpush2.bf16.msra.mxu0 0
  %5570 = vmatprep.subr.bf16.mxu0 0
  %5571 = vmatpush2.bf16.msra.mxu0 0
  %5572 = vmatprep.subr.bf16.mxu0 0
  %5573 = vmatpush2.bf16.msra.mxu0 0
  %5574 = vmatprep.subr.bf16.mxu0 0
  %5575 = vmatpush2.bf16.msra.mxu0 0
  %5576 = vmatprep.subr.bf16.mxu0 0
  %5577 = vmatpush2.bf16.msra.mxu0 0
  %5578 = vmatprep.subr.bf16.mxu0 0
  %5579 = vmatpush2.bf16.msra.mxu0 0
  %5580 = vmatprep.subr.bf16.mxu0 0
  %5581 = vmatpush2.bf16.msra.mxu0 0
  %5582 = vmatprep.subr.bf16.mxu0 0
  %5583 = vmatpush2.bf16.msra.mxu0 0
  %5584 = vmatprep.mubr.bf16.mxu0 0
  %5585 = vmatmul.mubr.bf16.gmra.mxu0 %v5102
  %v5586 = vpop.f32.mrf.mxu0
  %v5587 = vadd.f32 %v5546, %v5586
  %v5588 = vpop.f32.mrf.mxu0
  %v5589 = vadd.f32 %v5548, %v5588
  %v5590 = vpop.f32.mrf.mxu0
  %v5591 = vpop.f32.mrf.mxu0
  %5592 = vdwg.mxu0
  %5593 = vmatprep.subr.bf16.mxu0 %v3893
  %5594 = vmatpush1.bf16.msra.mxu0 %v3892
  %5595 = vmatprep.subr.bf16.mxu0 %v3891
  %5596 = vmatpush1.bf16.msra.mxu0 %v3890
  %5597 = vmatprep.subr.bf16.mxu0 %v3889
  %5598 = vmatpush1.bf16.msra.mxu0 %v3888
  %5599 = vmatprep.subr.bf16.mxu0 %v3887
  %5600 = vmatpush1.bf16.msra.mxu0 %v3886
  %5601 = vmatprep.subr.bf16.mxu0 %v3885
  %5602 = vmatpush1.bf16.msra.mxu0 %v3884
  %5603 = vmatprep.subr.bf16.mxu0 %v3883
  %5604 = vmatpush1.bf16.msra.mxu0 %v3882
  %5605 = vmatprep.subr.bf16.mxu0 %v3881
  %5606 = vmatpush1.bf16.msra.mxu0 %v3880
  %5607 = vmatprep.subr.bf16.mxu0 %v3879
  %5608 = vmatpush1.bf16.msra.mxu0 %v3878
  %5609 = vmatprep.subr.bf16.mxu0 %v3909
  %5610 = vmatpush2.bf16.msra.mxu0 %v3908
  %5611 = vmatprep.subr.bf16.mxu0 %v3907
  %5612 = vmatpush2.bf16.msra.mxu0 %v3906
  %5613 = vmatprep.subr.bf16.mxu0 %v3905
  %5614 = vmatpush2.bf16.msra.mxu0 %v3904
  %5615 = vmatprep.subr.bf16.mxu0 %v3903
  %5616 = vmatpush2.bf16.msra.mxu0 %v3902
  %5617 = vmatprep.subr.bf16.mxu0 %v3901
  %5618 = vmatpush2.bf16.msra.mxu0 %v3900
  %5619 = vmatprep.subr.bf16.mxu0 %v3899
  %5620 = vmatpush2.bf16.msra.mxu0 %v3898
  %5621 = vmatprep.subr.bf16.mxu0 %v3897
  %5622 = vmatpush2.bf16.msra.mxu0 %v3896
  %5623 = vmatprep.subr.bf16.mxu0 %v3895
  %5624 = vmatpush2.bf16.msra.mxu0 %v3894
  %5625 = vmatprep.mubr.bf16.mxu0 %v2410
  %5626 = vmatmul.mubr.bf16.gmra.mxu0 %v2409
  %v5627 = vpop.f32.mrf.mxu0
  %v5628 = vadd.f32 %v5587, %v5627
  %v5629 = vpop.f32.mrf.mxu0
  %v5630 = vadd.f32 %v5589, %v5629
  %v5631 = vpop.f32.mrf.mxu0
  %v5632 = vpop.f32.mrf.mxu0
  %5633 = vdwg.mxu0
  %5634 = vmatprep.subr.bf16.mxu0 0
  %5635 = vmatpush1.bf16.msra.mxu0 0
  %5636 = vmatprep.subr.bf16.mxu0 0
  %5637 = vmatpush1.bf16.msra.mxu0 0
  %5638 = vmatprep.subr.bf16.mxu0 0
  %5639 = vmatpush1.bf16.msra.mxu0 0
  %5640 = vmatprep.subr.bf16.mxu0 0
  %5641 = vmatpush1.bf16.msra.mxu0 0
  %5642 = vmatprep.subr.bf16.mxu0 0
  %5643 = vmatpush1.bf16.msra.mxu0 0
  %5644 = vmatprep.subr.bf16.mxu0 0
  %5645 = vmatpush1.bf16.msra.mxu0 0
  %5646 = vmatprep.subr.bf16.mxu0 %v3913
  %5647 = vmatpush1.bf16.msra.mxu0 %v3912
  %5648 = vmatprep.subr.bf16.mxu0 %v3911
  %5649 = vmatpush1.bf16.msra.mxu0 %v3910
  %5650 = vmatprep.subr.bf16.mxu0 0
  %5651 = vmatpush2.bf16.msra.mxu0 0
  %5652 = vmatprep.subr.bf16.mxu0 0
  %5653 = vmatpush2.bf16.msra.mxu0 0
  %5654 = vmatprep.subr.bf16.mxu0 0
  %5655 = vmatpush2.bf16.msra.mxu0 0
  %5656 = vmatprep.subr.bf16.mxu0 0
  %5657 = vmatpush2.bf16.msra.mxu0 0
  %5658 = vmatprep.subr.bf16.mxu0 0
  %5659 = vmatpush2.bf16.msra.mxu0 0
  %5660 = vmatprep.subr.bf16.mxu0 0
  %5661 = vmatpush2.bf16.msra.mxu0 0
  %5662 = vmatprep.subr.bf16.mxu0 0
  %5663 = vmatpush2.bf16.msra.mxu0 0
  %5664 = vmatprep.subr.bf16.mxu0 0
  %5665 = vmatpush2.bf16.msra.mxu0 0
  %5666 = vmatprep.mubr.bf16.mxu0 0
  %5667 = vmatmul.mubr.bf16.gmra.mxu0 %v4750
  %v5668 = vpop.f32.mrf.mxu0
  %v5669 = vadd.f32 %v5628, %v5668
  %v5670 = vpop.f32.mrf.mxu0
  %v5671 = vadd.f32 %v5630, %v5670
  %v5672 = vpop.f32.mrf.mxu0
  %v5673 = vpop.f32.mrf.mxu0
  %5674 = vdwg.mxu0
  %5675 = vmatprep.subr.bf16.mxu0 %v4158
  %5676 = vmatpush1.bf16.msra.mxu0 %v4157
  %5677 = vmatprep.subr.bf16.mxu0 %v4156
  %5678 = vmatpush1.bf16.msra.mxu0 %v4155
  %5679 = vmatprep.subr.bf16.mxu0 %v4154
  %5680 = vmatpush1.bf16.msra.mxu0 %v4153
  %5681 = vmatprep.subr.bf16.mxu0 %v4152
  %5682 = vmatpush1.bf16.msra.mxu0 %v4151
  %5683 = vmatprep.subr.bf16.mxu0 %v4150
  %5684 = vmatpush1.bf16.msra.mxu0 %v4149
  %5685 = vmatprep.subr.bf16.mxu0 %v4148
  %5686 = vmatpush1.bf16.msra.mxu0 %v4147
  %5687 = vmatprep.subr.bf16.mxu0 %v4146
  %5688 = vmatpush1.bf16.msra.mxu0 %v4145
  %5689 = vmatprep.subr.bf16.mxu0 %v4144
  %5690 = vmatpush1.bf16.msra.mxu0 %v4143
  %5691 = vmatprep.subr.bf16.mxu0 %v4174
  %5692 = vmatpush2.bf16.msra.mxu0 %v4173
  %5693 = vmatprep.subr.bf16.mxu0 %v4172
  %5694 = vmatpush2.bf16.msra.mxu0 %v4171
  %5695 = vmatprep.subr.bf16.mxu0 %v4170
  %5696 = vmatpush2.bf16.msra.mxu0 %v4169
  %5697 = vmatprep.subr.bf16.mxu0 %v4168
  %5698 = vmatpush2.bf16.msra.mxu0 %v4167
  %5699 = vmatprep.subr.bf16.mxu0 %v4166
  %5700 = vmatpush2.bf16.msra.mxu0 %v4165
  %5701 = vmatprep.subr.bf16.mxu0 %v4164
  %5702 = vmatpush2.bf16.msra.mxu0 %v4163
  %5703 = vmatprep.subr.bf16.mxu0 %v4162
  %5704 = vmatpush2.bf16.msra.mxu0 %v4161
  %5705 = vmatprep.subr.bf16.mxu0 %v4160
  %5706 = vmatpush2.bf16.msra.mxu0 %v4159
  %5707 = vmatprep.mubr.bf16.mxu0 %v2956
  %5708 = vmatmul.mubr.bf16.gmra.mxu0 %v2955
  %v5709 = vpop.f32.mrf.mxu0
  %v5710 = vadd.f32 0.0, %v5709
  %v5711 = vpop.f32.mrf.mxu0
  %v5712 = vadd.f32 0.0, %v5711
  %v5713 = vpop.f32.mrf.mxu0
  %v5714 = vpop.f32.mrf.mxu0
  %5715 = vdwg.mxu0
  %5716 = vmatprep.subr.bf16.mxu0 0
  %5717 = vmatpush1.bf16.msra.mxu0 0
  %5718 = vmatprep.subr.bf16.mxu0 0
  %5719 = vmatpush1.bf16.msra.mxu0 0
  %5720 = vmatprep.subr.bf16.mxu0 0
  %5721 = vmatpush1.bf16.msra.mxu0 0
  %5722 = vmatprep.subr.bf16.mxu0 0
  %5723 = vmatpush1.bf16.msra.mxu0 0
  %5724 = vmatprep.subr.bf16.mxu0 0
  %5725 = vmatpush1.bf16.msra.mxu0 0
  %5726 = vmatprep.subr.bf16.mxu0 0
  %5727 = vmatpush1.bf16.msra.mxu0 0
  %5728 = vmatprep.subr.bf16.mxu0 %v4178
  %5729 = vmatpush1.bf16.msra.mxu0 %v4177
  %5730 = vmatprep.subr.bf16.mxu0 %v4176
  %5731 = vmatpush1.bf16.msra.mxu0 %v4175
  %5732 = vmatprep.subr.bf16.mxu0 0
  %5733 = vmatpush2.bf16.msra.mxu0 0
  %5734 = vmatprep.subr.bf16.mxu0 0
  %5735 = vmatpush2.bf16.msra.mxu0 0
  %5736 = vmatprep.subr.bf16.mxu0 0
  %5737 = vmatpush2.bf16.msra.mxu0 0
  %5738 = vmatprep.subr.bf16.mxu0 0
  %5739 = vmatpush2.bf16.msra.mxu0 0
  %5740 = vmatprep.subr.bf16.mxu0 0
  %5741 = vmatpush2.bf16.msra.mxu0 0
  %5742 = vmatprep.subr.bf16.mxu0 0
  %5743 = vmatpush2.bf16.msra.mxu0 0
  %5744 = vmatprep.subr.bf16.mxu0 0
  %5745 = vmatpush2.bf16.msra.mxu0 0
  %5746 = vmatprep.subr.bf16.mxu0 0
  %5747 = vmatpush2.bf16.msra.mxu0 0
  %5748 = vmatprep.mubr.bf16.mxu0 0
  %5749 = vmatmul.mubr.bf16.gmra.mxu0 %v5189
  %v5750 = vpop.f32.mrf.mxu0
  %v5751 = vadd.f32 %v5710, %v5750
  %v5752 = vpop.f32.mrf.mxu0
  %v5753 = vadd.f32 %v5712, %v5752
  %v5754 = vpop.f32.mrf.mxu0
  %v5755 = vpop.f32.mrf.mxu0
  %5756 = vdwg.mxu0
  %v5757 = vadd.f32 %v5669, %v5751
  %v5758 = vadd.f32 %v5671, %v5753
  %v5760 = vsel %vm3684, %v3230, 0
  %5762 = vmatprep.subr.bf16.mxu0 %v4425
  %5763 = vmatpush1.bf16.msra.mxu0 %v4424
  %5764 = vmatprep.subr.bf16.mxu0 %v4423
  %5765 = vmatpush1.bf16.msra.mxu0 %v4422
  %5766 = vmatprep.subr.bf16.mxu0 %v4421
  %5767 = vmatpush1.bf16.msra.mxu0 %v4420
  %5768 = vmatprep.subr.bf16.mxu0 %v4419
  %5769 = vmatpush1.bf16.msra.mxu0 %v4418
  %5770 = vmatprep.subr.bf16.mxu0 %v4417
  %5771 = vmatpush1.bf16.msra.mxu0 %v4416
  %5772 = vmatprep.subr.bf16.mxu0 %v4415
  %5773 = vmatpush1.bf16.msra.mxu0 %v4414
  %5774 = vmatprep.subr.bf16.mxu0 %v4413
  %5775 = vmatpush1.bf16.msra.mxu0 %v4412
  %5776 = vmatprep.subr.bf16.mxu0 %v4411
  %5777 = vmatpush1.bf16.msra.mxu0 %v4410
  %5778 = vmatprep.subr.bf16.mxu0 %v4441
  %5779 = vmatpush2.bf16.msra.mxu0 %v4440
  %5780 = vmatprep.subr.bf16.mxu0 %v4439
  %5781 = vmatpush2.bf16.msra.mxu0 %v4438
  %5782 = vmatprep.subr.bf16.mxu0 %v4437
  %5783 = vmatpush2.bf16.msra.mxu0 %v4436
  %5784 = vmatprep.subr.bf16.mxu0 %v4435
  %5785 = vmatpush2.bf16.msra.mxu0 %v4434
  %5786 = vmatprep.subr.bf16.mxu0 %v4433
  %5787 = vmatpush2.bf16.msra.mxu0 %v4432
  %5788 = vmatprep.subr.bf16.mxu0 %v4431
  %5789 = vmatpush2.bf16.msra.mxu0 %v4430
  %5790 = vmatprep.subr.bf16.mxu0 %v4429
  %5791 = vmatpush2.bf16.msra.mxu0 %v4428
  %5792 = vmatprep.subr.bf16.mxu0 %v4427
  %5793 = vmatpush2.bf16.msra.mxu0 %v4426
  %5794 = vmatprep.mubr.bf16.mxu0 %v3229
  %5795 = vmatmul.mubr.bf16.gmra.mxu0 %v3228
  %v5796 = vpop.f32.mrf.mxu0
  %v5797 = vadd.f32 0.0, %v5796
  %v5798 = vpop.f32.mrf.mxu0
  %v5799 = vadd.f32 0.0, %v5798
  %v5800 = vpop.f32.mrf.mxu0
  %v5801 = vpop.f32.mrf.mxu0
  %5802 = vdwg.mxu0
  %5803 = vmatprep.subr.bf16.mxu0 0
  %5804 = vmatpush1.bf16.msra.mxu0 0
  %5805 = vmatprep.subr.bf16.mxu0 0
  %5806 = vmatpush1.bf16.msra.mxu0 0
  %5807 = vmatprep.subr.bf16.mxu0 0
  %5808 = vmatpush1.bf16.msra.mxu0 0
  %5809 = vmatprep.subr.bf16.mxu0 0
  %5810 = vmatpush1.bf16.msra.mxu0 0
  %5811 = vmatprep.subr.bf16.mxu0 0
  %5812 = vmatpush1.bf16.msra.mxu0 0
  %5813 = vmatprep.subr.bf16.mxu0 0
  %5814 = vmatpush1.bf16.msra.mxu0 0
  %5815 = vmatprep.subr.bf16.mxu0 %v4445
  %5816 = vmatpush1.bf16.msra.mxu0 %v4444
  %5817 = vmatprep.subr.bf16.mxu0 %v4443
  %5818 = vmatpush1.bf16.msra.mxu0 %v4442
  %5819 = vmatprep.subr.bf16.mxu0 0
  %5820 = vmatpush2.bf16.msra.mxu0 0
  %5821 = vmatprep.subr.bf16.mxu0 0
  %5822 = vmatpush2.bf16.msra.mxu0 0
  %5823 = vmatprep.subr.bf16.mxu0 0
  %5824 = vmatpush2.bf16.msra.mxu0 0
  %5825 = vmatprep.subr.bf16.mxu0 0
  %5826 = vmatpush2.bf16.msra.mxu0 0
  %5827 = vmatprep.subr.bf16.mxu0 0
  %5828 = vmatpush2.bf16.msra.mxu0 0
  %5829 = vmatprep.subr.bf16.mxu0 0
  %5830 = vmatpush2.bf16.msra.mxu0 0
  %5831 = vmatprep.subr.bf16.mxu0 0
  %5832 = vmatpush2.bf16.msra.mxu0 0
  %5833 = vmatprep.subr.bf16.mxu0 0
  %5834 = vmatpush2.bf16.msra.mxu0 0
  %5835 = vmatprep.mubr.bf16.mxu0 0
  %5836 = vmatmul.mubr.bf16.gmra.mxu0 %v5760
  %v5837 = vpop.f32.mrf.mxu0
  %v5838 = vadd.f32 %v5797, %v5837
  %v5839 = vpop.f32.mrf.mxu0
  %v5840 = vadd.f32 %v5799, %v5839
  %v5841 = vpop.f32.mrf.mxu0
  %v5842 = vpop.f32.mrf.mxu0
  %5843 = vdwg.mxu0
  %v5844 = vadd.f32 %v5757, %v5838
  %v5845 = vadd.f32 %v5758, %v5840
  %v5847 = vsel %vm3684, %v3503, 0
  %5849 = vmatprep.subr.bf16.mxu0 %v4692
  %5850 = vmatpush1.bf16.msra.mxu0 %v4691
  %5851 = vmatprep.subr.bf16.mxu0 %v4690
  %5852 = vmatpush1.bf16.msra.mxu0 %v4689
  %5853 = vmatprep.subr.bf16.mxu0 %v4688
  %5854 = vmatpush1.bf16.msra.mxu0 %v4687
  %5855 = vmatprep.subr.bf16.mxu0 %v4686
  %5856 = vmatpush1.bf16.msra.mxu0 %v4685
  %5857 = vmatprep.subr.bf16.mxu0 %v4684
  %5858 = vmatpush1.bf16.msra.mxu0 %v4683
  %5859 = vmatprep.subr.bf16.mxu0 %v4682
  %5860 = vmatpush1.bf16.msra.mxu0 %v4681
  %5861 = vmatprep.subr.bf16.mxu0 %v4680
  %5862 = vmatpush1.bf16.msra.mxu0 %v4679
  %5863 = vmatprep.subr.bf16.mxu0 %v4678
  %5864 = vmatpush1.bf16.msra.mxu0 %v4677
  %5865 = vmatprep.subr.bf16.mxu0 %v4708
  %5866 = vmatpush2.bf16.msra.mxu0 %v4707
  %5867 = vmatprep.subr.bf16.mxu0 %v4706
  %5868 = vmatpush2.bf16.msra.mxu0 %v4705
  %5869 = vmatprep.subr.bf16.mxu0 %v4704
  %5870 = vmatpush2.bf16.msra.mxu0 %v4703
  %5871 = vmatprep.subr.bf16.mxu0 %v4702
  %5872 = vmatpush2.bf16.msra.mxu0 %v4701
  %5873 = vmatprep.subr.bf16.mxu0 %v4700
  %5874 = vmatpush2.bf16.msra.mxu0 %v4699
  %5875 = vmatprep.subr.bf16.mxu0 %v4698
  %5876 = vmatpush2.bf16.msra.mxu0 %v4697
  %5877 = vmatprep.subr.bf16.mxu0 %v4696
  %5878 = vmatpush2.bf16.msra.mxu0 %v4695
  %5879 = vmatprep.subr.bf16.mxu0 %v4694
  %5880 = vmatpush2.bf16.msra.mxu0 %v4693
  %5881 = vmatprep.mubr.bf16.mxu0 %v3502
  %5882 = vmatmul.mubr.bf16.gmra.mxu0 %v3501
  %v5883 = vpop.f32.mrf.mxu0
  %v5884 = vadd.f32 0.0, %v5883
  %v5885 = vpop.f32.mrf.mxu0
  %v5886 = vadd.f32 0.0, %v5885
  %v5887 = vpop.f32.mrf.mxu0
  %v5888 = vpop.f32.mrf.mxu0
  %5889 = vdwg.mxu0
  %5890 = vmatprep.subr.bf16.mxu0 0
  %5891 = vmatpush1.bf16.msra.mxu0 0
  %5892 = vmatprep.subr.bf16.mxu0 0
  %5893 = vmatpush1.bf16.msra.mxu0 0
  %5894 = vmatprep.subr.bf16.mxu0 0
  %5895 = vmatpush1.bf16.msra.mxu0 0
  %5896 = vmatprep.subr.bf16.mxu0 0
  %5897 = vmatpush1.bf16.msra.mxu0 0
  %5898 = vmatprep.subr.bf16.mxu0 0
  %5899 = vmatpush1.bf16.msra.mxu0 0
  %5900 = vmatprep.subr.bf16.mxu0 0
  %5901 = vmatpush1.bf16.msra.mxu0 0
  %5902 = vmatprep.subr.bf16.mxu0 %v4712
  %5903 = vmatpush1.bf16.msra.mxu0 %v4711
  %5904 = vmatprep.subr.bf16.mxu0 %v4710
  %5905 = vmatpush1.bf16.msra.mxu0 %v4709
  %5906 = vmatprep.subr.bf16.mxu0 0
  %5907 = vmatpush2.bf16.msra.mxu0 0
  %5908 = vmatprep.subr.bf16.mxu0 0
  %5909 = vmatpush2.bf16.msra.mxu0 0
  %5910 = vmatprep.subr.bf16.mxu0 0
  %5911 = vmatpush2.bf16.msra.mxu0 0
  %5912 = vmatprep.subr.bf16.mxu0 0
  %5913 = vmatpush2.bf16.msra.mxu0 0
  %5914 = vmatprep.subr.bf16.mxu0 0
  %5915 = vmatpush2.bf16.msra.mxu0 0
  %5916 = vmatprep.subr.bf16.mxu0 0
  %5917 = vmatpush2.bf16.msra.mxu0 0
  %5918 = vmatprep.subr.bf16.mxu0 0
  %5919 = vmatpush2.bf16.msra.mxu0 0
  %5920 = vmatprep.subr.bf16.mxu0 0
  %5921 = vmatpush2.bf16.msra.mxu0 0
  %5922 = vmatprep.mubr.bf16.mxu0 0
  %5923 = vmatmul.mubr.bf16.gmra.mxu0 %v5847
  %v5924 = vpop.f32.mrf.mxu0
  %v5925 = vadd.f32 %v5884, %v5924
  %v5926 = vpop.f32.mrf.mxu0
  %v5927 = vadd.f32 %v5886, %v5926
  %v5928 = vpop.f32.mrf.mxu0
  %v5929 = vpop.f32.mrf.mxu0
  %5930 = vdwg.mxu0
  %v5931 = vadd.f32 %v5844, %v5925
  %v5932 = vadd.f32 %v5845, %v5927
  %v5933 = vadd.f32 %v5931, %v4840
  %v5934 = vadd.f32 %v5932, %v4844
  %v5935 = vmax.f32 %v5933, 0.0
  %v5936 = vmax.f32 %v5934, 0.0
  %v5937 = vpack.c.bf16 %v5935, %v5935
  %v5938 = vpack.c.bf16 %v5936, %v5936
  %v5963 = vunpack.c.l.b16 %v431
  %v5964 = vunpack.c.l.b16 %v432
  %v5965 = vunpack.c.l.b16 %v433
  %v5966 = vunpack.c.l.b16 %v434
  %v5967 = vunpack.c.l.b16 %v435
  %v5968 = vunpack.c.l.b16 %v436
  %v5969 = vunpack.c.l.b16 %v437
  %v5970 = vunpack.c.l.b16 %v438
  %v5971 = vunpack.c.l.b16 %v439
  %v5972 = vunpack.c.l.b16 %v440
  %v5973 = vunpack.c.l.b16 %v441
  %v5974 = vunpack.c.l.b16 %v442
  %v5975 = vunpack.c.l.b16 %v443
  %v5976 = vunpack.c.l.b16 %v444
  %v5977 = vunpack.c.l.b16 %v445
  %v5978 = vunpack.c.l.b16 %v446
  %v5979 = vunpack.c.l.b16 %v447
  %v5980 = vunpack.c.l.b16 %v448
  %v5981 = vunpack.c.l.b16 %v449
  %v5982 = vunpack.c.l.b16 %v450
  %v5983 = vunpack.c.l.b16 %v451
  %v5984 = vunpack.c.l.b16 %v452
  %v5985 = vunpack.c.l.b16 %v453
  %v5986 = vunpack.c.l.b16 %v454
  %v5987 = vpack.c.b16 %v5964, %v5963
  %v5988 = vpack.c.b16 %v5966, %v5965
  %v5989 = vpack.c.b16 %v5968, %v5967
  %v5990 = vpack.c.b16 %v5970, %v5969
  %v5991 = vpack.c.b16 %v5972, %v5971
  %v5992 = vpack.c.b16 %v5974, %v5973
  %v5993 = vpack.c.b16 %v5976, %v5975
  %v5994 = vpack.c.b16 %v5978, %v5977
  %v5995 = vpack.c.b16 %v5980, %v5979
  %v5996 = vpack.c.b16 %v5982, %v5981
  %v5997 = vpack.c.b16 %v5984, %v5983
  %v5998 = vpack.c.b16 %v5986, %v5985
  %v6012 = vsel %vm1067, %v5938, 0
  %6014 = vmatprep.subr.bf16.mxu0 0
  %6015 = vmatpush1.bf16.msra.mxu0 %v5994
  %6016 = vmatprep.subr.bf16.mxu0 0
  %6017 = vmatpush1.bf16.msra.mxu0 %v5993
  %6018 = vmatprep.subr.bf16.mxu0 0
  %6019 = vmatpush1.bf16.msra.mxu0 %v5992
  %6020 = vmatprep.subr.bf16.mxu0 0
  %6021 = vmatpush1.bf16.msra.mxu0 %v5991
  %6022 = vmatprep.subr.bf16.mxu0 0
  %6023 = vmatpush1.bf16.msra.mxu0 %v5990
  %6024 = vmatprep.subr.bf16.mxu0 0
  %6025 = vmatpush1.bf16.msra.mxu0 %v5989
  %6026 = vmatprep.subr.bf16.mxu0 0
  %6027 = vmatpush1.bf16.msra.mxu0 %v5988
  %6028 = vmatprep.subr.bf16.mxu0 0
  %6029 = vmatpush1.bf16.msra.mxu0 %v5987
  %6030 = vmatprep.subr.bf16.mxu0 0
  %6031 = vmatpush2.bf16.msra.mxu0 0
  %6032 = vmatprep.subr.bf16.mxu0 0
  %6033 = vmatpush2.bf16.msra.mxu0 0
  %6034 = vmatprep.subr.bf16.mxu0 0
  %6035 = vmatpush2.bf16.msra.mxu0 0
  %6036 = vmatprep.subr.bf16.mxu0 0
  %6037 = vmatpush2.bf16.msra.mxu0 0
  %6038 = vmatprep.subr.bf16.mxu0 0
  %6039 = vmatpush2.bf16.msra.mxu0 %v5998
  %6040 = vmatprep.subr.bf16.mxu0 0
  %6041 = vmatpush2.bf16.msra.mxu0 %v5997
  %6042 = vmatprep.subr.bf16.mxu0 0
  %6043 = vmatpush2.bf16.msra.mxu0 %v5996
  %6044 = vmatprep.subr.bf16.mxu0 0
  %6045 = vmatpush2.bf16.msra.mxu0 %v5995
  %6046 = vmatprep.mubr.bf16.mxu0 %v6012
  %6047 = vmatmul.mubr.bf16.gmra.mxu0 %v5937
  %v6048 = vpop.f32.mrf.mxu0
  %v6049 = vadd.f32 0.0, %v6048
  %v6050 = vpop.f32.mrf.mxu0
  %v6051 = vpop.f32.mrf.mxu0
  %v6052 = vpop.f32.mrf.mxu0
  %6053 = vdwg.mxu0
  %v6054 = vadd.f32 %v5506, %v6049
  %v6055 = vld [vmem:[%s7] sm:$0x1]
  %v6057 = vlaneseq
  %v6058 = vshrl.u32 %v6057, 7
  %v6059 = vsub.s32 0, %v6058
  %v6060 = vrot.slane %v6055, %v6059
  %v6062 = vadd.f32 %v6054, %v6060
  %v6063 = vmax.f32 %v6062, 0.0
  %v6064 = vld [vmem:[%s8] sm:$0xff]
  %v6065 = vld [vmem:[%s8 + $0x8] sm:$0xff]
  %v6066 = vld [vmem:[%s8 + $0x10] sm:$0xff]
  %v6067 = vld [vmem:[%s8 + $0x18] sm:$0xff]
  %v6068 = vld [vmem:[%s8 + $0x20] sm:$0xff]
  %v6069 = vld [vmem:[%s8 + $0x28] sm:$0xff]
  %v6070 = vld [vmem:[%s8 + $0x30] sm:$0xff]
  %v6071 = vld [vmem:[%s8 + $0x38] sm:$0xff]
  %v6072 = vld [vmem:[%s8 + $0x40] sm:$0xff]
  %v6073 = vld [vmem:[%s8 + $0x48] sm:$0xff]
  %v6074 = vld [vmem:[%s8 + $0x50] sm:$0xff]
  %v6075 = vld [vmem:[%s8 + $0x58] sm:$0xff]
  %v6076 = vld [vmem:[%s8 + $0x60] sm:$0xff]
  %v6077 = vld [vmem:[%s8 + $0x68] sm:$0xff]
  %v6078 = vld [vmem:[%s8 + $0x70] sm:$0xff]
  %v6079 = vld [vmem:[%s8 + $0x78] sm:$0xff]
  %v6080 = vld [vmem:[%s9] sm:$0x1]
  %v6082 = vlaneseq
  %v6083 = vshrl.u32 %v6082, 7
  %v6084 = vsub.s32 0, %v6083
  %v6085 = vrot.slane %v6080, %v6084
  %6087 = vmatprep.subr.mxu0 0.0
  %6088 = vmatpush1.msra.mxu0 %v6079
  %6089 = vmatprep.subr.mxu0 0.0
  %6090 = vmatpush1.msra.mxu0 %v6078
  %6091 = vmatprep.subr.mxu0 0.0
  %6092 = vmatpush1.msra.mxu0 %v6077
  %6093 = vmatprep.subr.mxu0 0.0
  %6094 = vmatpush1.msra.mxu0 %v6076
  %6095 = vmatprep.subr.mxu0 0.0
  %6096 = vmatpush1.msra.mxu0 %v6075
  %6097 = vmatprep.subr.mxu0 0.0
  %6098 = vmatpush1.msra.mxu0 %v6074
  %6099 = vmatprep.subr.mxu0 0.0
  %6100 = vmatpush1.msra.mxu0 %v6073
  %6101 = vmatprep.subr.mxu0 0.0
  %6102 = vmatpush1.msra.mxu0 %v6072
  %6103 = vmatprep.subr.mxu0 0.0
  %6104 = vmatpush1.msra.mxu0 %v6071
  %6105 = vmatprep.subr.mxu0 0.0
  %6106 = vmatpush1.msra.mxu0 %v6070
  %6107 = vmatprep.subr.mxu0 0.0
  %6108 = vmatpush1.msra.mxu0 %v6069
  %6109 = vmatprep.subr.mxu0 0.0
  %6110 = vmatpush1.msra.mxu0 %v6068
  %6111 = vmatprep.subr.mxu0 0.0
  %6112 = vmatpush1.msra.mxu0 %v6067
  %6113 = vmatprep.subr.mxu0 0.0
  %6114 = vmatpush1.msra.mxu0 %v6066
  %6115 = vmatprep.subr.mxu0 0.0
  %6116 = vmatpush1.msra.mxu0 %v6065
  %6117 = vmatprep.subr.mxu0 0.0
  %6118 = vmatpush1.msra.mxu0 %v6064
  %6119 = vmatprep.subr.mxu0 0.0
  %6120 = vmatpush2.msra.mxu0 0.0
  %6121 = vmatprep.subr.mxu0 0.0
  %6122 = vmatpush2.msra.mxu0 0.0
  %6123 = vmatprep.subr.mxu0 0.0
  %6124 = vmatpush2.msra.mxu0 0.0
  %6125 = vmatprep.subr.mxu0 0.0
  %6126 = vmatpush2.msra.mxu0 0.0
  %6127 = vmatprep.subr.mxu0 0.0
  %6128 = vmatpush2.msra.mxu0 0.0
  %6129 = vmatprep.subr.mxu0 0.0
  %6130 = vmatpush2.msra.mxu0 0.0
  %6131 = vmatprep.subr.mxu0 0.0
  %6132 = vmatpush2.msra.mxu0 0.0
  %6133 = vmatprep.subr.mxu0 0.0
  %6134 = vmatpush2.msra.mxu0 0.0
  %6135 = vmatprep.subr.mxu0 0.0
  %6136 = vmatpush2.msra.mxu0 0.0
  %6137 = vmatprep.subr.mxu0 0.0
  %6138 = vmatpush2.msra.mxu0 0.0
  %6139 = vmatprep.subr.mxu0 0.0
  %6140 = vmatpush2.msra.mxu0 0.0
  %6141 = vmatprep.subr.mxu0 0.0
  %6142 = vmatpush2.msra.mxu0 0.0
  %6143 = vmatprep.subr.mxu0 0.0
  %6144 = vmatpush2.msra.mxu0 0.0
  %6145 = vmatprep.subr.mxu0 0.0
  %6146 = vmatpush2.msra.mxu0 0.0
  %6147 = vmatprep.subr.mxu0 0.0
  %6148 = vmatpush2.msra.mxu0 0.0
  %6149 = vmatprep.subr.mxu0 0.0
  %6150 = vmatpush2.msra.mxu0 0.0
  %6151 = vmatprep.mubr.f32.mxu0 0.0
  %6152 = vmatmul.mubr.f32.gmra.mxu0 %v6063
  %v6153 = vpop.f32.mrf.mxu0
  %v6154 = vadd.f32 %v6085, %v6153
  %v6155 = vpop.f32.mrf.mxu0
  %6156 = vdwg.mxu0
  %v6157 = vmax.f32 %v6154, 0.0
  %v6158 = vld [vmem:[%s1] sm:$0xff]
  %v6159 = vld [vmem:[%s10] sm:$0x3]
  %v6160 = vld [vmem:[%s11] sm:$0x1]
  %v6162 = vlaneseq
  %v6163 = vshrl.u32 %v6162, 7
  %v6164 = vsub.s32 0, %v6163
  %v6165 = vrot.slane %v6160, %v6164
  %vm6167 = vcmask 15360
  %v6169 = vsel %vm6167, %v6158, 0
  %vm6171 = vcmask 1041408
  %v6173 = vsel %vm6171, %v6159, 0
  %6175 = vmatprep.subr.mxu0 0.0
  %6176 = vmatpush1.msra.mxu0 0.0
  %6177 = vmatprep.subr.mxu0 0.0
  %6178 = vmatpush1.msra.mxu0 0.0
  %6179 = vmatprep.subr.mxu0 0.0
  %6180 = vmatpush1.msra.mxu0 0.0
  %6181 = vmatprep.subr.mxu0 0.0
  %6182 = vmatpush1.msra.mxu0 0.0
  %6183 = vmatprep.subr.mxu0 0.0
  %6184 = vmatpush1.msra.mxu0 0.0
  %6185 = vmatprep.subr.mxu0 0.0
  %6186 = vmatpush1.msra.mxu0 0.0
  %6187 = vmatprep.subr.mxu0 0.0
  %6188 = vmatpush1.msra.mxu0 0.0
  %6189 = vmatprep.subr.mxu0 0.0
  %6190 = vmatpush1.msra.mxu0 0.0
  %6191 = vmatprep.subr.mxu0 0.0
  %6192 = vmatpush1.msra.mxu0 0.0
  %6193 = vmatprep.subr.mxu0 0.0
  %6194 = vmatpush1.msra.mxu0 0.0
  %6195 = vmatprep.subr.mxu0 0.0
  %6196 = vmatpush1.msra.mxu0 0.0
  %6197 = vmatprep.subr.mxu0 0.0
  %6198 = vmatpush1.msra.mxu0 0.0
  %6199 = vmatprep.subr.mxu0 0.0
  %6200 = vmatpush1.msra.mxu0 0.0
  %6201 = vmatprep.subr.mxu0 0.0
  %6202 = vmatpush1.msra.mxu0 0.0
  %6203 = vmatprep.subr.mxu0 0.0
  %6204 = vmatpush1.msra.mxu0 0.0
  %6205 = vmatprep.subr.mxu0 0.0
  %6206 = vmatpush1.msra.mxu0 %v6173
  %6207 = vmatprep.subr.mxu0 0.0
  %6208 = vmatpush2.msra.mxu0 0.0
  %6209 = vmatprep.subr.mxu0 0.0
  %6210 = vmatpush2.msra.mxu0 0.0
  %6211 = vmatprep.subr.mxu0 0.0
  %6212 = vmatpush2.msra.mxu0 0.0
  %6213 = vmatprep.subr.mxu0 0.0
  %6214 = vmatpush2.msra.mxu0 0.0
  %6215 = vmatprep.subr.mxu0 0.0
  %6216 = vmatpush2.msra.mxu0 0.0
  %6217 = vmatprep.subr.mxu0 0.0
  %6218 = vmatpush2.msra.mxu0 0.0
  %6219 = vmatprep.subr.mxu0 0.0
  %6220 = vmatpush2.msra.mxu0 0.0
  %6221 = vmatprep.subr.mxu0 0.0
  %6222 = vmatpush2.msra.mxu0 0.0
  %6223 = vmatprep.subr.mxu0 0.0
  %6224 = vmatpush2.msra.mxu0 0.0
  %6225 = vmatprep.subr.mxu0 0.0
  %6226 = vmatpush2.msra.mxu0 0.0
  %6227 = vmatprep.subr.mxu0 0.0
  %6228 = vmatpush2.msra.mxu0 0.0
  %6229 = vmatprep.subr.mxu0 0.0
  %6230 = vmatpush2.msra.mxu0 0.0
  %6231 = vmatprep.subr.mxu0 0.0
  %6232 = vmatpush2.msra.mxu0 0.0
  %6233 = vmatprep.subr.mxu0 0.0
  %6234 = vmatpush2.msra.mxu0 0.0
  %6235 = vmatprep.subr.mxu0 0.0
  %6236 = vmatpush2.msra.mxu0 0.0
  %6237 = vmatprep.subr.mxu0 0.0
  %6238 = vmatpush2.msra.mxu0 0.0
  %6239 = vmatprep.mubr.f32.mxu0 0.0
  %6240 = vmatmul.mubr.f32.gmra.mxu0 %v6169
  %v6241 = vpop.f32.mrf.mxu0
  %v6242 = vadd.f32 %v6165, %v6241
  %v6243 = vpop.f32.mrf.mxu0
  %6244 = vdwg.mxu0
  %v6245 = vmax.f32 %v6242, 0.0
  %v6246 = vld [vmem:[%s12] sm:$0xff]
  %v6247 = vld [vmem:[%s12 + $0x8] sm:$0xff]
  %v6248 = vld [vmem:[%s12 + $0x10] sm:$0xff]
  %v6249 = vld [vmem:[%s12 + $0x18] sm:$0xff]
  %v6250 = vld [vmem:[%s12 + $0x20] sm:$0xff]
  %v6251 = vld [vmem:[%s12 + $0x28] sm:$0xff]
  %v6252 = vld [vmem:[%s12 + $0x30] sm:$0xff]
  %v6253 = vld [vmem:[%s12 + $0x38] sm:$0xff]
  %v6254 = vld [vmem:[%s13] sm:$0xff]
  %v6255 = vld [vmem:[%s13 + $0x8] sm:$0xff]
  %v6256 = vld [vmem:[%s13 + $0x10] sm:$0xff]
  %v6257 = vld [vmem:[%s13 + $0x18] sm:$0xff]
  %v6259 = vsel %vm3684, %v6245, 0
  %6261 = vmatprep.subr.mxu0 0.0
  %6262 = vmatpush1.msra.mxu0 0.0
  %6263 = vmatprep.subr.mxu0 0.0
  %6264 = vmatpush1.msra.mxu0 0.0
  %6265 = vmatprep.subr.mxu0 0.0
  %6266 = vmatpush1.msra.mxu0 0.0
  %6267 = vmatprep.subr.mxu0 0.0
  %6268 = vmatpush1.msra.mxu0 0.0
  %6269 = vmatprep.subr.mxu0 0.0
  %6270 = vmatpush1.msra.mxu0 0.0
  %6271 = vmatprep.subr.mxu0 0.0
  %6272 = vmatpush1.msra.mxu0 0.0
  %6273 = vmatprep.subr.mxu0 0.0
  %6274 = vmatpush1.msra.mxu0 0.0
  %6275 = vmatprep.subr.mxu0 0.0
  %6276 = vmatpush1.msra.mxu0 0.0
  %6277 = vmatprep.subr.mxu0 0.0
  %6278 = vmatpush1.msra.mxu0 0.0
  %6279 = vmatprep.subr.mxu0 0.0
  %6280 = vmatpush1.msra.mxu0 0.0
  %6281 = vmatprep.subr.mxu0 0.0
  %6282 = vmatpush1.msra.mxu0 0.0
  %6283 = vmatprep.subr.mxu0 0.0
  %6284 = vmatpush1.msra.mxu0 0.0
  %6285 = vmatprep.subr.mxu0 0.0
  %6286 = vmatpush1.msra.mxu0 %v6257
  %6287 = vmatprep.subr.mxu0 0.0
  %6288 = vmatpush1.msra.mxu0 %v6256
  %6289 = vmatprep.subr.mxu0 0.0
  %6290 = vmatpush1.msra.mxu0 %v6255
  %6291 = vmatprep.subr.mxu0 0.0
  %6292 = vmatpush1.msra.mxu0 %v6254
  %6293 = vmatprep.subr.mxu0 0.0
  %6294 = vmatpush2.msra.mxu0 0.0
  %6295 = vmatprep.subr.mxu0 0.0
  %6296 = vmatpush2.msra.mxu0 0.0
  %6297 = vmatprep.subr.mxu0 0.0
  %6298 = vmatpush2.msra.mxu0 0.0
  %6299 = vmatprep.subr.mxu0 0.0
  %6300 = vmatpush2.msra.mxu0 0.0
  %6301 = vmatprep.subr.mxu0 0.0
  %6302 = vmatpush2.msra.mxu0 0.0
  %6303 = vmatprep.subr.mxu0 0.0
  %6304 = vmatpush2.msra.mxu0 0.0
  %6305 = vmatprep.subr.mxu0 0.0
  %6306 = vmatpush2.msra.mxu0 0.0
  %6307 = vmatprep.subr.mxu0 0.0
  %6308 = vmatpush2.msra.mxu0 0.0
  %6309 = vmatprep.subr.mxu0 0.0
  %6310 = vmatpush2.msra.mxu0 0.0
  %6311 = vmatprep.subr.mxu0 0.0
  %6312 = vmatpush2.msra.mxu0 0.0
  %6313 = vmatprep.subr.mxu0 0.0
  %6314 = vmatpush2.msra.mxu0 0.0
  %6315 = vmatprep.subr.mxu0 0.0
  %6316 = vmatpush2.msra.mxu0 0.0
  %6317 = vmatprep.subr.mxu0 0.0
  %6318 = vmatpush2.msra.mxu0 0.0
  %6319 = vmatprep.subr.mxu0 0.0
  %6320 = vmatpush2.msra.mxu0 0.0
  %6321 = vmatprep.subr.mxu0 0.0
  %6322 = vmatpush2.msra.mxu0 0.0
  %6323 = vmatprep.subr.mxu0 0.0
  %6324 = vmatpush2.msra.mxu0 0.0
  %6325 = vmatprep.mubr.f32.mxu0 0.0
  %6326 = vmatmul.mubr.f32.gmra.mxu0 %v6259
  %v6327 = vpop.f32.mrf.mxu0
  %v6328 = vadd.f32 0.0, %v6327
  %v6329 = vpop.f32.mrf.mxu0
  %6330 = vdwg.mxu0
  %v6332 = vsel %vm1067, %v6157, 0
  %6334 = vmatprep.subr.mxu0 0.0
  %6335 = vmatpush1.msra.mxu0 0.0
  %6336 = vmatprep.subr.mxu0 0.0
  %6337 = vmatpush1.msra.mxu0 0.0
  %6338 = vmatprep.subr.mxu0 0.0
  %6339 = vmatpush1.msra.mxu0 0.0
  %6340 = vmatprep.subr.mxu0 0.0
  %6341 = vmatpush1.msra.mxu0 0.0
  %6342 = vmatprep.subr.mxu0 0.0
  %6343 = vmatpush1.msra.mxu0 0.0
  %6344 = vmatprep.subr.mxu0 0.0
  %6345 = vmatpush1.msra.mxu0 0.0
  %6346 = vmatprep.subr.mxu0 0.0
  %6347 = vmatpush1.msra.mxu0 0.0
  %6348 = vmatprep.subr.mxu0 0.0
  %6349 = vmatpush1.msra.mxu0 0.0
  %6350 = vmatprep.subr.mxu0 0.0
  %6351 = vmatpush1.msra.mxu0 %v6253
  %6352 = vmatprep.subr.mxu0 0.0
  %6353 = vmatpush1.msra.mxu0 %v6252
  %6354 = vmatprep.subr.mxu0 0.0
  %6355 = vmatpush1.msra.mxu0 %v6251
  %6356 = vmatprep.subr.mxu0 0.0
  %6357 = vmatpush1.msra.mxu0 %v6250
  %6358 = vmatprep.subr.mxu0 0.0
  %6359 = vmatpush1.msra.mxu0 %v6249
  %6360 = vmatprep.subr.mxu0 0.0
  %6361 = vmatpush1.msra.mxu0 %v6248
  %6362 = vmatprep.subr.mxu0 0.0
  %6363 = vmatpush1.msra.mxu0 %v6247
  %6364 = vmatprep.subr.mxu0 0.0
  %6365 = vmatpush1.msra.mxu0 %v6246
  %6366 = vmatprep.subr.mxu0 0.0
  %6367 = vmatpush2.msra.mxu0 0.0
  %6368 = vmatprep.subr.mxu0 0.0
  %6369 = vmatpush2.msra.mxu0 0.0
  %6370 = vmatprep.subr.mxu0 0.0
  %6371 = vmatpush2.msra.mxu0 0.0
  %6372 = vmatprep.subr.mxu0 0.0
  %6373 = vmatpush2.msra.mxu0 0.0
  %6374 = vmatprep.subr.mxu0 0.0
  %6375 = vmatpush2.msra.mxu0 0.0
  %6376 = vmatprep.subr.mxu0 0.0
  %6377 = vmatpush2.msra.mxu0 0.0
  %6378 = vmatprep.subr.mxu0 0.0
  %6379 = vmatpush2.msra.mxu0 0.0
  %6380 = vmatprep.subr.mxu0 0.0
  %6381 = vmatpush2.msra.mxu0 0.0
  %6382 = vmatprep.subr.mxu0 0.0
  %6383 = vmatpush2.msra.mxu0 0.0
  %6384 = vmatprep.subr.mxu0 0.0
  %6385 = vmatpush2.msra.mxu0 0.0
  %6386 = vmatprep.subr.mxu0 0.0
  %6387 = vmatpush2.msra.mxu0 0.0
  %6388 = vmatprep.subr.mxu0 0.0
  %6389 = vmatpush2.msra.mxu0 0.0
  %6390 = vmatprep.subr.mxu0 0.0
  %6391 = vmatpush2.msra.mxu0 0.0
  %6392 = vmatprep.subr.mxu0 0.0
  %6393 = vmatpush2.msra.mxu0 0.0
  %6394 = vmatprep.subr.mxu0 0.0
  %6395 = vmatpush2.msra.mxu0 0.0
  %6396 = vmatprep.subr.mxu0 0.0
  %6397 = vmatpush2.msra.mxu0 0.0
  %6398 = vmatprep.mubr.f32.mxu0 0.0
  %6399 = vmatmul.mubr.f32.gmra.mxu0 %v6332
  %v6400 = vpop.f32.mrf.mxu0
  %v6401 = vadd.f32 %v6328, %v6400
  %v6402 = vpop.f32.mrf.mxu0
  %6403 = vdwg.mxu0
  %v6404 = vld [vmem:[%s14] sm:$0x1]
  %v6406 = vlaneseq
  %v6407 = vshrl.u32 %v6406, 7
  %v6408 = vsub.s32 0, %v6407
  %v6409 = vrot.slane %v6404, %v6408
  %v6411 = vadd.f32 %v6401, %v6409
  %v6412 = vld [vmem:[%s15] sm:$0xff]
  %v6413 = vld [vmem:[%s15 + $0x8] sm:$0xff]
  %v6414 = vld [vmem:[%s15 + $0x10] sm:$0xff]
  %v6415 = vld [vmem:[%s15 + $0x18] sm:$0xff]
  %v6416 = vld [vmem:[%s15 + $0x20] sm:$0xff]
  %v6417 = vld [vmem:[%s15 + $0x28] sm:$0xff]
  %v6418 = vld [vmem:[%s16] sm:$0x1]
  %v6420 = vlaneseq
  %v6421 = vshrl.u32 %v6420, 7
  %v6422 = vsub.s32 0, %v6421
  %v6423 = vrot.slane %v6418, %v6422
  %vm6425 = vcmask 392192
  %v6427 = vsel %vm6425, %v6411, 0
  %6429 = vmatprep.subr.mxu0 0.0
  %6430 = vmatpush1.msra.mxu0 0.0
  %6431 = vmatprep.subr.mxu0 0.0
  %6432 = vmatpush1.msra.mxu0 0.0
  %6433 = vmatprep.subr.mxu0 0.0
  %6434 = vmatpush1.msra.mxu0 0.0
  %6435 = vmatprep.subr.mxu0 0.0
  %6436 = vmatpush1.msra.mxu0 0.0
  %6437 = vmatprep.subr.mxu0 0.0
  %6438 = vmatpush1.msra.mxu0 0.0
  %6439 = vmatprep.subr.mxu0 0.0
  %6440 = vmatpush1.msra.mxu0 0.0
  %6441 = vmatprep.subr.mxu0 0.0
  %6442 = vmatpush1.msra.mxu0 0.0
  %6443 = vmatprep.subr.mxu0 0.0
  %6444 = vmatpush1.msra.mxu0 0.0
  %6445 = vmatprep.subr.mxu0 0.0
  %6446 = vmatpush1.msra.mxu0 0.0
  %6447 = vmatprep.subr.mxu0 0.0
  %6448 = vmatpush1.msra.mxu0 0.0
  %6449 = vmatprep.subr.mxu0 0.0
  %6450 = vmatpush1.msra.mxu0 %v6417
  %6451 = vmatprep.subr.mxu0 0.0
  %6452 = vmatpush1.msra.mxu0 %v6416
  %6453 = vmatprep.subr.mxu0 0.0
  %6454 = vmatpush1.msra.mxu0 %v6415
  %6455 = vmatprep.subr.mxu0 0.0
  %6456 = vmatpush1.msra.mxu0 %v6414
  %6457 = vmatprep.subr.mxu0 0.0
  %6458 = vmatpush1.msra.mxu0 %v6413
  %6459 = vmatprep.subr.mxu0 0.0
  %6460 = vmatpush1.msra.mxu0 %v6412
  %6461 = vmatprep.subr.mxu0 0.0
  %6462 = vmatpush2.msra.mxu0 0.0
  %6463 = vmatprep.subr.mxu0 0.0
  %6464 = vmatpush2.msra.mxu0 0.0
  %6465 = vmatprep.subr.mxu0 0.0
  %6466 = vmatpush2.msra.mxu0 0.0
  %6467 = vmatprep.subr.mxu0 0.0
  %6468 = vmatpush2.msra.mxu0 0.0
  %6469 = vmatprep.subr.mxu0 0.0
  %6470 = vmatpush2.msra.mxu0 0.0
  %6471 = vmatprep.subr.mxu0 0.0
  %6472 = vmatpush2.msra.mxu0 0.0
  %6473 = vmatprep.subr.mxu0 0.0
  %6474 = vmatpush2.msra.mxu0 0.0
  %6475 = vmatprep.subr.mxu0 0.0
  %6476 = vmatpush2.msra.mxu0 0.0
  %6477 = vmatprep.subr.mxu0 0.0
  %6478 = vmatpush2.msra.mxu0 0.0
  %6479 = vmatprep.subr.mxu0 0.0
  %6480 = vmatpush2.msra.mxu0 0.0
  %6481 = vmatprep.subr.mxu0 0.0
  %6482 = vmatpush2.msra.mxu0 0.0
  %6483 = vmatprep.subr.mxu0 0.0
  %6484 = vmatpush2.msra.mxu0 0.0
  %6485 = vmatprep.subr.mxu0 0.0
  %6486 = vmatpush2.msra.mxu0 0.0
  %6487 = vmatprep.subr.mxu0 0.0
  %6488 = vmatpush2.msra.mxu0 0.0
  %6489 = vmatprep.subr.mxu0 0.0
  %6490 = vmatpush2.msra.mxu0 0.0
  %6491 = vmatprep.subr.mxu0 0.0
  %6492 = vmatpush2.msra.mxu0 0.0
  %6493 = vmatprep.mubr.f32.mxu0 0.0
  %6494 = vmatmul.mubr.f32.gmra.mxu0 %v6427
  %v6495 = vpop.f32.mrf.mxu0
  %v6496 = vadd.f32 %v6423, %v6495
  %v6497 = vpop.f32.mrf.mxu0
  %6498 = vdwg.mxu0
  %6499 = vst [vmem:[%s17] sm:$0xff] %v6496
  // Predicated region
  $region70: #{dqn_forward.1} parent=0 // pred_check
    _
  $region71: #{dqn_forward.1} parent=0 // pred_check_branch
    %6501 = sbr.rel (0) target = $region73
  $region72: #{dqn_forward.1} parent=0 // pred_region
    _
  $region73: #{dqn_forward.1} parent=0 // pred_fallthru
    _
  // Predicated region
  $region74: #{dqn_forward.1} parent=0 // pred_check
    _
  $region75: #{dqn_forward.1} parent=0 // pred_check_branch
    %6503 = sbr.rel (0) target = $region77
  $region76: #{dqn_forward.1} parent=0 // pred_region
    _
  $region77: #{dqn_forward.1} parent=0 // pred_fallthru
    _

</llo_original>
